<compile_context>
chip_gen: v6e
topology: v6e:2x2x1
jax: 0.10.0
libtpu: 0.0.40
codegen_flags: <defaults>
</compile_context>

<pallas_src>
import functools

import jax
import jax.numpy as jnp
from jax.experimental import pallas as pl
from jax.experimental.pallas import tpu as pltpu  # noqa: F401  (TPU backend)


# ------------------------------ kernel helpers ------------------------------

def _layernorm(x, g, b, eps):
    mu = jnp.mean(x, axis=-1, keepdims=True)
    var = jnp.mean((x - mu) ** 2, axis=-1, keepdims=True)
    return (x - mu) * jax.lax.rsqrt(var + eps) * g + b


def _softmax_rows(s):
    s = s - jnp.max(s, axis=-1, keepdims=True)
    e = jnp.exp(s)
    return e * pl.reciprocal(jnp.sum(e, axis=-1, keepdims=True), approx=True)


_NT_DIMS = (((1,), (1,)), ((), ()))     # contract last dims: Q @ K^T on the MXU


# ------------------------------- fused kernel -------------------------------

def _cpc_fused_kernel(ids_ref, mask_ref, wemb_ref, oemb_ref, elng_ref, elnb_ref,
                      wq_ref, wk_ref, wv_ref, bq_ref, bk_ref, bv_ref,
                      wo_ref, bo_ref, ln1g_ref, ln1b_ref,
                      w1_ref, b1_ref, w2_ref, b2_ref, ln2g_ref, ln2b_ref,
                      lw_ref, lb_ref, o_ref, *, activations, epsilons):
    f32, bf16 = jnp.float32, jnp.bfloat16
    n = ids_ref.shape[0]
    vocab, d = wemb_ref.shape
    num_layers, num_heads = wq_ref.shape[0], wq_ref.shape[1]

    # ---- BERT embeddings: one-hot token gather on the MXU + add + LayerNorm ----
    ids = ids_ref[...]                                                # (N, 1) i32
    iota_v = jax.lax.broadcasted_iota(jnp.int32, (n, vocab), 1)
    onehot = jnp.where(iota_v == ids, 1.0, 0.0).astype(bf16)          # (N, V)
    h = jnp.dot(onehot, wemb_ref[...], preferred_element_type=f32)    # word emb
    h = h + oemb_ref[...]                                             # + pos + type
    h = _layernorm(h, elng_ref[...], elnb_ref[...], 1e-12)

    mask = mask_ref[...]                                              # (N, N) additive

    # ---- fused post-LN transformer stack (BERT layers then CPC layers) ----
    for l in range(num_layers):                                       # static unroll
        eps = epsilons[l]
        xb = h.astype(bf16)

        # multi-head self-attention; heads picked by leading-axis weight index.
        attn = jnp.zeros((n, d), f32)
        for hd in range(num_heads):                                   # static unroll
            q = jnp.dot(xb, wq_ref[l, hd], preferred_element_type=f32) + bq_ref[l, hd]
            k = jnp.dot(xb, wk_ref[l, hd], preferred_element_type=f32) + bk_ref[l, hd]
            v = jnp.dot(xb, wv_ref[l, hd], preferred_element_type=f32) + bv_ref[l, hd]
            s = jax.lax.dot_general(q.astype(bf16), k.astype(bf16), _NT_DIMS,
                                    preferred_element_type=f32) + mask   # (N, N)
            p = _softmax_rows(s)
            hv = jnp.dot(p.astype(bf16), v.astype(bf16),
                         preferred_element_type=f32)                  # (N, dh)
            attn = attn + jnp.dot(hv.astype(bf16), wo_ref[l, hd],
                                  preferred_element_type=f32)         # (N, D)
        attn = attn + bo_ref[l]
        h = _layernorm(h + attn, ln1g_ref[l], ln1b_ref[l], eps)

        # feed-forward
        xb = h.astype(bf16)
        h1 = jnp.dot(xb, w1_ref[l], preferred_element_type=f32) + b1_ref[l]
        if activations[l] == "gelu":                                  # BERT-style layers
            h1 = jax.nn.gelu(h1, approximate=True)
        else:                                                         # nn.TransformerEncoderLayer
            h1 = jnp.maximum(h1, 0.0)
        h2 = jnp.dot(h1.astype(bf16), w2_ref[l], preferred_element_type=f32) + b2_ref[l]
        h = _layernorm(h + h2, ln2g_ref[l], ln2b_ref[l], eps)

    # ---- final nn.Linear ----
    y = jnp.dot(h.astype(bf16), lw_ref[...], preferred_element_type=f32) + lb_ref[...]
    o_ref[...] = y.astype(o_ref.dtype)


# ------------------------------ JAX wrapper ---------------------------------

def cpc_forward(x_sb, prepped, cfg):
    """x_sb: (S, B) int32 token ids -> (S, B, D) float32 (PyTorch output layout)."""
    seq, batch = x_sb.shape
    n, d = seq * batch, cfg["d_model"]
    ids = x_sb.reshape(n, 1).astype(jnp.int32)     # seq-major flatten (metadata only)

    kernel = functools.partial(_cpc_fused_kernel,
                               activations=cfg["activations"],
                               epsilons=cfg["epsilons"])
    y = pl.pallas_call(                            # single fused call, no grid
        kernel,
        out_shape=jax.ShapeDtypeStruct((n, d), jnp.float32),
    )(ids, prepped["mask"], prepped["word_emb"], prepped["other_emb"],
      prepped["emb_ln_g"], prepped["emb_ln_b"],
      prepped["wq"], prepped["wk"], prepped["wv"],
      prepped["bq"], prepped["bk"], prepped["bv"],
      prepped["wo"], prepped["bo"], prepped["ln1g"], prepped["ln1b"],
      prepped["w1"], prepped["b1"], prepped["w2"], prepped["b2"],
      prepped["ln2g"], prepped["ln2b"],
      prepped["lin_w"], prepped["lin_b"])
    return y.reshape(seq, batch, d)                # seq-major rows -> (S, B, D)


# --------------------------- parameter handling -----------------------------

def init_params(key, *, vocab, max_pos, d, ffn_bert, ffn_cpc, n_bert, n_cpc):
    keys = iter(jax.random.split(key, 256))

    def w(shape, scale=0.02):
        return (scale * jax.random.normal(next(keys), shape)).astype(jnp.float32)

    def layer(ffn):
        return dict(
            wq=w((d, d)), bq=jnp.zeros((d,), jnp.float32),
            wk=w((d, d)), bk=jnp.zeros((d,), jnp.float32),
            wv=w((d, d)), bv=jnp.zeros((d,), jnp.float32),
            wo=w((d, d)), bo=jnp.zeros((d,), jnp.float32),
            ln1g=jnp.ones((d,), jnp.float32), ln1b=jnp.zeros((d,), jnp.float32),
            w1=w((d, ffn)), b1=jnp.zeros((ffn,), jnp.float32),
            w2=w((ffn, d)), b2=jnp.zeros((d,), jnp.float32),
            ln2g=jnp.ones((d,), jnp.float32), ln2b=jnp.zeros((d,), jnp.float32),
        )

    return dict(
        word=w((vocab, d)), pos=w((max_pos, d)), type=w((2, d)),
        emb_ln_g=jnp.ones((d,), jnp.float32), emb_ln_b=jnp.zeros((d,), jnp.float32),
        bert_layers=[layer(ffn_bert) for _ in range(n_bert)],
        cpc_layers=[layer(ffn_cpc) for _ in range(n_cpc)],
        lin_w=w((d, d)), lin_b=jnp.zeros((d,), jnp.float32),
    )


def prepare_params(params, *, seq_len, batch, num_heads):
    """One-time host-side weight re-layout:
       per-head stacking, scale folding, FFN padding, layer stacking, bf16 cast,
       pre-summed positional/type embedding slab, block-diagonal batch mask."""
    d = params["lin_w"].shape[0]
    dh = d // num_heads
    scale = 1.0 / (dh ** 0.5)
    layers = params["bert_layers"] + params["cpc_layers"]
    n_bert = len(params["bert_layers"])
    fmax = max(lp["w1"].shape[1] for lp in layers)

    def heads_in(wm, sc=1.0):        # (D, D) -> (H, D, dh), output cols grouped by head
        return jnp.transpose((wm * sc).reshape(d, num_heads, dh), (1, 0, 2))

    def heads_bias(bv, sc=1.0):      # (D,) -> (H, 1, dh)
        return (bv * sc).reshape(num_heads, 1, dh)

    stk = {}
    def put(name, val):
        stk.setdefault(name, []).append(val)

    for lp in layers:
        f = lp["w1"].shape[1]
        w1 = jnp.pad(lp["w1"], ((0, 0), (0, fmax - f)))
        b1 = jnp.pad(lp["b1"], (0, fmax - f))
        w2 = jnp.pad(lp["w2"], ((0, fmax - f), (0, 0)))
        put("wq", heads_in(lp["wq"], scale)); put("bq", heads_bias(lp["bq"], scale))
        put("wk", heads_in(lp["wk"]));        put("bk", heads_bias(lp["bk"]))
        put("wv", heads_in(lp["wv"]));        put("bv", heads_bias(lp["bv"]))
        put("wo", lp["wo"].reshape(num_heads, dh, d))      # input rows grouped by head
        put("bo", lp["bo"].reshape(1, d))
        put("ln1g", lp["ln1g"].reshape(1, d)); put("ln1b", lp["ln1b"].reshape(1, d))
        put("w1", w1); put("b1", b1.reshape(1, fmax))
        put("w2", w2); put("b2", lp["b2"].reshape(1, d))
        put("ln2g", lp["ln2g"].reshape(1, d)); put("ln2b", lp["ln2b"].reshape(1, d))

    prepped = {k: jnp.stack(v) for k, v in stk.items()}
    for k in ("wq", "wk", "wv", "wo", "w1", "w2"):          # MXU operands in bf16
        prepped[k] = prepped[k].astype(jnp.bfloat16)

    n = seq_len * batch
    pos_slab = jnp.repeat(params["pos"][:seq_len], batch, axis=0)   # row i -> pos i//B
    prepped["other_emb"] = (pos_slab + params["type"][0][None, :]).astype(jnp.float32)
    prepped["word_emb"] = params["word"].astype(jnp.bfloat16)
    prepped["emb_ln_g"] = params["emb_ln_g"].reshape(1, d)
    prepped["emb_ln_b"] = params["emb_ln_b"].reshape(1, d)
    row_batch = jnp.arange(n, dtype=jnp.int32) % batch
    prepped["mask"] = jnp.where(row_batch[:, None] == row_batch[None, :],
                                0.0, -1e30).astype(jnp.float32)
    prepped["lin_w"] = params["lin_w"].astype(jnp.bfloat16)
    prepped["lin_b"] = params["lin_b"].reshape(1, d)

    cfg = dict(
        d_model=d, num_heads=num_heads,
        activations=tuple(["gelu"] * n_bert + ["relu"] * (len(layers) - n_bert)),
        epsilons=tuple([1e-12] * n_bert + [1e-5] * (len(layers) - n_bert)),
    )
    return prepped, cfg


# ----------------------------------- main -----------------------------------

if __name__ == "__main__":
    S, B = 8, 2            # sequence length, batch
    D = 32                 # input_dim (d_model)
    NUM_HEADS = 4
    HIDDEN = 64            # dim_feedforward of the CPC transformer layers
    NUM_LAYERS = 2         # num_layers of the CPC transformer encoder
    BERT_LAYERS = 2        # stand-in depth for the BERT encoder
    VOCAB, MAX_POS = 50, 64

    key = jax.random.PRNGKey(0)
    pkey, xkey = jax.random.split(key)
    params = init_params(pkey, vocab=VOCAB, max_pos=MAX_POS, d=D,
                         ffn_bert=4 * D, ffn_cpc=HIDDEN,
                         n_bert=BERT_LAYERS, n_cpc=NUM_LAYERS)
    prepped, cfg = prepare_params(params, seq_len=S, batch=B, num_heads=NUM_HEADS)

    # x: (seq, batch) token ids, like the PyTorch module's input.
    x = jax.random.randint(xkey, (S, B), 0, VOCAB, dtype=jnp.int32)

    y = cpc_forward(x, prepped, cfg)
    y = jax.block_until_ready(y)
    assert y.shape == (S, B, D) and y.dtype == jnp.float32
    assert bool(jnp.all(jnp.isfinite(y)))
    print("KERNEL_OK")
</pallas_src>

<mosaic_0001>
module attributes {stable_mosaic.version = 11 : i64} {
  func.func @_cpc_fused_kernel(%arg0: memref<16x1xi32, #tpu.memory_space<vmem>>, %arg1: memref<16x16xf32, #tpu.memory_space<vmem>>, %arg2: memref<50x32xbf16, #tpu.memory_space<vmem>>, %arg3: memref<16x32xf32, #tpu.memory_space<vmem>>, %arg4: memref<1x32xf32, #tpu.memory_space<vmem>>, %arg5: memref<1x32xf32, #tpu.memory_space<vmem>>, %arg6: memref<4x4x32x8xbf16, #tpu.memory_space<vmem>>, %arg7: memref<4x4x32x8xbf16, #tpu.memory_space<vmem>>, %arg8: memref<4x4x32x8xbf16, #tpu.memory_space<vmem>>, %arg9: memref<4x4x1x8xf32, #tpu.memory_space<vmem>>, %arg10: memref<4x4x1x8xf32, #tpu.memory_space<vmem>>, %arg11: memref<4x4x1x8xf32, #tpu.memory_space<vmem>>, %arg12: memref<4x4x8x32xbf16, #tpu.memory_space<vmem>>, %arg13: memref<4x1x32xf32, #tpu.memory_space<vmem>>, %arg14: memref<4x1x32xf32, #tpu.memory_space<vmem>>, %arg15: memref<4x1x32xf32, #tpu.memory_space<vmem>>, %arg16: memref<4x32x128xbf16, #tpu.memory_space<vmem>>, %arg17: memref<4x1x128xf32, #tpu.memory_space<vmem>>, %arg18: memref<4x128x32xbf16, #tpu.memory_space<vmem>>, %arg19: memref<4x1x32xf32, #tpu.memory_space<vmem>>, %arg20: memref<4x1x32xf32, #tpu.memory_space<vmem>>, %arg21: memref<4x1x32xf32, #tpu.memory_space<vmem>>, %arg22: memref<32x32xbf16, #tpu.memory_space<vmem>>, %arg23: memref<1x32xf32, #tpu.memory_space<vmem>>, %arg24: memref<16x32xf32, #tpu.memory_space<vmem>>) attributes {dimension_semantics = [], scalar_prefetch = 0 : i64, scratch_operands = 0 : i64, tpu.core_type = #tpu.core_type<tc>} {
    %c0 = arith.constant 0 : index
    %c0_0 = arith.constant 0 : index
    %0 = vector.load %arg0[%c0, %c0_0] : memref<16x1xi32, #tpu.memory_space<vmem>>, vector<16x1xi32>
    %1 = tpu.iota {dimensions = array<i32: 1>} : vector<16x50xi32>
    %2 = vector.broadcast %0 : vector<16x1xi32> to vector<16x50xi32>
    %3 = arith.cmpi eq, %1, %2 : vector<16x50xi32>
    %cst = arith.constant 1.000000e+00 : f32
    %cst_1 = arith.constant 0.000000e+00 : f32
    %4 = vector.broadcast %cst : f32 to vector<16x50xf32>
    %5 = vector.broadcast %cst_1 : f32 to vector<16x50xf32>
    %6 = arith.select %3, %4, %5 : vector<16x50xi1>, vector<16x50xf32>
    %7 = arith.truncf %6 : vector<16x50xf32> to vector<16x50xbf16>
    %c0_2 = arith.constant 0 : index
    %c0_3 = arith.constant 0 : index
    %8 = vector.load %arg2[%c0_2, %c0_3] : memref<50x32xbf16, #tpu.memory_space<vmem>>, vector<50x32xbf16>
    %cst_4 = arith.constant dense<0.000000e+00> : vector<16x32xf32>
    %9 = tpu.matmul %7, %8, %cst_4 {dimension_numbers = #tpu.dot_dimension_numbers<[1], [0], [0], [1], [0, 0, 1, 1], [], []>} : vector<16x50xbf16>, vector<50x32xbf16>, vector<16x32xf32> -> vector<16x32xf32>
    %c0_5 = arith.constant 0 : index
    %c0_6 = arith.constant 0 : index
    %10 = vector.load %arg3[%c0_5, %c0_6] : memref<16x32xf32, #tpu.memory_space<vmem>>, vector<16x32xf32>
    %11 = arith.addf %9, %10 : vector<16x32xf32>
    %c0_7 = arith.constant 0 : index
    %c0_8 = arith.constant 0 : index
    %12 = vector.load %arg4[%c0_7, %c0_8] : memref<1x32xf32, #tpu.memory_space<vmem>>, vector<1x32xf32>
    %c0_9 = arith.constant 0 : index
    %c0_10 = arith.constant 0 : index
    %13 = vector.load %arg5[%c0_9, %c0_10] : memref<1x32xf32, #tpu.memory_space<vmem>>, vector<1x32xf32>
    %cst_11 = arith.constant dense<0.000000e+00> : vector<16xf32>
    %14 = vector.multi_reduction <add>, %11, %cst_11 [1] : vector<16x32xf32> to vector<16xf32>
    %15 = vector.shape_cast %14 : vector<16xf32> to vector<16x1xf32>
    %cst_12 = arith.constant 3.200000e+01 : f32
    %16 = vector.broadcast %cst_12 : f32 to vector<16x1xf32>
    %17 = arith.divf %15, %16 : vector<16x1xf32>
    %18 = vector.broadcast %17 : vector<16x1xf32> to vector<16x32xf32>
    %19 = arith.subf %11, %18 : vector<16x32xf32>
    %20 = arith.mulf %19, %19 : vector<16x32xf32>
    %cst_13 = arith.constant dense<0.000000e+00> : vector<16xf32>
    %21 = vector.multi_reduction <add>, %20, %cst_13 [1] : vector<16x32xf32> to vector<16xf32>
    %22 = vector.shape_cast %21 : vector<16xf32> to vector<16x1xf32>
    %cst_14 = arith.constant 3.200000e+01 : f32
    %23 = vector.broadcast %cst_14 : f32 to vector<16x1xf32>
    %24 = arith.divf %22, %23 : vector<16x1xf32>
    %25 = vector.broadcast %17 : vector<16x1xf32> to vector<16x32xf32>
    %26 = arith.subf %11, %25 : vector<16x32xf32>
    %cst_15 = arith.constant 9.99999996E-13 : f32
    %27 = vector.broadcast %cst_15 : f32 to vector<16x1xf32>
    %28 = arith.addf %24, %27 : vector<16x1xf32>
    %29 = math.rsqrt %28 : vector<16x1xf32>
    %30 = vector.broadcast %29 : vector<16x1xf32> to vector<16x32xf32>
    %31 = arith.mulf %26, %30 : vector<16x32xf32>
    %32 = vector.broadcast %12 : vector<1x32xf32> to vector<16x32xf32>
    %33 = arith.mulf %31, %32 : vector<16x32xf32>
    %34 = vector.broadcast %13 : vector<1x32xf32> to vector<16x32xf32>
    %35 = arith.addf %33, %34 : vector<16x32xf32>
    %c0_16 = arith.constant 0 : index
    %c0_17 = arith.constant 0 : index
    %36 = vector.load %arg1[%c0_16, %c0_17] : memref<16x16xf32, #tpu.memory_space<vmem>>, vector<16x16xf32>
    %37 = arith.truncf %35 : vector<16x32xf32> to vector<16x32xbf16>
    %cst_18 = arith.constant 0.000000e+00 : f32
    %38 = vector.broadcast %cst_18 : f32 to vector<16x32xf32>
    %c0_19 = arith.constant 0 : index
    %c0_20 = arith.constant 0 : index
    %c0_21 = arith.constant 0 : index
    %c0_22 = arith.constant 0 : index
    %39 = vector.load %arg6[%c0_19, %c0_20, %c0_21, %c0_22] : memref<4x4x32x8xbf16, #tpu.memory_space<vmem>>, vector<1x1x32x8xbf16>
    %40 = vector.shape_cast %39 : vector<1x1x32x8xbf16> to vector<32x8xbf16>
    %cst_23 = arith.constant dense<0.000000e+00> : vector<16x8xf32>
    %41 = tpu.matmul %37, %40, %cst_23 {dimension_numbers = #tpu.dot_dimension_numbers<[1], [0], [0], [1], [0, 0, 1, 1], [], []>} : vector<16x32xbf16>, vector<32x8xbf16>, vector<16x8xf32> -> vector<16x8xf32>
    %c0_24 = arith.constant 0 : index
    %c0_25 = arith.constant 0 : index
    %c0_26 = arith.constant 0 : index
    %c0_27 = arith.constant 0 : index
    %42 = vector.load %arg9[%c0_24, %c0_25, %c0_26, %c0_27] : memref<4x4x1x8xf32, #tpu.memory_space<vmem>>, vector<1x1x1x8xf32>
    %43 = vector.shape_cast %42 : vector<1x1x1x8xf32> to vector<1x8xf32>
    %44 = vector.broadcast %43 : vector<1x8xf32> to vector<16x8xf32>
    %45 = arith.addf %41, %44 : vector<16x8xf32>
    %c0_28 = arith.constant 0 : index
    %c0_29 = arith.constant 0 : index
    %c0_30 = arith.constant 0 : index
    %c0_31 = arith.constant 0 : index
    %46 = vector.load %arg7[%c0_28, %c0_29, %c0_30, %c0_31] : memref<4x4x32x8xbf16, #tpu.memory_space<vmem>>, vector<1x1x32x8xbf16>
    %47 = vector.shape_cast %46 : vector<1x1x32x8xbf16> to vector<32x8xbf16>
    %cst_32 = arith.constant dense<0.000000e+00> : vector<16x8xf32>
    %48 = tpu.matmul %37, %47, %cst_32 {dimension_numbers = #tpu.dot_dimension_numbers<[1], [0], [0], [1], [0, 0, 1, 1], [], []>} : vector<16x32xbf16>, vector<32x8xbf16>, vector<16x8xf32> -> vector<16x8xf32>
    %c0_33 = arith.constant 0 : index
    %c0_34 = arith.constant 0 : index
    %c0_35 = arith.constant 0 : index
    %c0_36 = arith.constant 0 : index
    %49 = vector.load %arg10[%c0_33, %c0_34, %c0_35, %c0_36] : memref<4x4x1x8xf32, #tpu.memory_space<vmem>>, vector<1x1x1x8xf32>
    %50 = vector.shape_cast %49 : vector<1x1x1x8xf32> to vector<1x8xf32>
    %51 = vector.broadcast %50 : vector<1x8xf32> to vector<16x8xf32>
    %52 = arith.addf %48, %51 : vector<16x8xf32>
    %c0_37 = arith.constant 0 : index
    %c0_38 = arith.constant 0 : index
    %c0_39 = arith.constant 0 : index
    %c0_40 = arith.constant 0 : index
    %53 = vector.load %arg8[%c0_37, %c0_38, %c0_39, %c0_40] : memref<4x4x32x8xbf16, #tpu.memory_space<vmem>>, vector<1x1x32x8xbf16>
    %54 = vector.shape_cast %53 : vector<1x1x32x8xbf16> to vector<32x8xbf16>
    %cst_41 = arith.constant dense<0.000000e+00> : vector<16x8xf32>
    %55 = tpu.matmul %37, %54, %cst_41 {dimension_numbers = #tpu.dot_dimension_numbers<[1], [0], [0], [1], [0, 0, 1, 1], [], []>} : vector<16x32xbf16>, vector<32x8xbf16>, vector<16x8xf32> -> vector<16x8xf32>
    %c0_42 = arith.constant 0 : index
    %c0_43 = arith.constant 0 : index
    %c0_44 = arith.constant 0 : index
    %c0_45 = arith.constant 0 : index
    %56 = vector.load %arg11[%c0_42, %c0_43, %c0_44, %c0_45] : memref<4x4x1x8xf32, #tpu.memory_space<vmem>>, vector<1x1x1x8xf32>
    %57 = vector.shape_cast %56 : vector<1x1x1x8xf32> to vector<1x8xf32>
    %58 = vector.broadcast %57 : vector<1x8xf32> to vector<16x8xf32>
    %59 = arith.addf %55, %58 : vector<16x8xf32>
    %60 = arith.truncf %45 : vector<16x8xf32> to vector<16x8xbf16>
    %61 = arith.truncf %52 : vector<16x8xf32> to vector<16x8xbf16>
    %cst_46 = arith.constant dense<0.000000e+00> : vector<16x16xf32>
    %62 = tpu.matmul %60, %61, %cst_46 {dimension_numbers = #tpu.dot_dimension_numbers<[1], [1], [0], [0], [0, 0, 1, 0], [], []>} : vector<16x8xbf16>, vector<16x8xbf16>, vector<16x16xf32> -> vector<16x16xf32>
    %63 = arith.addf %62, %36 : vector<16x16xf32>
    %cst_47 = arith.constant dense<0xFF800000> : vector<16xf32>
    %64 = vector.multi_reduction <maximumf>, %63, %cst_47 [1] : vector<16x16xf32> to vector<16xf32>
    %65 = vector.shape_cast %64 : vector<16xf32> to vector<16x1xf32>
    %66 = vector.broadcast %65 : vector<16x1xf32> to vector<16x16xf32>
    %67 = arith.subf %63, %66 : vector<16x16xf32>
    %68 = math.exp %67 : vector<16x16xf32>
    %cst_48 = arith.constant dense<0.000000e+00> : vector<16xf32>
    %69 = vector.multi_reduction <add>, %68, %cst_48 [1] : vector<16x16xf32> to vector<16xf32>
    %70 = vector.shape_cast %69 : vector<16xf32> to vector<16x1xf32>
    %71 = tpu.reciprocal %70 {approx = true} : vector<16x1xf32> -> vector<16x1xf32>
    %72 = vector.broadcast %71 : vector<16x1xf32> to vector<16x16xf32>
    %73 = arith.mulf %68, %72 : vector<16x16xf32>
    %74 = arith.truncf %73 : vector<16x16xf32> to vector<16x16xbf16>
    %75 = arith.truncf %59 : vector<16x8xf32> to vector<16x8xbf16>
    %cst_49 = arith.constant dense<0.000000e+00> : vector<16x8xf32>
    %76 = tpu.matmul %74, %75, %cst_49 {dimension_numbers = #tpu.dot_dimension_numbers<[1], [0], [0], [1], [0, 0, 1, 1], [], []>} : vector<16x16xbf16>, vector<16x8xbf16>, vector<16x8xf32> -> vector<16x8xf32>
    %77 = arith.truncf %76 : vector<16x8xf32> to vector<16x8xbf16>
    %c0_50 = arith.constant 0 : index
    %c0_51 = arith.constant 0 : index
    %c0_52 = arith.constant 0 : index
    %c0_53 = arith.constant 0 : index
    %78 = vector.load %arg12[%c0_50, %c0_51, %c0_52, %c0_53] : memref<4x4x8x32xbf16, #tpu.memory_space<vmem>>, vector<1x1x8x32xbf16>
    %79 = vector.shape_cast %78 : vector<1x1x8x32xbf16> to vector<8x32xbf16>
    %cst_54 = arith.constant dense<0.000000e+00> : vector<16x32xf32>
    %80 = tpu.matmul %77, %79, %cst_54 {dimension_numbers = #tpu.dot_dimension_numbers<[1], [0], [0], [1], [0, 0, 1, 1], [], []>} : vector<16x8xbf16>, vector<8x32xbf16>, vector<16x32xf32> -> vector<16x32xf32>
    %81 = arith.addf %38, %80 : vector<16x32xf32>
    %c0_55 = arith.constant 0 : index
    %c1 = arith.constant 1 : index
    %c0_56 = arith.constant 0 : index
    %c0_57 = arith.constant 0 : index
    %82 = vector.load %arg6[%c0_55, %c1, %c0_56, %c0_57] : memref<4x4x32x8xbf16, #tpu.memory_space<vmem>>, vector<1x1x32x8xbf16>
    %83 = vector.shape_cast %82 : vector<1x1x32x8xbf16> to vector<32x8xbf16>
    %cst_58 = arith.constant dense<0.000000e+00> : vector<16x8xf32>
    %84 = tpu.matmul %37, %83, %cst_58 {dimension_numbers = #tpu.dot_dimension_numbers<[1], [0], [0], [1], [0, 0, 1, 1], [], []>} : vector<16x32xbf16>, vector<32x8xbf16>, vector<16x8xf32> -> vector<16x8xf32>
    %c0_59 = arith.constant 0 : index
    %c1_60 = arith.constant 1 : index
    %c0_61 = arith.constant 0 : index
    %c0_62 = arith.constant 0 : index
    %85 = vector.load %arg9[%c0_59, %c1_60, %c0_61, %c0_62] : memref<4x4x1x8xf32, #tpu.memory_space<vmem>>, vector<1x1x1x8xf32>
    %86 = vector.shape_cast %85 : vector<1x1x1x8xf32> to vector<1x8xf32>
    %87 = vector.broadcast %86 : vector<1x8xf32> to vector<16x8xf32>
    %88 = arith.addf %84, %87 : vector<16x8xf32>
    %c0_63 = arith.constant 0 : index
    %c1_64 = arith.constant 1 : index
    %c0_65 = arith.constant 0 : index
    %c0_66 = arith.constant 0 : index
    %89 = vector.load %arg7[%c0_63, %c1_64, %c0_65, %c0_66] : memref<4x4x32x8xbf16, #tpu.memory_space<vmem>>, vector<1x1x32x8xbf16>
    %90 = vector.shape_cast %89 : vector<1x1x32x8xbf16> to vector<32x8xbf16>
    %cst_67 = arith.constant dense<0.000000e+00> : vector<16x8xf32>
    %91 = tpu.matmul %37, %90, %cst_67 {dimension_numbers = #tpu.dot_dimension_numbers<[1], [0], [0], [1], [0, 0, 1, 1], [], []>} : vector<16x32xbf16>, vector<32x8xbf16>, vector<16x8xf32> -> vector<16x8xf32>
    %c0_68 = arith.constant 0 : index
    %c1_69 = arith.constant 1 : index
    %c0_70 = arith.constant 0 : index
    %c0_71 = arith.constant 0 : index
    %92 = vector.load %arg10[%c0_68, %c1_69, %c0_70, %c0_71] : memref<4x4x1x8xf32, #tpu.memory_space<vmem>>, vector<1x1x1x8xf32>
    %93 = vector.shape_cast %92 : vector<1x1x1x8xf32> to vector<1x8xf32>
    %94 = vector.broadcast %93 : vector<1x8xf32> to vector<16x8xf32>
    %95 = arith.addf %91, %94 : vector<16x8xf32>
    %c0_72 = arith.constant 0 : index
    %c1_73 = arith.constant 1 : index
    %c0_74 = arith.constant 0 : index
    %c0_75 = arith.constant 0 : index
    %96 = vector.load %arg8[%c0_72, %c1_73, %c0_74, %c0_75] : memref<4x4x32x8xbf16, #tpu.memory_space<vmem>>, vector<1x1x32x8xbf16>
    %97 = vector.shape_cast %96 : vector<1x1x32x8xbf16> to vector<32x8xbf16>
    %cst_76 = arith.constant dense<0.000000e+00> : vector<16x8xf32>
    %98 = tpu.matmul %37, %97, %cst_76 {dimension_numbers = #tpu.dot_dimension_numbers<[1], [0], [0], [1], [0, 0, 1, 1], [], []>} : vector<16x32xbf16>, vector<32x8xbf16>, vector<16x8xf32> -> vector<16x8xf32>
    %c0_77 = arith.constant 0 : index
    %c1_78 = arith.constant 1 : index
    %c0_79 = arith.constant 0 : index
    %c0_80 = arith.constant 0 : index
    %99 = vector.load %arg11[%c0_77, %c1_78, %c0_79, %c0_80] : memref<4x4x1x8xf32, #tpu.memory_space<vmem>>, vector<1x1x1x8xf32>
    %100 = vector.shape_cast %99 : vector<1x1x1x8xf32> to vector<1x8xf32>
    %101 = vector.broadcast %100 : vector<1x8xf32> to vector<16x8xf32>
    %102 = arith.addf %98, %101 : vector<16x8xf32>
    %103 = arith.truncf %88 : vector<16x8xf32> to vector<16x8xbf16>
    %104 = arith.truncf %95 : vector<16x8xf32> to vector<16x8xbf16>
    %cst_81 = arith.constant dense<0.000000e+00> : vector<16x16xf32>
    %105 = tpu.matmul %103, %104, %cst_81 {dimension_numbers = #tpu.dot_dimension_numbers<[1], [1], [0], [0], [0, 0, 1, 0], [], []>} : vector<16x8xbf16>, vector<16x8xbf16>, vector<16x16xf32> -> vector<16x16xf32>
    %106 = arith.addf %105, %36 : vector<16x16xf32>
    %cst_82 = arith.constant dense<0xFF800000> : vector<16xf32>
    %107 = vector.multi_reduction <maximumf>, %106, %cst_82 [1] : vector<16x16xf32> to vector<16xf32>
    %108 = vector.shape_cast %107 : vector<16xf32> to vector<16x1xf32>
    %109 = vector.broadcast %108 : vector<16x1xf32> to vector<16x16xf32>
    %110 = arith.subf %106, %109 : vector<16x16xf32>
    %111 = math.exp %110 : vector<16x16xf32>
    %cst_83 = arith.constant dense<0.000000e+00> : vector<16xf32>
    %112 = vector.multi_reduction <add>, %111, %cst_83 [1] : vector<16x16xf32> to vector<16xf32>
    %113 = vector.shape_cast %112 : vector<16xf32> to vector<16x1xf32>
    %114 = tpu.reciprocal %113 {approx = true} : vector<16x1xf32> -> vector<16x1xf32>
    %115 = vector.broadcast %114 : vector<16x1xf32> to vector<16x16xf32>
    %116 = arith.mulf %111, %115 : vector<16x16xf32>
    %117 = arith.truncf %116 : vector<16x16xf32> to vector<16x16xbf16>
    %118 = arith.truncf %102 : vector<16x8xf32> to vector<16x8xbf16>
    %cst_84 = arith.constant dense<0.000000e+00> : vector<16x8xf32>
    %119 = tpu.matmul %117, %118, %cst_84 {dimension_numbers = #tpu.dot_dimension_numbers<[1], [0], [0], [1], [0, 0, 1, 1], [], []>} : vector<16x16xbf16>, vector<16x8xbf16>, vector<16x8xf32> -> vector<16x8xf32>
    %120 = arith.truncf %119 : vector<16x8xf32> to vector<16x8xbf16>
    %c0_85 = arith.constant 0 : index
    %c1_86 = arith.constant 1 : index
    %c0_87 = arith.constant 0 : index
    %c0_88 = arith.constant 0 : index
    %121 = vector.load %arg12[%c0_85, %c1_86, %c0_87, %c0_88] : memref<4x4x8x32xbf16, #tpu.memory_space<vmem>>, vector<1x1x8x32xbf16>
    %122 = vector.shape_cast %121 : vector<1x1x8x32xbf16> to vector<8x32xbf16>
    %cst_89 = arith.constant dense<0.000000e+00> : vector<16x32xf32>
    %123 = tpu.matmul %120, %122, %cst_89 {dimension_numbers = #tpu.dot_dimension_numbers<[1], [0], [0], [1], [0, 0, 1, 1], [], []>} : vector<16x8xbf16>, vector<8x32xbf16>, vector<16x32xf32> -> vector<16x32xf32>
    %124 = arith.addf %81, %123 : vector<16x32xf32>
    %c0_90 = arith.constant 0 : index
    %c2 = arith.constant 2 : index
    %c0_91 = arith.constant 0 : index
    %c0_92 = arith.constant 0 : index
    %125 = vector.load %arg6[%c0_90, %c2, %c0_91, %c0_92] : memref<4x4x32x8xbf16, #tpu.memory_space<vmem>>, vector<1x1x32x8xbf16>
    %126 = vector.shape_cast %125 : vector<1x1x32x8xbf16> to vector<32x8xbf16>
    %cst_93 = arith.constant dense<0.000000e+00> : vector<16x8xf32>
    %127 = tpu.matmul %37, %126, %cst_93 {dimension_numbers = #tpu.dot_dimension_numbers<[1], [0], [0], [1], [0, 0, 1, 1], [], []>} : vector<16x32xbf16>, vector<32x8xbf16>, vector<16x8xf32> -> vector<16x8xf32>
    %c0_94 = arith.constant 0 : index
    %c2_95 = arith.constant 2 : index
    %c0_96 = arith.constant 0 : index
    %c0_97 = arith.constant 0 : index
    %128 = vector.load %arg9[%c0_94, %c2_95, %c0_96, %c0_97] : memref<4x4x1x8xf32, #tpu.memory_space<vmem>>, vector<1x1x1x8xf32>
    %129 = vector.shape_cast %128 : vector<1x1x1x8xf32> to vector<1x8xf32>
    %130 = vector.broadcast %129 : vector<1x8xf32> to vector<16x8xf32>
    %131 = arith.addf %127, %130 : vector<16x8xf32>
    %c0_98 = arith.constant 0 : index
    %c2_99 = arith.constant 2 : index
    %c0_100 = arith.constant 0 : index
    %c0_101 = arith.constant 0 : index
    %132 = vector.load %arg7[%c0_98, %c2_99, %c0_100, %c0_101] : memref<4x4x32x8xbf16, #tpu.memory_space<vmem>>, vector<1x1x32x8xbf16>
    %133 = vector.shape_cast %132 : vector<1x1x32x8xbf16> to vector<32x8xbf16>
    %cst_102 = arith.constant dense<0.000000e+00> : vector<16x8xf32>
    %134 = tpu.matmul %37, %133, %cst_102 {dimension_numbers = #tpu.dot_dimension_numbers<[1], [0], [0], [1], [0, 0, 1, 1], [], []>} : vector<16x32xbf16>, vector<32x8xbf16>, vector<16x8xf32> -> vector<16x8xf32>
    %c0_103 = arith.constant 0 : index
    %c2_104 = arith.constant 2 : index
    %c0_105 = arith.constant 0 : index
    %c0_106 = arith.constant 0 : index
    %135 = vector.load %arg10[%c0_103, %c2_104, %c0_105, %c0_106] : memref<4x4x1x8xf32, #tpu.memory_space<vmem>>, vector<1x1x1x8xf32>
    %136 = vector.shape_cast %135 : vector<1x1x1x8xf32> to vector<1x8xf32>
    %137 = vector.broadcast %136 : vector<1x8xf32> to vector<16x8xf32>
    %138 = arith.addf %134, %137 : vector<16x8xf32>
    %c0_107 = arith.constant 0 : index
    %c2_108 = arith.constant 2 : index
    %c0_109 = arith.constant 0 : index
    %c0_110 = arith.constant 0 : index
    %139 = vector.load %arg8[%c0_107, %c2_108, %c0_109, %c0_110] : memref<4x4x32x8xbf16, #tpu.memory_space<vmem>>, vector<1x1x32x8xbf16>
    %140 = vector.shape_cast %139 : vector<1x1x32x8xbf16> to vector<32x8xbf16>
    %cst_111 = arith.constant dense<0.000000e+00> : vector<16x8xf32>
    %141 = tpu.matmul %37, %140, %cst_111 {dimension_numbers = #tpu.dot_dimension_numbers<[1], [0], [0], [1], [0, 0, 1, 1], [], []>} : vector<16x32xbf16>, vector<32x8xbf16>, vector<16x8xf32> -> vector<16x8xf32>
    %c0_112 = arith.constant 0 : index
    %c2_113 = arith.constant 2 : index
    %c0_114 = arith.constant 0 : index
    %c0_115 = arith.constant 0 : index
    %142 = vector.load %arg11[%c0_112, %c2_113, %c0_114, %c0_115] : memref<4x4x1x8xf32, #tpu.memory_space<vmem>>, vector<1x1x1x8xf32>
    %143 = vector.shape_cast %142 : vector<1x1x1x8xf32> to vector<1x8xf32>
    %144 = vector.broadcast %143 : vector<1x8xf32> to vector<16x8xf32>
    %145 = arith.addf %141, %144 : vector<16x8xf32>
    %146 = arith.truncf %131 : vector<16x8xf32> to vector<16x8xbf16>
    %147 = arith.truncf %138 : vector<16x8xf32> to vector<16x8xbf16>
    %cst_116 = arith.constant dense<0.000000e+00> : vector<16x16xf32>
    %148 = tpu.matmul %146, %147, %cst_116 {dimension_numbers = #tpu.dot_dimension_numbers<[1], [1], [0], [0], [0, 0, 1, 0], [], []>} : vector<16x8xbf16>, vector<16x8xbf16>, vector<16x16xf32> -> vector<16x16xf32>
    %149 = arith.addf %148, %36 : vector<16x16xf32>
    %cst_117 = arith.constant dense<0xFF800000> : vector<16xf32>
    %150 = vector.multi_reduction <maximumf>, %149, %cst_117 [1] : vector<16x16xf32> to vector<16xf32>
    %151 = vector.shape_cast %150 : vector<16xf32> to vector<16x1xf32>
    %152 = vector.broadcast %151 : vector<16x1xf32> to vector<16x16xf32>
    %153 = arith.subf %149, %152 : vector<16x16xf32>
    %154 = math.exp %153 : vector<16x16xf32>
    %cst_118 = arith.constant dense<0.000000e+00> : vector<16xf32>
    %155 = vector.multi_reduction <add>, %154, %cst_118 [1] : vector<16x16xf32> to vector<16xf32>
    %156 = vector.shape_cast %155 : vector<16xf32> to vector<16x1xf32>
    %157 = tpu.reciprocal %156 {approx = true} : vector<16x1xf32> -> vector<16x1xf32>
    %158 = vector.broadcast %157 : vector<16x1xf32> to vector<16x16xf32>
    %159 = arith.mulf %154, %158 : vector<16x16xf32>
    %160 = arith.truncf %159 : vector<16x16xf32> to vector<16x16xbf16>
    %161 = arith.truncf %145 : vector<16x8xf32> to vector<16x8xbf16>
    %cst_119 = arith.constant dense<0.000000e+00> : vector<16x8xf32>
    %162 = tpu.matmul %160, %161, %cst_119 {dimension_numbers = #tpu.dot_dimension_numbers<[1], [0], [0], [1], [0, 0, 1, 1], [], []>} : vector<16x16xbf16>, vector<16x8xbf16>, vector<16x8xf32> -> vector<16x8xf32>
    %163 = arith.truncf %162 : vector<16x8xf32> to vector<16x8xbf16>
    %c0_120 = arith.constant 0 : index
    %c2_121 = arith.constant 2 : index
    %c0_122 = arith.constant 0 : index
    %c0_123 = arith.constant 0 : index
    %164 = vector.load %arg12[%c0_120, %c2_121, %c0_122, %c0_123] : memref<4x4x8x32xbf16, #tpu.memory_space<vmem>>, vector<1x1x8x32xbf16>
    %165 = vector.shape_cast %164 : vector<1x1x8x32xbf16> to vector<8x32xbf16>
    %cst_124 = arith.constant dense<0.000000e+00> : vector<16x32xf32>
    %166 = tpu.matmul %163, %165, %cst_124 {dimension_numbers = #tpu.dot_dimension_numbers<[1], [0], [0], [1], [0, 0, 1, 1], [], []>} : vector<16x8xbf16>, vector<8x32xbf16>, vector<16x32xf32> -> vector<16x32xf32>
    %167 = arith.addf %124, %166 : vector<16x32xf32>
    %c0_125 = arith.constant 0 : index
    %c3 = arith.constant 3 : index
    %c0_126 = arith.constant 0 : index
    %c0_127 = arith.constant 0 : index
    %168 = vector.load %arg6[%c0_125, %c3, %c0_126, %c0_127] : memref<4x4x32x8xbf16, #tpu.memory_space<vmem>>, vector<1x1x32x8xbf16>
    %169 = vector.shape_cast %168 : vector<1x1x32x8xbf16> to vector<32x8xbf16>
    %cst_128 = arith.constant dense<0.000000e+00> : vector<16x8xf32>
    %170 = tpu.matmul %37, %169, %cst_128 {dimension_numbers = #tpu.dot_dimension_numbers<[1], [0], [0], [1], [0, 0, 1, 1], [], []>} : vector<16x32xbf16>, vector<32x8xbf16>, vector<16x8xf32> -> vector<16x8xf32>
    %c0_129 = arith.constant 0 : index
    %c3_130 = arith.constant 3 : index
    %c0_131 = arith.constant 0 : index
    %c0_132 = arith.constant 0 : index
    %171 = vector.load %arg9[%c0_129, %c3_130, %c0_131, %c0_132] : memref<4x4x1x8xf32, #tpu.memory_space<vmem>>, vector<1x1x1x8xf32>
    %172 = vector.shape_cast %171 : vector<1x1x1x8xf32> to vector<1x8xf32>
    %173 = vector.broadcast %172 : vector<1x8xf32> to vector<16x8xf32>
    %174 = arith.addf %170, %173 : vector<16x8xf32>
    %c0_133 = arith.constant 0 : index
    %c3_134 = arith.constant 3 : index
    %c0_135 = arith.constant 0 : index
    %c0_136 = arith.constant 0 : index
    %175 = vector.load %arg7[%c0_133, %c3_134, %c0_135, %c0_136] : memref<4x4x32x8xbf16, #tpu.memory_space<vmem>>, vector<1x1x32x8xbf16>
    %176 = vector.shape_cast %175 : vector<1x1x32x8xbf16> to vector<32x8xbf16>
    %cst_137 = arith.constant dense<0.000000e+00> : vector<16x8xf32>
    %177 = tpu.matmul %37, %176, %cst_137 {dimension_numbers = #tpu.dot_dimension_numbers<[1], [0], [0], [1], [0, 0, 1, 1], [], []>} : vector<16x32xbf16>, vector<32x8xbf16>, vector<16x8xf32> -> vector<16x8xf32>
    %c0_138 = arith.constant 0 : index
    %c3_139 = arith.constant 3 : index
    %c0_140 = arith.constant 0 : index
    %c0_141 = arith.constant 0 : index
    %178 = vector.load %arg10[%c0_138, %c3_139, %c0_140, %c0_141] : memref<4x4x1x8xf32, #tpu.memory_space<vmem>>, vector<1x1x1x8xf32>
    %179 = vector.shape_cast %178 : vector<1x1x1x8xf32> to vector<1x8xf32>
    %180 = vector.broadcast %179 : vector<1x8xf32> to vector<16x8xf32>
    %181 = arith.addf %177, %180 : vector<16x8xf32>
    %c0_142 = arith.constant 0 : index
    %c3_143 = arith.constant 3 : index
    %c0_144 = arith.constant 0 : index
    %c0_145 = arith.constant 0 : index
    %182 = vector.load %arg8[%c0_142, %c3_143, %c0_144, %c0_145] : memref<4x4x32x8xbf16, #tpu.memory_space<vmem>>, vector<1x1x32x8xbf16>
    %183 = vector.shape_cast %182 : vector<1x1x32x8xbf16> to vector<32x8xbf16>
    %cst_146 = arith.constant dense<0.000000e+00> : vector<16x8xf32>
    %184 = tpu.matmul %37, %183, %cst_146 {dimension_numbers = #tpu.dot_dimension_numbers<[1], [0], [0], [1], [0, 0, 1, 1], [], []>} : vector<16x32xbf16>, vector<32x8xbf16>, vector<16x8xf32> -> vector<16x8xf32>
    %c0_147 = arith.constant 0 : index
    %c3_148 = arith.constant 3 : index
    %c0_149 = arith.constant 0 : index
    %c0_150 = arith.constant 0 : index
    %185 = vector.load %arg11[%c0_147, %c3_148, %c0_149, %c0_150] : memref<4x4x1x8xf32, #tpu.memory_space<vmem>>, vector<1x1x1x8xf32>
    %186 = vector.shape_cast %185 : vector<1x1x1x8xf32> to vector<1x8xf32>
    %187 = vector.broadcast %186 : vector<1x8xf32> to vector<16x8xf32>
    %188 = arith.addf %184, %187 : vector<16x8xf32>
    %189 = arith.truncf %174 : vector<16x8xf32> to vector<16x8xbf16>
    %190 = arith.truncf %181 : vector<16x8xf32> to vector<16x8xbf16>
    %cst_151 = arith.constant dense<0.000000e+00> : vector<16x16xf32>
    %191 = tpu.matmul %189, %190, %cst_151 {dimension_numbers = #tpu.dot_dimension_numbers<[1], [1], [0], [0], [0, 0, 1, 0], [], []>} : vector<16x8xbf16>, vector<16x8xbf16>, vector<16x16xf32> -> vector<16x16xf32>
    %192 = arith.addf %191, %36 : vector<16x16xf32>
    %cst_152 = arith.constant dense<0xFF800000> : vector<16xf32>
    %193 = vector.multi_reduction <maximumf>, %192, %cst_152 [1] : vector<16x16xf32> to vector<16xf32>
    %194 = vector.shape_cast %193 : vector<16xf32> to vector<16x1xf32>
    %195 = vector.broadcast %194 : vector<16x1xf32> to vector<16x16xf32>
    %196 = arith.subf %192, %195 : vector<16x16xf32>
    %197 = math.exp %196 : vector<16x16xf32>
    %cst_153 = arith.constant dense<0.000000e+00> : vector<16xf32>
    %198 = vector.multi_reduction <add>, %197, %cst_153 [1] : vector<16x16xf32> to vector<16xf32>
    %199 = vector.shape_cast %198 : vector<16xf32> to vector<16x1xf32>
    %200 = tpu.reciprocal %199 {approx = true} : vector<16x1xf32> -> vector<16x1xf32>
    %201 = vector.broadcast %200 : vector<16x1xf32> to vector<16x16xf32>
    %202 = arith.mulf %197, %201 : vector<16x16xf32>
    %203 = arith.truncf %202 : vector<16x16xf32> to vector<16x16xbf16>
    %204 = arith.truncf %188 : vector<16x8xf32> to vector<16x8xbf16>
    %cst_154 = arith.constant dense<0.000000e+00> : vector<16x8xf32>
    %205 = tpu.matmul %203, %204, %cst_154 {dimension_numbers = #tpu.dot_dimension_numbers<[1], [0], [0], [1], [0, 0, 1, 1], [], []>} : vector<16x16xbf16>, vector<16x8xbf16>, vector<16x8xf32> -> vector<16x8xf32>
    %206 = arith.truncf %205 : vector<16x8xf32> to vector<16x8xbf16>
    %c0_155 = arith.constant 0 : index
    %c3_156 = arith.constant 3 : index
    %c0_157 = arith.constant 0 : index
    %c0_158 = arith.constant 0 : index
    %207 = vector.load %arg12[%c0_155, %c3_156, %c0_157, %c0_158] : memref<4x4x8x32xbf16, #tpu.memory_space<vmem>>, vector<1x1x8x32xbf16>
    %208 = vector.shape_cast %207 : vector<1x1x8x32xbf16> to vector<8x32xbf16>
    %cst_159 = arith.constant dense<0.000000e+00> : vector<16x32xf32>
    %209 = tpu.matmul %206, %208, %cst_159 {dimension_numbers = #tpu.dot_dimension_numbers<[1], [0], [0], [1], [0, 0, 1, 1], [], []>} : vector<16x8xbf16>, vector<8x32xbf16>, vector<16x32xf32> -> vector<16x32xf32>
    %210 = arith.addf %167, %209 : vector<16x32xf32>
    %c0_160 = arith.constant 0 : index
    %c0_161 = arith.constant 0 : index
    %c0_162 = arith.constant 0 : index
    %211 = vector.load %arg13[%c0_160, %c0_161, %c0_162] : memref<4x1x32xf32, #tpu.memory_space<vmem>>, vector<1x1x32xf32>
    %212 = vector.shape_cast %211 : vector<1x1x32xf32> to vector<1x32xf32>
    %213 = vector.broadcast %212 : vector<1x32xf32> to vector<16x32xf32>
    %214 = arith.addf %210, %213 : vector<16x32xf32>
    %215 = arith.addf %35, %214 : vector<16x32xf32>
    %c0_163 = arith.constant 0 : index
    %c0_164 = arith.constant 0 : index
    %c0_165 = arith.constant 0 : index
    %216 = vector.load %arg14[%c0_163, %c0_164, %c0_165] : memref<4x1x32xf32, #tpu.memory_space<vmem>>, vector<1x1x32xf32>
    %217 = vector.shape_cast %216 : vector<1x1x32xf32> to vector<1x32xf32>
    %c0_166 = arith.constant 0 : index
    %c0_167 = arith.constant 0 : index
    %c0_168 = arith.constant 0 : index
    %218 = vector.load %arg15[%c0_166, %c0_167, %c0_168] : memref<4x1x32xf32, #tpu.memory_space<vmem>>, vector<1x1x32xf32>
    %219 = vector.shape_cast %218 : vector<1x1x32xf32> to vector<1x32xf32>
    %cst_169 = arith.constant dense<0.000000e+00> : vector<16xf32>
    %220 = vector.multi_reduction <add>, %215, %cst_169 [1] : vector<16x32xf32> to vector<16xf32>
    %221 = vector.shape_cast %220 : vector<16xf32> to vector<16x1xf32>
    %cst_170 = arith.constant 3.200000e+01 : f32
    %222 = vector.broadcast %cst_170 : f32 to vector<16x1xf32>
    %223 = arith.divf %221, %222 : vector<16x1xf32>
    %224 = vector.broadcast %223 : vector<16x1xf32> to vector<16x32xf32>
    %225 = arith.subf %215, %224 : vector<16x32xf32>
    %226 = arith.mulf %225, %225 : vector<16x32xf32>
    %cst_171 = arith.constant dense<0.000000e+00> : vector<16xf32>
    %227 = vector.multi_reduction <add>, %226, %cst_171 [1] : vector<16x32xf32> to vector<16xf32>
    %228 = vector.shape_cast %227 : vector<16xf32> to vector<16x1xf32>
    %cst_172 = arith.constant 3.200000e+01 : f32
    %229 = vector.broadcast %cst_172 : f32 to vector<16x1xf32>
    %230 = arith.divf %228, %229 : vector<16x1xf32>
    %231 = vector.broadcast %223 : vector<16x1xf32> to vector<16x32xf32>
    %232 = arith.subf %215, %231 : vector<16x32xf32>
    %cst_173 = arith.constant 9.99999996E-13 : f32
    %233 = vector.broadcast %cst_173 : f32 to vector<16x1xf32>
    %234 = arith.addf %230, %233 : vector<16x1xf32>
    %235 = math.rsqrt %234 : vector<16x1xf32>
    %236 = vector.broadcast %235 : vector<16x1xf32> to vector<16x32xf32>
    %237 = arith.mulf %232, %236 : vector<16x32xf32>
    %238 = vector.broadcast %217 : vector<1x32xf32> to vector<16x32xf32>
    %239 = arith.mulf %237, %238 : vector<16x32xf32>
    %240 = vector.broadcast %219 : vector<1x32xf32> to vector<16x32xf32>
    %241 = arith.addf %239, %240 : vector<16x32xf32>
    %242 = arith.truncf %241 : vector<16x32xf32> to vector<16x32xbf16>
    %c0_174 = arith.constant 0 : index
    %c0_175 = arith.constant 0 : index
    %c0_176 = arith.constant 0 : index
    %243 = vector.load %arg16[%c0_174, %c0_175, %c0_176] : memref<4x32x128xbf16, #tpu.memory_space<vmem>>, vector<1x32x128xbf16>
    %244 = vector.shape_cast %243 : vector<1x32x128xbf16> to vector<32x128xbf16>
    %cst_177 = arith.constant dense<0.000000e+00> : vector<16x128xf32>
    %245 = tpu.matmul %242, %244, %cst_177 {dimension_numbers = #tpu.dot_dimension_numbers<[1], [0], [0], [1], [0, 0, 1, 1], [], []>} : vector<16x32xbf16>, vector<32x128xbf16>, vector<16x128xf32> -> vector<16x128xf32>
    %c0_178 = arith.constant 0 : index
    %c0_179 = arith.constant 0 : index
    %c0_180 = arith.constant 0 : index
    %246 = vector.load %arg17[%c0_178, %c0_179, %c0_180] : memref<4x1x128xf32, #tpu.memory_space<vmem>>, vector<1x1x128xf32>
    %247 = vector.shape_cast %246 : vector<1x1x128xf32> to vector<1x128xf32>
    %248 = vector.broadcast %247 : vector<1x128xf32> to vector<16x128xf32>
    %249 = arith.addf %245, %248 : vector<16x128xf32>
    %250 = arith.mulf %249, %249 : vector<16x128xf32>
    %251 = arith.mulf %249, %250 : vector<16x128xf32>
    %cst_181 = arith.constant 4.471500e-02 : f32
    %252 = vector.broadcast %cst_181 : f32 to vector<16x128xf32>
    %253 = arith.mulf %252, %251 : vector<16x128xf32>
    %254 = arith.addf %249, %253 : vector<16x128xf32>
    %cst_182 = arith.constant 0.797884583 : f32
    %255 = vector.broadcast %cst_182 : f32 to vector<16x128xf32>
    %256 = arith.mulf %255, %254 : vector<16x128xf32>
    %257 = math.tanh %256 : vector<16x128xf32>
    %cst_183 = arith.constant 1.000000e+00 : f32
    %258 = vector.broadcast %cst_183 : f32 to vector<16x128xf32>
    %259 = arith.addf %258, %257 : vector<16x128xf32>
    %cst_184 = arith.constant 5.000000e-01 : f32
    %260 = vector.broadcast %cst_184 : f32 to vector<16x128xf32>
    %261 = arith.mulf %260, %259 : vector<16x128xf32>
    %262 = arith.mulf %249, %261 : vector<16x128xf32>
    %263 = arith.truncf %262 : vector<16x128xf32> to vector<16x128xbf16>
    %c0_185 = arith.constant 0 : index
    %c0_186 = arith.constant 0 : index
    %c0_187 = arith.constant 0 : index
    %264 = vector.load %arg18[%c0_185, %c0_186, %c0_187] : memref<4x128x32xbf16, #tpu.memory_space<vmem>>, vector<1x128x32xbf16>
    %265 = vector.shape_cast %264 : vector<1x128x32xbf16> to vector<128x32xbf16>
    %cst_188 = arith.constant dense<0.000000e+00> : vector<16x32xf32>
    %266 = tpu.matmul %263, %265, %cst_188 {dimension_numbers = #tpu.dot_dimension_numbers<[1], [0], [0], [1], [0, 0, 1, 1], [], []>} : vector<16x128xbf16>, vector<128x32xbf16>, vector<16x32xf32> -> vector<16x32xf32>
    %c0_189 = arith.constant 0 : index
    %c0_190 = arith.constant 0 : index
    %c0_191 = arith.constant 0 : index
    %267 = vector.load %arg19[%c0_189, %c0_190, %c0_191] : memref<4x1x32xf32, #tpu.memory_space<vmem>>, vector<1x1x32xf32>
    %268 = vector.shape_cast %267 : vector<1x1x32xf32> to vector<1x32xf32>
    %269 = vector.broadcast %268 : vector<1x32xf32> to vector<16x32xf32>
    %270 = arith.addf %266, %269 : vector<16x32xf32>
    %271 = arith.addf %241, %270 : vector<16x32xf32>
    %c0_192 = arith.constant 0 : index
    %c0_193 = arith.constant 0 : index
    %c0_194 = arith.constant 0 : index
    %272 = vector.load %arg20[%c0_192, %c0_193, %c0_194] : memref<4x1x32xf32, #tpu.memory_space<vmem>>, vector<1x1x32xf32>
    %273 = vector.shape_cast %272 : vector<1x1x32xf32> to vector<1x32xf32>
    %c0_195 = arith.constant 0 : index
    %c0_196 = arith.constant 0 : index
    %c0_197 = arith.constant 0 : index
    %274 = vector.load %arg21[%c0_195, %c0_196, %c0_197] : memref<4x1x32xf32, #tpu.memory_space<vmem>>, vector<1x1x32xf32>
    %275 = vector.shape_cast %274 : vector<1x1x32xf32> to vector<1x32xf32>
    %cst_198 = arith.constant dense<0.000000e+00> : vector<16xf32>
    %276 = vector.multi_reduction <add>, %271, %cst_198 [1] : vector<16x32xf32> to vector<16xf32>
    %277 = vector.shape_cast %276 : vector<16xf32> to vector<16x1xf32>
    %cst_199 = arith.constant 3.200000e+01 : f32
    %278 = vector.broadcast %cst_199 : f32 to vector<16x1xf32>
    %279 = arith.divf %277, %278 : vector<16x1xf32>
    %280 = vector.broadcast %279 : vector<16x1xf32> to vector<16x32xf32>
    %281 = arith.subf %271, %280 : vector<16x32xf32>
    %282 = arith.mulf %281, %281 : vector<16x32xf32>
    %cst_200 = arith.constant dense<0.000000e+00> : vector<16xf32>
    %283 = vector.multi_reduction <add>, %282, %cst_200 [1] : vector<16x32xf32> to vector<16xf32>
    %284 = vector.shape_cast %283 : vector<16xf32> to vector<16x1xf32>
    %cst_201 = arith.constant 3.200000e+01 : f32
    %285 = vector.broadcast %cst_201 : f32 to vector<16x1xf32>
    %286 = arith.divf %284, %285 : vector<16x1xf32>
    %287 = vector.broadcast %279 : vector<16x1xf32> to vector<16x32xf32>
    %288 = arith.subf %271, %287 : vector<16x32xf32>
    %cst_202 = arith.constant 9.99999996E-13 : f32
    %289 = vector.broadcast %cst_202 : f32 to vector<16x1xf32>
    %290 = arith.addf %286, %289 : vector<16x1xf32>
    %291 = math.rsqrt %290 : vector<16x1xf32>
    %292 = vector.broadcast %291 : vector<16x1xf32> to vector<16x32xf32>
    %293 = arith.mulf %288, %292 : vector<16x32xf32>
    %294 = vector.broadcast %273 : vector<1x32xf32> to vector<16x32xf32>
    %295 = arith.mulf %293, %294 : vector<16x32xf32>
    %296 = vector.broadcast %275 : vector<1x32xf32> to vector<16x32xf32>
    %297 = arith.addf %295, %296 : vector<16x32xf32>
    %298 = arith.truncf %297 : vector<16x32xf32> to vector<16x32xbf16>
    %cst_203 = arith.constant 0.000000e+00 : f32
    %299 = vector.broadcast %cst_203 : f32 to vector<16x32xf32>
    %c1_204 = arith.constant 1 : index
    %c0_205 = arith.constant 0 : index
    %c0_206 = arith.constant 0 : index
    %c0_207 = arith.constant 0 : index
    %300 = vector.load %arg6[%c1_204, %c0_205, %c0_206, %c0_207] : memref<4x4x32x8xbf16, #tpu.memory_space<vmem>>, vector<1x1x32x8xbf16>
    %301 = vector.shape_cast %300 : vector<1x1x32x8xbf16> to vector<32x8xbf16>
    %cst_208 = arith.constant dense<0.000000e+00> : vector<16x8xf32>
    %302 = tpu.matmul %298, %301, %cst_208 {dimension_numbers = #tpu.dot_dimension_numbers<[1], [0], [0], [1], [0, 0, 1, 1], [], []>} : vector<16x32xbf16>, vector<32x8xbf16>, vector<16x8xf32> -> vector<16x8xf32>
    %c1_209 = arith.constant 1 : index
    %c0_210 = arith.constant 0 : index
    %c0_211 = arith.constant 0 : index
    %c0_212 = arith.constant 0 : index
    %303 = vector.load %arg9[%c1_209, %c0_210, %c0_211, %c0_212] : memref<4x4x1x8xf32, #tpu.memory_space<vmem>>, vector<1x1x1x8xf32>
    %304 = vector.shape_cast %303 : vector<1x1x1x8xf32> to vector<1x8xf32>
    %305 = vector.broadcast %304 : vector<1x8xf32> to vector<16x8xf32>
    %306 = arith.addf %302, %305 : vector<16x8xf32>
    %c1_213 = arith.constant 1 : index
    %c0_214 = arith.constant 0 : index
    %c0_215 = arith.constant 0 : index
    %c0_216 = arith.constant 0 : index
    %307 = vector.load %arg7[%c1_213, %c0_214, %c0_215, %c0_216] : memref<4x4x32x8xbf16, #tpu.memory_space<vmem>>, vector<1x1x32x8xbf16>
    %308 = vector.shape_cast %307 : vector<1x1x32x8xbf16> to vector<32x8xbf16>
    %cst_217 = arith.constant dense<0.000000e+00> : vector<16x8xf32>
    %309 = tpu.matmul %298, %308, %cst_217 {dimension_numbers = #tpu.dot_dimension_numbers<[1], [0], [0], [1], [0, 0, 1, 1], [], []>} : vector<16x32xbf16>, vector<32x8xbf16>, vector<16x8xf32> -> vector<16x8xf32>
    %c1_218 = arith.constant 1 : index
    %c0_219 = arith.constant 0 : index
    %c0_220 = arith.constant 0 : index
    %c0_221 = arith.constant 0 : index
    %310 = vector.load %arg10[%c1_218, %c0_219, %c0_220, %c0_221] : memref<4x4x1x8xf32, #tpu.memory_space<vmem>>, vector<1x1x1x8xf32>
    %311 = vector.shape_cast %310 : vector<1x1x1x8xf32> to vector<1x8xf32>
    %312 = vector.broadcast %311 : vector<1x8xf32> to vector<16x8xf32>
    %313 = arith.addf %309, %312 : vector<16x8xf32>
    %c1_222 = arith.constant 1 : index
    %c0_223 = arith.constant 0 : index
    %c0_224 = arith.constant 0 : index
    %c0_225 = arith.constant 0 : index
    %314 = vector.load %arg8[%c1_222, %c0_223, %c0_224, %c0_225] : memref<4x4x32x8xbf16, #tpu.memory_space<vmem>>, vector<1x1x32x8xbf16>
    %315 = vector.shape_cast %314 : vector<1x1x32x8xbf16> to vector<32x8xbf16>
    %cst_226 = arith.constant dense<0.000000e+00> : vector<16x8xf32>
    %316 = tpu.matmul %298, %315, %cst_226 {dimension_numbers = #tpu.dot_dimension_numbers<[1], [0], [0], [1], [0, 0, 1, 1], [], []>} : vector<16x32xbf16>, vector<32x8xbf16>, vector<16x8xf32> -> vector<16x8xf32>
    %c1_227 = arith.constant 1 : index
    %c0_228 = arith.constant 0 : index
    %c0_229 = arith.constant 0 : index
    %c0_230 = arith.constant 0 : index
    %317 = vector.load %arg11[%c1_227, %c0_228, %c0_229, %c0_230] : memref<4x4x1x8xf32, #tpu.memory_space<vmem>>, vector<1x1x1x8xf32>
    %318 = vector.shape_cast %317 : vector<1x1x1x8xf32> to vector<1x8xf32>
    %319 = vector.broadcast %318 : vector<1x8xf32> to vector<16x8xf32>
    %320 = arith.addf %316, %319 : vector<16x8xf32>
    %321 = arith.truncf %306 : vector<16x8xf32> to vector<16x8xbf16>
    %322 = arith.truncf %313 : vector<16x8xf32> to vector<16x8xbf16>
    %cst_231 = arith.constant dense<0.000000e+00> : vector<16x16xf32>
    %323 = tpu.matmul %321, %322, %cst_231 {dimension_numbers = #tpu.dot_dimension_numbers<[1], [1], [0], [0], [0, 0, 1, 0], [], []>} : vector<16x8xbf16>, vector<16x8xbf16>, vector<16x16xf32> -> vector<16x16xf32>
    %324 = arith.addf %323, %36 : vector<16x16xf32>
    %cst_232 = arith.constant dense<0xFF800000> : vector<16xf32>
    %325 = vector.multi_reduction <maximumf>, %324, %cst_232 [1] : vector<16x16xf32> to vector<16xf32>
    %326 = vector.shape_cast %325 : vector<16xf32> to vector<16x1xf32>
    %327 = vector.broadcast %326 : vector<16x1xf32> to vector<16x16xf32>
    %328 = arith.subf %324, %327 : vector<16x16xf32>
    %329 = math.exp %328 : vector<16x16xf32>
    %cst_233 = arith.constant dense<0.000000e+00> : vector<16xf32>
    %330 = vector.multi_reduction <add>, %329, %cst_233 [1] : vector<16x16xf32> to vector<16xf32>
    %331 = vector.shape_cast %330 : vector<16xf32> to vector<16x1xf32>
    %332 = tpu.reciprocal %331 {approx = true} : vector<16x1xf32> -> vector<16x1xf32>
    %333 = vector.broadcast %332 : vector<16x1xf32> to vector<16x16xf32>
    %334 = arith.mulf %329, %333 : vector<16x16xf32>
    %335 = arith.truncf %334 : vector<16x16xf32> to vector<16x16xbf16>
    %336 = arith.truncf %320 : vector<16x8xf32> to vector<16x8xbf16>
    %cst_234 = arith.constant dense<0.000000e+00> : vector<16x8xf32>
    %337 = tpu.matmul %335, %336, %cst_234 {dimension_numbers = #tpu.dot_dimension_numbers<[1], [0], [0], [1], [0, 0, 1, 1], [], []>} : vector<16x16xbf16>, vector<16x8xbf16>, vector<16x8xf32> -> vector<16x8xf32>
    %338 = arith.truncf %337 : vector<16x8xf32> to vector<16x8xbf16>
    %c1_235 = arith.constant 1 : index
    %c0_236 = arith.constant 0 : index
    %c0_237 = arith.constant 0 : index
    %c0_238 = arith.constant 0 : index
    %339 = vector.load %arg12[%c1_235, %c0_236, %c0_237, %c0_238] : memref<4x4x8x32xbf16, #tpu.memory_space<vmem>>, vector<1x1x8x32xbf16>
    %340 = vector.shape_cast %339 : vector<1x1x8x32xbf16> to vector<8x32xbf16>
    %cst_239 = arith.constant dense<0.000000e+00> : vector<16x32xf32>
    %341 = tpu.matmul %338, %340, %cst_239 {dimension_numbers = #tpu.dot_dimension_numbers<[1], [0], [0], [1], [0, 0, 1, 1], [], []>} : vector<16x8xbf16>, vector<8x32xbf16>, vector<16x32xf32> -> vector<16x32xf32>
    %342 = arith.addf %299, %341 : vector<16x32xf32>
    %c1_240 = arith.constant 1 : index
    %c1_241 = arith.constant 1 : index
    %c0_242 = arith.constant 0 : index
    %c0_243 = arith.constant 0 : index
    %343 = vector.load %arg6[%c1_240, %c1_241, %c0_242, %c0_243] : memref<4x4x32x8xbf16, #tpu.memory_space<vmem>>, vector<1x1x32x8xbf16>
    %344 = vector.shape_cast %343 : vector<1x1x32x8xbf16> to vector<32x8xbf16>
    %cst_244 = arith.constant dense<0.000000e+00> : vector<16x8xf32>
    %345 = tpu.matmul %298, %344, %cst_244 {dimension_numbers = #tpu.dot_dimension_numbers<[1], [0], [0], [1], [0, 0, 1, 1], [], []>} : vector<16x32xbf16>, vector<32x8xbf16>, vector<16x8xf32> -> vector<16x8xf32>
    %c1_245 = arith.constant 1 : index
    %c1_246 = arith.constant 1 : index
    %c0_247 = arith.constant 0 : index
    %c0_248 = arith.constant 0 : index
    %346 = vector.load %arg9[%c1_245, %c1_246, %c0_247, %c0_248] : memref<4x4x1x8xf32, #tpu.memory_space<vmem>>, vector<1x1x1x8xf32>
    %347 = vector.shape_cast %346 : vector<1x1x1x8xf32> to vector<1x8xf32>
    %348 = vector.broadcast %347 : vector<1x8xf32> to vector<16x8xf32>
    %349 = arith.addf %345, %348 : vector<16x8xf32>
    %c1_249 = arith.constant 1 : index
    %c1_250 = arith.constant 1 : index
    %c0_251 = arith.constant 0 : index
    %c0_252 = arith.constant 0 : index
    %350 = vector.load %arg7[%c1_249, %c1_250, %c0_251, %c0_252] : memref<4x4x32x8xbf16, #tpu.memory_space<vmem>>, vector<1x1x32x8xbf16>
    %351 = vector.shape_cast %350 : vector<1x1x32x8xbf16> to vector<32x8xbf16>
    %cst_253 = arith.constant dense<0.000000e+00> : vector<16x8xf32>
    %352 = tpu.matmul %298, %351, %cst_253 {dimension_numbers = #tpu.dot_dimension_numbers<[1], [0], [0], [1], [0, 0, 1, 1], [], []>} : vector<16x32xbf16>, vector<32x8xbf16>, vector<16x8xf32> -> vector<16x8xf32>
    %c1_254 = arith.constant 1 : index
    %c1_255 = arith.constant 1 : index
    %c0_256 = arith.constant 0 : index
    %c0_257 = arith.constant 0 : index
    %353 = vector.load %arg10[%c1_254, %c1_255, %c0_256, %c0_257] : memref<4x4x1x8xf32, #tpu.memory_space<vmem>>, vector<1x1x1x8xf32>
    %354 = vector.shape_cast %353 : vector<1x1x1x8xf32> to vector<1x8xf32>
    %355 = vector.broadcast %354 : vector<1x8xf32> to vector<16x8xf32>
    %356 = arith.addf %352, %355 : vector<16x8xf32>
    %c1_258 = arith.constant 1 : index
    %c1_259 = arith.constant 1 : index
    %c0_260 = arith.constant 0 : index
    %c0_261 = arith.constant 0 : index
    %357 = vector.load %arg8[%c1_258, %c1_259, %c0_260, %c0_261] : memref<4x4x32x8xbf16, #tpu.memory_space<vmem>>, vector<1x1x32x8xbf16>
    %358 = vector.shape_cast %357 : vector<1x1x32x8xbf16> to vector<32x8xbf16>
    %cst_262 = arith.constant dense<0.000000e+00> : vector<16x8xf32>
    %359 = tpu.matmul %298, %358, %cst_262 {dimension_numbers = #tpu.dot_dimension_numbers<[1], [0], [0], [1], [0, 0, 1, 1], [], []>} : vector<16x32xbf16>, vector<32x8xbf16>, vector<16x8xf32> -> vector<16x8xf32>
    %c1_263 = arith.constant 1 : index
    %c1_264 = arith.constant 1 : index
    %c0_265 = arith.constant 0 : index
    %c0_266 = arith.constant 0 : index
    %360 = vector.load %arg11[%c1_263, %c1_264, %c0_265, %c0_266] : memref<4x4x1x8xf32, #tpu.memory_space<vmem>>, vector<1x1x1x8xf32>
    %361 = vector.shape_cast %360 : vector<1x1x1x8xf32> to vector<1x8xf32>
    %362 = vector.broadcast %361 : vector<1x8xf32> to vector<16x8xf32>
    %363 = arith.addf %359, %362 : vector<16x8xf32>
    %364 = arith.truncf %349 : vector<16x8xf32> to vector<16x8xbf16>
    %365 = arith.truncf %356 : vector<16x8xf32> to vector<16x8xbf16>
    %cst_267 = arith.constant dense<0.000000e+00> : vector<16x16xf32>
    %366 = tpu.matmul %364, %365, %cst_267 {dimension_numbers = #tpu.dot_dimension_numbers<[1], [1], [0], [0], [0, 0, 1, 0], [], []>} : vector<16x8xbf16>, vector<16x8xbf16>, vector<16x16xf32> -> vector<16x16xf32>
    %367 = arith.addf %366, %36 : vector<16x16xf32>
    %cst_268 = arith.constant dense<0xFF800000> : vector<16xf32>
    %368 = vector.multi_reduction <maximumf>, %367, %cst_268 [1] : vector<16x16xf32> to vector<16xf32>
    %369 = vector.shape_cast %368 : vector<16xf32> to vector<16x1xf32>
    %370 = vector.broadcast %369 : vector<16x1xf32> to vector<16x16xf32>
    %371 = arith.subf %367, %370 : vector<16x16xf32>
    %372 = math.exp %371 : vector<16x16xf32>
    %cst_269 = arith.constant dense<0.000000e+00> : vector<16xf32>
    %373 = vector.multi_reduction <add>, %372, %cst_269 [1] : vector<16x16xf32> to vector<16xf32>
    %374 = vector.shape_cast %373 : vector<16xf32> to vector<16x1xf32>
    %375 = tpu.reciprocal %374 {approx = true} : vector<16x1xf32> -> vector<16x1xf32>
    %376 = vector.broadcast %375 : vector<16x1xf32> to vector<16x16xf32>
    %377 = arith.mulf %372, %376 : vector<16x16xf32>
    %378 = arith.truncf %377 : vector<16x16xf32> to vector<16x16xbf16>
    %379 = arith.truncf %363 : vector<16x8xf32> to vector<16x8xbf16>
    %cst_270 = arith.constant dense<0.000000e+00> : vector<16x8xf32>
    %380 = tpu.matmul %378, %379, %cst_270 {dimension_numbers = #tpu.dot_dimension_numbers<[1], [0], [0], [1], [0, 0, 1, 1], [], []>} : vector<16x16xbf16>, vector<16x8xbf16>, vector<16x8xf32> -> vector<16x8xf32>
    %381 = arith.truncf %380 : vector<16x8xf32> to vector<16x8xbf16>
    %c1_271 = arith.constant 1 : index
    %c1_272 = arith.constant 1 : index
    %c0_273 = arith.constant 0 : index
    %c0_274 = arith.constant 0 : index
    %382 = vector.load %arg12[%c1_271, %c1_272, %c0_273, %c0_274] : memref<4x4x8x32xbf16, #tpu.memory_space<vmem>>, vector<1x1x8x32xbf16>
    %383 = vector.shape_cast %382 : vector<1x1x8x32xbf16> to vector<8x32xbf16>
    %cst_275 = arith.constant dense<0.000000e+00> : vector<16x32xf32>
    %384 = tpu.matmul %381, %383, %cst_275 {dimension_numbers = #tpu.dot_dimension_numbers<[1], [0], [0], [1], [0, 0, 1, 1], [], []>} : vector<16x8xbf16>, vector<8x32xbf16>, vector<16x32xf32> -> vector<16x32xf32>
    %385 = arith.addf %342, %384 : vector<16x32xf32>
    %c1_276 = arith.constant 1 : index
    %c2_277 = arith.constant 2 : index
    %c0_278 = arith.constant 0 : index
    %c0_279 = arith.constant 0 : index
    %386 = vector.load %arg6[%c1_276, %c2_277, %c0_278, %c0_279] : memref<4x4x32x8xbf16, #tpu.memory_space<vmem>>, vector<1x1x32x8xbf16>
    %387 = vector.shape_cast %386 : vector<1x1x32x8xbf16> to vector<32x8xbf16>
    %cst_280 = arith.constant dense<0.000000e+00> : vector<16x8xf32>
    %388 = tpu.matmul %298, %387, %cst_280 {dimension_numbers = #tpu.dot_dimension_numbers<[1], [0], [0], [1], [0, 0, 1, 1], [], []>} : vector<16x32xbf16>, vector<32x8xbf16>, vector<16x8xf32> -> vector<16x8xf32>
    %c1_281 = arith.constant 1 : index
    %c2_282 = arith.constant 2 : index
    %c0_283 = arith.constant 0 : index
    %c0_284 = arith.constant 0 : index
    %389 = vector.load %arg9[%c1_281, %c2_282, %c0_283, %c0_284] : memref<4x4x1x8xf32, #tpu.memory_space<vmem>>, vector<1x1x1x8xf32>
    %390 = vector.shape_cast %389 : vector<1x1x1x8xf32> to vector<1x8xf32>
    %391 = vector.broadcast %390 : vector<1x8xf32> to vector<16x8xf32>
    %392 = arith.addf %388, %391 : vector<16x8xf32>
    %c1_285 = arith.constant 1 : index
    %c2_286 = arith.constant 2 : index
    %c0_287 = arith.constant 0 : index
    %c0_288 = arith.constant 0 : index
    %393 = vector.load %arg7[%c1_285, %c2_286, %c0_287, %c0_288] : memref<4x4x32x8xbf16, #tpu.memory_space<vmem>>, vector<1x1x32x8xbf16>
    %394 = vector.shape_cast %393 : vector<1x1x32x8xbf16> to vector<32x8xbf16>
    %cst_289 = arith.constant dense<0.000000e+00> : vector<16x8xf32>
    %395 = tpu.matmul %298, %394, %cst_289 {dimension_numbers = #tpu.dot_dimension_numbers<[1], [0], [0], [1], [0, 0, 1, 1], [], []>} : vector<16x32xbf16>, vector<32x8xbf16>, vector<16x8xf32> -> vector<16x8xf32>
    %c1_290 = arith.constant 1 : index
    %c2_291 = arith.constant 2 : index
    %c0_292 = arith.constant 0 : index
    %c0_293 = arith.constant 0 : index
    %396 = vector.load %arg10[%c1_290, %c2_291, %c0_292, %c0_293] : memref<4x4x1x8xf32, #tpu.memory_space<vmem>>, vector<1x1x1x8xf32>
    %397 = vector.shape_cast %396 : vector<1x1x1x8xf32> to vector<1x8xf32>
    %398 = vector.broadcast %397 : vector<1x8xf32> to vector<16x8xf32>
    %399 = arith.addf %395, %398 : vector<16x8xf32>
    %c1_294 = arith.constant 1 : index
    %c2_295 = arith.constant 2 : index
    %c0_296 = arith.constant 0 : index
    %c0_297 = arith.constant 0 : index
    %400 = vector.load %arg8[%c1_294, %c2_295, %c0_296, %c0_297] : memref<4x4x32x8xbf16, #tpu.memory_space<vmem>>, vector<1x1x32x8xbf16>
    %401 = vector.shape_cast %400 : vector<1x1x32x8xbf16> to vector<32x8xbf16>
    %cst_298 = arith.constant dense<0.000000e+00> : vector<16x8xf32>
    %402 = tpu.matmul %298, %401, %cst_298 {dimension_numbers = #tpu.dot_dimension_numbers<[1], [0], [0], [1], [0, 0, 1, 1], [], []>} : vector<16x32xbf16>, vector<32x8xbf16>, vector<16x8xf32> -> vector<16x8xf32>
    %c1_299 = arith.constant 1 : index
    %c2_300 = arith.constant 2 : index
    %c0_301 = arith.constant 0 : index
    %c0_302 = arith.constant 0 : index
    %403 = vector.load %arg11[%c1_299, %c2_300, %c0_301, %c0_302] : memref<4x4x1x8xf32, #tpu.memory_space<vmem>>, vector<1x1x1x8xf32>
    %404 = vector.shape_cast %403 : vector<1x1x1x8xf32> to vector<1x8xf32>
    %405 = vector.broadcast %404 : vector<1x8xf32> to vector<16x8xf32>
    %406 = arith.addf %402, %405 : vector<16x8xf32>
    %407 = arith.truncf %392 : vector<16x8xf32> to vector<16x8xbf16>
    %408 = arith.truncf %399 : vector<16x8xf32> to vector<16x8xbf16>
    %cst_303 = arith.constant dense<0.000000e+00> : vector<16x16xf32>
    %409 = tpu.matmul %407, %408, %cst_303 {dimension_numbers = #tpu.dot_dimension_numbers<[1], [1], [0], [0], [0, 0, 1, 0], [], []>} : vector<16x8xbf16>, vector<16x8xbf16>, vector<16x16xf32> -> vector<16x16xf32>
    %410 = arith.addf %409, %36 : vector<16x16xf32>
    %cst_304 = arith.constant dense<0xFF800000> : vector<16xf32>
    %411 = vector.multi_reduction <maximumf>, %410, %cst_304 [1] : vector<16x16xf32> to vector<16xf32>
    %412 = vector.shape_cast %411 : vector<16xf32> to vector<16x1xf32>
    %413 = vector.broadcast %412 : vector<16x1xf32> to vector<16x16xf32>
    %414 = arith.subf %410, %413 : vector<16x16xf32>
    %415 = math.exp %414 : vector<16x16xf32>
    %cst_305 = arith.constant dense<0.000000e+00> : vector<16xf32>
    %416 = vector.multi_reduction <add>, %415, %cst_305 [1] : vector<16x16xf32> to vector<16xf32>
    %417 = vector.shape_cast %416 : vector<16xf32> to vector<16x1xf32>
    %418 = tpu.reciprocal %417 {approx = true} : vector<16x1xf32> -> vector<16x1xf32>
    %419 = vector.broadcast %418 : vector<16x1xf32> to vector<16x16xf32>
    %420 = arith.mulf %415, %419 : vector<16x16xf32>
    %421 = arith.truncf %420 : vector<16x16xf32> to vector<16x16xbf16>
    %422 = arith.truncf %406 : vector<16x8xf32> to vector<16x8xbf16>
    %cst_306 = arith.constant dense<0.000000e+00> : vector<16x8xf32>
    %423 = tpu.matmul %421, %422, %cst_306 {dimension_numbers = #tpu.dot_dimension_numbers<[1], [0], [0], [1], [0, 0, 1, 1], [], []>} : vector<16x16xbf16>, vector<16x8xbf16>, vector<16x8xf32> -> vector<16x8xf32>
    %424 = arith.truncf %423 : vector<16x8xf32> to vector<16x8xbf16>
    %c1_307 = arith.constant 1 : index
    %c2_308 = arith.constant 2 : index
    %c0_309 = arith.constant 0 : index
    %c0_310 = arith.constant 0 : index
    %425 = vector.load %arg12[%c1_307, %c2_308, %c0_309, %c0_310] : memref<4x4x8x32xbf16, #tpu.memory_space<vmem>>, vector<1x1x8x32xbf16>
    %426 = vector.shape_cast %425 : vector<1x1x8x32xbf16> to vector<8x32xbf16>
    %cst_311 = arith.constant dense<0.000000e+00> : vector<16x32xf32>
    %427 = tpu.matmul %424, %426, %cst_311 {dimension_numbers = #tpu.dot_dimension_numbers<[1], [0], [0], [1], [0, 0, 1, 1], [], []>} : vector<16x8xbf16>, vector<8x32xbf16>, vector<16x32xf32> -> vector<16x32xf32>
    %428 = arith.addf %385, %427 : vector<16x32xf32>
    %c1_312 = arith.constant 1 : index
    %c3_313 = arith.constant 3 : index
    %c0_314 = arith.constant 0 : index
    %c0_315 = arith.constant 0 : index
    %429 = vector.load %arg6[%c1_312, %c3_313, %c0_314, %c0_315] : memref<4x4x32x8xbf16, #tpu.memory_space<vmem>>, vector<1x1x32x8xbf16>
    %430 = vector.shape_cast %429 : vector<1x1x32x8xbf16> to vector<32x8xbf16>
    %cst_316 = arith.constant dense<0.000000e+00> : vector<16x8xf32>
    %431 = tpu.matmul %298, %430, %cst_316 {dimension_numbers = #tpu.dot_dimension_numbers<[1], [0], [0], [1], [0, 0, 1, 1], [], []>} : vector<16x32xbf16>, vector<32x8xbf16>, vector<16x8xf32> -> vector<16x8xf32>
    %c1_317 = arith.constant 1 : index
    %c3_318 = arith.constant 3 : index
    %c0_319 = arith.constant 0 : index
    %c0_320 = arith.constant 0 : index
    %432 = vector.load %arg9[%c1_317, %c3_318, %c0_319, %c0_320] : memref<4x4x1x8xf32, #tpu.memory_space<vmem>>, vector<1x1x1x8xf32>
    %433 = vector.shape_cast %432 : vector<1x1x1x8xf32> to vector<1x8xf32>
    %434 = vector.broadcast %433 : vector<1x8xf32> to vector<16x8xf32>
    %435 = arith.addf %431, %434 : vector<16x8xf32>
    %c1_321 = arith.constant 1 : index
    %c3_322 = arith.constant 3 : index
    %c0_323 = arith.constant 0 : index
    %c0_324 = arith.constant 0 : index
    %436 = vector.load %arg7[%c1_321, %c3_322, %c0_323, %c0_324] : memref<4x4x32x8xbf16, #tpu.memory_space<vmem>>, vector<1x1x32x8xbf16>
    %437 = vector.shape_cast %436 : vector<1x1x32x8xbf16> to vector<32x8xbf16>
    %cst_325 = arith.constant dense<0.000000e+00> : vector<16x8xf32>
    %438 = tpu.matmul %298, %437, %cst_325 {dimension_numbers = #tpu.dot_dimension_numbers<[1], [0], [0], [1], [0, 0, 1, 1], [], []>} : vector<16x32xbf16>, vector<32x8xbf16>, vector<16x8xf32> -> vector<16x8xf32>
    %c1_326 = arith.constant 1 : index
    %c3_327 = arith.constant 3 : index
    %c0_328 = arith.constant 0 : index
    %c0_329 = arith.constant 0 : index
    %439 = vector.load %arg10[%c1_326, %c3_327, %c0_328, %c0_329] : memref<4x4x1x8xf32, #tpu.memory_space<vmem>>, vector<1x1x1x8xf32>
    %440 = vector.shape_cast %439 : vector<1x1x1x8xf32> to vector<1x8xf32>
    %441 = vector.broadcast %440 : vector<1x8xf32> to vector<16x8xf32>
    %442 = arith.addf %438, %441 : vector<16x8xf32>
    %c1_330 = arith.constant 1 : index
    %c3_331 = arith.constant 3 : index
    %c0_332 = arith.constant 0 : index
    %c0_333 = arith.constant 0 : index
    %443 = vector.load %arg8[%c1_330, %c3_331, %c0_332, %c0_333] : memref<4x4x32x8xbf16, #tpu.memory_space<vmem>>, vector<1x1x32x8xbf16>
    %444 = vector.shape_cast %443 : vector<1x1x32x8xbf16> to vector<32x8xbf16>
    %cst_334 = arith.constant dense<0.000000e+00> : vector<16x8xf32>
    %445 = tpu.matmul %298, %444, %cst_334 {dimension_numbers = #tpu.dot_dimension_numbers<[1], [0], [0], [1], [0, 0, 1, 1], [], []>} : vector<16x32xbf16>, vector<32x8xbf16>, vector<16x8xf32> -> vector<16x8xf32>
    %c1_335 = arith.constant 1 : index
    %c3_336 = arith.constant 3 : index
    %c0_337 = arith.constant 0 : index
    %c0_338 = arith.constant 0 : index
    %446 = vector.load %arg11[%c1_335, %c3_336, %c0_337, %c0_338] : memref<4x4x1x8xf32, #tpu.memory_space<vmem>>, vector<1x1x1x8xf32>
    %447 = vector.shape_cast %446 : vector<1x1x1x8xf32> to vector<1x8xf32>
    %448 = vector.broadcast %447 : vector<1x8xf32> to vector<16x8xf32>
    %449 = arith.addf %445, %448 : vector<16x8xf32>
    %450 = arith.truncf %435 : vector<16x8xf32> to vector<16x8xbf16>
    %451 = arith.truncf %442 : vector<16x8xf32> to vector<16x8xbf16>
    %cst_339 = arith.constant dense<0.000000e+00> : vector<16x16xf32>
    %452 = tpu.matmul %450, %451, %cst_339 {dimension_numbers = #tpu.dot_dimension_numbers<[1], [1], [0], [0], [0, 0, 1, 0], [], []>} : vector<16x8xbf16>, vector<16x8xbf16>, vector<16x16xf32> -> vector<16x16xf32>
    %453 = arith.addf %452, %36 : vector<16x16xf32>
    %cst_340 = arith.constant dense<0xFF800000> : vector<16xf32>
    %454 = vector.multi_reduction <maximumf>, %453, %cst_340 [1] : vector<16x16xf32> to vector<16xf32>
    %455 = vector.shape_cast %454 : vector<16xf32> to vector<16x1xf32>
    %456 = vector.broadcast %455 : vector<16x1xf32> to vector<16x16xf32>
    %457 = arith.subf %453, %456 : vector<16x16xf32>
    %458 = math.exp %457 : vector<16x16xf32>
    %cst_341 = arith.constant dense<0.000000e+00> : vector<16xf32>
    %459 = vector.multi_reduction <add>, %458, %cst_341 [1] : vector<16x16xf32> to vector<16xf32>
    %460 = vector.shape_cast %459 : vector<16xf32> to vector<16x1xf32>
    %461 = tpu.reciprocal %460 {approx = true} : vector<16x1xf32> -> vector<16x1xf32>
    %462 = vector.broadcast %461 : vector<16x1xf32> to vector<16x16xf32>
    %463 = arith.mulf %458, %462 : vector<16x16xf32>
    %464 = arith.truncf %463 : vector<16x16xf32> to vector<16x16xbf16>
    %465 = arith.truncf %449 : vector<16x8xf32> to vector<16x8xbf16>
    %cst_342 = arith.constant dense<0.000000e+00> : vector<16x8xf32>
    %466 = tpu.matmul %464, %465, %cst_342 {dimension_numbers = #tpu.dot_dimension_numbers<[1], [0], [0], [1], [0, 0, 1, 1], [], []>} : vector<16x16xbf16>, vector<16x8xbf16>, vector<16x8xf32> -> vector<16x8xf32>
    %467 = arith.truncf %466 : vector<16x8xf32> to vector<16x8xbf16>
    %c1_343 = arith.constant 1 : index
    %c3_344 = arith.constant 3 : index
    %c0_345 = arith.constant 0 : index
    %c0_346 = arith.constant 0 : index
    %468 = vector.load %arg12[%c1_343, %c3_344, %c0_345, %c0_346] : memref<4x4x8x32xbf16, #tpu.memory_space<vmem>>, vector<1x1x8x32xbf16>
    %469 = vector.shape_cast %468 : vector<1x1x8x32xbf16> to vector<8x32xbf16>
    %cst_347 = arith.constant dense<0.000000e+00> : vector<16x32xf32>
    %470 = tpu.matmul %467, %469, %cst_347 {dimension_numbers = #tpu.dot_dimension_numbers<[1], [0], [0], [1], [0, 0, 1, 1], [], []>} : vector<16x8xbf16>, vector<8x32xbf16>, vector<16x32xf32> -> vector<16x32xf32>
    %471 = arith.addf %428, %470 : vector<16x32xf32>
    %c1_348 = arith.constant 1 : index
    %c0_349 = arith.constant 0 : index
    %c0_350 = arith.constant 0 : index
    %472 = vector.load %arg13[%c1_348, %c0_349, %c0_350] : memref<4x1x32xf32, #tpu.memory_space<vmem>>, vector<1x1x32xf32>
    %473 = vector.shape_cast %472 : vector<1x1x32xf32> to vector<1x32xf32>
    %474 = vector.broadcast %473 : vector<1x32xf32> to vector<16x32xf32>
    %475 = arith.addf %471, %474 : vector<16x32xf32>
    %476 = arith.addf %297, %475 : vector<16x32xf32>
    %c1_351 = arith.constant 1 : index
    %c0_352 = arith.constant 0 : index
    %c0_353 = arith.constant 0 : index
    %477 = vector.load %arg14[%c1_351, %c0_352, %c0_353] : memref<4x1x32xf32, #tpu.memory_space<vmem>>, vector<1x1x32xf32>
    %478 = vector.shape_cast %477 : vector<1x1x32xf32> to vector<1x32xf32>
    %c1_354 = arith.constant 1 : index
    %c0_355 = arith.constant 0 : index
    %c0_356 = arith.constant 0 : index
    %479 = vector.load %arg15[%c1_354, %c0_355, %c0_356] : memref<4x1x32xf32, #tpu.memory_space<vmem>>, vector<1x1x32xf32>
    %480 = vector.shape_cast %479 : vector<1x1x32xf32> to vector<1x32xf32>
    %cst_357 = arith.constant dense<0.000000e+00> : vector<16xf32>
    %481 = vector.multi_reduction <add>, %476, %cst_357 [1] : vector<16x32xf32> to vector<16xf32>
    %482 = vector.shape_cast %481 : vector<16xf32> to vector<16x1xf32>
    %cst_358 = arith.constant 3.200000e+01 : f32
    %483 = vector.broadcast %cst_358 : f32 to vector<16x1xf32>
    %484 = arith.divf %482, %483 : vector<16x1xf32>
    %485 = vector.broadcast %484 : vector<16x1xf32> to vector<16x32xf32>
    %486 = arith.subf %476, %485 : vector<16x32xf32>
    %487 = arith.mulf %486, %486 : vector<16x32xf32>
    %cst_359 = arith.constant dense<0.000000e+00> : vector<16xf32>
    %488 = vector.multi_reduction <add>, %487, %cst_359 [1] : vector<16x32xf32> to vector<16xf32>
    %489 = vector.shape_cast %488 : vector<16xf32> to vector<16x1xf32>
    %cst_360 = arith.constant 3.200000e+01 : f32
    %490 = vector.broadcast %cst_360 : f32 to vector<16x1xf32>
    %491 = arith.divf %489, %490 : vector<16x1xf32>
    %492 = vector.broadcast %484 : vector<16x1xf32> to vector<16x32xf32>
    %493 = arith.subf %476, %492 : vector<16x32xf32>
    %cst_361 = arith.constant 9.99999996E-13 : f32
    %494 = vector.broadcast %cst_361 : f32 to vector<16x1xf32>
    %495 = arith.addf %491, %494 : vector<16x1xf32>
    %496 = math.rsqrt %495 : vector<16x1xf32>
    %497 = vector.broadcast %496 : vector<16x1xf32> to vector<16x32xf32>
    %498 = arith.mulf %493, %497 : vector<16x32xf32>
    %499 = vector.broadcast %478 : vector<1x32xf32> to vector<16x32xf32>
    %500 = arith.mulf %498, %499 : vector<16x32xf32>
    %501 = vector.broadcast %480 : vector<1x32xf32> to vector<16x32xf32>
    %502 = arith.addf %500, %501 : vector<16x32xf32>
    %503 = arith.truncf %502 : vector<16x32xf32> to vector<16x32xbf16>
    %c1_362 = arith.constant 1 : index
    %c0_363 = arith.constant 0 : index
    %c0_364 = arith.constant 0 : index
    %504 = vector.load %arg16[%c1_362, %c0_363, %c0_364] : memref<4x32x128xbf16, #tpu.memory_space<vmem>>, vector<1x32x128xbf16>
    %505 = vector.shape_cast %504 : vector<1x32x128xbf16> to vector<32x128xbf16>
    %cst_365 = arith.constant dense<0.000000e+00> : vector<16x128xf32>
    %506 = tpu.matmul %503, %505, %cst_365 {dimension_numbers = #tpu.dot_dimension_numbers<[1], [0], [0], [1], [0, 0, 1, 1], [], []>} : vector<16x32xbf16>, vector<32x128xbf16>, vector<16x128xf32> -> vector<16x128xf32>
    %c1_366 = arith.constant 1 : index
    %c0_367 = arith.constant 0 : index
    %c0_368 = arith.constant 0 : index
    %507 = vector.load %arg17[%c1_366, %c0_367, %c0_368] : memref<4x1x128xf32, #tpu.memory_space<vmem>>, vector<1x1x128xf32>
    %508 = vector.shape_cast %507 : vector<1x1x128xf32> to vector<1x128xf32>
    %509 = vector.broadcast %508 : vector<1x128xf32> to vector<16x128xf32>
    %510 = arith.addf %506, %509 : vector<16x128xf32>
    %511 = arith.mulf %510, %510 : vector<16x128xf32>
    %512 = arith.mulf %510, %511 : vector<16x128xf32>
    %cst_369 = arith.constant 4.471500e-02 : f32
    %513 = vector.broadcast %cst_369 : f32 to vector<16x128xf32>
    %514 = arith.mulf %513, %512 : vector<16x128xf32>
    %515 = arith.addf %510, %514 : vector<16x128xf32>
    %cst_370 = arith.constant 0.797884583 : f32
    %516 = vector.broadcast %cst_370 : f32 to vector<16x128xf32>
    %517 = arith.mulf %516, %515 : vector<16x128xf32>
    %518 = math.tanh %517 : vector<16x128xf32>
    %cst_371 = arith.constant 1.000000e+00 : f32
    %519 = vector.broadcast %cst_371 : f32 to vector<16x128xf32>
    %520 = arith.addf %519, %518 : vector<16x128xf32>
    %cst_372 = arith.constant 5.000000e-01 : f32
    %521 = vector.broadcast %cst_372 : f32 to vector<16x128xf32>
    %522 = arith.mulf %521, %520 : vector<16x128xf32>
    %523 = arith.mulf %510, %522 : vector<16x128xf32>
    %524 = arith.truncf %523 : vector<16x128xf32> to vector<16x128xbf16>
    %c1_373 = arith.constant 1 : index
    %c0_374 = arith.constant 0 : index
    %c0_375 = arith.constant 0 : index
    %525 = vector.load %arg18[%c1_373, %c0_374, %c0_375] : memref<4x128x32xbf16, #tpu.memory_space<vmem>>, vector<1x128x32xbf16>
    %526 = vector.shape_cast %525 : vector<1x128x32xbf16> to vector<128x32xbf16>
    %cst_376 = arith.constant dense<0.000000e+00> : vector<16x32xf32>
    %527 = tpu.matmul %524, %526, %cst_376 {dimension_numbers = #tpu.dot_dimension_numbers<[1], [0], [0], [1], [0, 0, 1, 1], [], []>} : vector<16x128xbf16>, vector<128x32xbf16>, vector<16x32xf32> -> vector<16x32xf32>
    %c1_377 = arith.constant 1 : index
    %c0_378 = arith.constant 0 : index
    %c0_379 = arith.constant 0 : index
    %528 = vector.load %arg19[%c1_377, %c0_378, %c0_379] : memref<4x1x32xf32, #tpu.memory_space<vmem>>, vector<1x1x32xf32>
    %529 = vector.shape_cast %528 : vector<1x1x32xf32> to vector<1x32xf32>
    %530 = vector.broadcast %529 : vector<1x32xf32> to vector<16x32xf32>
    %531 = arith.addf %527, %530 : vector<16x32xf32>
    %532 = arith.addf %502, %531 : vector<16x32xf32>
    %c1_380 = arith.constant 1 : index
    %c0_381 = arith.constant 0 : index
    %c0_382 = arith.constant 0 : index
    %533 = vector.load %arg20[%c1_380, %c0_381, %c0_382] : memref<4x1x32xf32, #tpu.memory_space<vmem>>, vector<1x1x32xf32>
    %534 = vector.shape_cast %533 : vector<1x1x32xf32> to vector<1x32xf32>
    %c1_383 = arith.constant 1 : index
    %c0_384 = arith.constant 0 : index
    %c0_385 = arith.constant 0 : index
    %535 = vector.load %arg21[%c1_383, %c0_384, %c0_385] : memref<4x1x32xf32, #tpu.memory_space<vmem>>, vector<1x1x32xf32>
    %536 = vector.shape_cast %535 : vector<1x1x32xf32> to vector<1x32xf32>
    %cst_386 = arith.constant dense<0.000000e+00> : vector<16xf32>
    %537 = vector.multi_reduction <add>, %532, %cst_386 [1] : vector<16x32xf32> to vector<16xf32>
    %538 = vector.shape_cast %537 : vector<16xf32> to vector<16x1xf32>
    %cst_387 = arith.constant 3.200000e+01 : f32
    %539 = vector.broadcast %cst_387 : f32 to vector<16x1xf32>
    %540 = arith.divf %538, %539 : vector<16x1xf32>
    %541 = vector.broadcast %540 : vector<16x1xf32> to vector<16x32xf32>
    %542 = arith.subf %532, %541 : vector<16x32xf32>
    %543 = arith.mulf %542, %542 : vector<16x32xf32>
    %cst_388 = arith.constant dense<0.000000e+00> : vector<16xf32>
    %544 = vector.multi_reduction <add>, %543, %cst_388 [1] : vector<16x32xf32> to vector<16xf32>
    %545 = vector.shape_cast %544 : vector<16xf32> to vector<16x1xf32>
    %cst_389 = arith.constant 3.200000e+01 : f32
    %546 = vector.broadcast %cst_389 : f32 to vector<16x1xf32>
    %547 = arith.divf %545, %546 : vector<16x1xf32>
    %548 = vector.broadcast %540 : vector<16x1xf32> to vector<16x32xf32>
    %549 = arith.subf %532, %548 : vector<16x32xf32>
    %cst_390 = arith.constant 9.99999996E-13 : f32
    %550 = vector.broadcast %cst_390 : f32 to vector<16x1xf32>
    %551 = arith.addf %547, %550 : vector<16x1xf32>
    %552 = math.rsqrt %551 : vector<16x1xf32>
    %553 = vector.broadcast %552 : vector<16x1xf32> to vector<16x32xf32>
    %554 = arith.mulf %549, %553 : vector<16x32xf32>
    %555 = vector.broadcast %534 : vector<1x32xf32> to vector<16x32xf32>
    %556 = arith.mulf %554, %555 : vector<16x32xf32>
    %557 = vector.broadcast %536 : vector<1x32xf32> to vector<16x32xf32>
    %558 = arith.addf %556, %557 : vector<16x32xf32>
    %559 = arith.truncf %558 : vector<16x32xf32> to vector<16x32xbf16>
    %cst_391 = arith.constant 0.000000e+00 : f32
    %560 = vector.broadcast %cst_391 : f32 to vector<16x32xf32>
    %c2_392 = arith.constant 2 : index
    %c0_393 = arith.constant 0 : index
    %c0_394 = arith.constant 0 : index
    %c0_395 = arith.constant 0 : index
    %561 = vector.load %arg6[%c2_392, %c0_393, %c0_394, %c0_395] : memref<4x4x32x8xbf16, #tpu.memory_space<vmem>>, vector<1x1x32x8xbf16>
    %562 = vector.shape_cast %561 : vector<1x1x32x8xbf16> to vector<32x8xbf16>
    %cst_396 = arith.constant dense<0.000000e+00> : vector<16x8xf32>
    %563 = tpu.matmul %559, %562, %cst_396 {dimension_numbers = #tpu.dot_dimension_numbers<[1], [0], [0], [1], [0, 0, 1, 1], [], []>} : vector<16x32xbf16>, vector<32x8xbf16>, vector<16x8xf32> -> vector<16x8xf32>
    %c2_397 = arith.constant 2 : index
    %c0_398 = arith.constant 0 : index
    %c0_399 = arith.constant 0 : index
    %c0_400 = arith.constant 0 : index
    %564 = vector.load %arg9[%c2_397, %c0_398, %c0_399, %c0_400] : memref<4x4x1x8xf32, #tpu.memory_space<vmem>>, vector<1x1x1x8xf32>
    %565 = vector.shape_cast %564 : vector<1x1x1x8xf32> to vector<1x8xf32>
    %566 = vector.broadcast %565 : vector<1x8xf32> to vector<16x8xf32>
    %567 = arith.addf %563, %566 : vector<16x8xf32>
    %c2_401 = arith.constant 2 : index
    %c0_402 = arith.constant 0 : index
    %c0_403 = arith.constant 0 : index
    %c0_404 = arith.constant 0 : index
    %568 = vector.load %arg7[%c2_401, %c0_402, %c0_403, %c0_404] : memref<4x4x32x8xbf16, #tpu.memory_space<vmem>>, vector<1x1x32x8xbf16>
    %569 = vector.shape_cast %568 : vector<1x1x32x8xbf16> to vector<32x8xbf16>
    %cst_405 = arith.constant dense<0.000000e+00> : vector<16x8xf32>
    %570 = tpu.matmul %559, %569, %cst_405 {dimension_numbers = #tpu.dot_dimension_numbers<[1], [0], [0], [1], [0, 0, 1, 1], [], []>} : vector<16x32xbf16>, vector<32x8xbf16>, vector<16x8xf32> -> vector<16x8xf32>
    %c2_406 = arith.constant 2 : index
    %c0_407 = arith.constant 0 : index
    %c0_408 = arith.constant 0 : index
    %c0_409 = arith.constant 0 : index
    %571 = vector.load %arg10[%c2_406, %c0_407, %c0_408, %c0_409] : memref<4x4x1x8xf32, #tpu.memory_space<vmem>>, vector<1x1x1x8xf32>
    %572 = vector.shape_cast %571 : vector<1x1x1x8xf32> to vector<1x8xf32>
    %573 = vector.broadcast %572 : vector<1x8xf32> to vector<16x8xf32>
    %574 = arith.addf %570, %573 : vector<16x8xf32>
    %c2_410 = arith.constant 2 : index
    %c0_411 = arith.constant 0 : index
    %c0_412 = arith.constant 0 : index
    %c0_413 = arith.constant 0 : index
    %575 = vector.load %arg8[%c2_410, %c0_411, %c0_412, %c0_413] : memref<4x4x32x8xbf16, #tpu.memory_space<vmem>>, vector<1x1x32x8xbf16>
    %576 = vector.shape_cast %575 : vector<1x1x32x8xbf16> to vector<32x8xbf16>
    %cst_414 = arith.constant dense<0.000000e+00> : vector<16x8xf32>
    %577 = tpu.matmul %559, %576, %cst_414 {dimension_numbers = #tpu.dot_dimension_numbers<[1], [0], [0], [1], [0, 0, 1, 1], [], []>} : vector<16x32xbf16>, vector<32x8xbf16>, vector<16x8xf32> -> vector<16x8xf32>
    %c2_415 = arith.constant 2 : index
    %c0_416 = arith.constant 0 : index
    %c0_417 = arith.constant 0 : index
    %c0_418 = arith.constant 0 : index
    %578 = vector.load %arg11[%c2_415, %c0_416, %c0_417, %c0_418] : memref<4x4x1x8xf32, #tpu.memory_space<vmem>>, vector<1x1x1x8xf32>
    %579 = vector.shape_cast %578 : vector<1x1x1x8xf32> to vector<1x8xf32>
    %580 = vector.broadcast %579 : vector<1x8xf32> to vector<16x8xf32>
    %581 = arith.addf %577, %580 : vector<16x8xf32>
    %582 = arith.truncf %567 : vector<16x8xf32> to vector<16x8xbf16>
    %583 = arith.truncf %574 : vector<16x8xf32> to vector<16x8xbf16>
    %cst_419 = arith.constant dense<0.000000e+00> : vector<16x16xf32>
    %584 = tpu.matmul %582, %583, %cst_419 {dimension_numbers = #tpu.dot_dimension_numbers<[1], [1], [0], [0], [0, 0, 1, 0], [], []>} : vector<16x8xbf16>, vector<16x8xbf16>, vector<16x16xf32> -> vector<16x16xf32>
    %585 = arith.addf %584, %36 : vector<16x16xf32>
    %cst_420 = arith.constant dense<0xFF800000> : vector<16xf32>
    %586 = vector.multi_reduction <maximumf>, %585, %cst_420 [1] : vector<16x16xf32> to vector<16xf32>
    %587 = vector.shape_cast %586 : vector<16xf32> to vector<16x1xf32>
    %588 = vector.broadcast %587 : vector<16x1xf32> to vector<16x16xf32>
    %589 = arith.subf %585, %588 : vector<16x16xf32>
    %590 = math.exp %589 : vector<16x16xf32>
    %cst_421 = arith.constant dense<0.000000e+00> : vector<16xf32>
    %591 = vector.multi_reduction <add>, %590, %cst_421 [1] : vector<16x16xf32> to vector<16xf32>
    %592 = vector.shape_cast %591 : vector<16xf32> to vector<16x1xf32>
    %593 = tpu.reciprocal %592 {approx = true} : vector<16x1xf32> -> vector<16x1xf32>
    %594 = vector.broadcast %593 : vector<16x1xf32> to vector<16x16xf32>
    %595 = arith.mulf %590, %594 : vector<16x16xf32>
    %596 = arith.truncf %595 : vector<16x16xf32> to vector<16x16xbf16>
    %597 = arith.truncf %581 : vector<16x8xf32> to vector<16x8xbf16>
    %cst_422 = arith.constant dense<0.000000e+00> : vector<16x8xf32>
    %598 = tpu.matmul %596, %597, %cst_422 {dimension_numbers = #tpu.dot_dimension_numbers<[1], [0], [0], [1], [0, 0, 1, 1], [], []>} : vector<16x16xbf16>, vector<16x8xbf16>, vector<16x8xf32> -> vector<16x8xf32>
    %599 = arith.truncf %598 : vector<16x8xf32> to vector<16x8xbf16>
    %c2_423 = arith.constant 2 : index
    %c0_424 = arith.constant 0 : index
    %c0_425 = arith.constant 0 : index
    %c0_426 = arith.constant 0 : index
    %600 = vector.load %arg12[%c2_423, %c0_424, %c0_425, %c0_426] : memref<4x4x8x32xbf16, #tpu.memory_space<vmem>>, vector<1x1x8x32xbf16>
    %601 = vector.shape_cast %600 : vector<1x1x8x32xbf16> to vector<8x32xbf16>
    %cst_427 = arith.constant dense<0.000000e+00> : vector<16x32xf32>
    %602 = tpu.matmul %599, %601, %cst_427 {dimension_numbers = #tpu.dot_dimension_numbers<[1], [0], [0], [1], [0, 0, 1, 1], [], []>} : vector<16x8xbf16>, vector<8x32xbf16>, vector<16x32xf32> -> vector<16x32xf32>
    %603 = arith.addf %560, %602 : vector<16x32xf32>
    %c2_428 = arith.constant 2 : index
    %c1_429 = arith.constant 1 : index
    %c0_430 = arith.constant 0 : index
    %c0_431 = arith.constant 0 : index
    %604 = vector.load %arg6[%c2_428, %c1_429, %c0_430, %c0_431] : memref<4x4x32x8xbf16, #tpu.memory_space<vmem>>, vector<1x1x32x8xbf16>
    %605 = vector.shape_cast %604 : vector<1x1x32x8xbf16> to vector<32x8xbf16>
    %cst_432 = arith.constant dense<0.000000e+00> : vector<16x8xf32>
    %606 = tpu.matmul %559, %605, %cst_432 {dimension_numbers = #tpu.dot_dimension_numbers<[1], [0], [0], [1], [0, 0, 1, 1], [], []>} : vector<16x32xbf16>, vector<32x8xbf16>, vector<16x8xf32> -> vector<16x8xf32>
    %c2_433 = arith.constant 2 : index
    %c1_434 = arith.constant 1 : index
    %c0_435 = arith.constant 0 : index
    %c0_436 = arith.constant 0 : index
    %607 = vector.load %arg9[%c2_433, %c1_434, %c0_435, %c0_436] : memref<4x4x1x8xf32, #tpu.memory_space<vmem>>, vector<1x1x1x8xf32>
    %608 = vector.shape_cast %607 : vector<1x1x1x8xf32> to vector<1x8xf32>
    %609 = vector.broadcast %608 : vector<1x8xf32> to vector<16x8xf32>
    %610 = arith.addf %606, %609 : vector<16x8xf32>
    %c2_437 = arith.constant 2 : index
    %c1_438 = arith.constant 1 : index
    %c0_439 = arith.constant 0 : index
    %c0_440 = arith.constant 0 : index
    %611 = vector.load %arg7[%c2_437, %c1_438, %c0_439, %c0_440] : memref<4x4x32x8xbf16, #tpu.memory_space<vmem>>, vector<1x1x32x8xbf16>
    %612 = vector.shape_cast %611 : vector<1x1x32x8xbf16> to vector<32x8xbf16>
    %cst_441 = arith.constant dense<0.000000e+00> : vector<16x8xf32>
    %613 = tpu.matmul %559, %612, %cst_441 {dimension_numbers = #tpu.dot_dimension_numbers<[1], [0], [0], [1], [0, 0, 1, 1], [], []>} : vector<16x32xbf16>, vector<32x8xbf16>, vector<16x8xf32> -> vector<16x8xf32>
    %c2_442 = arith.constant 2 : index
    %c1_443 = arith.constant 1 : index
    %c0_444 = arith.constant 0 : index
    %c0_445 = arith.constant 0 : index
    %614 = vector.load %arg10[%c2_442, %c1_443, %c0_444, %c0_445] : memref<4x4x1x8xf32, #tpu.memory_space<vmem>>, vector<1x1x1x8xf32>
    %615 = vector.shape_cast %614 : vector<1x1x1x8xf32> to vector<1x8xf32>
    %616 = vector.broadcast %615 : vector<1x8xf32> to vector<16x8xf32>
    %617 = arith.addf %613, %616 : vector<16x8xf32>
    %c2_446 = arith.constant 2 : index
    %c1_447 = arith.constant 1 : index
    %c0_448 = arith.constant 0 : index
    %c0_449 = arith.constant 0 : index
    %618 = vector.load %arg8[%c2_446, %c1_447, %c0_448, %c0_449] : memref<4x4x32x8xbf16, #tpu.memory_space<vmem>>, vector<1x1x32x8xbf16>
    %619 = vector.shape_cast %618 : vector<1x1x32x8xbf16> to vector<32x8xbf16>
    %cst_450 = arith.constant dense<0.000000e+00> : vector<16x8xf32>
    %620 = tpu.matmul %559, %619, %cst_450 {dimension_numbers = #tpu.dot_dimension_numbers<[1], [0], [0], [1], [0, 0, 1, 1], [], []>} : vector<16x32xbf16>, vector<32x8xbf16>, vector<16x8xf32> -> vector<16x8xf32>
    %c2_451 = arith.constant 2 : index
    %c1_452 = arith.constant 1 : index
    %c0_453 = arith.constant 0 : index
    %c0_454 = arith.constant 0 : index
    %621 = vector.load %arg11[%c2_451, %c1_452, %c0_453, %c0_454] : memref<4x4x1x8xf32, #tpu.memory_space<vmem>>, vector<1x1x1x8xf32>
    %622 = vector.shape_cast %621 : vector<1x1x1x8xf32> to vector<1x8xf32>
    %623 = vector.broadcast %622 : vector<1x8xf32> to vector<16x8xf32>
    %624 = arith.addf %620, %623 : vector<16x8xf32>
    %625 = arith.truncf %610 : vector<16x8xf32> to vector<16x8xbf16>
    %626 = arith.truncf %617 : vector<16x8xf32> to vector<16x8xbf16>
    %cst_455 = arith.constant dense<0.000000e+00> : vector<16x16xf32>
    %627 = tpu.matmul %625, %626, %cst_455 {dimension_numbers = #tpu.dot_dimension_numbers<[1], [1], [0], [0], [0, 0, 1, 0], [], []>} : vector<16x8xbf16>, vector<16x8xbf16>, vector<16x16xf32> -> vector<16x16xf32>
    %628 = arith.addf %627, %36 : vector<16x16xf32>
    %cst_456 = arith.constant dense<0xFF800000> : vector<16xf32>
    %629 = vector.multi_reduction <maximumf>, %628, %cst_456 [1] : vector<16x16xf32> to vector<16xf32>
    %630 = vector.shape_cast %629 : vector<16xf32> to vector<16x1xf32>
    %631 = vector.broadcast %630 : vector<16x1xf32> to vector<16x16xf32>
    %632 = arith.subf %628, %631 : vector<16x16xf32>
    %633 = math.exp %632 : vector<16x16xf32>
    %cst_457 = arith.constant dense<0.000000e+00> : vector<16xf32>
    %634 = vector.multi_reduction <add>, %633, %cst_457 [1] : vector<16x16xf32> to vector<16xf32>
    %635 = vector.shape_cast %634 : vector<16xf32> to vector<16x1xf32>
    %636 = tpu.reciprocal %635 {approx = true} : vector<16x1xf32> -> vector<16x1xf32>
    %637 = vector.broadcast %636 : vector<16x1xf32> to vector<16x16xf32>
    %638 = arith.mulf %633, %637 : vector<16x16xf32>
    %639 = arith.truncf %638 : vector<16x16xf32> to vector<16x16xbf16>
    %640 = arith.truncf %624 : vector<16x8xf32> to vector<16x8xbf16>
    %cst_458 = arith.constant dense<0.000000e+00> : vector<16x8xf32>
    %641 = tpu.matmul %639, %640, %cst_458 {dimension_numbers = #tpu.dot_dimension_numbers<[1], [0], [0], [1], [0, 0, 1, 1], [], []>} : vector<16x16xbf16>, vector<16x8xbf16>, vector<16x8xf32> -> vector<16x8xf32>
    %642 = arith.truncf %641 : vector<16x8xf32> to vector<16x8xbf16>
    %c2_459 = arith.constant 2 : index
    %c1_460 = arith.constant 1 : index
    %c0_461 = arith.constant 0 : index
    %c0_462 = arith.constant 0 : index
    %643 = vector.load %arg12[%c2_459, %c1_460, %c0_461, %c0_462] : memref<4x4x8x32xbf16, #tpu.memory_space<vmem>>, vector<1x1x8x32xbf16>
    %644 = vector.shape_cast %643 : vector<1x1x8x32xbf16> to vector<8x32xbf16>
    %cst_463 = arith.constant dense<0.000000e+00> : vector<16x32xf32>
    %645 = tpu.matmul %642, %644, %cst_463 {dimension_numbers = #tpu.dot_dimension_numbers<[1], [0], [0], [1], [0, 0, 1, 1], [], []>} : vector<16x8xbf16>, vector<8x32xbf16>, vector<16x32xf32> -> vector<16x32xf32>
    %646 = arith.addf %603, %645 : vector<16x32xf32>
    %c2_464 = arith.constant 2 : index
    %c2_465 = arith.constant 2 : index
    %c0_466 = arith.constant 0 : index
    %c0_467 = arith.constant 0 : index
    %647 = vector.load %arg6[%c2_464, %c2_465, %c0_466, %c0_467] : memref<4x4x32x8xbf16, #tpu.memory_space<vmem>>, vector<1x1x32x8xbf16>
    %648 = vector.shape_cast %647 : vector<1x1x32x8xbf16> to vector<32x8xbf16>
    %cst_468 = arith.constant dense<0.000000e+00> : vector<16x8xf32>
    %649 = tpu.matmul %559, %648, %cst_468 {dimension_numbers = #tpu.dot_dimension_numbers<[1], [0], [0], [1], [0, 0, 1, 1], [], []>} : vector<16x32xbf16>, vector<32x8xbf16>, vector<16x8xf32> -> vector<16x8xf32>
    %c2_469 = arith.constant 2 : index
    %c2_470 = arith.constant 2 : index
    %c0_471 = arith.constant 0 : index
    %c0_472 = arith.constant 0 : index
    %650 = vector.load %arg9[%c2_469, %c2_470, %c0_471, %c0_472] : memref<4x4x1x8xf32, #tpu.memory_space<vmem>>, vector<1x1x1x8xf32>
    %651 = vector.shape_cast %650 : vector<1x1x1x8xf32> to vector<1x8xf32>
    %652 = vector.broadcast %651 : vector<1x8xf32> to vector<16x8xf32>
    %653 = arith.addf %649, %652 : vector<16x8xf32>
    %c2_473 = arith.constant 2 : index
    %c2_474 = arith.constant 2 : index
    %c0_475 = arith.constant 0 : index
    %c0_476 = arith.constant 0 : index
    %654 = vector.load %arg7[%c2_473, %c2_474, %c0_475, %c0_476] : memref<4x4x32x8xbf16, #tpu.memory_space<vmem>>, vector<1x1x32x8xbf16>
    %655 = vector.shape_cast %654 : vector<1x1x32x8xbf16> to vector<32x8xbf16>
    %cst_477 = arith.constant dense<0.000000e+00> : vector<16x8xf32>
    %656 = tpu.matmul %559, %655, %cst_477 {dimension_numbers = #tpu.dot_dimension_numbers<[1], [0], [0], [1], [0, 0, 1, 1], [], []>} : vector<16x32xbf16>, vector<32x8xbf16>, vector<16x8xf32> -> vector<16x8xf32>
    %c2_478 = arith.constant 2 : index
    %c2_479 = arith.constant 2 : index
    %c0_480 = arith.constant 0 : index
    %c0_481 = arith.constant 0 : index
    %657 = vector.load %arg10[%c2_478, %c2_479, %c0_480, %c0_481] : memref<4x4x1x8xf32, #tpu.memory_space<vmem>>, vector<1x1x1x8xf32>
    %658 = vector.shape_cast %657 : vector<1x1x1x8xf32> to vector<1x8xf32>
    %659 = vector.broadcast %658 : vector<1x8xf32> to vector<16x8xf32>
    %660 = arith.addf %656, %659 : vector<16x8xf32>
    %c2_482 = arith.constant 2 : index
    %c2_483 = arith.constant 2 : index
    %c0_484 = arith.constant 0 : index
    %c0_485 = arith.constant 0 : index
    %661 = vector.load %arg8[%c2_482, %c2_483, %c0_484, %c0_485] : memref<4x4x32x8xbf16, #tpu.memory_space<vmem>>, vector<1x1x32x8xbf16>
    %662 = vector.shape_cast %661 : vector<1x1x32x8xbf16> to vector<32x8xbf16>
    %cst_486 = arith.constant dense<0.000000e+00> : vector<16x8xf32>
    %663 = tpu.matmul %559, %662, %cst_486 {dimension_numbers = #tpu.dot_dimension_numbers<[1], [0], [0], [1], [0, 0, 1, 1], [], []>} : vector<16x32xbf16>, vector<32x8xbf16>, vector<16x8xf32> -> vector<16x8xf32>
    %c2_487 = arith.constant 2 : index
    %c2_488 = arith.constant 2 : index
    %c0_489 = arith.constant 0 : index
    %c0_490 = arith.constant 0 : index
    %664 = vector.load %arg11[%c2_487, %c2_488, %c0_489, %c0_490] : memref<4x4x1x8xf32, #tpu.memory_space<vmem>>, vector<1x1x1x8xf32>
    %665 = vector.shape_cast %664 : vector<1x1x1x8xf32> to vector<1x8xf32>
    %666 = vector.broadcast %665 : vector<1x8xf32> to vector<16x8xf32>
    %667 = arith.addf %663, %666 : vector<16x8xf32>
    %668 = arith.truncf %653 : vector<16x8xf32> to vector<16x8xbf16>
    %669 = arith.truncf %660 : vector<16x8xf32> to vector<16x8xbf16>
    %cst_491 = arith.constant dense<0.000000e+00> : vector<16x16xf32>
    %670 = tpu.matmul %668, %669, %cst_491 {dimension_numbers = #tpu.dot_dimension_numbers<[1], [1], [0], [0], [0, 0, 1, 0], [], []>} : vector<16x8xbf16>, vector<16x8xbf16>, vector<16x16xf32> -> vector<16x16xf32>
    %671 = arith.addf %670, %36 : vector<16x16xf32>
    %cst_492 = arith.constant dense<0xFF800000> : vector<16xf32>
    %672 = vector.multi_reduction <maximumf>, %671, %cst_492 [1] : vector<16x16xf32> to vector<16xf32>
    %673 = vector.shape_cast %672 : vector<16xf32> to vector<16x1xf32>
    %674 = vector.broadcast %673 : vector<16x1xf32> to vector<16x16xf32>
    %675 = arith.subf %671, %674 : vector<16x16xf32>
    %676 = math.exp %675 : vector<16x16xf32>
    %cst_493 = arith.constant dense<0.000000e+00> : vector<16xf32>
    %677 = vector.multi_reduction <add>, %676, %cst_493 [1] : vector<16x16xf32> to vector<16xf32>
    %678 = vector.shape_cast %677 : vector<16xf32> to vector<16x1xf32>
    %679 = tpu.reciprocal %678 {approx = true} : vector<16x1xf32> -> vector<16x1xf32>
    %680 = vector.broadcast %679 : vector<16x1xf32> to vector<16x16xf32>
    %681 = arith.mulf %676, %680 : vector<16x16xf32>
    %682 = arith.truncf %681 : vector<16x16xf32> to vector<16x16xbf16>
    %683 = arith.truncf %667 : vector<16x8xf32> to vector<16x8xbf16>
    %cst_494 = arith.constant dense<0.000000e+00> : vector<16x8xf32>
    %684 = tpu.matmul %682, %683, %cst_494 {dimension_numbers = #tpu.dot_dimension_numbers<[1], [0], [0], [1], [0, 0, 1, 1], [], []>} : vector<16x16xbf16>, vector<16x8xbf16>, vector<16x8xf32> -> vector<16x8xf32>
    %685 = arith.truncf %684 : vector<16x8xf32> to vector<16x8xbf16>
    %c2_495 = arith.constant 2 : index
    %c2_496 = arith.constant 2 : index
    %c0_497 = arith.constant 0 : index
    %c0_498 = arith.constant 0 : index
    %686 = vector.load %arg12[%c2_495, %c2_496, %c0_497, %c0_498] : memref<4x4x8x32xbf16, #tpu.memory_space<vmem>>, vector<1x1x8x32xbf16>
    %687 = vector.shape_cast %686 : vector<1x1x8x32xbf16> to vector<8x32xbf16>
    %cst_499 = arith.constant dense<0.000000e+00> : vector<16x32xf32>
    %688 = tpu.matmul %685, %687, %cst_499 {dimension_numbers = #tpu.dot_dimension_numbers<[1], [0], [0], [1], [0, 0, 1, 1], [], []>} : vector<16x8xbf16>, vector<8x32xbf16>, vector<16x32xf32> -> vector<16x32xf32>
    %689 = arith.addf %646, %688 : vector<16x32xf32>
    %c2_500 = arith.constant 2 : index
    %c3_501 = arith.constant 3 : index
    %c0_502 = arith.constant 0 : index
    %c0_503 = arith.constant 0 : index
    %690 = vector.load %arg6[%c2_500, %c3_501, %c0_502, %c0_503] : memref<4x4x32x8xbf16, #tpu.memory_space<vmem>>, vector<1x1x32x8xbf16>
    %691 = vector.shape_cast %690 : vector<1x1x32x8xbf16> to vector<32x8xbf16>
    %cst_504 = arith.constant dense<0.000000e+00> : vector<16x8xf32>
    %692 = tpu.matmul %559, %691, %cst_504 {dimension_numbers = #tpu.dot_dimension_numbers<[1], [0], [0], [1], [0, 0, 1, 1], [], []>} : vector<16x32xbf16>, vector<32x8xbf16>, vector<16x8xf32> -> vector<16x8xf32>
    %c2_505 = arith.constant 2 : index
    %c3_506 = arith.constant 3 : index
    %c0_507 = arith.constant 0 : index
    %c0_508 = arith.constant 0 : index
    %693 = vector.load %arg9[%c2_505, %c3_506, %c0_507, %c0_508] : memref<4x4x1x8xf32, #tpu.memory_space<vmem>>, vector<1x1x1x8xf32>
    %694 = vector.shape_cast %693 : vector<1x1x1x8xf32> to vector<1x8xf32>
    %695 = vector.broadcast %694 : vector<1x8xf32> to vector<16x8xf32>
    %696 = arith.addf %692, %695 : vector<16x8xf32>
    %c2_509 = arith.constant 2 : index
    %c3_510 = arith.constant 3 : index
    %c0_511 = arith.constant 0 : index
    %c0_512 = arith.constant 0 : index
    %697 = vector.load %arg7[%c2_509, %c3_510, %c0_511, %c0_512] : memref<4x4x32x8xbf16, #tpu.memory_space<vmem>>, vector<1x1x32x8xbf16>
    %698 = vector.shape_cast %697 : vector<1x1x32x8xbf16> to vector<32x8xbf16>
    %cst_513 = arith.constant dense<0.000000e+00> : vector<16x8xf32>
    %699 = tpu.matmul %559, %698, %cst_513 {dimension_numbers = #tpu.dot_dimension_numbers<[1], [0], [0], [1], [0, 0, 1, 1], [], []>} : vector<16x32xbf16>, vector<32x8xbf16>, vector<16x8xf32> -> vector<16x8xf32>
    %c2_514 = arith.constant 2 : index
    %c3_515 = arith.constant 3 : index
    %c0_516 = arith.constant 0 : index
    %c0_517 = arith.constant 0 : index
    %700 = vector.load %arg10[%c2_514, %c3_515, %c0_516, %c0_517] : memref<4x4x1x8xf32, #tpu.memory_space<vmem>>, vector<1x1x1x8xf32>
    %701 = vector.shape_cast %700 : vector<1x1x1x8xf32> to vector<1x8xf32>
    %702 = vector.broadcast %701 : vector<1x8xf32> to vector<16x8xf32>
    %703 = arith.addf %699, %702 : vector<16x8xf32>
    %c2_518 = arith.constant 2 : index
    %c3_519 = arith.constant 3 : index
    %c0_520 = arith.constant 0 : index
    %c0_521 = arith.constant 0 : index
    %704 = vector.load %arg8[%c2_518, %c3_519, %c0_520, %c0_521] : memref<4x4x32x8xbf16, #tpu.memory_space<vmem>>, vector<1x1x32x8xbf16>
    %705 = vector.shape_cast %704 : vector<1x1x32x8xbf16> to vector<32x8xbf16>
    %cst_522 = arith.constant dense<0.000000e+00> : vector<16x8xf32>
    %706 = tpu.matmul %559, %705, %cst_522 {dimension_numbers = #tpu.dot_dimension_numbers<[1], [0], [0], [1], [0, 0, 1, 1], [], []>} : vector<16x32xbf16>, vector<32x8xbf16>, vector<16x8xf32> -> vector<16x8xf32>
    %c2_523 = arith.constant 2 : index
    %c3_524 = arith.constant 3 : index
    %c0_525 = arith.constant 0 : index
    %c0_526 = arith.constant 0 : index
    %707 = vector.load %arg11[%c2_523, %c3_524, %c0_525, %c0_526] : memref<4x4x1x8xf32, #tpu.memory_space<vmem>>, vector<1x1x1x8xf32>
    %708 = vector.shape_cast %707 : vector<1x1x1x8xf32> to vector<1x8xf32>
    %709 = vector.broadcast %708 : vector<1x8xf32> to vector<16x8xf32>
    %710 = arith.addf %706, %709 : vector<16x8xf32>
    %711 = arith.truncf %696 : vector<16x8xf32> to vector<16x8xbf16>
    %712 = arith.truncf %703 : vector<16x8xf32> to vector<16x8xbf16>
    %cst_527 = arith.constant dense<0.000000e+00> : vector<16x16xf32>
    %713 = tpu.matmul %711, %712, %cst_527 {dimension_numbers = #tpu.dot_dimension_numbers<[1], [1], [0], [0], [0, 0, 1, 0], [], []>} : vector<16x8xbf16>, vector<16x8xbf16>, vector<16x16xf32> -> vector<16x16xf32>
    %714 = arith.addf %713, %36 : vector<16x16xf32>
    %cst_528 = arith.constant dense<0xFF800000> : vector<16xf32>
    %715 = vector.multi_reduction <maximumf>, %714, %cst_528 [1] : vector<16x16xf32> to vector<16xf32>
    %716 = vector.shape_cast %715 : vector<16xf32> to vector<16x1xf32>
    %717 = vector.broadcast %716 : vector<16x1xf32> to vector<16x16xf32>
    %718 = arith.subf %714, %717 : vector<16x16xf32>
    %719 = math.exp %718 : vector<16x16xf32>
    %cst_529 = arith.constant dense<0.000000e+00> : vector<16xf32>
    %720 = vector.multi_reduction <add>, %719, %cst_529 [1] : vector<16x16xf32> to vector<16xf32>
    %721 = vector.shape_cast %720 : vector<16xf32> to vector<16x1xf32>
    %722 = tpu.reciprocal %721 {approx = true} : vector<16x1xf32> -> vector<16x1xf32>
    %723 = vector.broadcast %722 : vector<16x1xf32> to vector<16x16xf32>
    %724 = arith.mulf %719, %723 : vector<16x16xf32>
    %725 = arith.truncf %724 : vector<16x16xf32> to vector<16x16xbf16>
    %726 = arith.truncf %710 : vector<16x8xf32> to vector<16x8xbf16>
    %cst_530 = arith.constant dense<0.000000e+00> : vector<16x8xf32>
    %727 = tpu.matmul %725, %726, %cst_530 {dimension_numbers = #tpu.dot_dimension_numbers<[1], [0], [0], [1], [0, 0, 1, 1], [], []>} : vector<16x16xbf16>, vector<16x8xbf16>, vector<16x8xf32> -> vector<16x8xf32>
    %728 = arith.truncf %727 : vector<16x8xf32> to vector<16x8xbf16>
    %c2_531 = arith.constant 2 : index
    %c3_532 = arith.constant 3 : index
    %c0_533 = arith.constant 0 : index
    %c0_534 = arith.constant 0 : index
    %729 = vector.load %arg12[%c2_531, %c3_532, %c0_533, %c0_534] : memref<4x4x8x32xbf16, #tpu.memory_space<vmem>>, vector<1x1x8x32xbf16>
    %730 = vector.shape_cast %729 : vector<1x1x8x32xbf16> to vector<8x32xbf16>
    %cst_535 = arith.constant dense<0.000000e+00> : vector<16x32xf32>
    %731 = tpu.matmul %728, %730, %cst_535 {dimension_numbers = #tpu.dot_dimension_numbers<[1], [0], [0], [1], [0, 0, 1, 1], [], []>} : vector<16x8xbf16>, vector<8x32xbf16>, vector<16x32xf32> -> vector<16x32xf32>
    %732 = arith.addf %689, %731 : vector<16x32xf32>
    %c2_536 = arith.constant 2 : index
    %c0_537 = arith.constant 0 : index
    %c0_538 = arith.constant 0 : index
    %733 = vector.load %arg13[%c2_536, %c0_537, %c0_538] : memref<4x1x32xf32, #tpu.memory_space<vmem>>, vector<1x1x32xf32>
    %734 = vector.shape_cast %733 : vector<1x1x32xf32> to vector<1x32xf32>
    %735 = vector.broadcast %734 : vector<1x32xf32> to vector<16x32xf32>
    %736 = arith.addf %732, %735 : vector<16x32xf32>
    %737 = arith.addf %558, %736 : vector<16x32xf32>
    %c2_539 = arith.constant 2 : index
    %c0_540 = arith.constant 0 : index
    %c0_541 = arith.constant 0 : index
    %738 = vector.load %arg14[%c2_539, %c0_540, %c0_541] : memref<4x1x32xf32, #tpu.memory_space<vmem>>, vector<1x1x32xf32>
    %739 = vector.shape_cast %738 : vector<1x1x32xf32> to vector<1x32xf32>
    %c2_542 = arith.constant 2 : index
    %c0_543 = arith.constant 0 : index
    %c0_544 = arith.constant 0 : index
    %740 = vector.load %arg15[%c2_542, %c0_543, %c0_544] : memref<4x1x32xf32, #tpu.memory_space<vmem>>, vector<1x1x32xf32>
    %741 = vector.shape_cast %740 : vector<1x1x32xf32> to vector<1x32xf32>
    %cst_545 = arith.constant dense<0.000000e+00> : vector<16xf32>
    %742 = vector.multi_reduction <add>, %737, %cst_545 [1] : vector<16x32xf32> to vector<16xf32>
    %743 = vector.shape_cast %742 : vector<16xf32> to vector<16x1xf32>
    %cst_546 = arith.constant 3.200000e+01 : f32
    %744 = vector.broadcast %cst_546 : f32 to vector<16x1xf32>
    %745 = arith.divf %743, %744 : vector<16x1xf32>
    %746 = vector.broadcast %745 : vector<16x1xf32> to vector<16x32xf32>
    %747 = arith.subf %737, %746 : vector<16x32xf32>
    %748 = arith.mulf %747, %747 : vector<16x32xf32>
    %cst_547 = arith.constant dense<0.000000e+00> : vector<16xf32>
    %749 = vector.multi_reduction <add>, %748, %cst_547 [1] : vector<16x32xf32> to vector<16xf32>
    %750 = vector.shape_cast %749 : vector<16xf32> to vector<16x1xf32>
    %cst_548 = arith.constant 3.200000e+01 : f32
    %751 = vector.broadcast %cst_548 : f32 to vector<16x1xf32>
    %752 = arith.divf %750, %751 : vector<16x1xf32>
    %753 = vector.broadcast %745 : vector<16x1xf32> to vector<16x32xf32>
    %754 = arith.subf %737, %753 : vector<16x32xf32>
    %cst_549 = arith.constant 9.99999974E-6 : f32
    %755 = vector.broadcast %cst_549 : f32 to vector<16x1xf32>
    %756 = arith.addf %752, %755 : vector<16x1xf32>
    %757 = math.rsqrt %756 : vector<16x1xf32>
    %758 = vector.broadcast %757 : vector<16x1xf32> to vector<16x32xf32>
    %759 = arith.mulf %754, %758 : vector<16x32xf32>
    %760 = vector.broadcast %739 : vector<1x32xf32> to vector<16x32xf32>
    %761 = arith.mulf %759, %760 : vector<16x32xf32>
    %762 = vector.broadcast %741 : vector<1x32xf32> to vector<16x32xf32>
    %763 = arith.addf %761, %762 : vector<16x32xf32>
    %764 = arith.truncf %763 : vector<16x32xf32> to vector<16x32xbf16>
    %c2_550 = arith.constant 2 : index
    %c0_551 = arith.constant 0 : index
    %c0_552 = arith.constant 0 : index
    %765 = vector.load %arg16[%c2_550, %c0_551, %c0_552] : memref<4x32x128xbf16, #tpu.memory_space<vmem>>, vector<1x32x128xbf16>
    %766 = vector.shape_cast %765 : vector<1x32x128xbf16> to vector<32x128xbf16>
    %cst_553 = arith.constant dense<0.000000e+00> : vector<16x128xf32>
    %767 = tpu.matmul %764, %766, %cst_553 {dimension_numbers = #tpu.dot_dimension_numbers<[1], [0], [0], [1], [0, 0, 1, 1], [], []>} : vector<16x32xbf16>, vector<32x128xbf16>, vector<16x128xf32> -> vector<16x128xf32>
    %c2_554 = arith.constant 2 : index
    %c0_555 = arith.constant 0 : index
    %c0_556 = arith.constant 0 : index
    %768 = vector.load %arg17[%c2_554, %c0_555, %c0_556] : memref<4x1x128xf32, #tpu.memory_space<vmem>>, vector<1x1x128xf32>
    %769 = vector.shape_cast %768 : vector<1x1x128xf32> to vector<1x128xf32>
    %770 = vector.broadcast %769 : vector<1x128xf32> to vector<16x128xf32>
    %771 = arith.addf %767, %770 : vector<16x128xf32>
    %cst_557 = arith.constant 0.000000e+00 : f32
    %772 = vector.broadcast %cst_557 : f32 to vector<16x128xf32>
    %773 = arith.maximumf %771, %772 : vector<16x128xf32>
    %774 = arith.truncf %773 : vector<16x128xf32> to vector<16x128xbf16>
    %c2_558 = arith.constant 2 : index
    %c0_559 = arith.constant 0 : index
    %c0_560 = arith.constant 0 : index
    %775 = vector.load %arg18[%c2_558, %c0_559, %c0_560] : memref<4x128x32xbf16, #tpu.memory_space<vmem>>, vector<1x128x32xbf16>
    %776 = vector.shape_cast %775 : vector<1x128x32xbf16> to vector<128x32xbf16>
    %cst_561 = arith.constant dense<0.000000e+00> : vector<16x32xf32>
    %777 = tpu.matmul %774, %776, %cst_561 {dimension_numbers = #tpu.dot_dimension_numbers<[1], [0], [0], [1], [0, 0, 1, 1], [], []>} : vector<16x128xbf16>, vector<128x32xbf16>, vector<16x32xf32> -> vector<16x32xf32>
    %c2_562 = arith.constant 2 : index
    %c0_563 = arith.constant 0 : index
    %c0_564 = arith.constant 0 : index
    %778 = vector.load %arg19[%c2_562, %c0_563, %c0_564] : memref<4x1x32xf32, #tpu.memory_space<vmem>>, vector<1x1x32xf32>
    %779 = vector.shape_cast %778 : vector<1x1x32xf32> to vector<1x32xf32>
    %780 = vector.broadcast %779 : vector<1x32xf32> to vector<16x32xf32>
    %781 = arith.addf %777, %780 : vector<16x32xf32>
    %782 = arith.addf %763, %781 : vector<16x32xf32>
    %c2_565 = arith.constant 2 : index
    %c0_566 = arith.constant 0 : index
    %c0_567 = arith.constant 0 : index
    %783 = vector.load %arg20[%c2_565, %c0_566, %c0_567] : memref<4x1x32xf32, #tpu.memory_space<vmem>>, vector<1x1x32xf32>
    %784 = vector.shape_cast %783 : vector<1x1x32xf32> to vector<1x32xf32>
    %c2_568 = arith.constant 2 : index
    %c0_569 = arith.constant 0 : index
    %c0_570 = arith.constant 0 : index
    %785 = vector.load %arg21[%c2_568, %c0_569, %c0_570] : memref<4x1x32xf32, #tpu.memory_space<vmem>>, vector<1x1x32xf32>
    %786 = vector.shape_cast %785 : vector<1x1x32xf32> to vector<1x32xf32>
    %cst_571 = arith.constant dense<0.000000e+00> : vector<16xf32>
    %787 = vector.multi_reduction <add>, %782, %cst_571 [1] : vector<16x32xf32> to vector<16xf32>
    %788 = vector.shape_cast %787 : vector<16xf32> to vector<16x1xf32>
    %cst_572 = arith.constant 3.200000e+01 : f32
    %789 = vector.broadcast %cst_572 : f32 to vector<16x1xf32>
    %790 = arith.divf %788, %789 : vector<16x1xf32>
    %791 = vector.broadcast %790 : vector<16x1xf32> to vector<16x32xf32>
    %792 = arith.subf %782, %791 : vector<16x32xf32>
    %793 = arith.mulf %792, %792 : vector<16x32xf32>
    %cst_573 = arith.constant dense<0.000000e+00> : vector<16xf32>
    %794 = vector.multi_reduction <add>, %793, %cst_573 [1] : vector<16x32xf32> to vector<16xf32>
    %795 = vector.shape_cast %794 : vector<16xf32> to vector<16x1xf32>
    %cst_574 = arith.constant 3.200000e+01 : f32
    %796 = vector.broadcast %cst_574 : f32 to vector<16x1xf32>
    %797 = arith.divf %795, %796 : vector<16x1xf32>
    %798 = vector.broadcast %790 : vector<16x1xf32> to vector<16x32xf32>
    %799 = arith.subf %782, %798 : vector<16x32xf32>
    %cst_575 = arith.constant 9.99999974E-6 : f32
    %800 = vector.broadcast %cst_575 : f32 to vector<16x1xf32>
    %801 = arith.addf %797, %800 : vector<16x1xf32>
    %802 = math.rsqrt %801 : vector<16x1xf32>
    %803 = vector.broadcast %802 : vector<16x1xf32> to vector<16x32xf32>
    %804 = arith.mulf %799, %803 : vector<16x32xf32>
    %805 = vector.broadcast %784 : vector<1x32xf32> to vector<16x32xf32>
    %806 = arith.mulf %804, %805 : vector<16x32xf32>
    %807 = vector.broadcast %786 : vector<1x32xf32> to vector<16x32xf32>
    %808 = arith.addf %806, %807 : vector<16x32xf32>
    %809 = arith.truncf %808 : vector<16x32xf32> to vector<16x32xbf16>
    %cst_576 = arith.constant 0.000000e+00 : f32
    %810 = vector.broadcast %cst_576 : f32 to vector<16x32xf32>
    %c3_577 = arith.constant 3 : index
    %c0_578 = arith.constant 0 : index
    %c0_579 = arith.constant 0 : index
    %c0_580 = arith.constant 0 : index
    %811 = vector.load %arg6[%c3_577, %c0_578, %c0_579, %c0_580] : memref<4x4x32x8xbf16, #tpu.memory_space<vmem>>, vector<1x1x32x8xbf16>
    %812 = vector.shape_cast %811 : vector<1x1x32x8xbf16> to vector<32x8xbf16>
    %cst_581 = arith.constant dense<0.000000e+00> : vector<16x8xf32>
    %813 = tpu.matmul %809, %812, %cst_581 {dimension_numbers = #tpu.dot_dimension_numbers<[1], [0], [0], [1], [0, 0, 1, 1], [], []>} : vector<16x32xbf16>, vector<32x8xbf16>, vector<16x8xf32> -> vector<16x8xf32>
    %c3_582 = arith.constant 3 : index
    %c0_583 = arith.constant 0 : index
    %c0_584 = arith.constant 0 : index
    %c0_585 = arith.constant 0 : index
    %814 = vector.load %arg9[%c3_582, %c0_583, %c0_584, %c0_585] : memref<4x4x1x8xf32, #tpu.memory_space<vmem>>, vector<1x1x1x8xf32>
    %815 = vector.shape_cast %814 : vector<1x1x1x8xf32> to vector<1x8xf32>
    %816 = vector.broadcast %815 : vector<1x8xf32> to vector<16x8xf32>
    %817 = arith.addf %813, %816 : vector<16x8xf32>
    %c3_586 = arith.constant 3 : index
    %c0_587 = arith.constant 0 : index
    %c0_588 = arith.constant 0 : index
    %c0_589 = arith.constant 0 : index
    %818 = vector.load %arg7[%c3_586, %c0_587, %c0_588, %c0_589] : memref<4x4x32x8xbf16, #tpu.memory_space<vmem>>, vector<1x1x32x8xbf16>
    %819 = vector.shape_cast %818 : vector<1x1x32x8xbf16> to vector<32x8xbf16>
    %cst_590 = arith.constant dense<0.000000e+00> : vector<16x8xf32>
    %820 = tpu.matmul %809, %819, %cst_590 {dimension_numbers = #tpu.dot_dimension_numbers<[1], [0], [0], [1], [0, 0, 1, 1], [], []>} : vector<16x32xbf16>, vector<32x8xbf16>, vector<16x8xf32> -> vector<16x8xf32>
    %c3_591 = arith.constant 3 : index
    %c0_592 = arith.constant 0 : index
    %c0_593 = arith.constant 0 : index
    %c0_594 = arith.constant 0 : index
    %821 = vector.load %arg10[%c3_591, %c0_592, %c0_593, %c0_594] : memref<4x4x1x8xf32, #tpu.memory_space<vmem>>, vector<1x1x1x8xf32>
    %822 = vector.shape_cast %821 : vector<1x1x1x8xf32> to vector<1x8xf32>
    %823 = vector.broadcast %822 : vector<1x8xf32> to vector<16x8xf32>
    %824 = arith.addf %820, %823 : vector<16x8xf32>
    %c3_595 = arith.constant 3 : index
    %c0_596 = arith.constant 0 : index
    %c0_597 = arith.constant 0 : index
    %c0_598 = arith.constant 0 : index
    %825 = vector.load %arg8[%c3_595, %c0_596, %c0_597, %c0_598] : memref<4x4x32x8xbf16, #tpu.memory_space<vmem>>, vector<1x1x32x8xbf16>
    %826 = vector.shape_cast %825 : vector<1x1x32x8xbf16> to vector<32x8xbf16>
    %cst_599 = arith.constant dense<0.000000e+00> : vector<16x8xf32>
    %827 = tpu.matmul %809, %826, %cst_599 {dimension_numbers = #tpu.dot_dimension_numbers<[1], [0], [0], [1], [0, 0, 1, 1], [], []>} : vector<16x32xbf16>, vector<32x8xbf16>, vector<16x8xf32> -> vector<16x8xf32>
    %c3_600 = arith.constant 3 : index
    %c0_601 = arith.constant 0 : index
    %c0_602 = arith.constant 0 : index
    %c0_603 = arith.constant 0 : index
    %828 = vector.load %arg11[%c3_600, %c0_601, %c0_602, %c0_603] : memref<4x4x1x8xf32, #tpu.memory_space<vmem>>, vector<1x1x1x8xf32>
    %829 = vector.shape_cast %828 : vector<1x1x1x8xf32> to vector<1x8xf32>
    %830 = vector.broadcast %829 : vector<1x8xf32> to vector<16x8xf32>
    %831 = arith.addf %827, %830 : vector<16x8xf32>
    %832 = arith.truncf %817 : vector<16x8xf32> to vector<16x8xbf16>
    %833 = arith.truncf %824 : vector<16x8xf32> to vector<16x8xbf16>
    %cst_604 = arith.constant dense<0.000000e+00> : vector<16x16xf32>
    %834 = tpu.matmul %832, %833, %cst_604 {dimension_numbers = #tpu.dot_dimension_numbers<[1], [1], [0], [0], [0, 0, 1, 0], [], []>} : vector<16x8xbf16>, vector<16x8xbf16>, vector<16x16xf32> -> vector<16x16xf32>
    %835 = arith.addf %834, %36 : vector<16x16xf32>
    %cst_605 = arith.constant dense<0xFF800000> : vector<16xf32>
    %836 = vector.multi_reduction <maximumf>, %835, %cst_605 [1] : vector<16x16xf32> to vector<16xf32>
    %837 = vector.shape_cast %836 : vector<16xf32> to vector<16x1xf32>
    %838 = vector.broadcast %837 : vector<16x1xf32> to vector<16x16xf32>
    %839 = arith.subf %835, %838 : vector<16x16xf32>
    %840 = math.exp %839 : vector<16x16xf32>
    %cst_606 = arith.constant dense<0.000000e+00> : vector<16xf32>
    %841 = vector.multi_reduction <add>, %840, %cst_606 [1] : vector<16x16xf32> to vector<16xf32>
    %842 = vector.shape_cast %841 : vector<16xf32> to vector<16x1xf32>
    %843 = tpu.reciprocal %842 {approx = true} : vector<16x1xf32> -> vector<16x1xf32>
    %844 = vector.broadcast %843 : vector<16x1xf32> to vector<16x16xf32>
    %845 = arith.mulf %840, %844 : vector<16x16xf32>
    %846 = arith.truncf %845 : vector<16x16xf32> to vector<16x16xbf16>
    %847 = arith.truncf %831 : vector<16x8xf32> to vector<16x8xbf16>
    %cst_607 = arith.constant dense<0.000000e+00> : vector<16x8xf32>
    %848 = tpu.matmul %846, %847, %cst_607 {dimension_numbers = #tpu.dot_dimension_numbers<[1], [0], [0], [1], [0, 0, 1, 1], [], []>} : vector<16x16xbf16>, vector<16x8xbf16>, vector<16x8xf32> -> vector<16x8xf32>
    %849 = arith.truncf %848 : vector<16x8xf32> to vector<16x8xbf16>
    %c3_608 = arith.constant 3 : index
    %c0_609 = arith.constant 0 : index
    %c0_610 = arith.constant 0 : index
    %c0_611 = arith.constant 0 : index
    %850 = vector.load %arg12[%c3_608, %c0_609, %c0_610, %c0_611] : memref<4x4x8x32xbf16, #tpu.memory_space<vmem>>, vector<1x1x8x32xbf16>
    %851 = vector.shape_cast %850 : vector<1x1x8x32xbf16> to vector<8x32xbf16>
    %cst_612 = arith.constant dense<0.000000e+00> : vector<16x32xf32>
    %852 = tpu.matmul %849, %851, %cst_612 {dimension_numbers = #tpu.dot_dimension_numbers<[1], [0], [0], [1], [0, 0, 1, 1], [], []>} : vector<16x8xbf16>, vector<8x32xbf16>, vector<16x32xf32> -> vector<16x32xf32>
    %853 = arith.addf %810, %852 : vector<16x32xf32>
    %c3_613 = arith.constant 3 : index
    %c1_614 = arith.constant 1 : index
    %c0_615 = arith.constant 0 : index
    %c0_616 = arith.constant 0 : index
    %854 = vector.load %arg6[%c3_613, %c1_614, %c0_615, %c0_616] : memref<4x4x32x8xbf16, #tpu.memory_space<vmem>>, vector<1x1x32x8xbf16>
    %855 = vector.shape_cast %854 : vector<1x1x32x8xbf16> to vector<32x8xbf16>
    %cst_617 = arith.constant dense<0.000000e+00> : vector<16x8xf32>
    %856 = tpu.matmul %809, %855, %cst_617 {dimension_numbers = #tpu.dot_dimension_numbers<[1], [0], [0], [1], [0, 0, 1, 1], [], []>} : vector<16x32xbf16>, vector<32x8xbf16>, vector<16x8xf32> -> vector<16x8xf32>
    %c3_618 = arith.constant 3 : index
    %c1_619 = arith.constant 1 : index
    %c0_620 = arith.constant 0 : index
    %c0_621 = arith.constant 0 : index
    %857 = vector.load %arg9[%c3_618, %c1_619, %c0_620, %c0_621] : memref<4x4x1x8xf32, #tpu.memory_space<vmem>>, vector<1x1x1x8xf32>
    %858 = vector.shape_cast %857 : vector<1x1x1x8xf32> to vector<1x8xf32>
    %859 = vector.broadcast %858 : vector<1x8xf32> to vector<16x8xf32>
    %860 = arith.addf %856, %859 : vector<16x8xf32>
    %c3_622 = arith.constant 3 : index
    %c1_623 = arith.constant 1 : index
    %c0_624 = arith.constant 0 : index
    %c0_625 = arith.constant 0 : index
    %861 = vector.load %arg7[%c3_622, %c1_623, %c0_624, %c0_625] : memref<4x4x32x8xbf16, #tpu.memory_space<vmem>>, vector<1x1x32x8xbf16>
    %862 = vector.shape_cast %861 : vector<1x1x32x8xbf16> to vector<32x8xbf16>
    %cst_626 = arith.constant dense<0.000000e+00> : vector<16x8xf32>
    %863 = tpu.matmul %809, %862, %cst_626 {dimension_numbers = #tpu.dot_dimension_numbers<[1], [0], [0], [1], [0, 0, 1, 1], [], []>} : vector<16x32xbf16>, vector<32x8xbf16>, vector<16x8xf32> -> vector<16x8xf32>
    %c3_627 = arith.constant 3 : index
    %c1_628 = arith.constant 1 : index
    %c0_629 = arith.constant 0 : index
    %c0_630 = arith.constant 0 : index
    %864 = vector.load %arg10[%c3_627, %c1_628, %c0_629, %c0_630] : memref<4x4x1x8xf32, #tpu.memory_space<vmem>>, vector<1x1x1x8xf32>
    %865 = vector.shape_cast %864 : vector<1x1x1x8xf32> to vector<1x8xf32>
    %866 = vector.broadcast %865 : vector<1x8xf32> to vector<16x8xf32>
    %867 = arith.addf %863, %866 : vector<16x8xf32>
    %c3_631 = arith.constant 3 : index
    %c1_632 = arith.constant 1 : index
    %c0_633 = arith.constant 0 : index
    %c0_634 = arith.constant 0 : index
    %868 = vector.load %arg8[%c3_631, %c1_632, %c0_633, %c0_634] : memref<4x4x32x8xbf16, #tpu.memory_space<vmem>>, vector<1x1x32x8xbf16>
    %869 = vector.shape_cast %868 : vector<1x1x32x8xbf16> to vector<32x8xbf16>
    %cst_635 = arith.constant dense<0.000000e+00> : vector<16x8xf32>
    %870 = tpu.matmul %809, %869, %cst_635 {dimension_numbers = #tpu.dot_dimension_numbers<[1], [0], [0], [1], [0, 0, 1, 1], [], []>} : vector<16x32xbf16>, vector<32x8xbf16>, vector<16x8xf32> -> vector<16x8xf32>
    %c3_636 = arith.constant 3 : index
    %c1_637 = arith.constant 1 : index
    %c0_638 = arith.constant 0 : index
    %c0_639 = arith.constant 0 : index
    %871 = vector.load %arg11[%c3_636, %c1_637, %c0_638, %c0_639] : memref<4x4x1x8xf32, #tpu.memory_space<vmem>>, vector<1x1x1x8xf32>
    %872 = vector.shape_cast %871 : vector<1x1x1x8xf32> to vector<1x8xf32>
    %873 = vector.broadcast %872 : vector<1x8xf32> to vector<16x8xf32>
    %874 = arith.addf %870, %873 : vector<16x8xf32>
    %875 = arith.truncf %860 : vector<16x8xf32> to vector<16x8xbf16>
    %876 = arith.truncf %867 : vector<16x8xf32> to vector<16x8xbf16>
    %cst_640 = arith.constant dense<0.000000e+00> : vector<16x16xf32>
    %877 = tpu.matmul %875, %876, %cst_640 {dimension_numbers = #tpu.dot_dimension_numbers<[1], [1], [0], [0], [0, 0, 1, 0], [], []>} : vector<16x8xbf16>, vector<16x8xbf16>, vector<16x16xf32> -> vector<16x16xf32>
    %878 = arith.addf %877, %36 : vector<16x16xf32>
    %cst_641 = arith.constant dense<0xFF800000> : vector<16xf32>
    %879 = vector.multi_reduction <maximumf>, %878, %cst_641 [1] : vector<16x16xf32> to vector<16xf32>
    %880 = vector.shape_cast %879 : vector<16xf32> to vector<16x1xf32>
    %881 = vector.broadcast %880 : vector<16x1xf32> to vector<16x16xf32>
    %882 = arith.subf %878, %881 : vector<16x16xf32>
    %883 = math.exp %882 : vector<16x16xf32>
    %cst_642 = arith.constant dense<0.000000e+00> : vector<16xf32>
    %884 = vector.multi_reduction <add>, %883, %cst_642 [1] : vector<16x16xf32> to vector<16xf32>
    %885 = vector.shape_cast %884 : vector<16xf32> to vector<16x1xf32>
    %886 = tpu.reciprocal %885 {approx = true} : vector<16x1xf32> -> vector<16x1xf32>
    %887 = vector.broadcast %886 : vector<16x1xf32> to vector<16x16xf32>
    %888 = arith.mulf %883, %887 : vector<16x16xf32>
    %889 = arith.truncf %888 : vector<16x16xf32> to vector<16x16xbf16>
    %890 = arith.truncf %874 : vector<16x8xf32> to vector<16x8xbf16>
    %cst_643 = arith.constant dense<0.000000e+00> : vector<16x8xf32>
    %891 = tpu.matmul %889, %890, %cst_643 {dimension_numbers = #tpu.dot_dimension_numbers<[1], [0], [0], [1], [0, 0, 1, 1], [], []>} : vector<16x16xbf16>, vector<16x8xbf16>, vector<16x8xf32> -> vector<16x8xf32>
    %892 = arith.truncf %891 : vector<16x8xf32> to vector<16x8xbf16>
    %c3_644 = arith.constant 3 : index
    %c1_645 = arith.constant 1 : index
    %c0_646 = arith.constant 0 : index
    %c0_647 = arith.constant 0 : index
    %893 = vector.load %arg12[%c3_644, %c1_645, %c0_646, %c0_647] : memref<4x4x8x32xbf16, #tpu.memory_space<vmem>>, vector<1x1x8x32xbf16>
    %894 = vector.shape_cast %893 : vector<1x1x8x32xbf16> to vector<8x32xbf16>
    %cst_648 = arith.constant dense<0.000000e+00> : vector<16x32xf32>
    %895 = tpu.matmul %892, %894, %cst_648 {dimension_numbers = #tpu.dot_dimension_numbers<[1], [0], [0], [1], [0, 0, 1, 1], [], []>} : vector<16x8xbf16>, vector<8x32xbf16>, vector<16x32xf32> -> vector<16x32xf32>
    %896 = arith.addf %853, %895 : vector<16x32xf32>
    %c3_649 = arith.constant 3 : index
    %c2_650 = arith.constant 2 : index
    %c0_651 = arith.constant 0 : index
    %c0_652 = arith.constant 0 : index
    %897 = vector.load %arg6[%c3_649, %c2_650, %c0_651, %c0_652] : memref<4x4x32x8xbf16, #tpu.memory_space<vmem>>, vector<1x1x32x8xbf16>
    %898 = vector.shape_cast %897 : vector<1x1x32x8xbf16> to vector<32x8xbf16>
    %cst_653 = arith.constant dense<0.000000e+00> : vector<16x8xf32>
    %899 = tpu.matmul %809, %898, %cst_653 {dimension_numbers = #tpu.dot_dimension_numbers<[1], [0], [0], [1], [0, 0, 1, 1], [], []>} : vector<16x32xbf16>, vector<32x8xbf16>, vector<16x8xf32> -> vector<16x8xf32>
    %c3_654 = arith.constant 3 : index
    %c2_655 = arith.constant 2 : index
    %c0_656 = arith.constant 0 : index
    %c0_657 = arith.constant 0 : index
    %900 = vector.load %arg9[%c3_654, %c2_655, %c0_656, %c0_657] : memref<4x4x1x8xf32, #tpu.memory_space<vmem>>, vector<1x1x1x8xf32>
    %901 = vector.shape_cast %900 : vector<1x1x1x8xf32> to vector<1x8xf32>
    %902 = vector.broadcast %901 : vector<1x8xf32> to vector<16x8xf32>
    %903 = arith.addf %899, %902 : vector<16x8xf32>
    %c3_658 = arith.constant 3 : index
    %c2_659 = arith.constant 2 : index
    %c0_660 = arith.constant 0 : index
    %c0_661 = arith.constant 0 : index
    %904 = vector.load %arg7[%c3_658, %c2_659, %c0_660, %c0_661] : memref<4x4x32x8xbf16, #tpu.memory_space<vmem>>, vector<1x1x32x8xbf16>
    %905 = vector.shape_cast %904 : vector<1x1x32x8xbf16> to vector<32x8xbf16>
    %cst_662 = arith.constant dense<0.000000e+00> : vector<16x8xf32>
    %906 = tpu.matmul %809, %905, %cst_662 {dimension_numbers = #tpu.dot_dimension_numbers<[1], [0], [0], [1], [0, 0, 1, 1], [], []>} : vector<16x32xbf16>, vector<32x8xbf16>, vector<16x8xf32> -> vector<16x8xf32>
    %c3_663 = arith.constant 3 : index
    %c2_664 = arith.constant 2 : index
    %c0_665 = arith.constant 0 : index
    %c0_666 = arith.constant 0 : index
    %907 = vector.load %arg10[%c3_663, %c2_664, %c0_665, %c0_666] : memref<4x4x1x8xf32, #tpu.memory_space<vmem>>, vector<1x1x1x8xf32>
    %908 = vector.shape_cast %907 : vector<1x1x1x8xf32> to vector<1x8xf32>
    %909 = vector.broadcast %908 : vector<1x8xf32> to vector<16x8xf32>
    %910 = arith.addf %906, %909 : vector<16x8xf32>
    %c3_667 = arith.constant 3 : index
    %c2_668 = arith.constant 2 : index
    %c0_669 = arith.constant 0 : index
    %c0_670 = arith.constant 0 : index
    %911 = vector.load %arg8[%c3_667, %c2_668, %c0_669, %c0_670] : memref<4x4x32x8xbf16, #tpu.memory_space<vmem>>, vector<1x1x32x8xbf16>
    %912 = vector.shape_cast %911 : vector<1x1x32x8xbf16> to vector<32x8xbf16>
    %cst_671 = arith.constant dense<0.000000e+00> : vector<16x8xf32>
    %913 = tpu.matmul %809, %912, %cst_671 {dimension_numbers = #tpu.dot_dimension_numbers<[1], [0], [0], [1], [0, 0, 1, 1], [], []>} : vector<16x32xbf16>, vector<32x8xbf16>, vector<16x8xf32> -> vector<16x8xf32>
    %c3_672 = arith.constant 3 : index
    %c2_673 = arith.constant 2 : index
    %c0_674 = arith.constant 0 : index
    %c0_675 = arith.constant 0 : index
    %914 = vector.load %arg11[%c3_672, %c2_673, %c0_674, %c0_675] : memref<4x4x1x8xf32, #tpu.memory_space<vmem>>, vector<1x1x1x8xf32>
    %915 = vector.shape_cast %914 : vector<1x1x1x8xf32> to vector<1x8xf32>
    %916 = vector.broadcast %915 : vector<1x8xf32> to vector<16x8xf32>
    %917 = arith.addf %913, %916 : vector<16x8xf32>
    %918 = arith.truncf %903 : vector<16x8xf32> to vector<16x8xbf16>
    %919 = arith.truncf %910 : vector<16x8xf32> to vector<16x8xbf16>
    %cst_676 = arith.constant dense<0.000000e+00> : vector<16x16xf32>
    %920 = tpu.matmul %918, %919, %cst_676 {dimension_numbers = #tpu.dot_dimension_numbers<[1], [1], [0], [0], [0, 0, 1, 0], [], []>} : vector<16x8xbf16>, vector<16x8xbf16>, vector<16x16xf32> -> vector<16x16xf32>
    %921 = arith.addf %920, %36 : vector<16x16xf32>
    %cst_677 = arith.constant dense<0xFF800000> : vector<16xf32>
    %922 = vector.multi_reduction <maximumf>, %921, %cst_677 [1] : vector<16x16xf32> to vector<16xf32>
    %923 = vector.shape_cast %922 : vector<16xf32> to vector<16x1xf32>
    %924 = vector.broadcast %923 : vector<16x1xf32> to vector<16x16xf32>
    %925 = arith.subf %921, %924 : vector<16x16xf32>
    %926 = math.exp %925 : vector<16x16xf32>
    %cst_678 = arith.constant dense<0.000000e+00> : vector<16xf32>
    %927 = vector.multi_reduction <add>, %926, %cst_678 [1] : vector<16x16xf32> to vector<16xf32>
    %928 = vector.shape_cast %927 : vector<16xf32> to vector<16x1xf32>
    %929 = tpu.reciprocal %928 {approx = true} : vector<16x1xf32> -> vector<16x1xf32>
    %930 = vector.broadcast %929 : vector<16x1xf32> to vector<16x16xf32>
    %931 = arith.mulf %926, %930 : vector<16x16xf32>
    %932 = arith.truncf %931 : vector<16x16xf32> to vector<16x16xbf16>
    %933 = arith.truncf %917 : vector<16x8xf32> to vector<16x8xbf16>
    %cst_679 = arith.constant dense<0.000000e+00> : vector<16x8xf32>
    %934 = tpu.matmul %932, %933, %cst_679 {dimension_numbers = #tpu.dot_dimension_numbers<[1], [0], [0], [1], [0, 0, 1, 1], [], []>} : vector<16x16xbf16>, vector<16x8xbf16>, vector<16x8xf32> -> vector<16x8xf32>
    %935 = arith.truncf %934 : vector<16x8xf32> to vector<16x8xbf16>
    %c3_680 = arith.constant 3 : index
    %c2_681 = arith.constant 2 : index
    %c0_682 = arith.constant 0 : index
    %c0_683 = arith.constant 0 : index
    %936 = vector.load %arg12[%c3_680, %c2_681, %c0_682, %c0_683] : memref<4x4x8x32xbf16, #tpu.memory_space<vmem>>, vector<1x1x8x32xbf16>
    %937 = vector.shape_cast %936 : vector<1x1x8x32xbf16> to vector<8x32xbf16>
    %cst_684 = arith.constant dense<0.000000e+00> : vector<16x32xf32>
    %938 = tpu.matmul %935, %937, %cst_684 {dimension_numbers = #tpu.dot_dimension_numbers<[1], [0], [0], [1], [0, 0, 1, 1], [], []>} : vector<16x8xbf16>, vector<8x32xbf16>, vector<16x32xf32> -> vector<16x32xf32>
    %939 = arith.addf %896, %938 : vector<16x32xf32>
    %c3_685 = arith.constant 3 : index
    %c3_686 = arith.constant 3 : index
    %c0_687 = arith.constant 0 : index
    %c0_688 = arith.constant 0 : index
    %940 = vector.load %arg6[%c3_685, %c3_686, %c0_687, %c0_688] : memref<4x4x32x8xbf16, #tpu.memory_space<vmem>>, vector<1x1x32x8xbf16>
    %941 = vector.shape_cast %940 : vector<1x1x32x8xbf16> to vector<32x8xbf16>
    %cst_689 = arith.constant dense<0.000000e+00> : vector<16x8xf32>
    %942 = tpu.matmul %809, %941, %cst_689 {dimension_numbers = #tpu.dot_dimension_numbers<[1], [0], [0], [1], [0, 0, 1, 1], [], []>} : vector<16x32xbf16>, vector<32x8xbf16>, vector<16x8xf32> -> vector<16x8xf32>
    %c3_690 = arith.constant 3 : index
    %c3_691 = arith.constant 3 : index
    %c0_692 = arith.constant 0 : index
    %c0_693 = arith.constant 0 : index
    %943 = vector.load %arg9[%c3_690, %c3_691, %c0_692, %c0_693] : memref<4x4x1x8xf32, #tpu.memory_space<vmem>>, vector<1x1x1x8xf32>
    %944 = vector.shape_cast %943 : vector<1x1x1x8xf32> to vector<1x8xf32>
    %945 = vector.broadcast %944 : vector<1x8xf32> to vector<16x8xf32>
    %946 = arith.addf %942, %945 : vector<16x8xf32>
    %c3_694 = arith.constant 3 : index
    %c3_695 = arith.constant 3 : index
    %c0_696 = arith.constant 0 : index
    %c0_697 = arith.constant 0 : index
    %947 = vector.load %arg7[%c3_694, %c3_695, %c0_696, %c0_697] : memref<4x4x32x8xbf16, #tpu.memory_space<vmem>>, vector<1x1x32x8xbf16>
    %948 = vector.shape_cast %947 : vector<1x1x32x8xbf16> to vector<32x8xbf16>
    %cst_698 = arith.constant dense<0.000000e+00> : vector<16x8xf32>
    %949 = tpu.matmul %809, %948, %cst_698 {dimension_numbers = #tpu.dot_dimension_numbers<[1], [0], [0], [1], [0, 0, 1, 1], [], []>} : vector<16x32xbf16>, vector<32x8xbf16>, vector<16x8xf32> -> vector<16x8xf32>
    %c3_699 = arith.constant 3 : index
    %c3_700 = arith.constant 3 : index
    %c0_701 = arith.constant 0 : index
    %c0_702 = arith.constant 0 : index
    %950 = vector.load %arg10[%c3_699, %c3_700, %c0_701, %c0_702] : memref<4x4x1x8xf32, #tpu.memory_space<vmem>>, vector<1x1x1x8xf32>
    %951 = vector.shape_cast %950 : vector<1x1x1x8xf32> to vector<1x8xf32>
    %952 = vector.broadcast %951 : vector<1x8xf32> to vector<16x8xf32>
    %953 = arith.addf %949, %952 : vector<16x8xf32>
    %c3_703 = arith.constant 3 : index
    %c3_704 = arith.constant 3 : index
    %c0_705 = arith.constant 0 : index
    %c0_706 = arith.constant 0 : index
    %954 = vector.load %arg8[%c3_703, %c3_704, %c0_705, %c0_706] : memref<4x4x32x8xbf16, #tpu.memory_space<vmem>>, vector<1x1x32x8xbf16>
    %955 = vector.shape_cast %954 : vector<1x1x32x8xbf16> to vector<32x8xbf16>
    %cst_707 = arith.constant dense<0.000000e+00> : vector<16x8xf32>
    %956 = tpu.matmul %809, %955, %cst_707 {dimension_numbers = #tpu.dot_dimension_numbers<[1], [0], [0], [1], [0, 0, 1, 1], [], []>} : vector<16x32xbf16>, vector<32x8xbf16>, vector<16x8xf32> -> vector<16x8xf32>
    %c3_708 = arith.constant 3 : index
    %c3_709 = arith.constant 3 : index
    %c0_710 = arith.constant 0 : index
    %c0_711 = arith.constant 0 : index
    %957 = vector.load %arg11[%c3_708, %c3_709, %c0_710, %c0_711] : memref<4x4x1x8xf32, #tpu.memory_space<vmem>>, vector<1x1x1x8xf32>
    %958 = vector.shape_cast %957 : vector<1x1x1x8xf32> to vector<1x8xf32>
    %959 = vector.broadcast %958 : vector<1x8xf32> to vector<16x8xf32>
    %960 = arith.addf %956, %959 : vector<16x8xf32>
    %961 = arith.truncf %946 : vector<16x8xf32> to vector<16x8xbf16>
    %962 = arith.truncf %953 : vector<16x8xf32> to vector<16x8xbf16>
    %cst_712 = arith.constant dense<0.000000e+00> : vector<16x16xf32>
    %963 = tpu.matmul %961, %962, %cst_712 {dimension_numbers = #tpu.dot_dimension_numbers<[1], [1], [0], [0], [0, 0, 1, 0], [], []>} : vector<16x8xbf16>, vector<16x8xbf16>, vector<16x16xf32> -> vector<16x16xf32>
    %964 = arith.addf %963, %36 : vector<16x16xf32>
    %cst_713 = arith.constant dense<0xFF800000> : vector<16xf32>
    %965 = vector.multi_reduction <maximumf>, %964, %cst_713 [1] : vector<16x16xf32> to vector<16xf32>
    %966 = vector.shape_cast %965 : vector<16xf32> to vector<16x1xf32>
    %967 = vector.broadcast %966 : vector<16x1xf32> to vector<16x16xf32>
    %968 = arith.subf %964, %967 : vector<16x16xf32>
    %969 = math.exp %968 : vector<16x16xf32>
    %cst_714 = arith.constant dense<0.000000e+00> : vector<16xf32>
    %970 = vector.multi_reduction <add>, %969, %cst_714 [1] : vector<16x16xf32> to vector<16xf32>
    %971 = vector.shape_cast %970 : vector<16xf32> to vector<16x1xf32>
    %972 = tpu.reciprocal %971 {approx = true} : vector<16x1xf32> -> vector<16x1xf32>
    %973 = vector.broadcast %972 : vector<16x1xf32> to vector<16x16xf32>
    %974 = arith.mulf %969, %973 : vector<16x16xf32>
    %975 = arith.truncf %974 : vector<16x16xf32> to vector<16x16xbf16>
    %976 = arith.truncf %960 : vector<16x8xf32> to vector<16x8xbf16>
    %cst_715 = arith.constant dense<0.000000e+00> : vector<16x8xf32>
    %977 = tpu.matmul %975, %976, %cst_715 {dimension_numbers = #tpu.dot_dimension_numbers<[1], [0], [0], [1], [0, 0, 1, 1], [], []>} : vector<16x16xbf16>, vector<16x8xbf16>, vector<16x8xf32> -> vector<16x8xf32>
    %978 = arith.truncf %977 : vector<16x8xf32> to vector<16x8xbf16>
    %c3_716 = arith.constant 3 : index
    %c3_717 = arith.constant 3 : index
    %c0_718 = arith.constant 0 : index
    %c0_719 = arith.constant 0 : index
    %979 = vector.load %arg12[%c3_716, %c3_717, %c0_718, %c0_719] : memref<4x4x8x32xbf16, #tpu.memory_space<vmem>>, vector<1x1x8x32xbf16>
    %980 = vector.shape_cast %979 : vector<1x1x8x32xbf16> to vector<8x32xbf16>
    %cst_720 = arith.constant dense<0.000000e+00> : vector<16x32xf32>
    %981 = tpu.matmul %978, %980, %cst_720 {dimension_numbers = #tpu.dot_dimension_numbers<[1], [0], [0], [1], [0, 0, 1, 1], [], []>} : vector<16x8xbf16>, vector<8x32xbf16>, vector<16x32xf32> -> vector<16x32xf32>
    %982 = arith.addf %939, %981 : vector<16x32xf32>
    %c3_721 = arith.constant 3 : index
    %c0_722 = arith.constant 0 : index
    %c0_723 = arith.constant 0 : index
    %983 = vector.load %arg13[%c3_721, %c0_722, %c0_723] : memref<4x1x32xf32, #tpu.memory_space<vmem>>, vector<1x1x32xf32>
    %984 = vector.shape_cast %983 : vector<1x1x32xf32> to vector<1x32xf32>
    %985 = vector.broadcast %984 : vector<1x32xf32> to vector<16x32xf32>
    %986 = arith.addf %982, %985 : vector<16x32xf32>
    %987 = arith.addf %808, %986 : vector<16x32xf32>
    %c3_724 = arith.constant 3 : index
    %c0_725 = arith.constant 0 : index
    %c0_726 = arith.constant 0 : index
    %988 = vector.load %arg14[%c3_724, %c0_725, %c0_726] : memref<4x1x32xf32, #tpu.memory_space<vmem>>, vector<1x1x32xf32>
    %989 = vector.shape_cast %988 : vector<1x1x32xf32> to vector<1x32xf32>
    %c3_727 = arith.constant 3 : index
    %c0_728 = arith.constant 0 : index
    %c0_729 = arith.constant 0 : index
    %990 = vector.load %arg15[%c3_727, %c0_728, %c0_729] : memref<4x1x32xf32, #tpu.memory_space<vmem>>, vector<1x1x32xf32>
    %991 = vector.shape_cast %990 : vector<1x1x32xf32> to vector<1x32xf32>
    %cst_730 = arith.constant dense<0.000000e+00> : vector<16xf32>
    %992 = vector.multi_reduction <add>, %987, %cst_730 [1] : vector<16x32xf32> to vector<16xf32>
    %993 = vector.shape_cast %992 : vector<16xf32> to vector<16x1xf32>
    %cst_731 = arith.constant 3.200000e+01 : f32
    %994 = vector.broadcast %cst_731 : f32 to vector<16x1xf32>
    %995 = arith.divf %993, %994 : vector<16x1xf32>
    %996 = vector.broadcast %995 : vector<16x1xf32> to vector<16x32xf32>
    %997 = arith.subf %987, %996 : vector<16x32xf32>
    %998 = arith.mulf %997, %997 : vector<16x32xf32>
    %cst_732 = arith.constant dense<0.000000e+00> : vector<16xf32>
    %999 = vector.multi_reduction <add>, %998, %cst_732 [1] : vector<16x32xf32> to vector<16xf32>
    %1000 = vector.shape_cast %999 : vector<16xf32> to vector<16x1xf32>
    %cst_733 = arith.constant 3.200000e+01 : f32
    %1001 = vector.broadcast %cst_733 : f32 to vector<16x1xf32>
    %1002 = arith.divf %1000, %1001 : vector<16x1xf32>
    %1003 = vector.broadcast %995 : vector<16x1xf32> to vector<16x32xf32>
    %1004 = arith.subf %987, %1003 : vector<16x32xf32>
    %cst_734 = arith.constant 9.99999974E-6 : f32
    %1005 = vector.broadcast %cst_734 : f32 to vector<16x1xf32>
    %1006 = arith.addf %1002, %1005 : vector<16x1xf32>
    %1007 = math.rsqrt %1006 : vector<16x1xf32>
    %1008 = vector.broadcast %1007 : vector<16x1xf32> to vector<16x32xf32>
    %1009 = arith.mulf %1004, %1008 : vector<16x32xf32>
    %1010 = vector.broadcast %989 : vector<1x32xf32> to vector<16x32xf32>
    %1011 = arith.mulf %1009, %1010 : vector<16x32xf32>
    %1012 = vector.broadcast %991 : vector<1x32xf32> to vector<16x32xf32>
    %1013 = arith.addf %1011, %1012 : vector<16x32xf32>
    %1014 = arith.truncf %1013 : vector<16x32xf32> to vector<16x32xbf16>
    %c3_735 = arith.constant 3 : index
    %c0_736 = arith.constant 0 : index
    %c0_737 = arith.constant 0 : index
    %1015 = vector.load %arg16[%c3_735, %c0_736, %c0_737] : memref<4x32x128xbf16, #tpu.memory_space<vmem>>, vector<1x32x128xbf16>
    %1016 = vector.shape_cast %1015 : vector<1x32x128xbf16> to vector<32x128xbf16>
    %cst_738 = arith.constant dense<0.000000e+00> : vector<16x128xf32>
    %1017 = tpu.matmul %1014, %1016, %cst_738 {dimension_numbers = #tpu.dot_dimension_numbers<[1], [0], [0], [1], [0, 0, 1, 1], [], []>} : vector<16x32xbf16>, vector<32x128xbf16>, vector<16x128xf32> -> vector<16x128xf32>
    %c3_739 = arith.constant 3 : index
    %c0_740 = arith.constant 0 : index
    %c0_741 = arith.constant 0 : index
    %1018 = vector.load %arg17[%c3_739, %c0_740, %c0_741] : memref<4x1x128xf32, #tpu.memory_space<vmem>>, vector<1x1x128xf32>
    %1019 = vector.shape_cast %1018 : vector<1x1x128xf32> to vector<1x128xf32>
    %1020 = vector.broadcast %1019 : vector<1x128xf32> to vector<16x128xf32>
    %1021 = arith.addf %1017, %1020 : vector<16x128xf32>
    %cst_742 = arith.constant 0.000000e+00 : f32
    %1022 = vector.broadcast %cst_742 : f32 to vector<16x128xf32>
    %1023 = arith.maximumf %1021, %1022 : vector<16x128xf32>
    %1024 = arith.truncf %1023 : vector<16x128xf32> to vector<16x128xbf16>
    %c3_743 = arith.constant 3 : index
    %c0_744 = arith.constant 0 : index
    %c0_745 = arith.constant 0 : index
    %1025 = vector.load %arg18[%c3_743, %c0_744, %c0_745] : memref<4x128x32xbf16, #tpu.memory_space<vmem>>, vector<1x128x32xbf16>
    %1026 = vector.shape_cast %1025 : vector<1x128x32xbf16> to vector<128x32xbf16>
    %cst_746 = arith.constant dense<0.000000e+00> : vector<16x32xf32>
    %1027 = tpu.matmul %1024, %1026, %cst_746 {dimension_numbers = #tpu.dot_dimension_numbers<[1], [0], [0], [1], [0, 0, 1, 1], [], []>} : vector<16x128xbf16>, vector<128x32xbf16>, vector<16x32xf32> -> vector<16x32xf32>
    %c3_747 = arith.constant 3 : index
    %c0_748 = arith.constant 0 : index
    %c0_749 = arith.constant 0 : index
    %1028 = vector.load %arg19[%c3_747, %c0_748, %c0_749] : memref<4x1x32xf32, #tpu.memory_space<vmem>>, vector<1x1x32xf32>
    %1029 = vector.shape_cast %1028 : vector<1x1x32xf32> to vector<1x32xf32>
    %1030 = vector.broadcast %1029 : vector<1x32xf32> to vector<16x32xf32>
    %1031 = arith.addf %1027, %1030 : vector<16x32xf32>
    %1032 = arith.addf %1013, %1031 : vector<16x32xf32>
    %c3_750 = arith.constant 3 : index
    %c0_751 = arith.constant 0 : index
    %c0_752 = arith.constant 0 : index
    %1033 = vector.load %arg20[%c3_750, %c0_751, %c0_752] : memref<4x1x32xf32, #tpu.memory_space<vmem>>, vector<1x1x32xf32>
    %1034 = vector.shape_cast %1033 : vector<1x1x32xf32> to vector<1x32xf32>
    %c3_753 = arith.constant 3 : index
    %c0_754 = arith.constant 0 : index
    %c0_755 = arith.constant 0 : index
    %1035 = vector.load %arg21[%c3_753, %c0_754, %c0_755] : memref<4x1x32xf32, #tpu.memory_space<vmem>>, vector<1x1x32xf32>
    %1036 = vector.shape_cast %1035 : vector<1x1x32xf32> to vector<1x32xf32>
    %cst_756 = arith.constant dense<0.000000e+00> : vector<16xf32>
    %1037 = vector.multi_reduction <add>, %1032, %cst_756 [1] : vector<16x32xf32> to vector<16xf32>
    %1038 = vector.shape_cast %1037 : vector<16xf32> to vector<16x1xf32>
    %cst_757 = arith.constant 3.200000e+01 : f32
    %1039 = vector.broadcast %cst_757 : f32 to vector<16x1xf32>
    %1040 = arith.divf %1038, %1039 : vector<16x1xf32>
    %1041 = vector.broadcast %1040 : vector<16x1xf32> to vector<16x32xf32>
    %1042 = arith.subf %1032, %1041 : vector<16x32xf32>
    %1043 = arith.mulf %1042, %1042 : vector<16x32xf32>
    %cst_758 = arith.constant dense<0.000000e+00> : vector<16xf32>
    %1044 = vector.multi_reduction <add>, %1043, %cst_758 [1] : vector<16x32xf32> to vector<16xf32>
    %1045 = vector.shape_cast %1044 : vector<16xf32> to vector<16x1xf32>
    %cst_759 = arith.constant 3.200000e+01 : f32
    %1046 = vector.broadcast %cst_759 : f32 to vector<16x1xf32>
    %1047 = arith.divf %1045, %1046 : vector<16x1xf32>
    %1048 = vector.broadcast %1040 : vector<16x1xf32> to vector<16x32xf32>
    %1049 = arith.subf %1032, %1048 : vector<16x32xf32>
    %cst_760 = arith.constant 9.99999974E-6 : f32
    %1050 = vector.broadcast %cst_760 : f32 to vector<16x1xf32>
    %1051 = arith.addf %1047, %1050 : vector<16x1xf32>
    %1052 = math.rsqrt %1051 : vector<16x1xf32>
    %1053 = vector.broadcast %1052 : vector<16x1xf32> to vector<16x32xf32>
    %1054 = arith.mulf %1049, %1053 : vector<16x32xf32>
    %1055 = vector.broadcast %1034 : vector<1x32xf32> to vector<16x32xf32>
    %1056 = arith.mulf %1054, %1055 : vector<16x32xf32>
    %1057 = vector.broadcast %1036 : vector<1x32xf32> to vector<16x32xf32>
    %1058 = arith.addf %1056, %1057 : vector<16x32xf32>
    %1059 = arith.truncf %1058 : vector<16x32xf32> to vector<16x32xbf16>
    %c0_761 = arith.constant 0 : index
    %c0_762 = arith.constant 0 : index
    %1060 = vector.load %arg22[%c0_761, %c0_762] : memref<32x32xbf16, #tpu.memory_space<vmem>>, vector<32x32xbf16>
    %cst_763 = arith.constant dense<0.000000e+00> : vector<16x32xf32>
    %1061 = tpu.matmul %1059, %1060, %cst_763 {dimension_numbers = #tpu.dot_dimension_numbers<[1], [0], [0], [1], [0, 0, 1, 1], [], []>} : vector<16x32xbf16>, vector<32x32xbf16>, vector<16x32xf32> -> vector<16x32xf32>
    %c0_764 = arith.constant 0 : index
    %c0_765 = arith.constant 0 : index
    %1062 = vector.load %arg23[%c0_764, %c0_765] : memref<1x32xf32, #tpu.memory_space<vmem>>, vector<1x32xf32>
    %1063 = vector.broadcast %1062 : vector<1x32xf32> to vector<16x32xf32>
    %1064 = arith.addf %1061, %1063 : vector<16x32xf32>
    %c0_766 = arith.constant 0 : index
    %c0_767 = arith.constant 0 : index
    %1065 = vector.load %arg24[%c0_766, %c0_767] : memref<16x32xf32, #tpu.memory_space<vmem>>, vector<16x32xf32>
    tpu.vector_store %arg24[%c0_766, %c0_767], %1064 {strides = array<i32>} : memref<16x32xf32, #tpu.memory_space<vmem>>, vector<16x32xf32>,
    return
  }
}

</mosaic_0001>

<llo_original>
// kernel: tpu_custom_call.1
$region0: #{tpu_custom_call.1}
  #allocation0 [shape = 'u32[]', space=smem, size = 0x4, offset = 0x4, fixed_abs, tag = 'smem constant byte address 0x4 - core index']
  #allocation1 [shape = 'u32[144,128]{1,0:T(1,128)}', space=vmem, size = 0x12000, scoped, tag = 'internal scratch']
  %s0 = inlined_call_operand.vmem [shape: s32[16,1], index: 0, kind: input, shape index: {}]
  %s1 = inlined_call_operand.vmem [shape: f32[16,16], index: 1, kind: input, shape index: {}]
  %s2 = inlined_call_operand.vmem [shape: bf16[50,32], index: 2, kind: input, shape index: {}]
  %s3 = inlined_call_operand.vmem [shape: f32[16,32], index: 3, kind: input, shape index: {}]
  %s4 = inlined_call_operand.vmem [shape: f32[1,32], index: 4, kind: input, shape index: {}]
  %s5 = inlined_call_operand.vmem [shape: f32[1,32], index: 5, kind: input, shape index: {}]
  %s6 = inlined_call_operand.vmem [shape: bf16[4,4,32,8], index: 6, kind: input, shape index: {}]
  %s7 = inlined_call_operand.vmem [shape: bf16[4,4,32,8], index: 7, kind: input, shape index: {}]
  %s8 = inlined_call_operand.vmem [shape: bf16[4,4,32,8], index: 8, kind: input, shape index: {}]
  %s9 = inlined_call_operand.vmem [shape: f32[4,4,1,8], index: 9, kind: input, shape index: {}]
  %s10 = inlined_call_operand.vmem [shape: f32[4,4,1,8], index: 10, kind: input, shape index: {}]
  %s11 = inlined_call_operand.vmem [shape: f32[4,4,1,8], index: 11, kind: input, shape index: {}]
  %s12 = inlined_call_operand.vmem [shape: bf16[4,4,8,32], index: 12, kind: input, shape index: {}]
  %s13 = inlined_call_operand.vmem [shape: f32[4,1,32], index: 13, kind: input, shape index: {}]
  %s14 = inlined_call_operand.vmem [shape: f32[4,1,32], index: 14, kind: input, shape index: {}]
  %s15 = inlined_call_operand.vmem [shape: f32[4,1,32], index: 15, kind: input, shape index: {}]
  %s16 = inlined_call_operand.vmem [shape: bf16[4,32,128], index: 16, kind: input, shape index: {}]
  %s17 = inlined_call_operand.vmem [shape: f32[4,1,128], index: 17, kind: input, shape index: {}]
  %s18 = inlined_call_operand.vmem [shape: bf16[4,128,32], index: 18, kind: input, shape index: {}]
  %s19 = inlined_call_operand.vmem [shape: f32[4,1,32], index: 19, kind: input, shape index: {}]
  %s20 = inlined_call_operand.vmem [shape: f32[4,1,32], index: 20, kind: input, shape index: {}]
  %s21 = inlined_call_operand.vmem [shape: f32[4,1,32], index: 21, kind: input, shape index: {}]
  %s22 = inlined_call_operand.vmem [shape: bf16[32,32], index: 22, kind: input, shape index: {}]
  %s23 = inlined_call_operand.vmem [shape: f32[1,32], index: 23, kind: input, shape index: {}]
  %s24 = inlined_call_operand.hbm [shape: f32[16,32], index: 24, kind: output, shape index: {}]
  %s25 = sld [smem:[#allocation0]]
  $region106: #{tpu_custom_call.1} parent=0
    _
  %s27 = ssub.s32 1, %s25
  %s28 = scalar_select 0, %s27, %s25
  $region1: #{tpu_custom_call.1} parent=0
    #allocation2 [shape = 'u8[8192]{0}', space=vmem, size = 0x2000, scoped, tag = 'output window, operand 0, single buffered']
    #allocation3 [shape = 's32[1]{0}', space=sflag, size = 0x4, scoped, tag = 'scoped memory for tpu_custom_call.1']
    %29 = vsyncpa [#allocation3], 0
    // Predicated region
    $region2: #{tpu_custom_call.1} parent=1 // pred_check
      _
    $region3: #{tpu_custom_call.1} parent=1 // pred_check_branch
      %31 = sbr.rel (0) target = $region5
    $region4: #{tpu_custom_call.1} parent=1 // pred_region
      _
    $region5: #{tpu_custom_call.1} parent=1 // pred_fallthru
      _
    // Predicated region
    $region6: #{tpu_custom_call.1} parent=1 // pred_check
      _
    $region7: #{tpu_custom_call.1} parent=1 // pred_check_branch
      %33 = sbr.rel (0) target = $region9
    $region8: #{tpu_custom_call.1} parent=1 // pred_region
      _
    $region9: #{tpu_custom_call.1} parent=1 // pred_fallthru
      _
    // Predicated region
    $region10: #{tpu_custom_call.1} parent=1 // pred_check
      _
    $region11: #{tpu_custom_call.1} parent=1 // pred_check_branch
      %35 = sbr.rel (0) target = $region13
    $region12: #{tpu_custom_call.1} parent=1 // pred_region
      _
    $region13: #{tpu_custom_call.1} parent=1 // pred_fallthru
      _
    // Predicated region
    $region14: #{tpu_custom_call.1} parent=1 // pred_check
      _
    $region15: #{tpu_custom_call.1} parent=1 // pred_check_branch
      %37 = sbr.rel (0) target = $region17
    $region16: #{tpu_custom_call.1} parent=1 // pred_region
      _
    $region17: #{tpu_custom_call.1} parent=1 // pred_fallthru
      _
    // Predicated region
    $region18: #{tpu_custom_call.1} parent=1 // pred_check
      _
    $region19: #{tpu_custom_call.1} parent=1 // pred_check_branch
      %39 = sbr.rel (0) target = $region21
    $region20: #{tpu_custom_call.1} parent=1 // pred_region
      _
    $region21: #{tpu_custom_call.1} parent=1 // pred_fallthru
      _
    // Predicated region
    $region22: #{tpu_custom_call.1} parent=1 // pred_check
      _
    $region23: #{tpu_custom_call.1} parent=1 // pred_check_branch
      %41 = sbr.rel (0) target = $region25
    $region24: #{tpu_custom_call.1} parent=1 // pred_region
      _
    $region25: #{tpu_custom_call.1} parent=1 // pred_fallthru
      _
    // Predicated region
    $region26: #{tpu_custom_call.1} parent=1 // pred_check
      _
    $region27: #{tpu_custom_call.1} parent=1 // pred_check_branch
      %43 = sbr.rel (0) target = $region29
    $region28: #{tpu_custom_call.1} parent=1 // pred_region
      _
    $region29: #{tpu_custom_call.1} parent=1 // pred_fallthru
      _
    // Predicated region
    $region30: #{tpu_custom_call.1} parent=1 // pred_check
      _
    $region31: #{tpu_custom_call.1} parent=1 // pred_check_branch
      %45 = sbr.rel (0) target = $region33
    $region32: #{tpu_custom_call.1} parent=1 // pred_region
      _
    $region33: #{tpu_custom_call.1} parent=1 // pred_fallthru
      _
    // Predicated region
    $region34: #{tpu_custom_call.1} parent=1 // pred_check
      _
    $region35: #{tpu_custom_call.1} parent=1 // pred_check_branch
      %47 = sbr.rel (0) target = $region37
    $region36: #{tpu_custom_call.1} parent=1 // pred_region
      _
    $region37: #{tpu_custom_call.1} parent=1 // pred_fallthru
      _
    // Predicated region
    $region38: #{tpu_custom_call.1} parent=1 // pred_check
      _
    $region39: #{tpu_custom_call.1} parent=1 // pred_check_branch
      %49 = sbr.rel (0) target = $region41
    $region40: #{tpu_custom_call.1} parent=1 // pred_region
      _
    $region41: #{tpu_custom_call.1} parent=1 // pred_fallthru
      _
    // Predicated region
    $region42: #{tpu_custom_call.1} parent=1 // pred_check
      _
    $region43: #{tpu_custom_call.1} parent=1 // pred_check_branch
      %51 = sbr.rel (0) target = $region45
    $region44: #{tpu_custom_call.1} parent=1 // pred_region
      _
    $region45: #{tpu_custom_call.1} parent=1 // pred_fallthru
      _
    // Predicated region
    $region46: #{tpu_custom_call.1} parent=1 // pred_check
      _
    $region47: #{tpu_custom_call.1} parent=1 // pred_check_branch
      %53 = sbr.rel (0) target = $region49
    $region48: #{tpu_custom_call.1} parent=1 // pred_region
      _
    $region49: #{tpu_custom_call.1} parent=1 // pred_fallthru
      _
    // Predicated region
    $region50: #{tpu_custom_call.1} parent=1 // pred_check
      _
    $region51: #{tpu_custom_call.1} parent=1 // pred_check_branch
      %55 = sbr.rel (0) target = $region53
    $region52: #{tpu_custom_call.1} parent=1 // pred_region
      _
    $region53: #{tpu_custom_call.1} parent=1 // pred_fallthru
      _
    // Predicated region
    $region54: #{tpu_custom_call.1} parent=1 // pred_check
      _
    $region55: #{tpu_custom_call.1} parent=1 // pred_check_branch
      %57 = sbr.rel (0) target = $region57
    $region56: #{tpu_custom_call.1} parent=1 // pred_region
      _
    $region57: #{tpu_custom_call.1} parent=1 // pred_fallthru
      _
    // Predicated region
    $region58: #{tpu_custom_call.1} parent=1 // pred_check
      _
    $region59: #{tpu_custom_call.1} parent=1 // pred_check_branch
      %59 = sbr.rel (0) target = $region61
    $region60: #{tpu_custom_call.1} parent=1 // pred_region
      _
    $region61: #{tpu_custom_call.1} parent=1 // pred_fallthru
      _
    // Predicated region
    $region62: #{tpu_custom_call.1} parent=1 // pred_check
      _
    $region63: #{tpu_custom_call.1} parent=1 // pred_check_branch
      %61 = sbr.rel (0) target = $region65
    $region64: #{tpu_custom_call.1} parent=1 // pred_region
      _
    $region65: #{tpu_custom_call.1} parent=1 // pred_fallthru
      _
    // Predicated region
    $region66: #{tpu_custom_call.1} parent=1 // pred_check
      _
    $region67: #{tpu_custom_call.1} parent=1 // pred_check_branch
      %63 = sbr.rel (0) target = $region69
    $region68: #{tpu_custom_call.1} parent=1 // pred_region
      _
    $region69: #{tpu_custom_call.1} parent=1 // pred_fallthru
      _
    // Predicated region
    $region70: #{tpu_custom_call.1} parent=1 // pred_check
      _
    $region71: #{tpu_custom_call.1} parent=1 // pred_check_branch
      %65 = sbr.rel (0) target = $region73
    $region72: #{tpu_custom_call.1} parent=1 // pred_region
      _
    $region73: #{tpu_custom_call.1} parent=1 // pred_fallthru
      _
    // Predicated region
    $region74: #{tpu_custom_call.1} parent=1 // pred_check
      _
    $region75: #{tpu_custom_call.1} parent=1 // pred_check_branch
      %67 = sbr.rel (0) target = $region77
    $region76: #{tpu_custom_call.1} parent=1 // pred_region
      _
    $region77: #{tpu_custom_call.1} parent=1 // pred_fallthru
      _
    // Predicated region
    $region78: #{tpu_custom_call.1} parent=1 // pred_check
      _
    $region79: #{tpu_custom_call.1} parent=1 // pred_check_branch
      %69 = sbr.rel (0) target = $region81
    $region80: #{tpu_custom_call.1} parent=1 // pred_region
      _
    $region81: #{tpu_custom_call.1} parent=1 // pred_fallthru
      _
    // Predicated region
    $region82: #{tpu_custom_call.1} parent=1 // pred_check
      _
    $region83: #{tpu_custom_call.1} parent=1 // pred_check_branch
      %71 = sbr.rel (0) target = $region85
    $region84: #{tpu_custom_call.1} parent=1 // pred_region
      _
    $region85: #{tpu_custom_call.1} parent=1 // pred_fallthru
      _
    // Predicated region
    $region86: #{tpu_custom_call.1} parent=1 // pred_check
      _
    $region87: #{tpu_custom_call.1} parent=1 // pred_check_branch
      %73 = sbr.rel (0) target = $region89
    $region88: #{tpu_custom_call.1} parent=1 // pred_region
      _
    $region89: #{tpu_custom_call.1} parent=1 // pred_fallthru
      _
    // Predicated region
    $region90: #{tpu_custom_call.1} parent=1 // pred_check
      _
    $region91: #{tpu_custom_call.1} parent=1 // pred_check_branch
      %75 = sbr.rel (0) target = $region93
    $region92: #{tpu_custom_call.1} parent=1 // pred_region
      _
    $region93: #{tpu_custom_call.1} parent=1 // pred_fallthru
      _
    // Predicated region
    $region94: #{tpu_custom_call.1} parent=1 // pred_check
      _
    $region95: #{tpu_custom_call.1} parent=1 // pred_check_branch
      %77 = sbr.rel (0) target = $region97
    $region96: #{tpu_custom_call.1} parent=1 // pred_region
      _
    $region97: #{tpu_custom_call.1} parent=1 // pred_fallthru
      _
    %v79 = vld [vmem:[%s0] sm:$0xff]
    %v80 = vld [vmem:[%s0 + $0x8] sm:$0xff]
    %v81 = vlaneseq
    %v82 = vand.u32 %v81, 127
    %83 = vset.pattern.permute.xlu0 0
    %84 = vperm.xlu0 %83, %v79
    %v85 = vpop.permute.xlu0 %84
    %86 = vset.pattern.permute.xlu0 0
    %87 = vperm.xlu0 %86, %v80
    %v88 = vpop.permute.xlu0 %87
    %vm89 = vcmp.eq.s32.totalorder %v82, %v85
    %vm90 = vcmp.eq.s32.totalorder %v82, %v88
    %v91 = vsel %vm89, 1.0, 0.0
    %v92 = vsel %vm90, 1.0, 0.0
    %v93 = vpack.c.bf16 %v92, %v91
    %v94 = vld [vmem:[%s2] sm:$0xf]
    %v95 = vld [vmem:[%s2 + $0x4] sm:$0xf]
    %v96 = vld [vmem:[%s2 + $0x8] sm:$0xf]
    %v97 = vld [vmem:[%s2 + $0xc] sm:$0xf]
    %v98 = vld [vmem:[%s2 + $0x10] sm:$0xf]
    %v99 = vld [vmem:[%s2 + $0x14] sm:$0xf]
    %v100 = vld [vmem:[%s2 + $0x18] sm:$0x1]
    %v101 = vld [vmem:[%s3] sm:$0xff]
    %v102 = vld [vmem:[%s3 + $0x8] sm:$0xff]
    %v110 = vunpack.c.l.b16 %v94
    %v111 = vunpack.c.l.b16 %v95
    %v112 = vunpack.c.l.b16 %v96
    %v113 = vunpack.c.l.b16 %v97
    %v114 = vunpack.c.l.b16 %v98
    %v115 = vunpack.c.l.b16 %v99
    %v116 = vunpack.c.l.b16 %v100
    %v117 = vpack.c.b16 %v111, %v110
    %v118 = vpack.c.b16 %v113, %v112
    %v119 = vpack.c.b16 %v115, %v114
    %v120 = vpack.c.b16 %v116, %v116
    %vm124 = vcmask 408576
    %v126 = vsel %vm124, %v93, 0
    %vm128 = vcmask 1040384
    %v130 = vsel %vm128, %v120, 0
    %132 = vmatprep.subr.bf16.mxu0 0
    %133 = vmatpush1.bf16.msra.mxu0 0
    %134 = vmatprep.subr.bf16.mxu0 0
    %135 = vmatpush1.bf16.msra.mxu0 0
    %136 = vmatprep.subr.bf16.mxu0 0
    %137 = vmatpush1.bf16.msra.mxu0 0
    %138 = vmatprep.subr.bf16.mxu0 0
    %139 = vmatpush1.bf16.msra.mxu0 0
    %140 = vmatprep.subr.bf16.mxu0 0
    %141 = vmatpush1.bf16.msra.mxu0 %v130
    %142 = vmatprep.subr.bf16.mxu0 0
    %143 = vmatpush1.bf16.msra.mxu0 %v119
    %144 = vmatprep.subr.bf16.mxu0 0
    %145 = vmatpush1.bf16.msra.mxu0 %v118
    %146 = vmatprep.subr.bf16.mxu0 0
    %147 = vmatpush1.bf16.msra.mxu0 %v117
    %148 = vmatprep.subr.bf16.mxu0 0
    %149 = vmatpush2.bf16.msra.mxu0 0
    %150 = vmatprep.subr.bf16.mxu0 0
    %151 = vmatpush2.bf16.msra.mxu0 0
    %152 = vmatprep.subr.bf16.mxu0 0
    %153 = vmatpush2.bf16.msra.mxu0 0
    %154 = vmatprep.subr.bf16.mxu0 0
    %155 = vmatpush2.bf16.msra.mxu0 0
    %156 = vmatprep.subr.bf16.mxu0 0
    %157 = vmatpush2.bf16.msra.mxu0 0
    %158 = vmatprep.subr.bf16.mxu0 0
    %159 = vmatpush2.bf16.msra.mxu0 0
    %160 = vmatprep.subr.bf16.mxu0 0
    %161 = vmatpush2.bf16.msra.mxu0 0
    %162 = vmatprep.subr.bf16.mxu0 0
    %163 = vmatpush2.bf16.msra.mxu0 0
    %164 = vmatprep.mubr.bf16.mxu0 0
    %165 = vmatmul.mubr.bf16.gmra.mxu0 %v126
    %v166 = vpop.f32.mrf.mxu0
    %v167 = vadd.f32 %v101, %v166
    %v168 = vpop.f32.mrf.mxu0
    %v169 = vpop.f32.mrf.mxu0
    %v170 = vadd.f32 %v102, %v169
    %v171 = vpop.f32.mrf.mxu0
    %172 = vdwg.mxu0
    %v173 = vld [vmem:[%s4] sm:$0x1]
    %v174 = vld [vmem:[%s5] sm:$0x1]
    %vm175 = vcmask 261120
    %v176 = vsel %vm175, %v167, 0.0
    %177 = vadd.xlane.f32.xlu0 %v176
    %v178 = vpop.xlane.xlu0 %177
    %v179 = vsel %vm175, %v170, 0.0
    %180 = vadd.xlane.f32.xlu0 %v179
    %v181 = vpop.xlane.xlu0 %180
    %v182 = vrcp.pop 32.0
    %v183 = vmul.f32 %v178, %v182
    %v184 = vmul.f32 %v181, %v182
    %v185 = vsub.f32 %v167, %v183
    %v186 = vsub.f32 %v170, %v184
    %v187 = vmul.f32 %v185, %v185
    %v188 = vmul.f32 %v186, %v186
    %v189 = vsel %vm175, %v187, 0.0
    %190 = vadd.xlane.f32.xlu0 %v189
    %v191 = vpop.xlane.xlu0 %190
    %v192 = vsel %vm175, %v188, 0.0
    %193 = vadd.xlane.f32.xlu0 %v192
    %v194 = vpop.xlane.xlu0 %193
    %v195 = vmul.f32 %v191, %v182
    %v196 = vmul.f32 %v194, %v182
    %v197 = vadd.f32 %v195, 1e-12
    %v198 = vadd.f32 %v196, 1e-12
    %v199 = vrsqrt.pop %v197
    %v200 = vrsqrt.pop %v198
    %v201 = vmul.f32 %v185, %v199
    %v202 = vmul.f32 %v186, %v200
    %v204 = vlaneseq
    %v205 = vshrl.u32 %v204, 7
    %v206 = vsub.s32 0, %v205
    %v207 = vrot.slane %v173, %v206
    %v209 = vmul.f32 %v201, %v207
    %v210 = vmul.f32 %v202, %v207
    %v212 = vlaneseq
    %v213 = vshrl.u32 %v212, 7
    %v214 = vsub.s32 0, %v213
    %v215 = vrot.slane %v174, %v214
    %v217 = vadd.f32 %v209, %v215
    %v218 = vadd.f32 %v210, %v215
    %v219 = vld [vmem:[%s1] sm:$0xff]
    %v220 = vld [vmem:[%s1 + $0x8] sm:$0xff]
    %v221 = vpack.c.bf16 %v218, %v217
    %v222 = vld [vmem:[%s6] sm:$0xf]
    %v223 = vld [vmem:[%s6 + $0x4] sm:$0xf]
    %v224 = vld [vmem:[%s6 + $0x8] sm:$0xf]
    %v225 = vld [vmem:[%s6 + $0xc] sm:$0xf]
    %v226 = vld [vmem:[%s9] sm:$0x1]
    %v228 = vlaneseq
    %v229 = vshrl.u32 %v228, 7
    %v230 = vsub.s32 0, %v229
    %v231 = vrot.slane %v226, %v230
    %v237 = vunpack.c.l.b16 %v222
    %v238 = vunpack.c.l.b16 %v223
    %v239 = vunpack.c.l.b16 %v224
    %v240 = vunpack.c.l.b16 %v225
    %v241 = vpack.c.b16 %v238, %v237
    %v242 = vpack.c.b16 %v240, %v239
    %v246 = vsel %vm175, %v221, 0
    %248 = vmatprep.subr.bf16.mxu0 0
    %249 = vmatpush1.bf16.msra.mxu0 0
    %250 = vmatprep.subr.bf16.mxu0 0
    %251 = vmatpush1.bf16.msra.mxu0 0
    %252 = vmatprep.subr.bf16.mxu0 0
    %253 = vmatpush1.bf16.msra.mxu0 0
    %254 = vmatprep.subr.bf16.mxu0 0
    %255 = vmatpush1.bf16.msra.mxu0 0
    %256 = vmatprep.subr.bf16.mxu0 0
    %257 = vmatpush1.bf16.msra.mxu0 0
    %258 = vmatprep.subr.bf16.mxu0 0
    %259 = vmatpush1.bf16.msra.mxu0 0
    %260 = vmatprep.subr.bf16.mxu0 0
    %261 = vmatpush1.bf16.msra.mxu0 %v242
    %262 = vmatprep.subr.bf16.mxu0 0
    %263 = vmatpush1.bf16.msra.mxu0 %v241
    %264 = vmatprep.subr.bf16.mxu0 0
    %265 = vmatpush2.bf16.msra.mxu0 0
    %266 = vmatprep.subr.bf16.mxu0 0
    %267 = vmatpush2.bf16.msra.mxu0 0
    %268 = vmatprep.subr.bf16.mxu0 0
    %269 = vmatpush2.bf16.msra.mxu0 0
    %270 = vmatprep.subr.bf16.mxu0 0
    %271 = vmatpush2.bf16.msra.mxu0 0
    %272 = vmatprep.subr.bf16.mxu0 0
    %273 = vmatpush2.bf16.msra.mxu0 0
    %274 = vmatprep.subr.bf16.mxu0 0
    %275 = vmatpush2.bf16.msra.mxu0 0
    %276 = vmatprep.subr.bf16.mxu0 0
    %277 = vmatpush2.bf16.msra.mxu0 0
    %278 = vmatprep.subr.bf16.mxu0 0
    %279 = vmatpush2.bf16.msra.mxu0 0
    %280 = vmatprep.mubr.bf16.mxu0 0
    %281 = vmatmul.mubr.bf16.gmra.mxu0 %v246
    %v282 = vpop.f32.mrf.mxu0
    %v283 = vadd.f32 %v231, %v282
    %v284 = vpop.f32.mrf.mxu0
    %v285 = vpop.f32.mrf.mxu0
    %v286 = vadd.f32 %v231, %v285
    %v287 = vpop.f32.mrf.mxu0
    %288 = vdwg.mxu0
    %v289 = vld [vmem:[%s7] sm:$0xf]
    %v290 = vld [vmem:[%s7 + $0x4] sm:$0xf]
    %v291 = vld [vmem:[%s7 + $0x8] sm:$0xf]
    %v292 = vld [vmem:[%s7 + $0xc] sm:$0xf]
    %v293 = vld [vmem:[%s10] sm:$0x1]
    %v295 = vlaneseq
    %v296 = vshrl.u32 %v295, 7
    %v297 = vsub.s32 0, %v296
    %v298 = vrot.slane %v293, %v297
    %v304 = vunpack.c.l.b16 %v289
    %v305 = vunpack.c.l.b16 %v290
    %v306 = vunpack.c.l.b16 %v291
    %v307 = vunpack.c.l.b16 %v292
    %v308 = vpack.c.b16 %v305, %v304
    %v309 = vpack.c.b16 %v307, %v306
    %312 = vmatprep.subr.bf16.mxu0 0
    %313 = vmatpush1.bf16.msra.mxu0 0
    %314 = vmatprep.subr.bf16.mxu0 0
    %315 = vmatpush1.bf16.msra.mxu0 0
    %316 = vmatprep.subr.bf16.mxu0 0
    %317 = vmatpush1.bf16.msra.mxu0 0
    %318 = vmatprep.subr.bf16.mxu0 0
    %319 = vmatpush1.bf16.msra.mxu0 0
    %320 = vmatprep.subr.bf16.mxu0 0
    %321 = vmatpush1.bf16.msra.mxu0 0
    %322 = vmatprep.subr.bf16.mxu0 0
    %323 = vmatpush1.bf16.msra.mxu0 0
    %324 = vmatprep.subr.bf16.mxu0 0
    %325 = vmatpush1.bf16.msra.mxu0 %v309
    %326 = vmatprep.subr.bf16.mxu0 0
    %327 = vmatpush1.bf16.msra.mxu0 %v308
    %328 = vmatprep.subr.bf16.mxu0 0
    %329 = vmatpush2.bf16.msra.mxu0 0
    %330 = vmatprep.subr.bf16.mxu0 0
    %331 = vmatpush2.bf16.msra.mxu0 0
    %332 = vmatprep.subr.bf16.mxu0 0
    %333 = vmatpush2.bf16.msra.mxu0 0
    %334 = vmatprep.subr.bf16.mxu0 0
    %335 = vmatpush2.bf16.msra.mxu0 0
    %336 = vmatprep.subr.bf16.mxu0 0
    %337 = vmatpush2.bf16.msra.mxu0 0
    %338 = vmatprep.subr.bf16.mxu0 0
    %339 = vmatpush2.bf16.msra.mxu0 0
    %340 = vmatprep.subr.bf16.mxu0 0
    %341 = vmatpush2.bf16.msra.mxu0 0
    %342 = vmatprep.subr.bf16.mxu0 0
    %343 = vmatpush2.bf16.msra.mxu0 0
    %344 = vmatprep.mubr.bf16.mxu0 0
    %345 = vmatmul.mubr.bf16.gmra.mxu0 %v246
    %v346 = vpop.f32.mrf.mxu0
    %v347 = vadd.f32 %v298, %v346
    %v348 = vpop.f32.mrf.mxu0
    %v349 = vpop.f32.mrf.mxu0
    %v350 = vadd.f32 %v298, %v349
    %v351 = vpop.f32.mrf.mxu0
    %352 = vdwg.mxu0
    %v353 = vld [vmem:[%s8] sm:$0xf]
    %v354 = vld [vmem:[%s8 + $0x4] sm:$0xf]
    %v355 = vld [vmem:[%s8 + $0x8] sm:$0xf]
    %v356 = vld [vmem:[%s8 + $0xc] sm:$0xf]
    %v357 = vld [vmem:[%s11] sm:$0x1]
    %v359 = vlaneseq
    %v360 = vshrl.u32 %v359, 7
    %v361 = vsub.s32 0, %v360
    %v362 = vrot.slane %v357, %v361
    %v368 = vunpack.c.l.b16 %v353
    %v369 = vunpack.c.l.b16 %v354
    %v370 = vunpack.c.l.b16 %v355
    %v371 = vunpack.c.l.b16 %v356
    %v372 = vpack.c.b16 %v369, %v368
    %v373 = vpack.c.b16 %v371, %v370
    %376 = vmatprep.subr.bf16.mxu0 0
    %377 = vmatpush1.bf16.msra.mxu0 0
    %378 = vmatprep.subr.bf16.mxu0 0
    %379 = vmatpush1.bf16.msra.mxu0 0
    %380 = vmatprep.subr.bf16.mxu0 0
    %381 = vmatpush1.bf16.msra.mxu0 0
    %382 = vmatprep.subr.bf16.mxu0 0
    %383 = vmatpush1.bf16.msra.mxu0 0
    %384 = vmatprep.subr.bf16.mxu0 0
    %385 = vmatpush1.bf16.msra.mxu0 0
    %386 = vmatprep.subr.bf16.mxu0 0
    %387 = vmatpush1.bf16.msra.mxu0 0
    %388 = vmatprep.subr.bf16.mxu0 0
    %389 = vmatpush1.bf16.msra.mxu0 %v373
    %390 = vmatprep.subr.bf16.mxu0 0
    %391 = vmatpush1.bf16.msra.mxu0 %v372
    %392 = vmatprep.subr.bf16.mxu0 0
    %393 = vmatpush2.bf16.msra.mxu0 0
    %394 = vmatprep.subr.bf16.mxu0 0
    %395 = vmatpush2.bf16.msra.mxu0 0
    %396 = vmatprep.subr.bf16.mxu0 0
    %397 = vmatpush2.bf16.msra.mxu0 0
    %398 = vmatprep.subr.bf16.mxu0 0
    %399 = vmatpush2.bf16.msra.mxu0 0
    %400 = vmatprep.subr.bf16.mxu0 0
    %401 = vmatpush2.bf16.msra.mxu0 0
    %402 = vmatprep.subr.bf16.mxu0 0
    %403 = vmatpush2.bf16.msra.mxu0 0
    %404 = vmatprep.subr.bf16.mxu0 0
    %405 = vmatpush2.bf16.msra.mxu0 0
    %406 = vmatprep.subr.bf16.mxu0 0
    %407 = vmatpush2.bf16.msra.mxu0 0
    %408 = vmatprep.mubr.bf16.mxu0 0
    %409 = vmatmul.mubr.bf16.gmra.mxu0 %v246
    %v410 = vpop.f32.mrf.mxu0
    %v411 = vadd.f32 %v362, %v410
    %v412 = vpop.f32.mrf.mxu0
    %v413 = vpop.f32.mrf.mxu0
    %v414 = vadd.f32 %v362, %v413
    %v415 = vpop.f32.mrf.mxu0
    %416 = vdwg.mxu0
    %v417 = vpack.c.bf16 %v286, %v283
    %v418 = vpack.c.bf16 %v350, %v347
    %vm419 = vcmask 64512
    %v421 = vsel %vm419, %v417, 0
    %v424 = vsel %vm419, %v418, 0
    %426 = vmatprep.subr.bf16.mxu0 0
    %427 = vmatpush1.bf16.xpose.msra.mxu0 0
    %428 = vmatprep.subr.bf16.mxu0 0
    %429 = vmatpush1.bf16.xpose.msra.mxu0 0
    %430 = vmatprep.subr.bf16.mxu0 0
    %431 = vmatpush1.bf16.xpose.msra.mxu0 0
    %432 = vmatprep.subr.bf16.mxu0 0
    %433 = vmatpush1.bf16.xpose.msra.mxu0 0
    %434 = vmatprep.subr.bf16.mxu0 0
    %435 = vmatpush1.bf16.xpose.msra.mxu0 0
    %436 = vmatprep.subr.bf16.mxu0 0
    %437 = vmatpush1.bf16.xpose.msra.mxu0 0
    %438 = vmatprep.subr.bf16.mxu0 0
    %439 = vmatpush1.bf16.xpose.msra.mxu0 0
    %440 = vmatprep.subr.bf16.mxu0 0
    %441 = vmatpush1.bf16.xpose.msra.mxu0 %v424
    %442 = vmatprep.subr.bf16.mxu0 0
    %443 = vmatpush2.bf16.xpose.msra.mxu0 0
    %444 = vmatprep.subr.bf16.mxu0 0
    %445 = vmatpush2.bf16.xpose.msra.mxu0 0
    %446 = vmatprep.subr.bf16.mxu0 0
    %447 = vmatpush2.bf16.xpose.msra.mxu0 0
    %448 = vmatprep.subr.bf16.mxu0 0
    %449 = vmatpush2.bf16.xpose.msra.mxu0 0
    %450 = vmatprep.subr.bf16.mxu0 0
    %451 = vmatpush2.bf16.xpose.msra.mxu0 0
    %452 = vmatprep.subr.bf16.mxu0 0
    %453 = vmatpush2.bf16.xpose.msra.mxu0 0
    %454 = vmatprep.subr.bf16.mxu0 0
    %455 = vmatpush2.bf16.xpose.msra.mxu0 0
    %456 = vmatprep.subr.bf16.mxu0 0
    %457 = vmatpush2.bf16.xpose.msra.mxu0 0
    %458 = vmatprep.mubr.bf16.mxu0 0
    %459 = vmatmul.mubr.bf16.gmra.mxu0 %v421
    %v460 = vpop.f32.mrf.mxu0
    %v461 = vadd.f32 %v219, %v460
    %v462 = vpop.f32.mrf.mxu0
    %v463 = vpop.f32.mrf.mxu0
    %v464 = vadd.f32 %v220, %v463
    %v465 = vpop.f32.mrf.mxu0
    %466 = vdwg.mxu0
    %vm467 = vcmask 130048
    %v468 = vsel %vm467, %v461, -inf
    %469 = vmax.xlane.f32.xlu0 %v468
    %v470 = vpop.xlane.xlu0 %469
    %v471 = vsel %vm467, %v464, -inf
    %472 = vmax.xlane.f32.xlu0 %v471
    %v473 = vpop.xlane.xlu0 %472
    %v474 = vsub.f32 %v461, %v470
    %v475 = vsub.f32 %v464, %v473
    %v476 = vmul.f32 %v474, 1.442695
    %v477 = vpow.pop %v476
    %v478 = vmul.f32 %v475, 1.442695
    %v479 = vpow.pop %v478
    %v480 = vsel %vm467, %v477, 0.0
    %481 = vadd.xlane.f32.xlu0 %v480
    %v482 = vpop.xlane.xlu0 %481
    %v483 = vsel %vm467, %v479, 0.0
    %484 = vadd.xlane.f32.xlu0 %v483
    %v485 = vpop.xlane.xlu0 %484
    %v486 = vrcp.pop %v482
    %v487 = vrcp.pop %v485
    %v488 = vmul.f32 %v477, %v486
    %v489 = vmul.f32 %v479, %v487
    %v490 = vpack.c.bf16 %v489, %v488
    %v491 = vpack.c.bf16 %v414, %v411
    %v493 = vsel %vm467, %v490, 0
    %495 = vmatprep.subr.bf16.mxu0 0
    %496 = vmatpush1.bf16.msra.mxu0 0
    %497 = vmatprep.subr.bf16.mxu0 0
    %498 = vmatpush1.bf16.msra.mxu0 0
    %499 = vmatprep.subr.bf16.mxu0 0
    %500 = vmatpush1.bf16.msra.mxu0 0
    %501 = vmatprep.subr.bf16.mxu0 0
    %502 = vmatpush1.bf16.msra.mxu0 0
    %503 = vmatprep.subr.bf16.mxu0 0
    %504 = vmatpush1.bf16.msra.mxu0 0
    %505 = vmatprep.subr.bf16.mxu0 0
    %506 = vmatpush1.bf16.msra.mxu0 0
    %507 = vmatprep.subr.bf16.mxu0 0
    %508 = vmatpush1.bf16.msra.mxu0 0
    %509 = vmatprep.subr.bf16.mxu0 0
    %510 = vmatpush1.bf16.msra.mxu0 %v491
    %511 = vmatprep.subr.bf16.mxu0 0
    %512 = vmatpush2.bf16.msra.mxu0 0
    %513 = vmatprep.subr.bf16.mxu0 0
    %514 = vmatpush2.bf16.msra.mxu0 0
    %515 = vmatprep.subr.bf16.mxu0 0
    %516 = vmatpush2.bf16.msra.mxu0 0
    %517 = vmatprep.subr.bf16.mxu0 0
    %518 = vmatpush2.bf16.msra.mxu0 0
    %519 = vmatprep.subr.bf16.mxu0 0
    %520 = vmatpush2.bf16.msra.mxu0 0
    %521 = vmatprep.subr.bf16.mxu0 0
    %522 = vmatpush2.bf16.msra.mxu0 0
    %523 = vmatprep.subr.bf16.mxu0 0
    %524 = vmatpush2.bf16.msra.mxu0 0
    %525 = vmatprep.subr.bf16.mxu0 0
    %526 = vmatpush2.bf16.msra.mxu0 0
    %527 = vmatprep.mubr.bf16.mxu0 0
    %528 = vmatmul.mubr.bf16.gmra.mxu0 %v493
    %v529 = vpop.f32.mrf.mxu0
    %v530 = vadd.f32 0.0, %v529
    %v531 = vpop.f32.mrf.mxu0
    %v532 = vpop.f32.mrf.mxu0
    %v533 = vadd.f32 0.0, %v532
    %v534 = vpop.f32.mrf.mxu0
    %535 = vdwg.mxu0
    %v536 = vpack.c.bf16 %v533, %v530
    %v537 = vld [vmem:[%s12] sm:$0xf]
    %s538 = scalar_lea.vmem %s6, 16
    %v539 = vld [vmem:[%s538] sm:$0xf]
    %v540 = vld [vmem:[%s538 + $0x4] sm:$0xf]
    %v541 = vld [vmem:[%s538 + $0x8] sm:$0xf]
    %v542 = vld [vmem:[%s538 + $0xc] sm:$0xf]
    %s543 = scalar_lea.vmem %s9, 1
    %v544 = vld [vmem:[%s543] sm:$0x1]
    %v546 = vlaneseq
    %v547 = vshrl.u32 %v546, 7
    %v548 = vsub.s32 0, %v547
    %v549 = vrot.slane %v544, %v548
    %v555 = vunpack.c.l.b16 %v539
    %v556 = vunpack.c.l.b16 %v540
    %v557 = vunpack.c.l.b16 %v541
    %v558 = vunpack.c.l.b16 %v542
    %v559 = vpack.c.b16 %v556, %v555
    %v560 = vpack.c.b16 %v558, %v557
    %563 = vmatprep.subr.bf16.mxu0 0
    %564 = vmatpush1.bf16.msra.mxu0 0
    %565 = vmatprep.subr.bf16.mxu0 0
    %566 = vmatpush1.bf16.msra.mxu0 0
    %567 = vmatprep.subr.bf16.mxu0 0
    %568 = vmatpush1.bf16.msra.mxu0 0
    %569 = vmatprep.subr.bf16.mxu0 0
    %570 = vmatpush1.bf16.msra.mxu0 0
    %571 = vmatprep.subr.bf16.mxu0 0
    %572 = vmatpush1.bf16.msra.mxu0 0
    %573 = vmatprep.subr.bf16.mxu0 0
    %574 = vmatpush1.bf16.msra.mxu0 0
    %575 = vmatprep.subr.bf16.mxu0 0
    %576 = vmatpush1.bf16.msra.mxu0 %v560
    %577 = vmatprep.subr.bf16.mxu0 0
    %578 = vmatpush1.bf16.msra.mxu0 %v559
    %579 = vmatprep.subr.bf16.mxu0 0
    %580 = vmatpush2.bf16.msra.mxu0 0
    %581 = vmatprep.subr.bf16.mxu0 0
    %582 = vmatpush2.bf16.msra.mxu0 0
    %583 = vmatprep.subr.bf16.mxu0 0
    %584 = vmatpush2.bf16.msra.mxu0 0
    %585 = vmatprep.subr.bf16.mxu0 0
    %586 = vmatpush2.bf16.msra.mxu0 0
    %587 = vmatprep.subr.bf16.mxu0 0
    %588 = vmatpush2.bf16.msra.mxu0 0
    %589 = vmatprep.subr.bf16.mxu0 0
    %590 = vmatpush2.bf16.msra.mxu0 0
    %591 = vmatprep.subr.bf16.mxu0 0
    %592 = vmatpush2.bf16.msra.mxu0 0
    %593 = vmatprep.subr.bf16.mxu0 0
    %594 = vmatpush2.bf16.msra.mxu0 0
    %595 = vmatprep.mubr.bf16.mxu0 0
    %596 = vmatmul.mubr.bf16.gmra.mxu0 %v246
    %v597 = vpop.f32.mrf.mxu0
    %v598 = vadd.f32 %v549, %v597
    %v599 = vpop.f32.mrf.mxu0
    %v600 = vpop.f32.mrf.mxu0
    %v601 = vadd.f32 %v549, %v600
    %v602 = vpop.f32.mrf.mxu0
    %603 = vdwg.mxu0
    %s604 = scalar_lea.vmem %s7, 16
    %v605 = vld [vmem:[%s604] sm:$0xf]
    %v606 = vld [vmem:[%s604 + $0x4] sm:$0xf]
    %v607 = vld [vmem:[%s604 + $0x8] sm:$0xf]
    %v608 = vld [vmem:[%s604 + $0xc] sm:$0xf]
    %s609 = scalar_lea.vmem %s10, 1
    %v610 = vld [vmem:[%s609] sm:$0x1]
    %v612 = vlaneseq
    %v613 = vshrl.u32 %v612, 7
    %v614 = vsub.s32 0, %v613
    %v615 = vrot.slane %v610, %v614
    %v621 = vunpack.c.l.b16 %v605
    %v622 = vunpack.c.l.b16 %v606
    %v623 = vunpack.c.l.b16 %v607
    %v624 = vunpack.c.l.b16 %v608
    %v625 = vpack.c.b16 %v622, %v621
    %v626 = vpack.c.b16 %v624, %v623
    %629 = vmatprep.subr.bf16.mxu0 0
    %630 = vmatpush1.bf16.msra.mxu0 0
    %631 = vmatprep.subr.bf16.mxu0 0
    %632 = vmatpush1.bf16.msra.mxu0 0
    %633 = vmatprep.subr.bf16.mxu0 0
    %634 = vmatpush1.bf16.msra.mxu0 0
    %635 = vmatprep.subr.bf16.mxu0 0
    %636 = vmatpush1.bf16.msra.mxu0 0
    %637 = vmatprep.subr.bf16.mxu0 0
    %638 = vmatpush1.bf16.msra.mxu0 0
    %639 = vmatprep.subr.bf16.mxu0 0
    %640 = vmatpush1.bf16.msra.mxu0 0
    %641 = vmatprep.subr.bf16.mxu0 0
    %642 = vmatpush1.bf16.msra.mxu0 %v626
    %643 = vmatprep.subr.bf16.mxu0 0
    %644 = vmatpush1.bf16.msra.mxu0 %v625
    %645 = vmatprep.subr.bf16.mxu0 0
    %646 = vmatpush2.bf16.msra.mxu0 0
    %647 = vmatprep.subr.bf16.mxu0 0
    %648 = vmatpush2.bf16.msra.mxu0 0
    %649 = vmatprep.subr.bf16.mxu0 0
    %650 = vmatpush2.bf16.msra.mxu0 0
    %651 = vmatprep.subr.bf16.mxu0 0
    %652 = vmatpush2.bf16.msra.mxu0 0
    %653 = vmatprep.subr.bf16.mxu0 0
    %654 = vmatpush2.bf16.msra.mxu0 0
    %655 = vmatprep.subr.bf16.mxu0 0
    %656 = vmatpush2.bf16.msra.mxu0 0
    %657 = vmatprep.subr.bf16.mxu0 0
    %658 = vmatpush2.bf16.msra.mxu0 0
    %659 = vmatprep.subr.bf16.mxu0 0
    %660 = vmatpush2.bf16.msra.mxu0 0
    %661 = vmatprep.mubr.bf16.mxu0 0
    %662 = vmatmul.mubr.bf16.gmra.mxu0 %v246
    %v663 = vpop.f32.mrf.mxu0
    %v664 = vadd.f32 %v615, %v663
    %v665 = vpop.f32.mrf.mxu0
    %v666 = vpop.f32.mrf.mxu0
    %v667 = vadd.f32 %v615, %v666
    %v668 = vpop.f32.mrf.mxu0
    %669 = vdwg.mxu0
    %s670 = scalar_lea.vmem %s8, 16
    %v671 = vld [vmem:[%s670] sm:$0xf]
    %v672 = vld [vmem:[%s670 + $0x4] sm:$0xf]
    %v673 = vld [vmem:[%s670 + $0x8] sm:$0xf]
    %v674 = vld [vmem:[%s670 + $0xc] sm:$0xf]
    %s675 = scalar_lea.vmem %s11, 1
    %v676 = vld [vmem:[%s675] sm:$0x1]
    %v678 = vlaneseq
    %v679 = vshrl.u32 %v678, 7
    %v680 = vsub.s32 0, %v679
    %v681 = vrot.slane %v676, %v680
    %v687 = vunpack.c.l.b16 %v671
    %v688 = vunpack.c.l.b16 %v672
    %v689 = vunpack.c.l.b16 %v673
    %v690 = vunpack.c.l.b16 %v674
    %v691 = vpack.c.b16 %v688, %v687
    %v692 = vpack.c.b16 %v690, %v689
    %695 = vmatprep.subr.bf16.mxu0 0
    %696 = vmatpush1.bf16.msra.mxu0 0
    %697 = vmatprep.subr.bf16.mxu0 0
    %698 = vmatpush1.bf16.msra.mxu0 0
    %699 = vmatprep.subr.bf16.mxu0 0
    %700 = vmatpush1.bf16.msra.mxu0 0
    %701 = vmatprep.subr.bf16.mxu0 0
    %702 = vmatpush1.bf16.msra.mxu0 0
    %703 = vmatprep.subr.bf16.mxu0 0
    %704 = vmatpush1.bf16.msra.mxu0 0
    %705 = vmatprep.subr.bf16.mxu0 0
    %706 = vmatpush1.bf16.msra.mxu0 0
    %707 = vmatprep.subr.bf16.mxu0 0
    %708 = vmatpush1.bf16.msra.mxu0 %v692
    %709 = vmatprep.subr.bf16.mxu0 0
    %710 = vmatpush1.bf16.msra.mxu0 %v691
    %711 = vmatprep.subr.bf16.mxu0 0
    %712 = vmatpush2.bf16.msra.mxu0 0
    %713 = vmatprep.subr.bf16.mxu0 0
    %714 = vmatpush2.bf16.msra.mxu0 0
    %715 = vmatprep.subr.bf16.mxu0 0
    %716 = vmatpush2.bf16.msra.mxu0 0
    %717 = vmatprep.subr.bf16.mxu0 0
    %718 = vmatpush2.bf16.msra.mxu0 0
    %719 = vmatprep.subr.bf16.mxu0 0
    %720 = vmatpush2.bf16.msra.mxu0 0
    %721 = vmatprep.subr.bf16.mxu0 0
    %722 = vmatpush2.bf16.msra.mxu0 0
    %723 = vmatprep.subr.bf16.mxu0 0
    %724 = vmatpush2.bf16.msra.mxu0 0
    %725 = vmatprep.subr.bf16.mxu0 0
    %726 = vmatpush2.bf16.msra.mxu0 0
    %727 = vmatprep.mubr.bf16.mxu0 0
    %728 = vmatmul.mubr.bf16.gmra.mxu0 %v246
    %v729 = vpop.f32.mrf.mxu0
    %v730 = vadd.f32 %v681, %v729
    %v731 = vpop.f32.mrf.mxu0
    %v732 = vpop.f32.mrf.mxu0
    %v733 = vadd.f32 %v681, %v732
    %v734 = vpop.f32.mrf.mxu0
    %735 = vdwg.mxu0
    %v736 = vpack.c.bf16 %v601, %v598
    %v737 = vpack.c.bf16 %v667, %v664
    %v739 = vsel %vm419, %v736, 0
    %v742 = vsel %vm419, %v737, 0
    %744 = vmatprep.subr.bf16.mxu0 0
    %745 = vmatpush1.bf16.xpose.msra.mxu0 0
    %746 = vmatprep.subr.bf16.mxu0 0
    %747 = vmatpush1.bf16.xpose.msra.mxu0 0
    %748 = vmatprep.subr.bf16.mxu0 0
    %749 = vmatpush1.bf16.xpose.msra.mxu0 0
    %750 = vmatprep.subr.bf16.mxu0 0
    %751 = vmatpush1.bf16.xpose.msra.mxu0 0
    %752 = vmatprep.subr.bf16.mxu0 0
    %753 = vmatpush1.bf16.xpose.msra.mxu0 0
    %754 = vmatprep.subr.bf16.mxu0 0
    %755 = vmatpush1.bf16.xpose.msra.mxu0 0
    %756 = vmatprep.subr.bf16.mxu0 0
    %757 = vmatpush1.bf16.xpose.msra.mxu0 0
    %758 = vmatprep.subr.bf16.mxu0 0
    %759 = vmatpush1.bf16.xpose.msra.mxu0 %v742
    %760 = vmatprep.subr.bf16.mxu0 0
    %761 = vmatpush2.bf16.xpose.msra.mxu0 0
    %762 = vmatprep.subr.bf16.mxu0 0
    %763 = vmatpush2.bf16.xpose.msra.mxu0 0
    %764 = vmatprep.subr.bf16.mxu0 0
    %765 = vmatpush2.bf16.xpose.msra.mxu0 0
    %766 = vmatprep.subr.bf16.mxu0 0
    %767 = vmatpush2.bf16.xpose.msra.mxu0 0
    %768 = vmatprep.subr.bf16.mxu0 0
    %769 = vmatpush2.bf16.xpose.msra.mxu0 0
    %770 = vmatprep.subr.bf16.mxu0 0
    %771 = vmatpush2.bf16.xpose.msra.mxu0 0
    %772 = vmatprep.subr.bf16.mxu0 0
    %773 = vmatpush2.bf16.xpose.msra.mxu0 0
    %774 = vmatprep.subr.bf16.mxu0 0
    %775 = vmatpush2.bf16.xpose.msra.mxu0 0
    %776 = vmatprep.mubr.bf16.mxu0 0
    %777 = vmatmul.mubr.bf16.gmra.mxu0 %v739
    %v778 = vpop.f32.mrf.mxu0
    %v779 = vadd.f32 %v219, %v778
    %v780 = vpop.f32.mrf.mxu0
    %v781 = vpop.f32.mrf.mxu0
    %v782 = vadd.f32 %v220, %v781
    %v783 = vpop.f32.mrf.mxu0
    %784 = vdwg.mxu0
    %v785 = vsel %vm467, %v779, -inf
    %786 = vmax.xlane.f32.xlu0 %v785
    %v787 = vpop.xlane.xlu0 %786
    %v788 = vsel %vm467, %v782, -inf
    %789 = vmax.xlane.f32.xlu0 %v788
    %v790 = vpop.xlane.xlu0 %789
    %v791 = vsub.f32 %v779, %v787
    %v792 = vsub.f32 %v782, %v790
    %v793 = vmul.f32 %v791, 1.442695
    %v794 = vpow.pop %v793
    %v795 = vmul.f32 %v792, 1.442695
    %v796 = vpow.pop %v795
    %v797 = vsel %vm467, %v794, 0.0
    %798 = vadd.xlane.f32.xlu0 %v797
    %v799 = vpop.xlane.xlu0 %798
    %v800 = vsel %vm467, %v796, 0.0
    %801 = vadd.xlane.f32.xlu0 %v800
    %v802 = vpop.xlane.xlu0 %801
    %v803 = vrcp.pop %v799
    %v804 = vrcp.pop %v802
    %v805 = vmul.f32 %v794, %v803
    %v806 = vmul.f32 %v796, %v804
    %v807 = vpack.c.bf16 %v806, %v805
    %v808 = vpack.c.bf16 %v733, %v730
    %v810 = vsel %vm467, %v807, 0
    %812 = vmatprep.subr.bf16.mxu0 0
    %813 = vmatpush1.bf16.msra.mxu0 0
    %814 = vmatprep.subr.bf16.mxu0 0
    %815 = vmatpush1.bf16.msra.mxu0 0
    %816 = vmatprep.subr.bf16.mxu0 0
    %817 = vmatpush1.bf16.msra.mxu0 0
    %818 = vmatprep.subr.bf16.mxu0 0
    %819 = vmatpush1.bf16.msra.mxu0 0
    %820 = vmatprep.subr.bf16.mxu0 0
    %821 = vmatpush1.bf16.msra.mxu0 0
    %822 = vmatprep.subr.bf16.mxu0 0
    %823 = vmatpush1.bf16.msra.mxu0 0
    %824 = vmatprep.subr.bf16.mxu0 0
    %825 = vmatpush1.bf16.msra.mxu0 0
    %826 = vmatprep.subr.bf16.mxu0 0
    %827 = vmatpush1.bf16.msra.mxu0 %v808
    %828 = vmatprep.subr.bf16.mxu0 0
    %829 = vmatpush2.bf16.msra.mxu0 0
    %830 = vmatprep.subr.bf16.mxu0 0
    %831 = vmatpush2.bf16.msra.mxu0 0
    %832 = vmatprep.subr.bf16.mxu0 0
    %833 = vmatpush2.bf16.msra.mxu0 0
    %834 = vmatprep.subr.bf16.mxu0 0
    %835 = vmatpush2.bf16.msra.mxu0 0
    %836 = vmatprep.subr.bf16.mxu0 0
    %837 = vmatpush2.bf16.msra.mxu0 0
    %838 = vmatprep.subr.bf16.mxu0 0
    %839 = vmatpush2.bf16.msra.mxu0 0
    %840 = vmatprep.subr.bf16.mxu0 0
    %841 = vmatpush2.bf16.msra.mxu0 0
    %842 = vmatprep.subr.bf16.mxu0 0
    %843 = vmatpush2.bf16.msra.mxu0 0
    %844 = vmatprep.mubr.bf16.mxu0 0
    %845 = vmatmul.mubr.bf16.gmra.mxu0 %v810
    %v846 = vpop.f32.mrf.mxu0
    %v847 = vadd.f32 0.0, %v846
    %v848 = vpop.f32.mrf.mxu0
    %v849 = vpop.f32.mrf.mxu0
    %v850 = vadd.f32 0.0, %v849
    %v851 = vpop.f32.mrf.mxu0
    %852 = vdwg.mxu0
    %v853 = vpack.c.bf16 %v850, %v847
    %s854 = scalar_lea.vmem %s12, 4
    %v855 = vld [vmem:[%s854] sm:$0xf]
    %v857 = vsel %vm419, %v853, 0
    %vm859 = vcmask 1043456
    %v861 = vsel %vm859, %v855, 0
    %863 = vmatprep.subr.bf16.mxu0 0
    %864 = vmatpush1.bf16.msra.mxu0 0
    %865 = vmatprep.subr.bf16.mxu0 0
    %866 = vmatpush1.bf16.msra.mxu0 0
    %867 = vmatprep.subr.bf16.mxu0 0
    %868 = vmatpush1.bf16.msra.mxu0 0
    %869 = vmatprep.subr.bf16.mxu0 0
    %870 = vmatpush1.bf16.msra.mxu0 0
    %871 = vmatprep.subr.bf16.mxu0 0
    %872 = vmatpush1.bf16.msra.mxu0 0
    %873 = vmatprep.subr.bf16.mxu0 0
    %874 = vmatpush1.bf16.msra.mxu0 0
    %875 = vmatprep.subr.bf16.mxu0 0
    %876 = vmatpush1.bf16.msra.mxu0 0
    %877 = vmatprep.subr.bf16.mxu0 0
    %878 = vmatpush1.bf16.msra.mxu0 %v861
    %879 = vmatprep.subr.bf16.mxu0 0
    %880 = vmatpush2.bf16.msra.mxu0 0
    %881 = vmatprep.subr.bf16.mxu0 0
    %882 = vmatpush2.bf16.msra.mxu0 0
    %883 = vmatprep.subr.bf16.mxu0 0
    %884 = vmatpush2.bf16.msra.mxu0 0
    %885 = vmatprep.subr.bf16.mxu0 0
    %886 = vmatpush2.bf16.msra.mxu0 0
    %887 = vmatprep.subr.bf16.mxu0 0
    %888 = vmatpush2.bf16.msra.mxu0 0
    %889 = vmatprep.subr.bf16.mxu0 0
    %890 = vmatpush2.bf16.msra.mxu0 0
    %891 = vmatprep.subr.bf16.mxu0 0
    %892 = vmatpush2.bf16.msra.mxu0 0
    %893 = vmatprep.subr.bf16.mxu0 0
    %894 = vmatpush2.bf16.msra.mxu0 0
    %895 = vmatprep.mubr.bf16.mxu0 0
    %896 = vmatmul.mubr.bf16.gmra.mxu0 %v857
    %v897 = vpop.f32.mrf.mxu0
    %v898 = vadd.f32 0.0, %v897
    %v899 = vpop.f32.mrf.mxu0
    %v900 = vpop.f32.mrf.mxu0
    %v901 = vadd.f32 0.0, %v900
    %v902 = vpop.f32.mrf.mxu0
    %903 = vdwg.mxu0
    %v905 = vsel %vm419, %v536, 0
    %v908 = vsel %vm859, %v537, 0
    %910 = vmatprep.subr.bf16.mxu0 0
    %911 = vmatpush1.bf16.msra.mxu0 0
    %912 = vmatprep.subr.bf16.mxu0 0
    %913 = vmatpush1.bf16.msra.mxu0 0
    %914 = vmatprep.subr.bf16.mxu0 0
    %915 = vmatpush1.bf16.msra.mxu0 0
    %916 = vmatprep.subr.bf16.mxu0 0
    %917 = vmatpush1.bf16.msra.mxu0 0
    %918 = vmatprep.subr.bf16.mxu0 0
    %919 = vmatpush1.bf16.msra.mxu0 0
    %920 = vmatprep.subr.bf16.mxu0 0
    %921 = vmatpush1.bf16.msra.mxu0 0
    %922 = vmatprep.subr.bf16.mxu0 0
    %923 = vmatpush1.bf16.msra.mxu0 0
    %924 = vmatprep.subr.bf16.mxu0 0
    %925 = vmatpush1.bf16.msra.mxu0 %v908
    %926 = vmatprep.subr.bf16.mxu0 0
    %927 = vmatpush2.bf16.msra.mxu0 0
    %928 = vmatprep.subr.bf16.mxu0 0
    %929 = vmatpush2.bf16.msra.mxu0 0
    %930 = vmatprep.subr.bf16.mxu0 0
    %931 = vmatpush2.bf16.msra.mxu0 0
    %932 = vmatprep.subr.bf16.mxu0 0
    %933 = vmatpush2.bf16.msra.mxu0 0
    %934 = vmatprep.subr.bf16.mxu0 0
    %935 = vmatpush2.bf16.msra.mxu0 0
    %936 = vmatprep.subr.bf16.mxu0 0
    %937 = vmatpush2.bf16.msra.mxu0 0
    %938 = vmatprep.subr.bf16.mxu0 0
    %939 = vmatpush2.bf16.msra.mxu0 0
    %940 = vmatprep.subr.bf16.mxu0 0
    %941 = vmatpush2.bf16.msra.mxu0 0
    %942 = vmatprep.mubr.bf16.mxu0 0
    %943 = vmatmul.mubr.bf16.gmra.mxu0 %v905
    %v944 = vpop.f32.mrf.mxu0
    %v945 = vadd.f32 %v898, %v944
    %v946 = vpop.f32.mrf.mxu0
    %v947 = vpop.f32.mrf.mxu0
    %v948 = vadd.f32 %v901, %v947
    %v949 = vpop.f32.mrf.mxu0
    %950 = vdwg.mxu0
    %s951 = scalar_lea.vmem %s6, 32
    %v952 = vld [vmem:[%s951] sm:$0xf]
    %v953 = vld [vmem:[%s951 + $0x4] sm:$0xf]
    %v954 = vld [vmem:[%s951 + $0x8] sm:$0xf]
    %v955 = vld [vmem:[%s951 + $0xc] sm:$0xf]
    %s956 = scalar_lea.vmem %s9, 2
    %v957 = vld [vmem:[%s956] sm:$0x1]
    %v959 = vlaneseq
    %v960 = vshrl.u32 %v959, 7
    %v961 = vsub.s32 0, %v960
    %v962 = vrot.slane %v957, %v961
    %v968 = vunpack.c.l.b16 %v952
    %v969 = vunpack.c.l.b16 %v953
    %v970 = vunpack.c.l.b16 %v954
    %v971 = vunpack.c.l.b16 %v955
    %v972 = vpack.c.b16 %v969, %v968
    %v973 = vpack.c.b16 %v971, %v970
    %976 = vmatprep.subr.bf16.mxu0 0
    %977 = vmatpush1.bf16.msra.mxu0 0
    %978 = vmatprep.subr.bf16.mxu0 0
    %979 = vmatpush1.bf16.msra.mxu0 0
    %980 = vmatprep.subr.bf16.mxu0 0
    %981 = vmatpush1.bf16.msra.mxu0 0
    %982 = vmatprep.subr.bf16.mxu0 0
    %983 = vmatpush1.bf16.msra.mxu0 0
    %984 = vmatprep.subr.bf16.mxu0 0
    %985 = vmatpush1.bf16.msra.mxu0 0
    %986 = vmatprep.subr.bf16.mxu0 0
    %987 = vmatpush1.bf16.msra.mxu0 0
    %988 = vmatprep.subr.bf16.mxu0 0
    %989 = vmatpush1.bf16.msra.mxu0 %v973
    %990 = vmatprep.subr.bf16.mxu0 0
    %991 = vmatpush1.bf16.msra.mxu0 %v972
    %992 = vmatprep.subr.bf16.mxu0 0
    %993 = vmatpush2.bf16.msra.mxu0 0
    %994 = vmatprep.subr.bf16.mxu0 0
    %995 = vmatpush2.bf16.msra.mxu0 0
    %996 = vmatprep.subr.bf16.mxu0 0
    %997 = vmatpush2.bf16.msra.mxu0 0
    %998 = vmatprep.subr.bf16.mxu0 0
    %999 = vmatpush2.bf16.msra.mxu0 0
    %1000 = vmatprep.subr.bf16.mxu0 0
    %1001 = vmatpush2.bf16.msra.mxu0 0
    %1002 = vmatprep.subr.bf16.mxu0 0
    %1003 = vmatpush2.bf16.msra.mxu0 0
    %1004 = vmatprep.subr.bf16.mxu0 0
    %1005 = vmatpush2.bf16.msra.mxu0 0
    %1006 = vmatprep.subr.bf16.mxu0 0
    %1007 = vmatpush2.bf16.msra.mxu0 0
    %1008 = vmatprep.mubr.bf16.mxu0 0
    %1009 = vmatmul.mubr.bf16.gmra.mxu0 %v246
    %v1010 = vpop.f32.mrf.mxu0
    %v1011 = vadd.f32 %v962, %v1010
    %v1012 = vpop.f32.mrf.mxu0
    %v1013 = vpop.f32.mrf.mxu0
    %v1014 = vadd.f32 %v962, %v1013
    %v1015 = vpop.f32.mrf.mxu0
    %1016 = vdwg.mxu0
    %s1017 = scalar_lea.vmem %s7, 32
    %v1018 = vld [vmem:[%s1017] sm:$0xf]
    %v1019 = vld [vmem:[%s1017 + $0x4] sm:$0xf]
    %v1020 = vld [vmem:[%s1017 + $0x8] sm:$0xf]
    %v1021 = vld [vmem:[%s1017 + $0xc] sm:$0xf]
    %s1022 = scalar_lea.vmem %s10, 2
    %v1023 = vld [vmem:[%s1022] sm:$0x1]
    %v1025 = vlaneseq
    %v1026 = vshrl.u32 %v1025, 7
    %v1027 = vsub.s32 0, %v1026
    %v1028 = vrot.slane %v1023, %v1027
    %v1034 = vunpack.c.l.b16 %v1018
    %v1035 = vunpack.c.l.b16 %v1019
    %v1036 = vunpack.c.l.b16 %v1020
    %v1037 = vunpack.c.l.b16 %v1021
    %v1038 = vpack.c.b16 %v1035, %v1034
    %v1039 = vpack.c.b16 %v1037, %v1036
    %1042 = vmatprep.subr.bf16.mxu0 0
    %1043 = vmatpush1.bf16.msra.mxu0 0
    %1044 = vmatprep.subr.bf16.mxu0 0
    %1045 = vmatpush1.bf16.msra.mxu0 0
    %1046 = vmatprep.subr.bf16.mxu0 0
    %1047 = vmatpush1.bf16.msra.mxu0 0
    %1048 = vmatprep.subr.bf16.mxu0 0
    %1049 = vmatpush1.bf16.msra.mxu0 0
    %1050 = vmatprep.subr.bf16.mxu0 0
    %1051 = vmatpush1.bf16.msra.mxu0 0
    %1052 = vmatprep.subr.bf16.mxu0 0
    %1053 = vmatpush1.bf16.msra.mxu0 0
    %1054 = vmatprep.subr.bf16.mxu0 0
    %1055 = vmatpush1.bf16.msra.mxu0 %v1039
    %1056 = vmatprep.subr.bf16.mxu0 0
    %1057 = vmatpush1.bf16.msra.mxu0 %v1038
    %1058 = vmatprep.subr.bf16.mxu0 0
    %1059 = vmatpush2.bf16.msra.mxu0 0
    %1060 = vmatprep.subr.bf16.mxu0 0
    %1061 = vmatpush2.bf16.msra.mxu0 0
    %1062 = vmatprep.subr.bf16.mxu0 0
    %1063 = vmatpush2.bf16.msra.mxu0 0
    %1064 = vmatprep.subr.bf16.mxu0 0
    %1065 = vmatpush2.bf16.msra.mxu0 0
    %1066 = vmatprep.subr.bf16.mxu0 0
    %1067 = vmatpush2.bf16.msra.mxu0 0
    %1068 = vmatprep.subr.bf16.mxu0 0
    %1069 = vmatpush2.bf16.msra.mxu0 0
    %1070 = vmatprep.subr.bf16.mxu0 0
    %1071 = vmatpush2.bf16.msra.mxu0 0
    %1072 = vmatprep.subr.bf16.mxu0 0
    %1073 = vmatpush2.bf16.msra.mxu0 0
    %1074 = vmatprep.mubr.bf16.mxu0 0
    %1075 = vmatmul.mubr.bf16.gmra.mxu0 %v246
    %v1076 = vpop.f32.mrf.mxu0
    %v1077 = vadd.f32 %v1028, %v1076
    %v1078 = vpop.f32.mrf.mxu0
    %v1079 = vpop.f32.mrf.mxu0
    %v1080 = vadd.f32 %v1028, %v1079
    %v1081 = vpop.f32.mrf.mxu0
    %1082 = vdwg.mxu0
    %s1083 = scalar_lea.vmem %s8, 32
    %v1084 = vld [vmem:[%s1083] sm:$0xf]
    %v1085 = vld [vmem:[%s1083 + $0x4] sm:$0xf]
    %v1086 = vld [vmem:[%s1083 + $0x8] sm:$0xf]
    %v1087 = vld [vmem:[%s1083 + $0xc] sm:$0xf]
    %s1088 = scalar_lea.vmem %s11, 2
    %v1089 = vld [vmem:[%s1088] sm:$0x1]
    %v1091 = vlaneseq
    %v1092 = vshrl.u32 %v1091, 7
    %v1093 = vsub.s32 0, %v1092
    %v1094 = vrot.slane %v1089, %v1093
    %v1100 = vunpack.c.l.b16 %v1084
    %v1101 = vunpack.c.l.b16 %v1085
    %v1102 = vunpack.c.l.b16 %v1086
    %v1103 = vunpack.c.l.b16 %v1087
    %v1104 = vpack.c.b16 %v1101, %v1100
    %v1105 = vpack.c.b16 %v1103, %v1102
    %1108 = vmatprep.subr.bf16.mxu0 0
    %1109 = vmatpush1.bf16.msra.mxu0 0
    %1110 = vmatprep.subr.bf16.mxu0 0
    %1111 = vmatpush1.bf16.msra.mxu0 0
    %1112 = vmatprep.subr.bf16.mxu0 0
    %1113 = vmatpush1.bf16.msra.mxu0 0
    %1114 = vmatprep.subr.bf16.mxu0 0
    %1115 = vmatpush1.bf16.msra.mxu0 0
    %1116 = vmatprep.subr.bf16.mxu0 0
    %1117 = vmatpush1.bf16.msra.mxu0 0
    %1118 = vmatprep.subr.bf16.mxu0 0
    %1119 = vmatpush1.bf16.msra.mxu0 0
    %1120 = vmatprep.subr.bf16.mxu0 0
    %1121 = vmatpush1.bf16.msra.mxu0 %v1105
    %1122 = vmatprep.subr.bf16.mxu0 0
    %1123 = vmatpush1.bf16.msra.mxu0 %v1104
    %1124 = vmatprep.subr.bf16.mxu0 0
    %1125 = vmatpush2.bf16.msra.mxu0 0
    %1126 = vmatprep.subr.bf16.mxu0 0
    %1127 = vmatpush2.bf16.msra.mxu0 0
    %1128 = vmatprep.subr.bf16.mxu0 0
    %1129 = vmatpush2.bf16.msra.mxu0 0
    %1130 = vmatprep.subr.bf16.mxu0 0
    %1131 = vmatpush2.bf16.msra.mxu0 0
    %1132 = vmatprep.subr.bf16.mxu0 0
    %1133 = vmatpush2.bf16.msra.mxu0 0
    %1134 = vmatprep.subr.bf16.mxu0 0
    %1135 = vmatpush2.bf16.msra.mxu0 0
    %1136 = vmatprep.subr.bf16.mxu0 0
    %1137 = vmatpush2.bf16.msra.mxu0 0
    %1138 = vmatprep.subr.bf16.mxu0 0
    %1139 = vmatpush2.bf16.msra.mxu0 0
    %1140 = vmatprep.mubr.bf16.mxu0 0
    %1141 = vmatmul.mubr.bf16.gmra.mxu0 %v246
    %v1142 = vpop.f32.mrf.mxu0
    %v1143 = vadd.f32 %v1094, %v1142
    %v1144 = vpop.f32.mrf.mxu0
    %v1145 = vpop.f32.mrf.mxu0
    %v1146 = vadd.f32 %v1094, %v1145
    %v1147 = vpop.f32.mrf.mxu0
    %1148 = vdwg.mxu0
    %v1149 = vpack.c.bf16 %v1014, %v1011
    %v1150 = vpack.c.bf16 %v1080, %v1077
    %v1152 = vsel %vm419, %v1149, 0
    %v1155 = vsel %vm419, %v1150, 0
    %1157 = vmatprep.subr.bf16.mxu0 0
    %1158 = vmatpush1.bf16.xpose.msra.mxu0 0
    %1159 = vmatprep.subr.bf16.mxu0 0
    %1160 = vmatpush1.bf16.xpose.msra.mxu0 0
    %1161 = vmatprep.subr.bf16.mxu0 0
    %1162 = vmatpush1.bf16.xpose.msra.mxu0 0
    %1163 = vmatprep.subr.bf16.mxu0 0
    %1164 = vmatpush1.bf16.xpose.msra.mxu0 0
    %1165 = vmatprep.subr.bf16.mxu0 0
    %1166 = vmatpush1.bf16.xpose.msra.mxu0 0
    %1167 = vmatprep.subr.bf16.mxu0 0
    %1168 = vmatpush1.bf16.xpose.msra.mxu0 0
    %1169 = vmatprep.subr.bf16.mxu0 0
    %1170 = vmatpush1.bf16.xpose.msra.mxu0 0
    %1171 = vmatprep.subr.bf16.mxu0 0
    %1172 = vmatpush1.bf16.xpose.msra.mxu0 %v1155
    %1173 = vmatprep.subr.bf16.mxu0 0
    %1174 = vmatpush2.bf16.xpose.msra.mxu0 0
    %1175 = vmatprep.subr.bf16.mxu0 0
    %1176 = vmatpush2.bf16.xpose.msra.mxu0 0
    %1177 = vmatprep.subr.bf16.mxu0 0
    %1178 = vmatpush2.bf16.xpose.msra.mxu0 0
    %1179 = vmatprep.subr.bf16.mxu0 0
    %1180 = vmatpush2.bf16.xpose.msra.mxu0 0
    %1181 = vmatprep.subr.bf16.mxu0 0
    %1182 = vmatpush2.bf16.xpose.msra.mxu0 0
    %1183 = vmatprep.subr.bf16.mxu0 0
    %1184 = vmatpush2.bf16.xpose.msra.mxu0 0
    %1185 = vmatprep.subr.bf16.mxu0 0
    %1186 = vmatpush2.bf16.xpose.msra.mxu0 0
    %1187 = vmatprep.subr.bf16.mxu0 0
    %1188 = vmatpush2.bf16.xpose.msra.mxu0 0
    %1189 = vmatprep.mubr.bf16.mxu0 0
    %1190 = vmatmul.mubr.bf16.gmra.mxu0 %v1152
    %v1191 = vpop.f32.mrf.mxu0
    %v1192 = vadd.f32 %v219, %v1191
    %v1193 = vpop.f32.mrf.mxu0
    %v1194 = vpop.f32.mrf.mxu0
    %v1195 = vadd.f32 %v220, %v1194
    %v1196 = vpop.f32.mrf.mxu0
    %1197 = vdwg.mxu0
    %v1198 = vsel %vm467, %v1192, -inf
    %1199 = vmax.xlane.f32.xlu0 %v1198
    %v1200 = vpop.xlane.xlu0 %1199
    %v1201 = vsel %vm467, %v1195, -inf
    %1202 = vmax.xlane.f32.xlu0 %v1201
    %v1203 = vpop.xlane.xlu0 %1202
    %v1204 = vsub.f32 %v1192, %v1200
    %v1205 = vsub.f32 %v1195, %v1203
    %v1206 = vmul.f32 %v1204, 1.442695
    %v1207 = vpow.pop %v1206
    %v1208 = vmul.f32 %v1205, 1.442695
    %v1209 = vpow.pop %v1208
    %v1210 = vsel %vm467, %v1207, 0.0
    %1211 = vadd.xlane.f32.xlu0 %v1210
    %v1212 = vpop.xlane.xlu0 %1211
    %v1213 = vsel %vm467, %v1209, 0.0
    %1214 = vadd.xlane.f32.xlu0 %v1213
    %v1215 = vpop.xlane.xlu0 %1214
    %v1216 = vrcp.pop %v1212
    %v1217 = vrcp.pop %v1215
    %v1218 = vmul.f32 %v1207, %v1216
    %v1219 = vmul.f32 %v1209, %v1217
    %v1220 = vpack.c.bf16 %v1219, %v1218
    %v1221 = vpack.c.bf16 %v1146, %v1143
    %v1223 = vsel %vm467, %v1220, 0
    %1225 = vmatprep.subr.bf16.mxu0 0
    %1226 = vmatpush1.bf16.msra.mxu0 0
    %1227 = vmatprep.subr.bf16.mxu0 0
    %1228 = vmatpush1.bf16.msra.mxu0 0
    %1229 = vmatprep.subr.bf16.mxu0 0
    %1230 = vmatpush1.bf16.msra.mxu0 0
    %1231 = vmatprep.subr.bf16.mxu0 0
    %1232 = vmatpush1.bf16.msra.mxu0 0
    %1233 = vmatprep.subr.bf16.mxu0 0
    %1234 = vmatpush1.bf16.msra.mxu0 0
    %1235 = vmatprep.subr.bf16.mxu0 0
    %1236 = vmatpush1.bf16.msra.mxu0 0
    %1237 = vmatprep.subr.bf16.mxu0 0
    %1238 = vmatpush1.bf16.msra.mxu0 0
    %1239 = vmatprep.subr.bf16.mxu0 0
    %1240 = vmatpush1.bf16.msra.mxu0 %v1221
    %1241 = vmatprep.subr.bf16.mxu0 0
    %1242 = vmatpush2.bf16.msra.mxu0 0
    %1243 = vmatprep.subr.bf16.mxu0 0
    %1244 = vmatpush2.bf16.msra.mxu0 0
    %1245 = vmatprep.subr.bf16.mxu0 0
    %1246 = vmatpush2.bf16.msra.mxu0 0
    %1247 = vmatprep.subr.bf16.mxu0 0
    %1248 = vmatpush2.bf16.msra.mxu0 0
    %1249 = vmatprep.subr.bf16.mxu0 0
    %1250 = vmatpush2.bf16.msra.mxu0 0
    %1251 = vmatprep.subr.bf16.mxu0 0
    %1252 = vmatpush2.bf16.msra.mxu0 0
    %1253 = vmatprep.subr.bf16.mxu0 0
    %1254 = vmatpush2.bf16.msra.mxu0 0
    %1255 = vmatprep.subr.bf16.mxu0 0
    %1256 = vmatpush2.bf16.msra.mxu0 0
    %1257 = vmatprep.mubr.bf16.mxu0 0
    %1258 = vmatmul.mubr.bf16.gmra.mxu0 %v1223
    %v1259 = vpop.f32.mrf.mxu0
    %v1260 = vadd.f32 0.0, %v1259
    %v1261 = vpop.f32.mrf.mxu0
    %v1262 = vpop.f32.mrf.mxu0
    %v1263 = vadd.f32 0.0, %v1262
    %v1264 = vpop.f32.mrf.mxu0
    %1265 = vdwg.mxu0
    %v1266 = vpack.c.bf16 %v1263, %v1260
    %s1267 = scalar_lea.vmem %s12, 8
    %v1268 = vld [vmem:[%s1267] sm:$0xf]
    %v1270 = vsel %vm419, %v1266, 0
    %v1273 = vsel %vm859, %v1268, 0
    %1275 = vmatprep.subr.bf16.mxu0 0
    %1276 = vmatpush1.bf16.msra.mxu0 0
    %1277 = vmatprep.subr.bf16.mxu0 0
    %1278 = vmatpush1.bf16.msra.mxu0 0
    %1279 = vmatprep.subr.bf16.mxu0 0
    %1280 = vmatpush1.bf16.msra.mxu0 0
    %1281 = vmatprep.subr.bf16.mxu0 0
    %1282 = vmatpush1.bf16.msra.mxu0 0
    %1283 = vmatprep.subr.bf16.mxu0 0
    %1284 = vmatpush1.bf16.msra.mxu0 0
    %1285 = vmatprep.subr.bf16.mxu0 0
    %1286 = vmatpush1.bf16.msra.mxu0 0
    %1287 = vmatprep.subr.bf16.mxu0 0
    %1288 = vmatpush1.bf16.msra.mxu0 0
    %1289 = vmatprep.subr.bf16.mxu0 0
    %1290 = vmatpush1.bf16.msra.mxu0 %v1273
    %1291 = vmatprep.subr.bf16.mxu0 0
    %1292 = vmatpush2.bf16.msra.mxu0 0
    %1293 = vmatprep.subr.bf16.mxu0 0
    %1294 = vmatpush2.bf16.msra.mxu0 0
    %1295 = vmatprep.subr.bf16.mxu0 0
    %1296 = vmatpush2.bf16.msra.mxu0 0
    %1297 = vmatprep.subr.bf16.mxu0 0
    %1298 = vmatpush2.bf16.msra.mxu0 0
    %1299 = vmatprep.subr.bf16.mxu0 0
    %1300 = vmatpush2.bf16.msra.mxu0 0
    %1301 = vmatprep.subr.bf16.mxu0 0
    %1302 = vmatpush2.bf16.msra.mxu0 0
    %1303 = vmatprep.subr.bf16.mxu0 0
    %1304 = vmatpush2.bf16.msra.mxu0 0
    %1305 = vmatprep.subr.bf16.mxu0 0
    %1306 = vmatpush2.bf16.msra.mxu0 0
    %1307 = vmatprep.mubr.bf16.mxu0 0
    %1308 = vmatmul.mubr.bf16.gmra.mxu0 %v1270
    %v1309 = vpop.f32.mrf.mxu0
    %v1310 = vadd.f32 0.0, %v1309
    %v1311 = vpop.f32.mrf.mxu0
    %v1312 = vpop.f32.mrf.mxu0
    %v1313 = vadd.f32 0.0, %v1312
    %v1314 = vpop.f32.mrf.mxu0
    %1315 = vdwg.mxu0
    %v1316 = vadd.f32 %v945, %v1310
    %v1317 = vadd.f32 %v948, %v1313
    %s1318 = scalar_lea.vmem %s6, 48
    %v1319 = vld [vmem:[%s1318] sm:$0xf]
    %v1320 = vld [vmem:[%s1318 + $0x4] sm:$0xf]
    %v1321 = vld [vmem:[%s1318 + $0x8] sm:$0xf]
    %v1322 = vld [vmem:[%s1318 + $0xc] sm:$0xf]
    %s1323 = scalar_lea.vmem %s9, 3
    %v1324 = vld [vmem:[%s1323] sm:$0x1]
    %v1326 = vlaneseq
    %v1327 = vshrl.u32 %v1326, 7
    %v1328 = vsub.s32 0, %v1327
    %v1329 = vrot.slane %v1324, %v1328
    %v1335 = vunpack.c.l.b16 %v1319
    %v1336 = vunpack.c.l.b16 %v1320
    %v1337 = vunpack.c.l.b16 %v1321
    %v1338 = vunpack.c.l.b16 %v1322
    %v1339 = vpack.c.b16 %v1336, %v1335
    %v1340 = vpack.c.b16 %v1338, %v1337
    %1343 = vmatprep.subr.bf16.mxu0 0
    %1344 = vmatpush1.bf16.msra.mxu0 0
    %1345 = vmatprep.subr.bf16.mxu0 0
    %1346 = vmatpush1.bf16.msra.mxu0 0
    %1347 = vmatprep.subr.bf16.mxu0 0
    %1348 = vmatpush1.bf16.msra.mxu0 0
    %1349 = vmatprep.subr.bf16.mxu0 0
    %1350 = vmatpush1.bf16.msra.mxu0 0
    %1351 = vmatprep.subr.bf16.mxu0 0
    %1352 = vmatpush1.bf16.msra.mxu0 0
    %1353 = vmatprep.subr.bf16.mxu0 0
    %1354 = vmatpush1.bf16.msra.mxu0 0
    %1355 = vmatprep.subr.bf16.mxu0 0
    %1356 = vmatpush1.bf16.msra.mxu0 %v1340
    %1357 = vmatprep.subr.bf16.mxu0 0
    %1358 = vmatpush1.bf16.msra.mxu0 %v1339
    %1359 = vmatprep.subr.bf16.mxu0 0
    %1360 = vmatpush2.bf16.msra.mxu0 0
    %1361 = vmatprep.subr.bf16.mxu0 0
    %1362 = vmatpush2.bf16.msra.mxu0 0
    %1363 = vmatprep.subr.bf16.mxu0 0
    %1364 = vmatpush2.bf16.msra.mxu0 0
    %1365 = vmatprep.subr.bf16.mxu0 0
    %1366 = vmatpush2.bf16.msra.mxu0 0
    %1367 = vmatprep.subr.bf16.mxu0 0
    %1368 = vmatpush2.bf16.msra.mxu0 0
    %1369 = vmatprep.subr.bf16.mxu0 0
    %1370 = vmatpush2.bf16.msra.mxu0 0
    %1371 = vmatprep.subr.bf16.mxu0 0
    %1372 = vmatpush2.bf16.msra.mxu0 0
    %1373 = vmatprep.subr.bf16.mxu0 0
    %1374 = vmatpush2.bf16.msra.mxu0 0
    %1375 = vmatprep.mubr.bf16.mxu0 0
    %1376 = vmatmul.mubr.bf16.gmra.mxu0 %v246
    %v1377 = vpop.f32.mrf.mxu0
    %v1378 = vadd.f32 %v1329, %v1377
    %v1379 = vpop.f32.mrf.mxu0
    %v1380 = vpop.f32.mrf.mxu0
    %v1381 = vadd.f32 %v1329, %v1380
    %v1382 = vpop.f32.mrf.mxu0
    %1383 = vdwg.mxu0
    %s1384 = scalar_lea.vmem %s7, 48
    %v1385 = vld [vmem:[%s1384] sm:$0xf]
    %v1386 = vld [vmem:[%s1384 + $0x4] sm:$0xf]
    %v1387 = vld [vmem:[%s1384 + $0x8] sm:$0xf]
    %v1388 = vld [vmem:[%s1384 + $0xc] sm:$0xf]
    %s1389 = scalar_lea.vmem %s10, 3
    %v1390 = vld [vmem:[%s1389] sm:$0x1]
    %v1392 = vlaneseq
    %v1393 = vshrl.u32 %v1392, 7
    %v1394 = vsub.s32 0, %v1393
    %v1395 = vrot.slane %v1390, %v1394
    %v1401 = vunpack.c.l.b16 %v1385
    %v1402 = vunpack.c.l.b16 %v1386
    %v1403 = vunpack.c.l.b16 %v1387
    %v1404 = vunpack.c.l.b16 %v1388
    %v1405 = vpack.c.b16 %v1402, %v1401
    %v1406 = vpack.c.b16 %v1404, %v1403
    %1409 = vmatprep.subr.bf16.mxu0 0
    %1410 = vmatpush1.bf16.msra.mxu0 0
    %1411 = vmatprep.subr.bf16.mxu0 0
    %1412 = vmatpush1.bf16.msra.mxu0 0
    %1413 = vmatprep.subr.bf16.mxu0 0
    %1414 = vmatpush1.bf16.msra.mxu0 0
    %1415 = vmatprep.subr.bf16.mxu0 0
    %1416 = vmatpush1.bf16.msra.mxu0 0
    %1417 = vmatprep.subr.bf16.mxu0 0
    %1418 = vmatpush1.bf16.msra.mxu0 0
    %1419 = vmatprep.subr.bf16.mxu0 0
    %1420 = vmatpush1.bf16.msra.mxu0 0
    %1421 = vmatprep.subr.bf16.mxu0 0
    %1422 = vmatpush1.bf16.msra.mxu0 %v1406
    %1423 = vmatprep.subr.bf16.mxu0 0
    %1424 = vmatpush1.bf16.msra.mxu0 %v1405
    %1425 = vmatprep.subr.bf16.mxu0 0
    %1426 = vmatpush2.bf16.msra.mxu0 0
    %1427 = vmatprep.subr.bf16.mxu0 0
    %1428 = vmatpush2.bf16.msra.mxu0 0
    %1429 = vmatprep.subr.bf16.mxu0 0
    %1430 = vmatpush2.bf16.msra.mxu0 0
    %1431 = vmatprep.subr.bf16.mxu0 0
    %1432 = vmatpush2.bf16.msra.mxu0 0
    %1433 = vmatprep.subr.bf16.mxu0 0
    %1434 = vmatpush2.bf16.msra.mxu0 0
    %1435 = vmatprep.subr.bf16.mxu0 0
    %1436 = vmatpush2.bf16.msra.mxu0 0
    %1437 = vmatprep.subr.bf16.mxu0 0
    %1438 = vmatpush2.bf16.msra.mxu0 0
    %1439 = vmatprep.subr.bf16.mxu0 0
    %1440 = vmatpush2.bf16.msra.mxu0 0
    %1441 = vmatprep.mubr.bf16.mxu0 0
    %1442 = vmatmul.mubr.bf16.gmra.mxu0 %v246
    %v1443 = vpop.f32.mrf.mxu0
    %v1444 = vadd.f32 %v1395, %v1443
    %v1445 = vpop.f32.mrf.mxu0
    %v1446 = vpop.f32.mrf.mxu0
    %v1447 = vadd.f32 %v1395, %v1446
    %v1448 = vpop.f32.mrf.mxu0
    %1449 = vdwg.mxu0
    %s1450 = scalar_lea.vmem %s8, 48
    %v1451 = vld [vmem:[%s1450] sm:$0xf]
    %v1452 = vld [vmem:[%s1450 + $0x4] sm:$0xf]
    %v1453 = vld [vmem:[%s1450 + $0x8] sm:$0xf]
    %v1454 = vld [vmem:[%s1450 + $0xc] sm:$0xf]
    %s1455 = scalar_lea.vmem %s11, 3
    %v1456 = vld [vmem:[%s1455] sm:$0x1]
    %v1458 = vlaneseq
    %v1459 = vshrl.u32 %v1458, 7
    %v1460 = vsub.s32 0, %v1459
    %v1461 = vrot.slane %v1456, %v1460
    %v1467 = vunpack.c.l.b16 %v1451
    %v1468 = vunpack.c.l.b16 %v1452
    %v1469 = vunpack.c.l.b16 %v1453
    %v1470 = vunpack.c.l.b16 %v1454
    %v1471 = vpack.c.b16 %v1468, %v1467
    %v1472 = vpack.c.b16 %v1470, %v1469
    %1475 = vmatprep.subr.bf16.mxu0 0
    %1476 = vmatpush1.bf16.msra.mxu0 0
    %1477 = vmatprep.subr.bf16.mxu0 0
    %1478 = vmatpush1.bf16.msra.mxu0 0
    %1479 = vmatprep.subr.bf16.mxu0 0
    %1480 = vmatpush1.bf16.msra.mxu0 0
    %1481 = vmatprep.subr.bf16.mxu0 0
    %1482 = vmatpush1.bf16.msra.mxu0 0
    %1483 = vmatprep.subr.bf16.mxu0 0
    %1484 = vmatpush1.bf16.msra.mxu0 0
    %1485 = vmatprep.subr.bf16.mxu0 0
    %1486 = vmatpush1.bf16.msra.mxu0 0
    %1487 = vmatprep.subr.bf16.mxu0 0
    %1488 = vmatpush1.bf16.msra.mxu0 %v1472
    %1489 = vmatprep.subr.bf16.mxu0 0
    %1490 = vmatpush1.bf16.msra.mxu0 %v1471
    %1491 = vmatprep.subr.bf16.mxu0 0
    %1492 = vmatpush2.bf16.msra.mxu0 0
    %1493 = vmatprep.subr.bf16.mxu0 0
    %1494 = vmatpush2.bf16.msra.mxu0 0
    %1495 = vmatprep.subr.bf16.mxu0 0
    %1496 = vmatpush2.bf16.msra.mxu0 0
    %1497 = vmatprep.subr.bf16.mxu0 0
    %1498 = vmatpush2.bf16.msra.mxu0 0
    %1499 = vmatprep.subr.bf16.mxu0 0
    %1500 = vmatpush2.bf16.msra.mxu0 0
    %1501 = vmatprep.subr.bf16.mxu0 0
    %1502 = vmatpush2.bf16.msra.mxu0 0
    %1503 = vmatprep.subr.bf16.mxu0 0
    %1504 = vmatpush2.bf16.msra.mxu0 0
    %1505 = vmatprep.subr.bf16.mxu0 0
    %1506 = vmatpush2.bf16.msra.mxu0 0
    %1507 = vmatprep.mubr.bf16.mxu0 0
    %1508 = vmatmul.mubr.bf16.gmra.mxu0 %v246
    %v1509 = vpop.f32.mrf.mxu0
    %v1510 = vadd.f32 %v1461, %v1509
    %v1511 = vpop.f32.mrf.mxu0
    %v1512 = vpop.f32.mrf.mxu0
    %v1513 = vadd.f32 %v1461, %v1512
    %v1514 = vpop.f32.mrf.mxu0
    %1515 = vdwg.mxu0
    %v1516 = vpack.c.bf16 %v1381, %v1378
    %v1517 = vpack.c.bf16 %v1447, %v1444
    %v1519 = vsel %vm419, %v1516, 0
    %v1522 = vsel %vm419, %v1517, 0
    %1524 = vmatprep.subr.bf16.mxu0 0
    %1525 = vmatpush1.bf16.xpose.msra.mxu0 0
    %1526 = vmatprep.subr.bf16.mxu0 0
    %1527 = vmatpush1.bf16.xpose.msra.mxu0 0
    %1528 = vmatprep.subr.bf16.mxu0 0
    %1529 = vmatpush1.bf16.xpose.msra.mxu0 0
    %1530 = vmatprep.subr.bf16.mxu0 0
    %1531 = vmatpush1.bf16.xpose.msra.mxu0 0
    %1532 = vmatprep.subr.bf16.mxu0 0
    %1533 = vmatpush1.bf16.xpose.msra.mxu0 0
    %1534 = vmatprep.subr.bf16.mxu0 0
    %1535 = vmatpush1.bf16.xpose.msra.mxu0 0
    %1536 = vmatprep.subr.bf16.mxu0 0
    %1537 = vmatpush1.bf16.xpose.msra.mxu0 0
    %1538 = vmatprep.subr.bf16.mxu0 0
    %1539 = vmatpush1.bf16.xpose.msra.mxu0 %v1522
    %1540 = vmatprep.subr.bf16.mxu0 0
    %1541 = vmatpush2.bf16.xpose.msra.mxu0 0
    %1542 = vmatprep.subr.bf16.mxu0 0
    %1543 = vmatpush2.bf16.xpose.msra.mxu0 0
    %1544 = vmatprep.subr.bf16.mxu0 0
    %1545 = vmatpush2.bf16.xpose.msra.mxu0 0
    %1546 = vmatprep.subr.bf16.mxu0 0
    %1547 = vmatpush2.bf16.xpose.msra.mxu0 0
    %1548 = vmatprep.subr.bf16.mxu0 0
    %1549 = vmatpush2.bf16.xpose.msra.mxu0 0
    %1550 = vmatprep.subr.bf16.mxu0 0
    %1551 = vmatpush2.bf16.xpose.msra.mxu0 0
    %1552 = vmatprep.subr.bf16.mxu0 0
    %1553 = vmatpush2.bf16.xpose.msra.mxu0 0
    %1554 = vmatprep.subr.bf16.mxu0 0
    %1555 = vmatpush2.bf16.xpose.msra.mxu0 0
    %1556 = vmatprep.mubr.bf16.mxu0 0
    %1557 = vmatmul.mubr.bf16.gmra.mxu0 %v1519
    %v1558 = vpop.f32.mrf.mxu0
    %v1559 = vadd.f32 %v219, %v1558
    %v1560 = vpop.f32.mrf.mxu0
    %v1561 = vpop.f32.mrf.mxu0
    %v1562 = vadd.f32 %v220, %v1561
    %v1563 = vpop.f32.mrf.mxu0
    %1564 = vdwg.mxu0
    %v1565 = vsel %vm467, %v1559, -inf
    %1566 = vmax.xlane.f32.xlu0 %v1565
    %v1567 = vpop.xlane.xlu0 %1566
    %v1568 = vsel %vm467, %v1562, -inf
    %1569 = vmax.xlane.f32.xlu0 %v1568
    %v1570 = vpop.xlane.xlu0 %1569
    %v1571 = vsub.f32 %v1559, %v1567
    %v1572 = vsub.f32 %v1562, %v1570
    %v1573 = vmul.f32 %v1571, 1.442695
    %v1574 = vpow.pop %v1573
    %v1575 = vmul.f32 %v1572, 1.442695
    %v1576 = vpow.pop %v1575
    %v1577 = vsel %vm467, %v1574, 0.0
    %1578 = vadd.xlane.f32.xlu0 %v1577
    %v1579 = vpop.xlane.xlu0 %1578
    %v1580 = vsel %vm467, %v1576, 0.0
    %1581 = vadd.xlane.f32.xlu0 %v1580
    %v1582 = vpop.xlane.xlu0 %1581
    %v1583 = vrcp.pop %v1579
    %v1584 = vrcp.pop %v1582
    %v1585 = vmul.f32 %v1574, %v1583
    %v1586 = vmul.f32 %v1576, %v1584
    %v1587 = vpack.c.bf16 %v1586, %v1585
    %v1588 = vpack.c.bf16 %v1513, %v1510
    %v1590 = vsel %vm467, %v1587, 0
    %1592 = vmatprep.subr.bf16.mxu0 0
    %1593 = vmatpush1.bf16.msra.mxu0 0
    %1594 = vmatprep.subr.bf16.mxu0 0
    %1595 = vmatpush1.bf16.msra.mxu0 0
    %1596 = vmatprep.subr.bf16.mxu0 0
    %1597 = vmatpush1.bf16.msra.mxu0 0
    %1598 = vmatprep.subr.bf16.mxu0 0
    %1599 = vmatpush1.bf16.msra.mxu0 0
    %1600 = vmatprep.subr.bf16.mxu0 0
    %1601 = vmatpush1.bf16.msra.mxu0 0
    %1602 = vmatprep.subr.bf16.mxu0 0
    %1603 = vmatpush1.bf16.msra.mxu0 0
    %1604 = vmatprep.subr.bf16.mxu0 0
    %1605 = vmatpush1.bf16.msra.mxu0 0
    %1606 = vmatprep.subr.bf16.mxu0 0
    %1607 = vmatpush1.bf16.msra.mxu0 %v1588
    %1608 = vmatprep.subr.bf16.mxu0 0
    %1609 = vmatpush2.bf16.msra.mxu0 0
    %1610 = vmatprep.subr.bf16.mxu0 0
    %1611 = vmatpush2.bf16.msra.mxu0 0
    %1612 = vmatprep.subr.bf16.mxu0 0
    %1613 = vmatpush2.bf16.msra.mxu0 0
    %1614 = vmatprep.subr.bf16.mxu0 0
    %1615 = vmatpush2.bf16.msra.mxu0 0
    %1616 = vmatprep.subr.bf16.mxu0 0
    %1617 = vmatpush2.bf16.msra.mxu0 0
    %1618 = vmatprep.subr.bf16.mxu0 0
    %1619 = vmatpush2.bf16.msra.mxu0 0
    %1620 = vmatprep.subr.bf16.mxu0 0
    %1621 = vmatpush2.bf16.msra.mxu0 0
    %1622 = vmatprep.subr.bf16.mxu0 0
    %1623 = vmatpush2.bf16.msra.mxu0 0
    %1624 = vmatprep.mubr.bf16.mxu0 0
    %1625 = vmatmul.mubr.bf16.gmra.mxu0 %v1590
    %v1626 = vpop.f32.mrf.mxu0
    %v1627 = vadd.f32 0.0, %v1626
    %v1628 = vpop.f32.mrf.mxu0
    %v1629 = vpop.f32.mrf.mxu0
    %v1630 = vadd.f32 0.0, %v1629
    %v1631 = vpop.f32.mrf.mxu0
    %1632 = vdwg.mxu0
    %v1633 = vpack.c.bf16 %v1630, %v1627
    %s1634 = scalar_lea.vmem %s12, 12
    %v1635 = vld [vmem:[%s1634] sm:$0xf]
    %v1637 = vsel %vm419, %v1633, 0
    %v1640 = vsel %vm859, %v1635, 0
    %1642 = vmatprep.subr.bf16.mxu0 0
    %1643 = vmatpush1.bf16.msra.mxu0 0
    %1644 = vmatprep.subr.bf16.mxu0 0
    %1645 = vmatpush1.bf16.msra.mxu0 0
    %1646 = vmatprep.subr.bf16.mxu0 0
    %1647 = vmatpush1.bf16.msra.mxu0 0
    %1648 = vmatprep.subr.bf16.mxu0 0
    %1649 = vmatpush1.bf16.msra.mxu0 0
    %1650 = vmatprep.subr.bf16.mxu0 0
    %1651 = vmatpush1.bf16.msra.mxu0 0
    %1652 = vmatprep.subr.bf16.mxu0 0
    %1653 = vmatpush1.bf16.msra.mxu0 0
    %1654 = vmatprep.subr.bf16.mxu0 0
    %1655 = vmatpush1.bf16.msra.mxu0 0
    %1656 = vmatprep.subr.bf16.mxu0 0
    %1657 = vmatpush1.bf16.msra.mxu0 %v1640
    %1658 = vmatprep.subr.bf16.mxu0 0
    %1659 = vmatpush2.bf16.msra.mxu0 0
    %1660 = vmatprep.subr.bf16.mxu0 0
    %1661 = vmatpush2.bf16.msra.mxu0 0
    %1662 = vmatprep.subr.bf16.mxu0 0
    %1663 = vmatpush2.bf16.msra.mxu0 0
    %1664 = vmatprep.subr.bf16.mxu0 0
    %1665 = vmatpush2.bf16.msra.mxu0 0
    %1666 = vmatprep.subr.bf16.mxu0 0
    %1667 = vmatpush2.bf16.msra.mxu0 0
    %1668 = vmatprep.subr.bf16.mxu0 0
    %1669 = vmatpush2.bf16.msra.mxu0 0
    %1670 = vmatprep.subr.bf16.mxu0 0
    %1671 = vmatpush2.bf16.msra.mxu0 0
    %1672 = vmatprep.subr.bf16.mxu0 0
    %1673 = vmatpush2.bf16.msra.mxu0 0
    %1674 = vmatprep.mubr.bf16.mxu0 0
    %1675 = vmatmul.mubr.bf16.gmra.mxu0 %v1637
    %v1676 = vpop.f32.mrf.mxu0
    %v1677 = vadd.f32 0.0, %v1676
    %v1678 = vpop.f32.mrf.mxu0
    %v1679 = vpop.f32.mrf.mxu0
    %v1680 = vadd.f32 0.0, %v1679
    %v1681 = vpop.f32.mrf.mxu0
    %1682 = vdwg.mxu0
    %v1683 = vadd.f32 %v1316, %v1677
    %v1684 = vadd.f32 %v1317, %v1680
    %v1685 = vld [vmem:[%s13] sm:$0x1]
    %v1687 = vlaneseq
    %v1688 = vshrl.u32 %v1687, 7
    %v1689 = vsub.s32 0, %v1688
    %v1690 = vrot.slane %v1685, %v1689
    %v1692 = vadd.f32 %v1683, %v1690
    %v1693 = vadd.f32 %v1684, %v1690
    %v1694 = vadd.f32 %v217, %v1692
    %v1695 = vadd.f32 %v218, %v1693
    %v1696 = vld [vmem:[%s14] sm:$0x1]
    %v1697 = vld [vmem:[%s15] sm:$0x1]
    %v1698 = vsel %vm175, %v1694, 0.0
    %1699 = vadd.xlane.f32.xlu0 %v1698
    %v1700 = vpop.xlane.xlu0 %1699
    %v1701 = vsel %vm175, %v1695, 0.0
    %1702 = vadd.xlane.f32.xlu0 %v1701
    %v1703 = vpop.xlane.xlu0 %1702
    %v1704 = vmul.f32 %v1700, %v182
    %v1705 = vmul.f32 %v1703, %v182
    %v1706 = vsub.f32 %v1694, %v1704
    %v1707 = vsub.f32 %v1695, %v1705
    %v1708 = vmul.f32 %v1706, %v1706
    %v1709 = vmul.f32 %v1707, %v1707
    %v1710 = vsel %vm175, %v1708, 0.0
    %1711 = vadd.xlane.f32.xlu0 %v1710
    %v1712 = vpop.xlane.xlu0 %1711
    %v1713 = vsel %vm175, %v1709, 0.0
    %1714 = vadd.xlane.f32.xlu0 %v1713
    %v1715 = vpop.xlane.xlu0 %1714
    %v1716 = vmul.f32 %v1712, %v182
    %v1717 = vmul.f32 %v1715, %v182
    %v1718 = vadd.f32 %v1716, 1e-12
    %v1719 = vadd.f32 %v1717, 1e-12
    %v1720 = vrsqrt.pop %v1718
    %v1721 = vrsqrt.pop %v1719
    %v1722 = vmul.f32 %v1706, %v1720
    %v1723 = vmul.f32 %v1707, %v1721
    %v1725 = vlaneseq
    %v1726 = vshrl.u32 %v1725, 7
    %v1727 = vsub.s32 0, %v1726
    %v1728 = vrot.slane %v1696, %v1727
    %v1730 = vmul.f32 %v1722, %v1728
    %v1731 = vmul.f32 %v1723, %v1728
    %v1733 = vlaneseq
    %v1734 = vshrl.u32 %v1733, 7
    %v1735 = vsub.s32 0, %v1734
    %v1736 = vrot.slane %v1697, %v1735
    %v1738 = vadd.f32 %v1730, %v1736
    %v1739 = vadd.f32 %v1731, %v1736
    %v1740 = vpack.c.bf16 %v1739, %v1738
    %v1741 = vld [vmem:[%s16] sm:$0xf]
    %v1742 = vld [vmem:[%s16 + $0x4] sm:$0xf]
    %v1743 = vld [vmem:[%s16 + $0x8] sm:$0xf]
    %v1744 = vld [vmem:[%s16 + $0xc] sm:$0xf]
    %v1745 = vld [vmem:[%s17] sm:$0x1]
    %v1747 = vlaneseq
    %v1748 = vshrl.u32 %v1747, 7
    %v1749 = vsub.s32 0, %v1748
    %v1750 = vrot.slane %v1745, %v1749
    %v1756 = vunpack.c.l.b16 %v1741
    %v1757 = vunpack.c.l.b16 %v1742
    %v1758 = vunpack.c.l.b16 %v1743
    %v1759 = vunpack.c.l.b16 %v1744
    %v1760 = vpack.c.b16 %v1757, %v1756
    %v1761 = vpack.c.b16 %v1759, %v1758
    %v1765 = vsel %vm175, %v1740, 0
    %1767 = vmatprep.subr.bf16.mxu0 0
    %1768 = vmatpush1.bf16.msra.mxu0 0
    %1769 = vmatprep.subr.bf16.mxu0 0
    %1770 = vmatpush1.bf16.msra.mxu0 0
    %1771 = vmatprep.subr.bf16.mxu0 0
    %1772 = vmatpush1.bf16.msra.mxu0 0
    %1773 = vmatprep.subr.bf16.mxu0 0
    %1774 = vmatpush1.bf16.msra.mxu0 0
    %1775 = vmatprep.subr.bf16.mxu0 0
    %1776 = vmatpush1.bf16.msra.mxu0 0
    %1777 = vmatprep.subr.bf16.mxu0 0
    %1778 = vmatpush1.bf16.msra.mxu0 0
    %1779 = vmatprep.subr.bf16.mxu0 0
    %1780 = vmatpush1.bf16.msra.mxu0 %v1761
    %1781 = vmatprep.subr.bf16.mxu0 0
    %1782 = vmatpush1.bf16.msra.mxu0 %v1760
    %1783 = vmatprep.subr.bf16.mxu0 0
    %1784 = vmatpush2.bf16.msra.mxu0 0
    %1785 = vmatprep.subr.bf16.mxu0 0
    %1786 = vmatpush2.bf16.msra.mxu0 0
    %1787 = vmatprep.subr.bf16.mxu0 0
    %1788 = vmatpush2.bf16.msra.mxu0 0
    %1789 = vmatprep.subr.bf16.mxu0 0
    %1790 = vmatpush2.bf16.msra.mxu0 0
    %1791 = vmatprep.subr.bf16.mxu0 0
    %1792 = vmatpush2.bf16.msra.mxu0 0
    %1793 = vmatprep.subr.bf16.mxu0 0
    %1794 = vmatpush2.bf16.msra.mxu0 0
    %1795 = vmatprep.subr.bf16.mxu0 0
    %1796 = vmatpush2.bf16.msra.mxu0 0
    %1797 = vmatprep.subr.bf16.mxu0 0
    %1798 = vmatpush2.bf16.msra.mxu0 0
    %1799 = vmatprep.mubr.bf16.mxu0 0
    %1800 = vmatmul.mubr.bf16.gmra.mxu0 %v1765
    %v1801 = vpop.f32.mrf.mxu0
    %v1802 = vadd.f32 %v1750, %v1801
    %v1803 = vpop.f32.mrf.mxu0
    %v1804 = vpop.f32.mrf.mxu0
    %v1805 = vadd.f32 %v1750, %v1804
    %v1806 = vpop.f32.mrf.mxu0
    %1807 = vdwg.mxu0
    %v1808 = vmul.f32 %v1802, %v1802
    %v1809 = vmul.f32 %v1805, %v1805
    %v1810 = vmul.f32 %v1802, %v1808
    %v1811 = vmul.f32 %v1805, %v1809
    %v1812 = vmul.f32 %v1810, 0.044715
    %v1813 = vmul.f32 %v1811, 0.044715
    %v1814 = vadd.f32 %v1802, %v1812
    %v1815 = vadd.f32 %v1805, %v1813
    %v1816 = vmul.f32 %v1814, 0.7978846
    %v1817 = vmul.f32 %v1815, 0.7978846
    %v1818 = vtanh.pop %v1816
    %v1819 = vtanh.pop %v1817
    %v1820 = vadd.f32 %v1818, 1.0
    %v1821 = vadd.f32 %v1819, 1.0
    %v1822 = vmul.f32 %v1820, 0.5
    %v1823 = vmul.f32 %v1821, 0.5
    %v1824 = vmul.f32 %v1802, %v1822
    %v1825 = vmul.f32 %v1805, %v1823
    %v1826 = vpack.c.bf16 %v1825, %v1824
    %v1827 = vld [vmem:[%s18] sm:$0xf]
    %v1828 = vld [vmem:[%s18 + $0x4] sm:$0xf]
    %v1829 = vld [vmem:[%s18 + $0x8] sm:$0xf]
    %v1830 = vld [vmem:[%s18 + $0xc] sm:$0xf]
    %v1831 = vld [vmem:[%s18 + $0x10] sm:$0xf]
    %v1832 = vld [vmem:[%s18 + $0x14] sm:$0xf]
    %v1833 = vld [vmem:[%s18 + $0x18] sm:$0xf]
    %v1834 = vld [vmem:[%s18 + $0x1c] sm:$0xf]
    %v1835 = vld [vmem:[%s18 + $0x20] sm:$0xf]
    %v1836 = vld [vmem:[%s18 + $0x24] sm:$0xf]
    %v1837 = vld [vmem:[%s18 + $0x28] sm:$0xf]
    %v1838 = vld [vmem:[%s18 + $0x2c] sm:$0xf]
    %v1839 = vld [vmem:[%s18 + $0x30] sm:$0xf]
    %v1840 = vld [vmem:[%s18 + $0x34] sm:$0xf]
    %v1841 = vld [vmem:[%s18 + $0x38] sm:$0xf]
    %v1842 = vld [vmem:[%s18 + $0x3c] sm:$0xf]
    %v1843 = vld [vmem:[%s19] sm:$0x1]
    %v1845 = vlaneseq
    %v1846 = vshrl.u32 %v1845, 7
    %v1847 = vsub.s32 0, %v1846
    %v1848 = vrot.slane %v1843, %v1847
    %v1866 = vunpack.c.l.b16 %v1827
    %v1867 = vunpack.c.l.b16 %v1828
    %v1868 = vunpack.c.l.b16 %v1829
    %v1869 = vunpack.c.l.b16 %v1830
    %v1870 = vunpack.c.l.b16 %v1831
    %v1871 = vunpack.c.l.b16 %v1832
    %v1872 = vunpack.c.l.b16 %v1833
    %v1873 = vunpack.c.l.b16 %v1834
    %v1874 = vunpack.c.l.b16 %v1835
    %v1875 = vunpack.c.l.b16 %v1836
    %v1876 = vunpack.c.l.b16 %v1837
    %v1877 = vunpack.c.l.b16 %v1838
    %v1878 = vunpack.c.l.b16 %v1839
    %v1879 = vunpack.c.l.b16 %v1840
    %v1880 = vunpack.c.l.b16 %v1841
    %v1881 = vunpack.c.l.b16 %v1842
    %v1882 = vpack.c.b16 %v1867, %v1866
    %v1883 = vpack.c.b16 %v1869, %v1868
    %v1884 = vpack.c.b16 %v1871, %v1870
    %v1885 = vpack.c.b16 %v1873, %v1872
    %v1886 = vpack.c.b16 %v1875, %v1874
    %v1887 = vpack.c.b16 %v1877, %v1876
    %v1888 = vpack.c.b16 %v1879, %v1878
    %v1889 = vpack.c.b16 %v1881, %v1880
    %1898 = vmatprep.subr.bf16.mxu0 0
    %1899 = vmatpush1.bf16.msra.mxu0 %v1889
    %1900 = vmatprep.subr.bf16.mxu0 0
    %1901 = vmatpush1.bf16.msra.mxu0 %v1888
    %1902 = vmatprep.subr.bf16.mxu0 0
    %1903 = vmatpush1.bf16.msra.mxu0 %v1887
    %1904 = vmatprep.subr.bf16.mxu0 0
    %1905 = vmatpush1.bf16.msra.mxu0 %v1886
    %1906 = vmatprep.subr.bf16.mxu0 0
    %1907 = vmatpush1.bf16.msra.mxu0 %v1885
    %1908 = vmatprep.subr.bf16.mxu0 0
    %1909 = vmatpush1.bf16.msra.mxu0 %v1884
    %1910 = vmatprep.subr.bf16.mxu0 0
    %1911 = vmatpush1.bf16.msra.mxu0 %v1883
    %1912 = vmatprep.subr.bf16.mxu0 0
    %1913 = vmatpush1.bf16.msra.mxu0 %v1882
    %1914 = vmatprep.subr.bf16.mxu0 0
    %1915 = vmatpush2.bf16.msra.mxu0 0
    %1916 = vmatprep.subr.bf16.mxu0 0
    %1917 = vmatpush2.bf16.msra.mxu0 0
    %1918 = vmatprep.subr.bf16.mxu0 0
    %1919 = vmatpush2.bf16.msra.mxu0 0
    %1920 = vmatprep.subr.bf16.mxu0 0
    %1921 = vmatpush2.bf16.msra.mxu0 0
    %1922 = vmatprep.subr.bf16.mxu0 0
    %1923 = vmatpush2.bf16.msra.mxu0 0
    %1924 = vmatprep.subr.bf16.mxu0 0
    %1925 = vmatpush2.bf16.msra.mxu0 0
    %1926 = vmatprep.subr.bf16.mxu0 0
    %1927 = vmatpush2.bf16.msra.mxu0 0
    %1928 = vmatprep.subr.bf16.mxu0 0
    %1929 = vmatpush2.bf16.msra.mxu0 0
    %1930 = vmatprep.mubr.bf16.mxu0 0
    %1931 = vmatmul.mubr.bf16.gmra.mxu0 %v1826
    %v1932 = vpop.f32.mrf.mxu0
    %v1933 = vadd.f32 %v1848, %v1932
    %v1934 = vpop.f32.mrf.mxu0
    %v1935 = vpop.f32.mrf.mxu0
    %v1936 = vadd.f32 %v1848, %v1935
    %v1937 = vpop.f32.mrf.mxu0
    %1938 = vdwg.mxu0
    %v1939 = vadd.f32 %v1738, %v1933
    %v1940 = vadd.f32 %v1739, %v1936
    %v1941 = vld [vmem:[%s20] sm:$0x1]
    %v1942 = vld [vmem:[%s21] sm:$0x1]
    %v1943 = vsel %vm175, %v1939, 0.0
    %1944 = vadd.xlane.f32.xlu0 %v1943
    %v1945 = vpop.xlane.xlu0 %1944
    %v1946 = vsel %vm175, %v1940, 0.0
    %1947 = vadd.xlane.f32.xlu0 %v1946
    %v1948 = vpop.xlane.xlu0 %1947
    %v1949 = vmul.f32 %v1945, %v182
    %v1950 = vmul.f32 %v1948, %v182
    %v1951 = vsub.f32 %v1939, %v1949
    %v1952 = vsub.f32 %v1940, %v1950
    %v1953 = vmul.f32 %v1951, %v1951
    %v1954 = vmul.f32 %v1952, %v1952
    %v1955 = vsel %vm175, %v1953, 0.0
    %1956 = vadd.xlane.f32.xlu0 %v1955
    %v1957 = vpop.xlane.xlu0 %1956
    %v1958 = vsel %vm175, %v1954, 0.0
    %1959 = vadd.xlane.f32.xlu0 %v1958
    %v1960 = vpop.xlane.xlu0 %1959
    %v1961 = vmul.f32 %v1957, %v182
    %v1962 = vmul.f32 %v1960, %v182
    %v1963 = vadd.f32 %v1961, 1e-12
    %v1964 = vadd.f32 %v1962, 1e-12
    %v1965 = vrsqrt.pop %v1963
    %v1966 = vrsqrt.pop %v1964
    %v1967 = vmul.f32 %v1951, %v1965
    %v1968 = vmul.f32 %v1952, %v1966
    %v1970 = vlaneseq
    %v1971 = vshrl.u32 %v1970, 7
    %v1972 = vsub.s32 0, %v1971
    %v1973 = vrot.slane %v1941, %v1972
    %v1975 = vmul.f32 %v1967, %v1973
    %v1976 = vmul.f32 %v1968, %v1973
    %v1978 = vlaneseq
    %v1979 = vshrl.u32 %v1978, 7
    %v1980 = vsub.s32 0, %v1979
    %v1981 = vrot.slane %v1942, %v1980
    %v1983 = vadd.f32 %v1975, %v1981
    %v1984 = vadd.f32 %v1976, %v1981
    %v1985 = vpack.c.bf16 %v1984, %v1983
    %s1986 = scalar_lea.vmem %s6, 64
    %v1987 = vld [vmem:[%s1986] sm:$0xf]
    %v1988 = vld [vmem:[%s1986 + $0x4] sm:$0xf]
    %v1989 = vld [vmem:[%s1986 + $0x8] sm:$0xf]
    %v1990 = vld [vmem:[%s1986 + $0xc] sm:$0xf]
    %s1991 = scalar_lea.vmem %s9, 4
    %v1992 = vld [vmem:[%s1991] sm:$0x1]
    %v1994 = vlaneseq
    %v1995 = vshrl.u32 %v1994, 7
    %v1996 = vsub.s32 0, %v1995
    %v1997 = vrot.slane %v1992, %v1996
    %v2003 = vunpack.c.l.b16 %v1987
    %v2004 = vunpack.c.l.b16 %v1988
    %v2005 = vunpack.c.l.b16 %v1989
    %v2006 = vunpack.c.l.b16 %v1990
    %v2007 = vpack.c.b16 %v2004, %v2003
    %v2008 = vpack.c.b16 %v2006, %v2005
    %v2012 = vsel %vm175, %v1985, 0
    %2014 = vmatprep.subr.bf16.mxu0 0
    %2015 = vmatpush1.bf16.msra.mxu0 0
    %2016 = vmatprep.subr.bf16.mxu0 0
    %2017 = vmatpush1.bf16.msra.mxu0 0
    %2018 = vmatprep.subr.bf16.mxu0 0
    %2019 = vmatpush1.bf16.msra.mxu0 0
    %2020 = vmatprep.subr.bf16.mxu0 0
    %2021 = vmatpush1.bf16.msra.mxu0 0
    %2022 = vmatprep.subr.bf16.mxu0 0
    %2023 = vmatpush1.bf16.msra.mxu0 0
    %2024 = vmatprep.subr.bf16.mxu0 0
    %2025 = vmatpush1.bf16.msra.mxu0 0
    %2026 = vmatprep.subr.bf16.mxu0 0
    %2027 = vmatpush1.bf16.msra.mxu0 %v2008
    %2028 = vmatprep.subr.bf16.mxu0 0
    %2029 = vmatpush1.bf16.msra.mxu0 %v2007
    %2030 = vmatprep.subr.bf16.mxu0 0
    %2031 = vmatpush2.bf16.msra.mxu0 0
    %2032 = vmatprep.subr.bf16.mxu0 0
    %2033 = vmatpush2.bf16.msra.mxu0 0
    %2034 = vmatprep.subr.bf16.mxu0 0
    %2035 = vmatpush2.bf16.msra.mxu0 0
    %2036 = vmatprep.subr.bf16.mxu0 0
    %2037 = vmatpush2.bf16.msra.mxu0 0
    %2038 = vmatprep.subr.bf16.mxu0 0
    %2039 = vmatpush2.bf16.msra.mxu0 0
    %2040 = vmatprep.subr.bf16.mxu0 0
    %2041 = vmatpush2.bf16.msra.mxu0 0
    %2042 = vmatprep.subr.bf16.mxu0 0
    %2043 = vmatpush2.bf16.msra.mxu0 0
    %2044 = vmatprep.subr.bf16.mxu0 0
    %2045 = vmatpush2.bf16.msra.mxu0 0
    %2046 = vmatprep.mubr.bf16.mxu0 0
    %2047 = vmatmul.mubr.bf16.gmra.mxu0 %v2012
    %v2048 = vpop.f32.mrf.mxu0
    %v2049 = vadd.f32 %v1997, %v2048
    %v2050 = vpop.f32.mrf.mxu0
    %v2051 = vpop.f32.mrf.mxu0
    %v2052 = vadd.f32 %v1997, %v2051
    %v2053 = vpop.f32.mrf.mxu0
    %2054 = vdwg.mxu0
    %s2055 = scalar_lea.vmem %s7, 64
    %v2056 = vld [vmem:[%s2055] sm:$0xf]
    %v2057 = vld [vmem:[%s2055 + $0x4] sm:$0xf]
    %v2058 = vld [vmem:[%s2055 + $0x8] sm:$0xf]
    %v2059 = vld [vmem:[%s2055 + $0xc] sm:$0xf]
    %s2060 = scalar_lea.vmem %s10, 4
    %v2061 = vld [vmem:[%s2060] sm:$0x1]
    %v2063 = vlaneseq
    %v2064 = vshrl.u32 %v2063, 7
    %v2065 = vsub.s32 0, %v2064
    %v2066 = vrot.slane %v2061, %v2065
    %v2072 = vunpack.c.l.b16 %v2056
    %v2073 = vunpack.c.l.b16 %v2057
    %v2074 = vunpack.c.l.b16 %v2058
    %v2075 = vunpack.c.l.b16 %v2059
    %v2076 = vpack.c.b16 %v2073, %v2072
    %v2077 = vpack.c.b16 %v2075, %v2074
    %2080 = vmatprep.subr.bf16.mxu0 0
    %2081 = vmatpush1.bf16.msra.mxu0 0
    %2082 = vmatprep.subr.bf16.mxu0 0
    %2083 = vmatpush1.bf16.msra.mxu0 0
    %2084 = vmatprep.subr.bf16.mxu0 0
    %2085 = vmatpush1.bf16.msra.mxu0 0
    %2086 = vmatprep.subr.bf16.mxu0 0
    %2087 = vmatpush1.bf16.msra.mxu0 0
    %2088 = vmatprep.subr.bf16.mxu0 0
    %2089 = vmatpush1.bf16.msra.mxu0 0
    %2090 = vmatprep.subr.bf16.mxu0 0
    %2091 = vmatpush1.bf16.msra.mxu0 0
    %2092 = vmatprep.subr.bf16.mxu0 0
    %2093 = vmatpush1.bf16.msra.mxu0 %v2077
    %2094 = vmatprep.subr.bf16.mxu0 0
    %2095 = vmatpush1.bf16.msra.mxu0 %v2076
    %2096 = vmatprep.subr.bf16.mxu0 0
    %2097 = vmatpush2.bf16.msra.mxu0 0
    %2098 = vmatprep.subr.bf16.mxu0 0
    %2099 = vmatpush2.bf16.msra.mxu0 0
    %2100 = vmatprep.subr.bf16.mxu0 0
    %2101 = vmatpush2.bf16.msra.mxu0 0
    %2102 = vmatprep.subr.bf16.mxu0 0
    %2103 = vmatpush2.bf16.msra.mxu0 0
    %2104 = vmatprep.subr.bf16.mxu0 0
    %2105 = vmatpush2.bf16.msra.mxu0 0
    %2106 = vmatprep.subr.bf16.mxu0 0
    %2107 = vmatpush2.bf16.msra.mxu0 0
    %2108 = vmatprep.subr.bf16.mxu0 0
    %2109 = vmatpush2.bf16.msra.mxu0 0
    %2110 = vmatprep.subr.bf16.mxu0 0
    %2111 = vmatpush2.bf16.msra.mxu0 0
    %2112 = vmatprep.mubr.bf16.mxu0 0
    %2113 = vmatmul.mubr.bf16.gmra.mxu0 %v2012
    %v2114 = vpop.f32.mrf.mxu0
    %v2115 = vadd.f32 %v2066, %v2114
    %v2116 = vpop.f32.mrf.mxu0
    %v2117 = vpop.f32.mrf.mxu0
    %v2118 = vadd.f32 %v2066, %v2117
    %v2119 = vpop.f32.mrf.mxu0
    %2120 = vdwg.mxu0
    %s2121 = scalar_lea.vmem %s8, 64
    %v2122 = vld [vmem:[%s2121] sm:$0xf]
    %v2123 = vld [vmem:[%s2121 + $0x4] sm:$0xf]
    %v2124 = vld [vmem:[%s2121 + $0x8] sm:$0xf]
    %v2125 = vld [vmem:[%s2121 + $0xc] sm:$0xf]
    %s2126 = scalar_lea.vmem %s11, 4
    %v2127 = vld [vmem:[%s2126] sm:$0x1]
    %v2129 = vlaneseq
    %v2130 = vshrl.u32 %v2129, 7
    %v2131 = vsub.s32 0, %v2130
    %v2132 = vrot.slane %v2127, %v2131
    %v2138 = vunpack.c.l.b16 %v2122
    %v2139 = vunpack.c.l.b16 %v2123
    %v2140 = vunpack.c.l.b16 %v2124
    %v2141 = vunpack.c.l.b16 %v2125
    %v2142 = vpack.c.b16 %v2139, %v2138
    %v2143 = vpack.c.b16 %v2141, %v2140
    %2146 = vmatprep.subr.bf16.mxu0 0
    %2147 = vmatpush1.bf16.msra.mxu0 0
    %2148 = vmatprep.subr.bf16.mxu0 0
    %2149 = vmatpush1.bf16.msra.mxu0 0
    %2150 = vmatprep.subr.bf16.mxu0 0
    %2151 = vmatpush1.bf16.msra.mxu0 0
    %2152 = vmatprep.subr.bf16.mxu0 0
    %2153 = vmatpush1.bf16.msra.mxu0 0
    %2154 = vmatprep.subr.bf16.mxu0 0
    %2155 = vmatpush1.bf16.msra.mxu0 0
    %2156 = vmatprep.subr.bf16.mxu0 0
    %2157 = vmatpush1.bf16.msra.mxu0 0
    %2158 = vmatprep.subr.bf16.mxu0 0
    %2159 = vmatpush1.bf16.msra.mxu0 %v2143
    %2160 = vmatprep.subr.bf16.mxu0 0
    %2161 = vmatpush1.bf16.msra.mxu0 %v2142
    %2162 = vmatprep.subr.bf16.mxu0 0
    %2163 = vmatpush2.bf16.msra.mxu0 0
    %2164 = vmatprep.subr.bf16.mxu0 0
    %2165 = vmatpush2.bf16.msra.mxu0 0
    %2166 = vmatprep.subr.bf16.mxu0 0
    %2167 = vmatpush2.bf16.msra.mxu0 0
    %2168 = vmatprep.subr.bf16.mxu0 0
    %2169 = vmatpush2.bf16.msra.mxu0 0
    %2170 = vmatprep.subr.bf16.mxu0 0
    %2171 = vmatpush2.bf16.msra.mxu0 0
    %2172 = vmatprep.subr.bf16.mxu0 0
    %2173 = vmatpush2.bf16.msra.mxu0 0
    %2174 = vmatprep.subr.bf16.mxu0 0
    %2175 = vmatpush2.bf16.msra.mxu0 0
    %2176 = vmatprep.subr.bf16.mxu0 0
    %2177 = vmatpush2.bf16.msra.mxu0 0
    %2178 = vmatprep.mubr.bf16.mxu0 0
    %2179 = vmatmul.mubr.bf16.gmra.mxu0 %v2012
    %v2180 = vpop.f32.mrf.mxu0
    %v2181 = vadd.f32 %v2132, %v2180
    %v2182 = vpop.f32.mrf.mxu0
    %v2183 = vpop.f32.mrf.mxu0
    %v2184 = vadd.f32 %v2132, %v2183
    %v2185 = vpop.f32.mrf.mxu0
    %2186 = vdwg.mxu0
    %v2187 = vpack.c.bf16 %v2052, %v2049
    %v2188 = vpack.c.bf16 %v2118, %v2115
    %v2190 = vsel %vm419, %v2187, 0
    %v2193 = vsel %vm419, %v2188, 0
    %2195 = vmatprep.subr.bf16.mxu0 0
    %2196 = vmatpush1.bf16.xpose.msra.mxu0 0
    %2197 = vmatprep.subr.bf16.mxu0 0
    %2198 = vmatpush1.bf16.xpose.msra.mxu0 0
    %2199 = vmatprep.subr.bf16.mxu0 0
    %2200 = vmatpush1.bf16.xpose.msra.mxu0 0
    %2201 = vmatprep.subr.bf16.mxu0 0
    %2202 = vmatpush1.bf16.xpose.msra.mxu0 0
    %2203 = vmatprep.subr.bf16.mxu0 0
    %2204 = vmatpush1.bf16.xpose.msra.mxu0 0
    %2205 = vmatprep.subr.bf16.mxu0 0
    %2206 = vmatpush1.bf16.xpose.msra.mxu0 0
    %2207 = vmatprep.subr.bf16.mxu0 0
    %2208 = vmatpush1.bf16.xpose.msra.mxu0 0
    %2209 = vmatprep.subr.bf16.mxu0 0
    %2210 = vmatpush1.bf16.xpose.msra.mxu0 %v2193
    %2211 = vmatprep.subr.bf16.mxu0 0
    %2212 = vmatpush2.bf16.xpose.msra.mxu0 0
    %2213 = vmatprep.subr.bf16.mxu0 0
    %2214 = vmatpush2.bf16.xpose.msra.mxu0 0
    %2215 = vmatprep.subr.bf16.mxu0 0
    %2216 = vmatpush2.bf16.xpose.msra.mxu0 0
    %2217 = vmatprep.subr.bf16.mxu0 0
    %2218 = vmatpush2.bf16.xpose.msra.mxu0 0
    %2219 = vmatprep.subr.bf16.mxu0 0
    %2220 = vmatpush2.bf16.xpose.msra.mxu0 0
    %2221 = vmatprep.subr.bf16.mxu0 0
    %2222 = vmatpush2.bf16.xpose.msra.mxu0 0
    %2223 = vmatprep.subr.bf16.mxu0 0
    %2224 = vmatpush2.bf16.xpose.msra.mxu0 0
    %2225 = vmatprep.subr.bf16.mxu0 0
    %2226 = vmatpush2.bf16.xpose.msra.mxu0 0
    %2227 = vmatprep.mubr.bf16.mxu0 0
    %2228 = vmatmul.mubr.bf16.gmra.mxu0 %v2190
    %v2229 = vpop.f32.mrf.mxu0
    %v2230 = vadd.f32 %v219, %v2229
    %v2231 = vpop.f32.mrf.mxu0
    %v2232 = vpop.f32.mrf.mxu0
    %v2233 = vadd.f32 %v220, %v2232
    %v2234 = vpop.f32.mrf.mxu0
    %2235 = vdwg.mxu0
    %v2236 = vsel %vm467, %v2230, -inf
    %2237 = vmax.xlane.f32.xlu0 %v2236
    %v2238 = vpop.xlane.xlu0 %2237
    %v2239 = vsel %vm467, %v2233, -inf
    %2240 = vmax.xlane.f32.xlu0 %v2239
    %v2241 = vpop.xlane.xlu0 %2240
    %v2242 = vsub.f32 %v2230, %v2238
    %v2243 = vsub.f32 %v2233, %v2241
    %v2244 = vmul.f32 %v2242, 1.442695
    %v2245 = vpow.pop %v2244
    %v2246 = vmul.f32 %v2243, 1.442695
    %v2247 = vpow.pop %v2246
    %v2248 = vsel %vm467, %v2245, 0.0
    %2249 = vadd.xlane.f32.xlu0 %v2248
    %v2250 = vpop.xlane.xlu0 %2249
    %v2251 = vsel %vm467, %v2247, 0.0
    %2252 = vadd.xlane.f32.xlu0 %v2251
    %v2253 = vpop.xlane.xlu0 %2252
    %v2254 = vrcp.pop %v2250
    %v2255 = vrcp.pop %v2253
    %v2256 = vmul.f32 %v2245, %v2254
    %v2257 = vmul.f32 %v2247, %v2255
    %v2258 = vpack.c.bf16 %v2257, %v2256
    %v2259 = vpack.c.bf16 %v2184, %v2181
    %v2261 = vsel %vm467, %v2258, 0
    %2263 = vmatprep.subr.bf16.mxu0 0
    %2264 = vmatpush1.bf16.msra.mxu0 0
    %2265 = vmatprep.subr.bf16.mxu0 0
    %2266 = vmatpush1.bf16.msra.mxu0 0
    %2267 = vmatprep.subr.bf16.mxu0 0
    %2268 = vmatpush1.bf16.msra.mxu0 0
    %2269 = vmatprep.subr.bf16.mxu0 0
    %2270 = vmatpush1.bf16.msra.mxu0 0
    %2271 = vmatprep.subr.bf16.mxu0 0
    %2272 = vmatpush1.bf16.msra.mxu0 0
    %2273 = vmatprep.subr.bf16.mxu0 0
    %2274 = vmatpush1.bf16.msra.mxu0 0
    %2275 = vmatprep.subr.bf16.mxu0 0
    %2276 = vmatpush1.bf16.msra.mxu0 0
    %2277 = vmatprep.subr.bf16.mxu0 0
    %2278 = vmatpush1.bf16.msra.mxu0 %v2259
    %2279 = vmatprep.subr.bf16.mxu0 0
    %2280 = vmatpush2.bf16.msra.mxu0 0
    %2281 = vmatprep.subr.bf16.mxu0 0
    %2282 = vmatpush2.bf16.msra.mxu0 0
    %2283 = vmatprep.subr.bf16.mxu0 0
    %2284 = vmatpush2.bf16.msra.mxu0 0
    %2285 = vmatprep.subr.bf16.mxu0 0
    %2286 = vmatpush2.bf16.msra.mxu0 0
    %2287 = vmatprep.subr.bf16.mxu0 0
    %2288 = vmatpush2.bf16.msra.mxu0 0
    %2289 = vmatprep.subr.bf16.mxu0 0
    %2290 = vmatpush2.bf16.msra.mxu0 0
    %2291 = vmatprep.subr.bf16.mxu0 0
    %2292 = vmatpush2.bf16.msra.mxu0 0
    %2293 = vmatprep.subr.bf16.mxu0 0
    %2294 = vmatpush2.bf16.msra.mxu0 0
    %2295 = vmatprep.mubr.bf16.mxu0 0
    %2296 = vmatmul.mubr.bf16.gmra.mxu0 %v2261
    %v2297 = vpop.f32.mrf.mxu0
    %v2298 = vadd.f32 0.0, %v2297
    %v2299 = vpop.f32.mrf.mxu0
    %v2300 = vpop.f32.mrf.mxu0
    %v2301 = vadd.f32 0.0, %v2300
    %v2302 = vpop.f32.mrf.mxu0
    %2303 = vdwg.mxu0
    %v2304 = vpack.c.bf16 %v2301, %v2298
    %s2305 = scalar_lea.vmem %s12, 16
    %v2306 = vld [vmem:[%s2305] sm:$0xf]
    %s2307 = scalar_lea.vmem %s6, 80
    %v2308 = vld [vmem:[%s2307] sm:$0xf]
    %v2309 = vld [vmem:[%s2307 + $0x4] sm:$0xf]
    %v2310 = vld [vmem:[%s2307 + $0x8] sm:$0xf]
    %v2311 = vld [vmem:[%s2307 + $0xc] sm:$0xf]
    %s2312 = scalar_lea.vmem %s9, 5
    %v2313 = vld [vmem:[%s2312] sm:$0x1]
    %v2315 = vlaneseq
    %v2316 = vshrl.u32 %v2315, 7
    %v2317 = vsub.s32 0, %v2316
    %v2318 = vrot.slane %v2313, %v2317
    %v2324 = vunpack.c.l.b16 %v2308
    %v2325 = vunpack.c.l.b16 %v2309
    %v2326 = vunpack.c.l.b16 %v2310
    %v2327 = vunpack.c.l.b16 %v2311
    %v2328 = vpack.c.b16 %v2325, %v2324
    %v2329 = vpack.c.b16 %v2327, %v2326
    %2332 = vmatprep.subr.bf16.mxu0 0
    %2333 = vmatpush1.bf16.msra.mxu0 0
    %2334 = vmatprep.subr.bf16.mxu0 0
    %2335 = vmatpush1.bf16.msra.mxu0 0
    %2336 = vmatprep.subr.bf16.mxu0 0
    %2337 = vmatpush1.bf16.msra.mxu0 0
    %2338 = vmatprep.subr.bf16.mxu0 0
    %2339 = vmatpush1.bf16.msra.mxu0 0
    %2340 = vmatprep.subr.bf16.mxu0 0
    %2341 = vmatpush1.bf16.msra.mxu0 0
    %2342 = vmatprep.subr.bf16.mxu0 0
    %2343 = vmatpush1.bf16.msra.mxu0 0
    %2344 = vmatprep.subr.bf16.mxu0 0
    %2345 = vmatpush1.bf16.msra.mxu0 %v2329
    %2346 = vmatprep.subr.bf16.mxu0 0
    %2347 = vmatpush1.bf16.msra.mxu0 %v2328
    %2348 = vmatprep.subr.bf16.mxu0 0
    %2349 = vmatpush2.bf16.msra.mxu0 0
    %2350 = vmatprep.subr.bf16.mxu0 0
    %2351 = vmatpush2.bf16.msra.mxu0 0
    %2352 = vmatprep.subr.bf16.mxu0 0
    %2353 = vmatpush2.bf16.msra.mxu0 0
    %2354 = vmatprep.subr.bf16.mxu0 0
    %2355 = vmatpush2.bf16.msra.mxu0 0
    %2356 = vmatprep.subr.bf16.mxu0 0
    %2357 = vmatpush2.bf16.msra.mxu0 0
    %2358 = vmatprep.subr.bf16.mxu0 0
    %2359 = vmatpush2.bf16.msra.mxu0 0
    %2360 = vmatprep.subr.bf16.mxu0 0
    %2361 = vmatpush2.bf16.msra.mxu0 0
    %2362 = vmatprep.subr.bf16.mxu0 0
    %2363 = vmatpush2.bf16.msra.mxu0 0
    %2364 = vmatprep.mubr.bf16.mxu0 0
    %2365 = vmatmul.mubr.bf16.gmra.mxu0 %v2012
    %v2366 = vpop.f32.mrf.mxu0
    %v2367 = vadd.f32 %v2318, %v2366
    %v2368 = vpop.f32.mrf.mxu0
    %v2369 = vpop.f32.mrf.mxu0
    %v2370 = vadd.f32 %v2318, %v2369
    %v2371 = vpop.f32.mrf.mxu0
    %2372 = vdwg.mxu0
    %s2373 = scalar_lea.vmem %s7, 80
    %v2374 = vld [vmem:[%s2373] sm:$0xf]
    %v2375 = vld [vmem:[%s2373 + $0x4] sm:$0xf]
    %v2376 = vld [vmem:[%s2373 + $0x8] sm:$0xf]
    %v2377 = vld [vmem:[%s2373 + $0xc] sm:$0xf]
    %s2378 = scalar_lea.vmem %s10, 5
    %v2379 = vld [vmem:[%s2378] sm:$0x1]
    %v2381 = vlaneseq
    %v2382 = vshrl.u32 %v2381, 7
    %v2383 = vsub.s32 0, %v2382
    %v2384 = vrot.slane %v2379, %v2383
    %v2390 = vunpack.c.l.b16 %v2374
    %v2391 = vunpack.c.l.b16 %v2375
    %v2392 = vunpack.c.l.b16 %v2376
    %v2393 = vunpack.c.l.b16 %v2377
    %v2394 = vpack.c.b16 %v2391, %v2390
    %v2395 = vpack.c.b16 %v2393, %v2392
    %2398 = vmatprep.subr.bf16.mxu0 0
    %2399 = vmatpush1.bf16.msra.mxu0 0
    %2400 = vmatprep.subr.bf16.mxu0 0
    %2401 = vmatpush1.bf16.msra.mxu0 0
    %2402 = vmatprep.subr.bf16.mxu0 0
    %2403 = vmatpush1.bf16.msra.mxu0 0
    %2404 = vmatprep.subr.bf16.mxu0 0
    %2405 = vmatpush1.bf16.msra.mxu0 0
    %2406 = vmatprep.subr.bf16.mxu0 0
    %2407 = vmatpush1.bf16.msra.mxu0 0
    %2408 = vmatprep.subr.bf16.mxu0 0
    %2409 = vmatpush1.bf16.msra.mxu0 0
    %2410 = vmatprep.subr.bf16.mxu0 0
    %2411 = vmatpush1.bf16.msra.mxu0 %v2395
    %2412 = vmatprep.subr.bf16.mxu0 0
    %2413 = vmatpush1.bf16.msra.mxu0 %v2394
    %2414 = vmatprep.subr.bf16.mxu0 0
    %2415 = vmatpush2.bf16.msra.mxu0 0
    %2416 = vmatprep.subr.bf16.mxu0 0
    %2417 = vmatpush2.bf16.msra.mxu0 0
    %2418 = vmatprep.subr.bf16.mxu0 0
    %2419 = vmatpush2.bf16.msra.mxu0 0
    %2420 = vmatprep.subr.bf16.mxu0 0
    %2421 = vmatpush2.bf16.msra.mxu0 0
    %2422 = vmatprep.subr.bf16.mxu0 0
    %2423 = vmatpush2.bf16.msra.mxu0 0
    %2424 = vmatprep.subr.bf16.mxu0 0
    %2425 = vmatpush2.bf16.msra.mxu0 0
    %2426 = vmatprep.subr.bf16.mxu0 0
    %2427 = vmatpush2.bf16.msra.mxu0 0
    %2428 = vmatprep.subr.bf16.mxu0 0
    %2429 = vmatpush2.bf16.msra.mxu0 0
    %2430 = vmatprep.mubr.bf16.mxu0 0
    %2431 = vmatmul.mubr.bf16.gmra.mxu0 %v2012
    %v2432 = vpop.f32.mrf.mxu0
    %v2433 = vadd.f32 %v2384, %v2432
    %v2434 = vpop.f32.mrf.mxu0
    %v2435 = vpop.f32.mrf.mxu0
    %v2436 = vadd.f32 %v2384, %v2435
    %v2437 = vpop.f32.mrf.mxu0
    %2438 = vdwg.mxu0
    %s2439 = scalar_lea.vmem %s8, 80
    %v2440 = vld [vmem:[%s2439] sm:$0xf]
    %v2441 = vld [vmem:[%s2439 + $0x4] sm:$0xf]
    %v2442 = vld [vmem:[%s2439 + $0x8] sm:$0xf]
    %v2443 = vld [vmem:[%s2439 + $0xc] sm:$0xf]
    %s2444 = scalar_lea.vmem %s11, 5
    %v2445 = vld [vmem:[%s2444] sm:$0x1]
    %v2447 = vlaneseq
    %v2448 = vshrl.u32 %v2447, 7
    %v2449 = vsub.s32 0, %v2448
    %v2450 = vrot.slane %v2445, %v2449
    %v2456 = vunpack.c.l.b16 %v2440
    %v2457 = vunpack.c.l.b16 %v2441
    %v2458 = vunpack.c.l.b16 %v2442
    %v2459 = vunpack.c.l.b16 %v2443
    %v2460 = vpack.c.b16 %v2457, %v2456
    %v2461 = vpack.c.b16 %v2459, %v2458
    %2464 = vmatprep.subr.bf16.mxu0 0
    %2465 = vmatpush1.bf16.msra.mxu0 0
    %2466 = vmatprep.subr.bf16.mxu0 0
    %2467 = vmatpush1.bf16.msra.mxu0 0
    %2468 = vmatprep.subr.bf16.mxu0 0
    %2469 = vmatpush1.bf16.msra.mxu0 0
    %2470 = vmatprep.subr.bf16.mxu0 0
    %2471 = vmatpush1.bf16.msra.mxu0 0
    %2472 = vmatprep.subr.bf16.mxu0 0
    %2473 = vmatpush1.bf16.msra.mxu0 0
    %2474 = vmatprep.subr.bf16.mxu0 0
    %2475 = vmatpush1.bf16.msra.mxu0 0
    %2476 = vmatprep.subr.bf16.mxu0 0
    %2477 = vmatpush1.bf16.msra.mxu0 %v2461
    %2478 = vmatprep.subr.bf16.mxu0 0
    %2479 = vmatpush1.bf16.msra.mxu0 %v2460
    %2480 = vmatprep.subr.bf16.mxu0 0
    %2481 = vmatpush2.bf16.msra.mxu0 0
    %2482 = vmatprep.subr.bf16.mxu0 0
    %2483 = vmatpush2.bf16.msra.mxu0 0
    %2484 = vmatprep.subr.bf16.mxu0 0
    %2485 = vmatpush2.bf16.msra.mxu0 0
    %2486 = vmatprep.subr.bf16.mxu0 0
    %2487 = vmatpush2.bf16.msra.mxu0 0
    %2488 = vmatprep.subr.bf16.mxu0 0
    %2489 = vmatpush2.bf16.msra.mxu0 0
    %2490 = vmatprep.subr.bf16.mxu0 0
    %2491 = vmatpush2.bf16.msra.mxu0 0
    %2492 = vmatprep.subr.bf16.mxu0 0
    %2493 = vmatpush2.bf16.msra.mxu0 0
    %2494 = vmatprep.subr.bf16.mxu0 0
    %2495 = vmatpush2.bf16.msra.mxu0 0
    %2496 = vmatprep.mubr.bf16.mxu0 0
    %2497 = vmatmul.mubr.bf16.gmra.mxu0 %v2012
    %v2498 = vpop.f32.mrf.mxu0
    %v2499 = vadd.f32 %v2450, %v2498
    %v2500 = vpop.f32.mrf.mxu0
    %v2501 = vpop.f32.mrf.mxu0
    %v2502 = vadd.f32 %v2450, %v2501
    %v2503 = vpop.f32.mrf.mxu0
    %2504 = vdwg.mxu0
    %v2505 = vpack.c.bf16 %v2370, %v2367
    %v2506 = vpack.c.bf16 %v2436, %v2433
    %v2508 = vsel %vm419, %v2505, 0
    %v2511 = vsel %vm419, %v2506, 0
    %2513 = vmatprep.subr.bf16.mxu0 0
    %2514 = vmatpush1.bf16.xpose.msra.mxu0 0
    %2515 = vmatprep.subr.bf16.mxu0 0
    %2516 = vmatpush1.bf16.xpose.msra.mxu0 0
    %2517 = vmatprep.subr.bf16.mxu0 0
    %2518 = vmatpush1.bf16.xpose.msra.mxu0 0
    %2519 = vmatprep.subr.bf16.mxu0 0
    %2520 = vmatpush1.bf16.xpose.msra.mxu0 0
    %2521 = vmatprep.subr.bf16.mxu0 0
    %2522 = vmatpush1.bf16.xpose.msra.mxu0 0
    %2523 = vmatprep.subr.bf16.mxu0 0
    %2524 = vmatpush1.bf16.xpose.msra.mxu0 0
    %2525 = vmatprep.subr.bf16.mxu0 0
    %2526 = vmatpush1.bf16.xpose.msra.mxu0 0
    %2527 = vmatprep.subr.bf16.mxu0 0
    %2528 = vmatpush1.bf16.xpose.msra.mxu0 %v2511
    %2529 = vmatprep.subr.bf16.mxu0 0
    %2530 = vmatpush2.bf16.xpose.msra.mxu0 0
    %2531 = vmatprep.subr.bf16.mxu0 0
    %2532 = vmatpush2.bf16.xpose.msra.mxu0 0
    %2533 = vmatprep.subr.bf16.mxu0 0
    %2534 = vmatpush2.bf16.xpose.msra.mxu0 0
    %2535 = vmatprep.subr.bf16.mxu0 0
    %2536 = vmatpush2.bf16.xpose.msra.mxu0 0
    %2537 = vmatprep.subr.bf16.mxu0 0
    %2538 = vmatpush2.bf16.xpose.msra.mxu0 0
    %2539 = vmatprep.subr.bf16.mxu0 0
    %2540 = vmatpush2.bf16.xpose.msra.mxu0 0
    %2541 = vmatprep.subr.bf16.mxu0 0
    %2542 = vmatpush2.bf16.xpose.msra.mxu0 0
    %2543 = vmatprep.subr.bf16.mxu0 0
    %2544 = vmatpush2.bf16.xpose.msra.mxu0 0
    %2545 = vmatprep.mubr.bf16.mxu0 0
    %2546 = vmatmul.mubr.bf16.gmra.mxu0 %v2508
    %v2547 = vpop.f32.mrf.mxu0
    %v2548 = vadd.f32 %v219, %v2547
    %v2549 = vpop.f32.mrf.mxu0
    %v2550 = vpop.f32.mrf.mxu0
    %v2551 = vadd.f32 %v220, %v2550
    %v2552 = vpop.f32.mrf.mxu0
    %2553 = vdwg.mxu0
    %v2554 = vsel %vm467, %v2548, -inf
    %2555 = vmax.xlane.f32.xlu0 %v2554
    %v2556 = vpop.xlane.xlu0 %2555
    %v2557 = vsel %vm467, %v2551, -inf
    %2558 = vmax.xlane.f32.xlu0 %v2557
    %v2559 = vpop.xlane.xlu0 %2558
    %v2560 = vsub.f32 %v2548, %v2556
    %v2561 = vsub.f32 %v2551, %v2559
    %v2562 = vmul.f32 %v2560, 1.442695
    %v2563 = vpow.pop %v2562
    %v2564 = vmul.f32 %v2561, 1.442695
    %v2565 = vpow.pop %v2564
    %v2566 = vsel %vm467, %v2563, 0.0
    %2567 = vadd.xlane.f32.xlu0 %v2566
    %v2568 = vpop.xlane.xlu0 %2567
    %v2569 = vsel %vm467, %v2565, 0.0
    %2570 = vadd.xlane.f32.xlu0 %v2569
    %v2571 = vpop.xlane.xlu0 %2570
    %v2572 = vrcp.pop %v2568
    %v2573 = vrcp.pop %v2571
    %v2574 = vmul.f32 %v2563, %v2572
    %v2575 = vmul.f32 %v2565, %v2573
    %v2576 = vpack.c.bf16 %v2575, %v2574
    %v2577 = vpack.c.bf16 %v2502, %v2499
    %v2579 = vsel %vm467, %v2576, 0
    %2581 = vmatprep.subr.bf16.mxu0 0
    %2582 = vmatpush1.bf16.msra.mxu0 0
    %2583 = vmatprep.subr.bf16.mxu0 0
    %2584 = vmatpush1.bf16.msra.mxu0 0
    %2585 = vmatprep.subr.bf16.mxu0 0
    %2586 = vmatpush1.bf16.msra.mxu0 0
    %2587 = vmatprep.subr.bf16.mxu0 0
    %2588 = vmatpush1.bf16.msra.mxu0 0
    %2589 = vmatprep.subr.bf16.mxu0 0
    %2590 = vmatpush1.bf16.msra.mxu0 0
    %2591 = vmatprep.subr.bf16.mxu0 0
    %2592 = vmatpush1.bf16.msra.mxu0 0
    %2593 = vmatprep.subr.bf16.mxu0 0
    %2594 = vmatpush1.bf16.msra.mxu0 0
    %2595 = vmatprep.subr.bf16.mxu0 0
    %2596 = vmatpush1.bf16.msra.mxu0 %v2577
    %2597 = vmatprep.subr.bf16.mxu0 0
    %2598 = vmatpush2.bf16.msra.mxu0 0
    %2599 = vmatprep.subr.bf16.mxu0 0
    %2600 = vmatpush2.bf16.msra.mxu0 0
    %2601 = vmatprep.subr.bf16.mxu0 0
    %2602 = vmatpush2.bf16.msra.mxu0 0
    %2603 = vmatprep.subr.bf16.mxu0 0
    %2604 = vmatpush2.bf16.msra.mxu0 0
    %2605 = vmatprep.subr.bf16.mxu0 0
    %2606 = vmatpush2.bf16.msra.mxu0 0
    %2607 = vmatprep.subr.bf16.mxu0 0
    %2608 = vmatpush2.bf16.msra.mxu0 0
    %2609 = vmatprep.subr.bf16.mxu0 0
    %2610 = vmatpush2.bf16.msra.mxu0 0
    %2611 = vmatprep.subr.bf16.mxu0 0
    %2612 = vmatpush2.bf16.msra.mxu0 0
    %2613 = vmatprep.mubr.bf16.mxu0 0
    %2614 = vmatmul.mubr.bf16.gmra.mxu0 %v2579
    %v2615 = vpop.f32.mrf.mxu0
    %v2616 = vadd.f32 0.0, %v2615
    %v2617 = vpop.f32.mrf.mxu0
    %v2618 = vpop.f32.mrf.mxu0
    %v2619 = vadd.f32 0.0, %v2618
    %v2620 = vpop.f32.mrf.mxu0
    %2621 = vdwg.mxu0
    %v2622 = vpack.c.bf16 %v2619, %v2616
    %s2623 = scalar_lea.vmem %s12, 20
    %v2624 = vld [vmem:[%s2623] sm:$0xf]
    %v2626 = vsel %vm419, %v2622, 0
    %v2629 = vsel %vm859, %v2624, 0
    %2631 = vmatprep.subr.bf16.mxu0 0
    %2632 = vmatpush1.bf16.msra.mxu0 0
    %2633 = vmatprep.subr.bf16.mxu0 0
    %2634 = vmatpush1.bf16.msra.mxu0 0
    %2635 = vmatprep.subr.bf16.mxu0 0
    %2636 = vmatpush1.bf16.msra.mxu0 0
    %2637 = vmatprep.subr.bf16.mxu0 0
    %2638 = vmatpush1.bf16.msra.mxu0 0
    %2639 = vmatprep.subr.bf16.mxu0 0
    %2640 = vmatpush1.bf16.msra.mxu0 0
    %2641 = vmatprep.subr.bf16.mxu0 0
    %2642 = vmatpush1.bf16.msra.mxu0 0
    %2643 = vmatprep.subr.bf16.mxu0 0
    %2644 = vmatpush1.bf16.msra.mxu0 0
    %2645 = vmatprep.subr.bf16.mxu0 0
    %2646 = vmatpush1.bf16.msra.mxu0 %v2629
    %2647 = vmatprep.subr.bf16.mxu0 0
    %2648 = vmatpush2.bf16.msra.mxu0 0
    %2649 = vmatprep.subr.bf16.mxu0 0
    %2650 = vmatpush2.bf16.msra.mxu0 0
    %2651 = vmatprep.subr.bf16.mxu0 0
    %2652 = vmatpush2.bf16.msra.mxu0 0
    %2653 = vmatprep.subr.bf16.mxu0 0
    %2654 = vmatpush2.bf16.msra.mxu0 0
    %2655 = vmatprep.subr.bf16.mxu0 0
    %2656 = vmatpush2.bf16.msra.mxu0 0
    %2657 = vmatprep.subr.bf16.mxu0 0
    %2658 = vmatpush2.bf16.msra.mxu0 0
    %2659 = vmatprep.subr.bf16.mxu0 0
    %2660 = vmatpush2.bf16.msra.mxu0 0
    %2661 = vmatprep.subr.bf16.mxu0 0
    %2662 = vmatpush2.bf16.msra.mxu0 0
    %2663 = vmatprep.mubr.bf16.mxu0 0
    %2664 = vmatmul.mubr.bf16.gmra.mxu0 %v2626
    %v2665 = vpop.f32.mrf.mxu0
    %v2666 = vadd.f32 0.0, %v2665
    %v2667 = vpop.f32.mrf.mxu0
    %v2668 = vpop.f32.mrf.mxu0
    %v2669 = vadd.f32 0.0, %v2668
    %v2670 = vpop.f32.mrf.mxu0
    %2671 = vdwg.mxu0
    %v2673 = vsel %vm419, %v2304, 0
    %v2676 = vsel %vm859, %v2306, 0
    %2678 = vmatprep.subr.bf16.mxu0 0
    %2679 = vmatpush1.bf16.msra.mxu0 0
    %2680 = vmatprep.subr.bf16.mxu0 0
    %2681 = vmatpush1.bf16.msra.mxu0 0
    %2682 = vmatprep.subr.bf16.mxu0 0
    %2683 = vmatpush1.bf16.msra.mxu0 0
    %2684 = vmatprep.subr.bf16.mxu0 0
    %2685 = vmatpush1.bf16.msra.mxu0 0
    %2686 = vmatprep.subr.bf16.mxu0 0
    %2687 = vmatpush1.bf16.msra.mxu0 0
    %2688 = vmatprep.subr.bf16.mxu0 0
    %2689 = vmatpush1.bf16.msra.mxu0 0
    %2690 = vmatprep.subr.bf16.mxu0 0
    %2691 = vmatpush1.bf16.msra.mxu0 0
    %2692 = vmatprep.subr.bf16.mxu0 0
    %2693 = vmatpush1.bf16.msra.mxu0 %v2676
    %2694 = vmatprep.subr.bf16.mxu0 0
    %2695 = vmatpush2.bf16.msra.mxu0 0
    %2696 = vmatprep.subr.bf16.mxu0 0
    %2697 = vmatpush2.bf16.msra.mxu0 0
    %2698 = vmatprep.subr.bf16.mxu0 0
    %2699 = vmatpush2.bf16.msra.mxu0 0
    %2700 = vmatprep.subr.bf16.mxu0 0
    %2701 = vmatpush2.bf16.msra.mxu0 0
    %2702 = vmatprep.subr.bf16.mxu0 0
    %2703 = vmatpush2.bf16.msra.mxu0 0
    %2704 = vmatprep.subr.bf16.mxu0 0
    %2705 = vmatpush2.bf16.msra.mxu0 0
    %2706 = vmatprep.subr.bf16.mxu0 0
    %2707 = vmatpush2.bf16.msra.mxu0 0
    %2708 = vmatprep.subr.bf16.mxu0 0
    %2709 = vmatpush2.bf16.msra.mxu0 0
    %2710 = vmatprep.mubr.bf16.mxu0 0
    %2711 = vmatmul.mubr.bf16.gmra.mxu0 %v2673
    %v2712 = vpop.f32.mrf.mxu0
    %v2713 = vadd.f32 %v2666, %v2712
    %v2714 = vpop.f32.mrf.mxu0
    %v2715 = vpop.f32.mrf.mxu0
    %v2716 = vadd.f32 %v2669, %v2715
    %v2717 = vpop.f32.mrf.mxu0
    %2718 = vdwg.mxu0
    %s2719 = scalar_lea.vmem %s6, 96
    %v2720 = vld [vmem:[%s2719] sm:$0xf]
    %v2721 = vld [vmem:[%s2719 + $0x4] sm:$0xf]
    %v2722 = vld [vmem:[%s2719 + $0x8] sm:$0xf]
    %v2723 = vld [vmem:[%s2719 + $0xc] sm:$0xf]
    %s2724 = scalar_lea.vmem %s9, 6
    %v2725 = vld [vmem:[%s2724] sm:$0x1]
    %v2727 = vlaneseq
    %v2728 = vshrl.u32 %v2727, 7
    %v2729 = vsub.s32 0, %v2728
    %v2730 = vrot.slane %v2725, %v2729
    %v2736 = vunpack.c.l.b16 %v2720
    %v2737 = vunpack.c.l.b16 %v2721
    %v2738 = vunpack.c.l.b16 %v2722
    %v2739 = vunpack.c.l.b16 %v2723
    %v2740 = vpack.c.b16 %v2737, %v2736
    %v2741 = vpack.c.b16 %v2739, %v2738
    %2744 = vmatprep.subr.bf16.mxu0 0
    %2745 = vmatpush1.bf16.msra.mxu0 0
    %2746 = vmatprep.subr.bf16.mxu0 0
    %2747 = vmatpush1.bf16.msra.mxu0 0
    %2748 = vmatprep.subr.bf16.mxu0 0
    %2749 = vmatpush1.bf16.msra.mxu0 0
    %2750 = vmatprep.subr.bf16.mxu0 0
    %2751 = vmatpush1.bf16.msra.mxu0 0
    %2752 = vmatprep.subr.bf16.mxu0 0
    %2753 = vmatpush1.bf16.msra.mxu0 0
    %2754 = vmatprep.subr.bf16.mxu0 0
    %2755 = vmatpush1.bf16.msra.mxu0 0
    %2756 = vmatprep.subr.bf16.mxu0 0
    %2757 = vmatpush1.bf16.msra.mxu0 %v2741
    %2758 = vmatprep.subr.bf16.mxu0 0
    %2759 = vmatpush1.bf16.msra.mxu0 %v2740
    %2760 = vmatprep.subr.bf16.mxu0 0
    %2761 = vmatpush2.bf16.msra.mxu0 0
    %2762 = vmatprep.subr.bf16.mxu0 0
    %2763 = vmatpush2.bf16.msra.mxu0 0
    %2764 = vmatprep.subr.bf16.mxu0 0
    %2765 = vmatpush2.bf16.msra.mxu0 0
    %2766 = vmatprep.subr.bf16.mxu0 0
    %2767 = vmatpush2.bf16.msra.mxu0 0
    %2768 = vmatprep.subr.bf16.mxu0 0
    %2769 = vmatpush2.bf16.msra.mxu0 0
    %2770 = vmatprep.subr.bf16.mxu0 0
    %2771 = vmatpush2.bf16.msra.mxu0 0
    %2772 = vmatprep.subr.bf16.mxu0 0
    %2773 = vmatpush2.bf16.msra.mxu0 0
    %2774 = vmatprep.subr.bf16.mxu0 0
    %2775 = vmatpush2.bf16.msra.mxu0 0
    %2776 = vmatprep.mubr.bf16.mxu0 0
    %2777 = vmatmul.mubr.bf16.gmra.mxu0 %v2012
    %v2778 = vpop.f32.mrf.mxu0
    %v2779 = vadd.f32 %v2730, %v2778
    %v2780 = vpop.f32.mrf.mxu0
    %v2781 = vpop.f32.mrf.mxu0
    %v2782 = vadd.f32 %v2730, %v2781
    %v2783 = vpop.f32.mrf.mxu0
    %2784 = vdwg.mxu0
    %s2785 = scalar_lea.vmem %s7, 96
    %v2786 = vld [vmem:[%s2785] sm:$0xf]
    %v2787 = vld [vmem:[%s2785 + $0x4] sm:$0xf]
    %v2788 = vld [vmem:[%s2785 + $0x8] sm:$0xf]
    %v2789 = vld [vmem:[%s2785 + $0xc] sm:$0xf]
    %s2790 = scalar_lea.vmem %s10, 6
    %v2791 = vld [vmem:[%s2790] sm:$0x1]
    %v2793 = vlaneseq
    %v2794 = vshrl.u32 %v2793, 7
    %v2795 = vsub.s32 0, %v2794
    %v2796 = vrot.slane %v2791, %v2795
    %v2802 = vunpack.c.l.b16 %v2786
    %v2803 = vunpack.c.l.b16 %v2787
    %v2804 = vunpack.c.l.b16 %v2788
    %v2805 = vunpack.c.l.b16 %v2789
    %v2806 = vpack.c.b16 %v2803, %v2802
    %v2807 = vpack.c.b16 %v2805, %v2804
    %2810 = vmatprep.subr.bf16.mxu0 0
    %2811 = vmatpush1.bf16.msra.mxu0 0
    %2812 = vmatprep.subr.bf16.mxu0 0
    %2813 = vmatpush1.bf16.msra.mxu0 0
    %2814 = vmatprep.subr.bf16.mxu0 0
    %2815 = vmatpush1.bf16.msra.mxu0 0
    %2816 = vmatprep.subr.bf16.mxu0 0
    %2817 = vmatpush1.bf16.msra.mxu0 0
    %2818 = vmatprep.subr.bf16.mxu0 0
    %2819 = vmatpush1.bf16.msra.mxu0 0
    %2820 = vmatprep.subr.bf16.mxu0 0
    %2821 = vmatpush1.bf16.msra.mxu0 0
    %2822 = vmatprep.subr.bf16.mxu0 0
    %2823 = vmatpush1.bf16.msra.mxu0 %v2807
    %2824 = vmatprep.subr.bf16.mxu0 0
    %2825 = vmatpush1.bf16.msra.mxu0 %v2806
    %2826 = vmatprep.subr.bf16.mxu0 0
    %2827 = vmatpush2.bf16.msra.mxu0 0
    %2828 = vmatprep.subr.bf16.mxu0 0
    %2829 = vmatpush2.bf16.msra.mxu0 0
    %2830 = vmatprep.subr.bf16.mxu0 0
    %2831 = vmatpush2.bf16.msra.mxu0 0
    %2832 = vmatprep.subr.bf16.mxu0 0
    %2833 = vmatpush2.bf16.msra.mxu0 0
    %2834 = vmatprep.subr.bf16.mxu0 0
    %2835 = vmatpush2.bf16.msra.mxu0 0
    %2836 = vmatprep.subr.bf16.mxu0 0
    %2837 = vmatpush2.bf16.msra.mxu0 0
    %2838 = vmatprep.subr.bf16.mxu0 0
    %2839 = vmatpush2.bf16.msra.mxu0 0
    %2840 = vmatprep.subr.bf16.mxu0 0
    %2841 = vmatpush2.bf16.msra.mxu0 0
    %2842 = vmatprep.mubr.bf16.mxu0 0
    %2843 = vmatmul.mubr.bf16.gmra.mxu0 %v2012
    %v2844 = vpop.f32.mrf.mxu0
    %v2845 = vadd.f32 %v2796, %v2844
    %v2846 = vpop.f32.mrf.mxu0
    %v2847 = vpop.f32.mrf.mxu0
    %v2848 = vadd.f32 %v2796, %v2847
    %v2849 = vpop.f32.mrf.mxu0
    %2850 = vdwg.mxu0
    %s2851 = scalar_lea.vmem %s8, 96
    %v2852 = vld [vmem:[%s2851] sm:$0xf]
    %v2853 = vld [vmem:[%s2851 + $0x4] sm:$0xf]
    %v2854 = vld [vmem:[%s2851 + $0x8] sm:$0xf]
    %v2855 = vld [vmem:[%s2851 + $0xc] sm:$0xf]
    %s2856 = scalar_lea.vmem %s11, 6
    %v2857 = vld [vmem:[%s2856] sm:$0x1]
    %v2859 = vlaneseq
    %v2860 = vshrl.u32 %v2859, 7
    %v2861 = vsub.s32 0, %v2860
    %v2862 = vrot.slane %v2857, %v2861
    %v2868 = vunpack.c.l.b16 %v2852
    %v2869 = vunpack.c.l.b16 %v2853
    %v2870 = vunpack.c.l.b16 %v2854
    %v2871 = vunpack.c.l.b16 %v2855
    %v2872 = vpack.c.b16 %v2869, %v2868
    %v2873 = vpack.c.b16 %v2871, %v2870
    %2876 = vmatprep.subr.bf16.mxu0 0
    %2877 = vmatpush1.bf16.msra.mxu0 0
    %2878 = vmatprep.subr.bf16.mxu0 0
    %2879 = vmatpush1.bf16.msra.mxu0 0
    %2880 = vmatprep.subr.bf16.mxu0 0
    %2881 = vmatpush1.bf16.msra.mxu0 0
    %2882 = vmatprep.subr.bf16.mxu0 0
    %2883 = vmatpush1.bf16.msra.mxu0 0
    %2884 = vmatprep.subr.bf16.mxu0 0
    %2885 = vmatpush1.bf16.msra.mxu0 0
    %2886 = vmatprep.subr.bf16.mxu0 0
    %2887 = vmatpush1.bf16.msra.mxu0 0
    %2888 = vmatprep.subr.bf16.mxu0 0
    %2889 = vmatpush1.bf16.msra.mxu0 %v2873
    %2890 = vmatprep.subr.bf16.mxu0 0
    %2891 = vmatpush1.bf16.msra.mxu0 %v2872
    %2892 = vmatprep.subr.bf16.mxu0 0
    %2893 = vmatpush2.bf16.msra.mxu0 0
    %2894 = vmatprep.subr.bf16.mxu0 0
    %2895 = vmatpush2.bf16.msra.mxu0 0
    %2896 = vmatprep.subr.bf16.mxu0 0
    %2897 = vmatpush2.bf16.msra.mxu0 0
    %2898 = vmatprep.subr.bf16.mxu0 0
    %2899 = vmatpush2.bf16.msra.mxu0 0
    %2900 = vmatprep.subr.bf16.mxu0 0
    %2901 = vmatpush2.bf16.msra.mxu0 0
    %2902 = vmatprep.subr.bf16.mxu0 0
    %2903 = vmatpush2.bf16.msra.mxu0 0
    %2904 = vmatprep.subr.bf16.mxu0 0
    %2905 = vmatpush2.bf16.msra.mxu0 0
    %2906 = vmatprep.subr.bf16.mxu0 0
    %2907 = vmatpush2.bf16.msra.mxu0 0
    %2908 = vmatprep.mubr.bf16.mxu0 0
    %2909 = vmatmul.mubr.bf16.gmra.mxu0 %v2012
    %v2910 = vpop.f32.mrf.mxu0
    %v2911 = vadd.f32 %v2862, %v2910
    %v2912 = vpop.f32.mrf.mxu0
    %v2913 = vpop.f32.mrf.mxu0
    %v2914 = vadd.f32 %v2862, %v2913
    %v2915 = vpop.f32.mrf.mxu0
    %2916 = vdwg.mxu0
    %v2917 = vpack.c.bf16 %v2782, %v2779
    %v2918 = vpack.c.bf16 %v2848, %v2845
    %v2920 = vsel %vm419, %v2917, 0
    %v2923 = vsel %vm419, %v2918, 0
    %2925 = vmatprep.subr.bf16.mxu0 0
    %2926 = vmatpush1.bf16.xpose.msra.mxu0 0
    %2927 = vmatprep.subr.bf16.mxu0 0
    %2928 = vmatpush1.bf16.xpose.msra.mxu0 0
    %2929 = vmatprep.subr.bf16.mxu0 0
    %2930 = vmatpush1.bf16.xpose.msra.mxu0 0
    %2931 = vmatprep.subr.bf16.mxu0 0
    %2932 = vmatpush1.bf16.xpose.msra.mxu0 0
    %2933 = vmatprep.subr.bf16.mxu0 0
    %2934 = vmatpush1.bf16.xpose.msra.mxu0 0
    %2935 = vmatprep.subr.bf16.mxu0 0
    %2936 = vmatpush1.bf16.xpose.msra.mxu0 0
    %2937 = vmatprep.subr.bf16.mxu0 0
    %2938 = vmatpush1.bf16.xpose.msra.mxu0 0
    %2939 = vmatprep.subr.bf16.mxu0 0
    %2940 = vmatpush1.bf16.xpose.msra.mxu0 %v2923
    %2941 = vmatprep.subr.bf16.mxu0 0
    %2942 = vmatpush2.bf16.xpose.msra.mxu0 0
    %2943 = vmatprep.subr.bf16.mxu0 0
    %2944 = vmatpush2.bf16.xpose.msra.mxu0 0
    %2945 = vmatprep.subr.bf16.mxu0 0
    %2946 = vmatpush2.bf16.xpose.msra.mxu0 0
    %2947 = vmatprep.subr.bf16.mxu0 0
    %2948 = vmatpush2.bf16.xpose.msra.mxu0 0
    %2949 = vmatprep.subr.bf16.mxu0 0
    %2950 = vmatpush2.bf16.xpose.msra.mxu0 0
    %2951 = vmatprep.subr.bf16.mxu0 0
    %2952 = vmatpush2.bf16.xpose.msra.mxu0 0
    %2953 = vmatprep.subr.bf16.mxu0 0
    %2954 = vmatpush2.bf16.xpose.msra.mxu0 0
    %2955 = vmatprep.subr.bf16.mxu0 0
    %2956 = vmatpush2.bf16.xpose.msra.mxu0 0
    %2957 = vmatprep.mubr.bf16.mxu0 0
    %2958 = vmatmul.mubr.bf16.gmra.mxu0 %v2920
    %v2959 = vpop.f32.mrf.mxu0
    %v2960 = vadd.f32 %v219, %v2959
    %v2961 = vpop.f32.mrf.mxu0
    %v2962 = vpop.f32.mrf.mxu0
    %v2963 = vadd.f32 %v220, %v2962
    %v2964 = vpop.f32.mrf.mxu0
    %2965 = vdwg.mxu0
    %v2966 = vsel %vm467, %v2960, -inf
    %2967 = vmax.xlane.f32.xlu0 %v2966
    %v2968 = vpop.xlane.xlu0 %2967
    %v2969 = vsel %vm467, %v2963, -inf
    %2970 = vmax.xlane.f32.xlu0 %v2969
    %v2971 = vpop.xlane.xlu0 %2970
    %v2972 = vsub.f32 %v2960, %v2968
    %v2973 = vsub.f32 %v2963, %v2971
    %v2974 = vmul.f32 %v2972, 1.442695
    %v2975 = vpow.pop %v2974
    %v2976 = vmul.f32 %v2973, 1.442695
    %v2977 = vpow.pop %v2976
    %v2978 = vsel %vm467, %v2975, 0.0
    %2979 = vadd.xlane.f32.xlu0 %v2978
    %v2980 = vpop.xlane.xlu0 %2979
    %v2981 = vsel %vm467, %v2977, 0.0
    %2982 = vadd.xlane.f32.xlu0 %v2981
    %v2983 = vpop.xlane.xlu0 %2982
    %v2984 = vrcp.pop %v2980
    %v2985 = vrcp.pop %v2983
    %v2986 = vmul.f32 %v2975, %v2984
    %v2987 = vmul.f32 %v2977, %v2985
    %v2988 = vpack.c.bf16 %v2987, %v2986
    %v2989 = vpack.c.bf16 %v2914, %v2911
    %v2991 = vsel %vm467, %v2988, 0
    %2993 = vmatprep.subr.bf16.mxu0 0
    %2994 = vmatpush1.bf16.msra.mxu0 0
    %2995 = vmatprep.subr.bf16.mxu0 0
    %2996 = vmatpush1.bf16.msra.mxu0 0
    %2997 = vmatprep.subr.bf16.mxu0 0
    %2998 = vmatpush1.bf16.msra.mxu0 0
    %2999 = vmatprep.subr.bf16.mxu0 0
    %3000 = vmatpush1.bf16.msra.mxu0 0
    %3001 = vmatprep.subr.bf16.mxu0 0
    %3002 = vmatpush1.bf16.msra.mxu0 0
    %3003 = vmatprep.subr.bf16.mxu0 0
    %3004 = vmatpush1.bf16.msra.mxu0 0
    %3005 = vmatprep.subr.bf16.mxu0 0
    %3006 = vmatpush1.bf16.msra.mxu0 0
    %3007 = vmatprep.subr.bf16.mxu0 0
    %3008 = vmatpush1.bf16.msra.mxu0 %v2989
    %3009 = vmatprep.subr.bf16.mxu0 0
    %3010 = vmatpush2.bf16.msra.mxu0 0
    %3011 = vmatprep.subr.bf16.mxu0 0
    %3012 = vmatpush2.bf16.msra.mxu0 0
    %3013 = vmatprep.subr.bf16.mxu0 0
    %3014 = vmatpush2.bf16.msra.mxu0 0
    %3015 = vmatprep.subr.bf16.mxu0 0
    %3016 = vmatpush2.bf16.msra.mxu0 0
    %3017 = vmatprep.subr.bf16.mxu0 0
    %3018 = vmatpush2.bf16.msra.mxu0 0
    %3019 = vmatprep.subr.bf16.mxu0 0
    %3020 = vmatpush2.bf16.msra.mxu0 0
    %3021 = vmatprep.subr.bf16.mxu0 0
    %3022 = vmatpush2.bf16.msra.mxu0 0
    %3023 = vmatprep.subr.bf16.mxu0 0
    %3024 = vmatpush2.bf16.msra.mxu0 0
    %3025 = vmatprep.mubr.bf16.mxu0 0
    %3026 = vmatmul.mubr.bf16.gmra.mxu0 %v2991
    %v3027 = vpop.f32.mrf.mxu0
    %v3028 = vadd.f32 0.0, %v3027
    %v3029 = vpop.f32.mrf.mxu0
    %v3030 = vpop.f32.mrf.mxu0
    %v3031 = vadd.f32 0.0, %v3030
    %v3032 = vpop.f32.mrf.mxu0
    %3033 = vdwg.mxu0
    %v3034 = vpack.c.bf16 %v3031, %v3028
    %s3035 = scalar_lea.vmem %s12, 24
    %v3036 = vld [vmem:[%s3035] sm:$0xf]
    %v3038 = vsel %vm419, %v3034, 0
    %v3041 = vsel %vm859, %v3036, 0
    %3043 = vmatprep.subr.bf16.mxu0 0
    %3044 = vmatpush1.bf16.msra.mxu0 0
    %3045 = vmatprep.subr.bf16.mxu0 0
    %3046 = vmatpush1.bf16.msra.mxu0 0
    %3047 = vmatprep.subr.bf16.mxu0 0
    %3048 = vmatpush1.bf16.msra.mxu0 0
    %3049 = vmatprep.subr.bf16.mxu0 0
    %3050 = vmatpush1.bf16.msra.mxu0 0
    %3051 = vmatprep.subr.bf16.mxu0 0
    %3052 = vmatpush1.bf16.msra.mxu0 0
    %3053 = vmatprep.subr.bf16.mxu0 0
    %3054 = vmatpush1.bf16.msra.mxu0 0
    %3055 = vmatprep.subr.bf16.mxu0 0
    %3056 = vmatpush1.bf16.msra.mxu0 0
    %3057 = vmatprep.subr.bf16.mxu0 0
    %3058 = vmatpush1.bf16.msra.mxu0 %v3041
    %3059 = vmatprep.subr.bf16.mxu0 0
    %3060 = vmatpush2.bf16.msra.mxu0 0
    %3061 = vmatprep.subr.bf16.mxu0 0
    %3062 = vmatpush2.bf16.msra.mxu0 0
    %3063 = vmatprep.subr.bf16.mxu0 0
    %3064 = vmatpush2.bf16.msra.mxu0 0
    %3065 = vmatprep.subr.bf16.mxu0 0
    %3066 = vmatpush2.bf16.msra.mxu0 0
    %3067 = vmatprep.subr.bf16.mxu0 0
    %3068 = vmatpush2.bf16.msra.mxu0 0
    %3069 = vmatprep.subr.bf16.mxu0 0
    %3070 = vmatpush2.bf16.msra.mxu0 0
    %3071 = vmatprep.subr.bf16.mxu0 0
    %3072 = vmatpush2.bf16.msra.mxu0 0
    %3073 = vmatprep.subr.bf16.mxu0 0
    %3074 = vmatpush2.bf16.msra.mxu0 0
    %3075 = vmatprep.mubr.bf16.mxu0 0
    %3076 = vmatmul.mubr.bf16.gmra.mxu0 %v3038
    %v3077 = vpop.f32.mrf.mxu0
    %v3078 = vadd.f32 0.0, %v3077
    %v3079 = vpop.f32.mrf.mxu0
    %v3080 = vpop.f32.mrf.mxu0
    %v3081 = vadd.f32 0.0, %v3080
    %v3082 = vpop.f32.mrf.mxu0
    %3083 = vdwg.mxu0
    %v3084 = vadd.f32 %v2713, %v3078
    %v3085 = vadd.f32 %v2716, %v3081
    %s3086 = scalar_lea.vmem %s6, 112
    %v3087 = vld [vmem:[%s3086] sm:$0xf]
    %v3088 = vld [vmem:[%s3086 + $0x4] sm:$0xf]
    %v3089 = vld [vmem:[%s3086 + $0x8] sm:$0xf]
    %v3090 = vld [vmem:[%s3086 + $0xc] sm:$0xf]
    %s3091 = scalar_lea.vmem %s9, 7
    %v3092 = vld [vmem:[%s3091] sm:$0x1]
    %v3094 = vlaneseq
    %v3095 = vshrl.u32 %v3094, 7
    %v3096 = vsub.s32 0, %v3095
    %v3097 = vrot.slane %v3092, %v3096
    %v3103 = vunpack.c.l.b16 %v3087
    %v3104 = vunpack.c.l.b16 %v3088
    %v3105 = vunpack.c.l.b16 %v3089
    %v3106 = vunpack.c.l.b16 %v3090
    %v3107 = vpack.c.b16 %v3104, %v3103
    %v3108 = vpack.c.b16 %v3106, %v3105
    %3111 = vmatprep.subr.bf16.mxu0 0
    %3112 = vmatpush1.bf16.msra.mxu0 0
    %3113 = vmatprep.subr.bf16.mxu0 0
    %3114 = vmatpush1.bf16.msra.mxu0 0
    %3115 = vmatprep.subr.bf16.mxu0 0
    %3116 = vmatpush1.bf16.msra.mxu0 0
    %3117 = vmatprep.subr.bf16.mxu0 0
    %3118 = vmatpush1.bf16.msra.mxu0 0
    %3119 = vmatprep.subr.bf16.mxu0 0
    %3120 = vmatpush1.bf16.msra.mxu0 0
    %3121 = vmatprep.subr.bf16.mxu0 0
    %3122 = vmatpush1.bf16.msra.mxu0 0
    %3123 = vmatprep.subr.bf16.mxu0 0
    %3124 = vmatpush1.bf16.msra.mxu0 %v3108
    %3125 = vmatprep.subr.bf16.mxu0 0
    %3126 = vmatpush1.bf16.msra.mxu0 %v3107
    %3127 = vmatprep.subr.bf16.mxu0 0
    %3128 = vmatpush2.bf16.msra.mxu0 0
    %3129 = vmatprep.subr.bf16.mxu0 0
    %3130 = vmatpush2.bf16.msra.mxu0 0
    %3131 = vmatprep.subr.bf16.mxu0 0
    %3132 = vmatpush2.bf16.msra.mxu0 0
    %3133 = vmatprep.subr.bf16.mxu0 0
    %3134 = vmatpush2.bf16.msra.mxu0 0
    %3135 = vmatprep.subr.bf16.mxu0 0
    %3136 = vmatpush2.bf16.msra.mxu0 0
    %3137 = vmatprep.subr.bf16.mxu0 0
    %3138 = vmatpush2.bf16.msra.mxu0 0
    %3139 = vmatprep.subr.bf16.mxu0 0
    %3140 = vmatpush2.bf16.msra.mxu0 0
    %3141 = vmatprep.subr.bf16.mxu0 0
    %3142 = vmatpush2.bf16.msra.mxu0 0
    %3143 = vmatprep.mubr.bf16.mxu0 0
    %3144 = vmatmul.mubr.bf16.gmra.mxu0 %v2012
    %v3145 = vpop.f32.mrf.mxu0
    %v3146 = vadd.f32 %v3097, %v3145
    %v3147 = vpop.f32.mrf.mxu0
    %v3148 = vpop.f32.mrf.mxu0
    %v3149 = vadd.f32 %v3097, %v3148
    %v3150 = vpop.f32.mrf.mxu0
    %3151 = vdwg.mxu0
    %s3152 = scalar_lea.vmem %s7, 112
    %v3153 = vld [vmem:[%s3152] sm:$0xf]
    %v3154 = vld [vmem:[%s3152 + $0x4] sm:$0xf]
    %v3155 = vld [vmem:[%s3152 + $0x8] sm:$0xf]
    %v3156 = vld [vmem:[%s3152 + $0xc] sm:$0xf]
    %s3157 = scalar_lea.vmem %s10, 7
    %v3158 = vld [vmem:[%s3157] sm:$0x1]
    %v3160 = vlaneseq
    %v3161 = vshrl.u32 %v3160, 7
    %v3162 = vsub.s32 0, %v3161
    %v3163 = vrot.slane %v3158, %v3162
    %v3169 = vunpack.c.l.b16 %v3153
    %v3170 = vunpack.c.l.b16 %v3154
    %v3171 = vunpack.c.l.b16 %v3155
    %v3172 = vunpack.c.l.b16 %v3156
    %v3173 = vpack.c.b16 %v3170, %v3169
    %v3174 = vpack.c.b16 %v3172, %v3171
    %3177 = vmatprep.subr.bf16.mxu0 0
    %3178 = vmatpush1.bf16.msra.mxu0 0
    %3179 = vmatprep.subr.bf16.mxu0 0
    %3180 = vmatpush1.bf16.msra.mxu0 0
    %3181 = vmatprep.subr.bf16.mxu0 0
    %3182 = vmatpush1.bf16.msra.mxu0 0
    %3183 = vmatprep.subr.bf16.mxu0 0
    %3184 = vmatpush1.bf16.msra.mxu0 0
    %3185 = vmatprep.subr.bf16.mxu0 0
    %3186 = vmatpush1.bf16.msra.mxu0 0
    %3187 = vmatprep.subr.bf16.mxu0 0
    %3188 = vmatpush1.bf16.msra.mxu0 0
    %3189 = vmatprep.subr.bf16.mxu0 0
    %3190 = vmatpush1.bf16.msra.mxu0 %v3174
    %3191 = vmatprep.subr.bf16.mxu0 0
    %3192 = vmatpush1.bf16.msra.mxu0 %v3173
    %3193 = vmatprep.subr.bf16.mxu0 0
    %3194 = vmatpush2.bf16.msra.mxu0 0
    %3195 = vmatprep.subr.bf16.mxu0 0
    %3196 = vmatpush2.bf16.msra.mxu0 0
    %3197 = vmatprep.subr.bf16.mxu0 0
    %3198 = vmatpush2.bf16.msra.mxu0 0
    %3199 = vmatprep.subr.bf16.mxu0 0
    %3200 = vmatpush2.bf16.msra.mxu0 0
    %3201 = vmatprep.subr.bf16.mxu0 0
    %3202 = vmatpush2.bf16.msra.mxu0 0
    %3203 = vmatprep.subr.bf16.mxu0 0
    %3204 = vmatpush2.bf16.msra.mxu0 0
    %3205 = vmatprep.subr.bf16.mxu0 0
    %3206 = vmatpush2.bf16.msra.mxu0 0
    %3207 = vmatprep.subr.bf16.mxu0 0
    %3208 = vmatpush2.bf16.msra.mxu0 0
    %3209 = vmatprep.mubr.bf16.mxu0 0
    %3210 = vmatmul.mubr.bf16.gmra.mxu0 %v2012
    %v3211 = vpop.f32.mrf.mxu0
    %v3212 = vadd.f32 %v3163, %v3211
    %v3213 = vpop.f32.mrf.mxu0
    %v3214 = vpop.f32.mrf.mxu0
    %v3215 = vadd.f32 %v3163, %v3214
    %v3216 = vpop.f32.mrf.mxu0
    %3217 = vdwg.mxu0
    %s3218 = scalar_lea.vmem %s8, 112
    %v3219 = vld [vmem:[%s3218] sm:$0xf]
    %v3220 = vld [vmem:[%s3218 + $0x4] sm:$0xf]
    %v3221 = vld [vmem:[%s3218 + $0x8] sm:$0xf]
    %v3222 = vld [vmem:[%s3218 + $0xc] sm:$0xf]
    %s3223 = scalar_lea.vmem %s11, 7
    %v3224 = vld [vmem:[%s3223] sm:$0x1]
    %v3226 = vlaneseq
    %v3227 = vshrl.u32 %v3226, 7
    %v3228 = vsub.s32 0, %v3227
    %v3229 = vrot.slane %v3224, %v3228
    %v3235 = vunpack.c.l.b16 %v3219
    %v3236 = vunpack.c.l.b16 %v3220
    %v3237 = vunpack.c.l.b16 %v3221
    %v3238 = vunpack.c.l.b16 %v3222
    %v3239 = vpack.c.b16 %v3236, %v3235
    %v3240 = vpack.c.b16 %v3238, %v3237
    %3243 = vmatprep.subr.bf16.mxu0 0
    %3244 = vmatpush1.bf16.msra.mxu0 0
    %3245 = vmatprep.subr.bf16.mxu0 0
    %3246 = vmatpush1.bf16.msra.mxu0 0
    %3247 = vmatprep.subr.bf16.mxu0 0
    %3248 = vmatpush1.bf16.msra.mxu0 0
    %3249 = vmatprep.subr.bf16.mxu0 0
    %3250 = vmatpush1.bf16.msra.mxu0 0
    %3251 = vmatprep.subr.bf16.mxu0 0
    %3252 = vmatpush1.bf16.msra.mxu0 0
    %3253 = vmatprep.subr.bf16.mxu0 0
    %3254 = vmatpush1.bf16.msra.mxu0 0
    %3255 = vmatprep.subr.bf16.mxu0 0
    %3256 = vmatpush1.bf16.msra.mxu0 %v3240
    %3257 = vmatprep.subr.bf16.mxu0 0
    %3258 = vmatpush1.bf16.msra.mxu0 %v3239
    %3259 = vmatprep.subr.bf16.mxu0 0
    %3260 = vmatpush2.bf16.msra.mxu0 0
    %3261 = vmatprep.subr.bf16.mxu0 0
    %3262 = vmatpush2.bf16.msra.mxu0 0
    %3263 = vmatprep.subr.bf16.mxu0 0
    %3264 = vmatpush2.bf16.msra.mxu0 0
    %3265 = vmatprep.subr.bf16.mxu0 0
    %3266 = vmatpush2.bf16.msra.mxu0 0
    %3267 = vmatprep.subr.bf16.mxu0 0
    %3268 = vmatpush2.bf16.msra.mxu0 0
    %3269 = vmatprep.subr.bf16.mxu0 0
    %3270 = vmatpush2.bf16.msra.mxu0 0
    %3271 = vmatprep.subr.bf16.mxu0 0
    %3272 = vmatpush2.bf16.msra.mxu0 0
    %3273 = vmatprep.subr.bf16.mxu0 0
    %3274 = vmatpush2.bf16.msra.mxu0 0
    %3275 = vmatprep.mubr.bf16.mxu0 0
    %3276 = vmatmul.mubr.bf16.gmra.mxu0 %v2012
    %v3277 = vpop.f32.mrf.mxu0
    %v3278 = vadd.f32 %v3229, %v3277
    %v3279 = vpop.f32.mrf.mxu0
    %v3280 = vpop.f32.mrf.mxu0
    %v3281 = vadd.f32 %v3229, %v3280
    %v3282 = vpop.f32.mrf.mxu0
    %3283 = vdwg.mxu0
    %v3284 = vpack.c.bf16 %v3149, %v3146
    %v3285 = vpack.c.bf16 %v3215, %v3212
    %v3287 = vsel %vm419, %v3284, 0
    %v3290 = vsel %vm419, %v3285, 0
    %3292 = vmatprep.subr.bf16.mxu0 0
    %3293 = vmatpush1.bf16.xpose.msra.mxu0 0
    %3294 = vmatprep.subr.bf16.mxu0 0
    %3295 = vmatpush1.bf16.xpose.msra.mxu0 0
    %3296 = vmatprep.subr.bf16.mxu0 0
    %3297 = vmatpush1.bf16.xpose.msra.mxu0 0
    %3298 = vmatprep.subr.bf16.mxu0 0
    %3299 = vmatpush1.bf16.xpose.msra.mxu0 0
    %3300 = vmatprep.subr.bf16.mxu0 0
    %3301 = vmatpush1.bf16.xpose.msra.mxu0 0
    %3302 = vmatprep.subr.bf16.mxu0 0
    %3303 = vmatpush1.bf16.xpose.msra.mxu0 0
    %3304 = vmatprep.subr.bf16.mxu0 0
    %3305 = vmatpush1.bf16.xpose.msra.mxu0 0
    %3306 = vmatprep.subr.bf16.mxu0 0
    %3307 = vmatpush1.bf16.xpose.msra.mxu0 %v3290
    %3308 = vmatprep.subr.bf16.mxu0 0
    %3309 = vmatpush2.bf16.xpose.msra.mxu0 0
    %3310 = vmatprep.subr.bf16.mxu0 0
    %3311 = vmatpush2.bf16.xpose.msra.mxu0 0
    %3312 = vmatprep.subr.bf16.mxu0 0
    %3313 = vmatpush2.bf16.xpose.msra.mxu0 0
    %3314 = vmatprep.subr.bf16.mxu0 0
    %3315 = vmatpush2.bf16.xpose.msra.mxu0 0
    %3316 = vmatprep.subr.bf16.mxu0 0
    %3317 = vmatpush2.bf16.xpose.msra.mxu0 0
    %3318 = vmatprep.subr.bf16.mxu0 0
    %3319 = vmatpush2.bf16.xpose.msra.mxu0 0
    %3320 = vmatprep.subr.bf16.mxu0 0
    %3321 = vmatpush2.bf16.xpose.msra.mxu0 0
    %3322 = vmatprep.subr.bf16.mxu0 0
    %3323 = vmatpush2.bf16.xpose.msra.mxu0 0
    %3324 = vmatprep.mubr.bf16.mxu0 0
    %3325 = vmatmul.mubr.bf16.gmra.mxu0 %v3287
    %v3326 = vpop.f32.mrf.mxu0
    %v3327 = vadd.f32 %v219, %v3326
    %v3328 = vpop.f32.mrf.mxu0
    %v3329 = vpop.f32.mrf.mxu0
    %v3330 = vadd.f32 %v220, %v3329
    %v3331 = vpop.f32.mrf.mxu0
    %3332 = vdwg.mxu0
    %v3333 = vsel %vm467, %v3327, -inf
    %3334 = vmax.xlane.f32.xlu0 %v3333
    %v3335 = vpop.xlane.xlu0 %3334
    %v3336 = vsel %vm467, %v3330, -inf
    %3337 = vmax.xlane.f32.xlu0 %v3336
    %v3338 = vpop.xlane.xlu0 %3337
    %v3339 = vsub.f32 %v3327, %v3335
    %v3340 = vsub.f32 %v3330, %v3338
    %v3341 = vmul.f32 %v3339, 1.442695
    %v3342 = vpow.pop %v3341
    %v3343 = vmul.f32 %v3340, 1.442695
    %v3344 = vpow.pop %v3343
    %v3345 = vsel %vm467, %v3342, 0.0
    %3346 = vadd.xlane.f32.xlu0 %v3345
    %v3347 = vpop.xlane.xlu0 %3346
    %v3348 = vsel %vm467, %v3344, 0.0
    %3349 = vadd.xlane.f32.xlu0 %v3348
    %v3350 = vpop.xlane.xlu0 %3349
    %v3351 = vrcp.pop %v3347
    %v3352 = vrcp.pop %v3350
    %v3353 = vmul.f32 %v3342, %v3351
    %v3354 = vmul.f32 %v3344, %v3352
    %v3355 = vpack.c.bf16 %v3354, %v3353
    %v3356 = vpack.c.bf16 %v3281, %v3278
    %v3358 = vsel %vm467, %v3355, 0
    %3360 = vmatprep.subr.bf16.mxu0 0
    %3361 = vmatpush1.bf16.msra.mxu0 0
    %3362 = vmatprep.subr.bf16.mxu0 0
    %3363 = vmatpush1.bf16.msra.mxu0 0
    %3364 = vmatprep.subr.bf16.mxu0 0
    %3365 = vmatpush1.bf16.msra.mxu0 0
    %3366 = vmatprep.subr.bf16.mxu0 0
    %3367 = vmatpush1.bf16.msra.mxu0 0
    %3368 = vmatprep.subr.bf16.mxu0 0
    %3369 = vmatpush1.bf16.msra.mxu0 0
    %3370 = vmatprep.subr.bf16.mxu0 0
    %3371 = vmatpush1.bf16.msra.mxu0 0
    %3372 = vmatprep.subr.bf16.mxu0 0
    %3373 = vmatpush1.bf16.msra.mxu0 0
    %3374 = vmatprep.subr.bf16.mxu0 0
    %3375 = vmatpush1.bf16.msra.mxu0 %v3356
    %3376 = vmatprep.subr.bf16.mxu0 0
    %3377 = vmatpush2.bf16.msra.mxu0 0
    %3378 = vmatprep.subr.bf16.mxu0 0
    %3379 = vmatpush2.bf16.msra.mxu0 0
    %3380 = vmatprep.subr.bf16.mxu0 0
    %3381 = vmatpush2.bf16.msra.mxu0 0
    %3382 = vmatprep.subr.bf16.mxu0 0
    %3383 = vmatpush2.bf16.msra.mxu0 0
    %3384 = vmatprep.subr.bf16.mxu0 0
    %3385 = vmatpush2.bf16.msra.mxu0 0
    %3386 = vmatprep.subr.bf16.mxu0 0
    %3387 = vmatpush2.bf16.msra.mxu0 0
    %3388 = vmatprep.subr.bf16.mxu0 0
    %3389 = vmatpush2.bf16.msra.mxu0 0
    %3390 = vmatprep.subr.bf16.mxu0 0
    %3391 = vmatpush2.bf16.msra.mxu0 0
    %3392 = vmatprep.mubr.bf16.mxu0 0
    %3393 = vmatmul.mubr.bf16.gmra.mxu0 %v3358
    %v3394 = vpop.f32.mrf.mxu0
    %v3395 = vadd.f32 0.0, %v3394
    %v3396 = vpop.f32.mrf.mxu0
    %v3397 = vpop.f32.mrf.mxu0
    %v3398 = vadd.f32 0.0, %v3397
    %v3399 = vpop.f32.mrf.mxu0
    %3400 = vdwg.mxu0
    %v3401 = vpack.c.bf16 %v3398, %v3395
    %s3402 = scalar_lea.vmem %s12, 28
    %v3403 = vld [vmem:[%s3402] sm:$0xf]
    %v3405 = vsel %vm419, %v3401, 0
    %v3408 = vsel %vm859, %v3403, 0
    %3410 = vmatprep.subr.bf16.mxu0 0
    %3411 = vmatpush1.bf16.msra.mxu0 0
    %3412 = vmatprep.subr.bf16.mxu0 0
    %3413 = vmatpush1.bf16.msra.mxu0 0
    %3414 = vmatprep.subr.bf16.mxu0 0
    %3415 = vmatpush1.bf16.msra.mxu0 0
    %3416 = vmatprep.subr.bf16.mxu0 0
    %3417 = vmatpush1.bf16.msra.mxu0 0
    %3418 = vmatprep.subr.bf16.mxu0 0
    %3419 = vmatpush1.bf16.msra.mxu0 0
    %3420 = vmatprep.subr.bf16.mxu0 0
    %3421 = vmatpush1.bf16.msra.mxu0 0
    %3422 = vmatprep.subr.bf16.mxu0 0
    %3423 = vmatpush1.bf16.msra.mxu0 0
    %3424 = vmatprep.subr.bf16.mxu0 0
    %3425 = vmatpush1.bf16.msra.mxu0 %v3408
    %3426 = vmatprep.subr.bf16.mxu0 0
    %3427 = vmatpush2.bf16.msra.mxu0 0
    %3428 = vmatprep.subr.bf16.mxu0 0
    %3429 = vmatpush2.bf16.msra.mxu0 0
    %3430 = vmatprep.subr.bf16.mxu0 0
    %3431 = vmatpush2.bf16.msra.mxu0 0
    %3432 = vmatprep.subr.bf16.mxu0 0
    %3433 = vmatpush2.bf16.msra.mxu0 0
    %3434 = vmatprep.subr.bf16.mxu0 0
    %3435 = vmatpush2.bf16.msra.mxu0 0
    %3436 = vmatprep.subr.bf16.mxu0 0
    %3437 = vmatpush2.bf16.msra.mxu0 0
    %3438 = vmatprep.subr.bf16.mxu0 0
    %3439 = vmatpush2.bf16.msra.mxu0 0
    %3440 = vmatprep.subr.bf16.mxu0 0
    %3441 = vmatpush2.bf16.msra.mxu0 0
    %3442 = vmatprep.mubr.bf16.mxu0 0
    %3443 = vmatmul.mubr.bf16.gmra.mxu0 %v3405
    %v3444 = vpop.f32.mrf.mxu0
    %v3445 = vadd.f32 0.0, %v3444
    %v3446 = vpop.f32.mrf.mxu0
    %v3447 = vpop.f32.mrf.mxu0
    %v3448 = vadd.f32 0.0, %v3447
    %v3449 = vpop.f32.mrf.mxu0
    %3450 = vdwg.mxu0
    %v3451 = vadd.f32 %v3084, %v3445
    %v3452 = vadd.f32 %v3085, %v3448
    %s3453 = scalar_lea.vmem %s13, 1
    %v3454 = vld [vmem:[%s3453] sm:$0x1]
    %v3456 = vlaneseq
    %v3457 = vshrl.u32 %v3456, 7
    %v3458 = vsub.s32 0, %v3457
    %v3459 = vrot.slane %v3454, %v3458
    %v3461 = vadd.f32 %v3451, %v3459
    %v3462 = vadd.f32 %v3452, %v3459
    %v3463 = vadd.f32 %v1983, %v3461
    %v3464 = vadd.f32 %v1984, %v3462
    %s3465 = scalar_lea.vmem %s14, 1
    %v3466 = vld [vmem:[%s3465] sm:$0x1]
    %s3467 = scalar_lea.vmem %s15, 1
    %v3468 = vld [vmem:[%s3467] sm:$0x1]
    %v3469 = vsel %vm175, %v3463, 0.0
    %3470 = vadd.xlane.f32.xlu0 %v3469
    %v3471 = vpop.xlane.xlu0 %3470
    %v3472 = vsel %vm175, %v3464, 0.0
    %3473 = vadd.xlane.f32.xlu0 %v3472
    %v3474 = vpop.xlane.xlu0 %3473
    %v3475 = vmul.f32 %v3471, %v182
    %v3476 = vmul.f32 %v3474, %v182
    %v3477 = vsub.f32 %v3463, %v3475
    %v3478 = vsub.f32 %v3464, %v3476
    %v3479 = vmul.f32 %v3477, %v3477
    %v3480 = vmul.f32 %v3478, %v3478
    %v3481 = vsel %vm175, %v3479, 0.0
    %3482 = vadd.xlane.f32.xlu0 %v3481
    %v3483 = vpop.xlane.xlu0 %3482
    %v3484 = vsel %vm175, %v3480, 0.0
    %3485 = vadd.xlane.f32.xlu0 %v3484
    %v3486 = vpop.xlane.xlu0 %3485
    %v3487 = vmul.f32 %v3483, %v182
    %v3488 = vmul.f32 %v3486, %v182
    %v3489 = vadd.f32 %v3487, 1e-12
    %v3490 = vadd.f32 %v3488, 1e-12
    %v3491 = vrsqrt.pop %v3489
    %v3492 = vrsqrt.pop %v3490
    %v3493 = vmul.f32 %v3477, %v3491
    %v3494 = vmul.f32 %v3478, %v3492
    %v3496 = vlaneseq
    %v3497 = vshrl.u32 %v3496, 7
    %v3498 = vsub.s32 0, %v3497
    %v3499 = vrot.slane %v3466, %v3498
    %v3501 = vmul.f32 %v3493, %v3499
    %v3502 = vmul.f32 %v3494, %v3499
    %v3504 = vlaneseq
    %v3505 = vshrl.u32 %v3504, 7
    %v3506 = vsub.s32 0, %v3505
    %v3507 = vrot.slane %v3468, %v3506
    %v3509 = vadd.f32 %v3501, %v3507
    %v3510 = vadd.f32 %v3502, %v3507
    %v3511 = vpack.c.bf16 %v3510, %v3509
    %s3512 = scalar_lea.vmem %s16, 16
    %v3513 = vld [vmem:[%s3512] sm:$0xf]
    %v3514 = vld [vmem:[%s3512 + $0x4] sm:$0xf]
    %v3515 = vld [vmem:[%s3512 + $0x8] sm:$0xf]
    %v3516 = vld [vmem:[%s3512 + $0xc] sm:$0xf]
    %s3517 = scalar_lea.vmem %s17, 1
    %v3518 = vld [vmem:[%s3517] sm:$0x1]
    %v3520 = vlaneseq
    %v3521 = vshrl.u32 %v3520, 7
    %v3522 = vsub.s32 0, %v3521
    %v3523 = vrot.slane %v3518, %v3522
    %v3529 = vunpack.c.l.b16 %v3513
    %v3530 = vunpack.c.l.b16 %v3514
    %v3531 = vunpack.c.l.b16 %v3515
    %v3532 = vunpack.c.l.b16 %v3516
    %v3533 = vpack.c.b16 %v3530, %v3529
    %v3534 = vpack.c.b16 %v3532, %v3531
    %v3538 = vsel %vm175, %v3511, 0
    %3540 = vmatprep.subr.bf16.mxu0 0
    %3541 = vmatpush1.bf16.msra.mxu0 0
    %3542 = vmatprep.subr.bf16.mxu0 0
    %3543 = vmatpush1.bf16.msra.mxu0 0
    %3544 = vmatprep.subr.bf16.mxu0 0
    %3545 = vmatpush1.bf16.msra.mxu0 0
    %3546 = vmatprep.subr.bf16.mxu0 0
    %3547 = vmatpush1.bf16.msra.mxu0 0
    %3548 = vmatprep.subr.bf16.mxu0 0
    %3549 = vmatpush1.bf16.msra.mxu0 0
    %3550 = vmatprep.subr.bf16.mxu0 0
    %3551 = vmatpush1.bf16.msra.mxu0 0
    %3552 = vmatprep.subr.bf16.mxu0 0
    %3553 = vmatpush1.bf16.msra.mxu0 %v3534
    %3554 = vmatprep.subr.bf16.mxu0 0
    %3555 = vmatpush1.bf16.msra.mxu0 %v3533
    %3556 = vmatprep.subr.bf16.mxu0 0
    %3557 = vmatpush2.bf16.msra.mxu0 0
    %3558 = vmatprep.subr.bf16.mxu0 0
    %3559 = vmatpush2.bf16.msra.mxu0 0
    %3560 = vmatprep.subr.bf16.mxu0 0
    %3561 = vmatpush2.bf16.msra.mxu0 0
    %3562 = vmatprep.subr.bf16.mxu0 0
    %3563 = vmatpush2.bf16.msra.mxu0 0
    %3564 = vmatprep.subr.bf16.mxu0 0
    %3565 = vmatpush2.bf16.msra.mxu0 0
    %3566 = vmatprep.subr.bf16.mxu0 0
    %3567 = vmatpush2.bf16.msra.mxu0 0
    %3568 = vmatprep.subr.bf16.mxu0 0
    %3569 = vmatpush2.bf16.msra.mxu0 0
    %3570 = vmatprep.subr.bf16.mxu0 0
    %3571 = vmatpush2.bf16.msra.mxu0 0
    %3572 = vmatprep.mubr.bf16.mxu0 0
    %3573 = vmatmul.mubr.bf16.gmra.mxu0 %v3538
    %v3574 = vpop.f32.mrf.mxu0
    %v3575 = vadd.f32 %v3523, %v3574
    %v3576 = vpop.f32.mrf.mxu0
    %v3577 = vpop.f32.mrf.mxu0
    %v3578 = vadd.f32 %v3523, %v3577
    %v3579 = vpop.f32.mrf.mxu0
    %3580 = vdwg.mxu0
    %v3581 = vmul.f32 %v3575, %v3575
    %v3582 = vmul.f32 %v3578, %v3578
    %v3583 = vmul.f32 %v3575, %v3581
    %v3584 = vmul.f32 %v3578, %v3582
    %v3585 = vmul.f32 %v3583, 0.044715
    %v3586 = vmul.f32 %v3584, 0.044715
    %v3587 = vadd.f32 %v3575, %v3585
    %v3588 = vadd.f32 %v3578, %v3586
    %v3589 = vmul.f32 %v3587, 0.7978846
    %v3590 = vmul.f32 %v3588, 0.7978846
    %v3591 = vtanh.pop %v3589
    %v3592 = vtanh.pop %v3590
    %v3593 = vadd.f32 %v3591, 1.0
    %v3594 = vadd.f32 %v3592, 1.0
    %v3595 = vmul.f32 %v3593, 0.5
    %v3596 = vmul.f32 %v3594, 0.5
    %v3597 = vmul.f32 %v3575, %v3595
    %v3598 = vmul.f32 %v3578, %v3596
    %v3599 = vpack.c.bf16 %v3598, %v3597
    %s3600 = scalar_lea.vmem %s18, 64
    %v3601 = vld [vmem:[%s3600] sm:$0xf]
    %v3602 = vld [vmem:[%s3600 + $0x4] sm:$0xf]
    %v3603 = vld [vmem:[%s3600 + $0x8] sm:$0xf]
    %v3604 = vld [vmem:[%s3600 + $0xc] sm:$0xf]
    %v3605 = vld [vmem:[%s3600 + $0x10] sm:$0xf]
    %v3606 = vld [vmem:[%s3600 + $0x14] sm:$0xf]
    %v3607 = vld [vmem:[%s3600 + $0x18] sm:$0xf]
    %v3608 = vld [vmem:[%s3600 + $0x1c] sm:$0xf]
    %v3609 = vld [vmem:[%s3600 + $0x20] sm:$0xf]
    %v3610 = vld [vmem:[%s3600 + $0x24] sm:$0xf]
    %v3611 = vld [vmem:[%s3600 + $0x28] sm:$0xf]
    %v3612 = vld [vmem:[%s3600 + $0x2c] sm:$0xf]
    %v3613 = vld [vmem:[%s3600 + $0x30] sm:$0xf]
    %v3614 = vld [vmem:[%s3600 + $0x34] sm:$0xf]
    %v3615 = vld [vmem:[%s3600 + $0x38] sm:$0xf]
    %v3616 = vld [vmem:[%s3600 + $0x3c] sm:$0xf]
    %s3617 = scalar_lea.vmem %s19, 1
    %v3618 = vld [vmem:[%s3617] sm:$0x1]
    %v3620 = vlaneseq
    %v3621 = vshrl.u32 %v3620, 7
    %v3622 = vsub.s32 0, %v3621
    %v3623 = vrot.slane %v3618, %v3622
    %v3641 = vunpack.c.l.b16 %v3601
    %v3642 = vunpack.c.l.b16 %v3602
    %v3643 = vunpack.c.l.b16 %v3603
    %v3644 = vunpack.c.l.b16 %v3604
    %v3645 = vunpack.c.l.b16 %v3605
    %v3646 = vunpack.c.l.b16 %v3606
    %v3647 = vunpack.c.l.b16 %v3607
    %v3648 = vunpack.c.l.b16 %v3608
    %v3649 = vunpack.c.l.b16 %v3609
    %v3650 = vunpack.c.l.b16 %v3610
    %v3651 = vunpack.c.l.b16 %v3611
    %v3652 = vunpack.c.l.b16 %v3612
    %v3653 = vunpack.c.l.b16 %v3613
    %v3654 = vunpack.c.l.b16 %v3614
    %v3655 = vunpack.c.l.b16 %v3615
    %v3656 = vunpack.c.l.b16 %v3616
    %v3657 = vpack.c.b16 %v3642, %v3641
    %v3658 = vpack.c.b16 %v3644, %v3643
    %v3659 = vpack.c.b16 %v3646, %v3645
    %v3660 = vpack.c.b16 %v3648, %v3647
    %v3661 = vpack.c.b16 %v3650, %v3649
    %v3662 = vpack.c.b16 %v3652, %v3651
    %v3663 = vpack.c.b16 %v3654, %v3653
    %v3664 = vpack.c.b16 %v3656, %v3655
    %3673 = vmatprep.subr.bf16.mxu0 0
    %3674 = vmatpush1.bf16.msra.mxu0 %v3664
    %3675 = vmatprep.subr.bf16.mxu0 0
    %3676 = vmatpush1.bf16.msra.mxu0 %v3663
    %3677 = vmatprep.subr.bf16.mxu0 0
    %3678 = vmatpush1.bf16.msra.mxu0 %v3662
    %3679 = vmatprep.subr.bf16.mxu0 0
    %3680 = vmatpush1.bf16.msra.mxu0 %v3661
    %3681 = vmatprep.subr.bf16.mxu0 0
    %3682 = vmatpush1.bf16.msra.mxu0 %v3660
    %3683 = vmatprep.subr.bf16.mxu0 0
    %3684 = vmatpush1.bf16.msra.mxu0 %v3659
    %3685 = vmatprep.subr.bf16.mxu0 0
    %3686 = vmatpush1.bf16.msra.mxu0 %v3658
    %3687 = vmatprep.subr.bf16.mxu0 0
    %3688 = vmatpush1.bf16.msra.mxu0 %v3657
    %3689 = vmatprep.subr.bf16.mxu0 0
    %3690 = vmatpush2.bf16.msra.mxu0 0
    %3691 = vmatprep.subr.bf16.mxu0 0
    %3692 = vmatpush2.bf16.msra.mxu0 0
    %3693 = vmatprep.subr.bf16.mxu0 0
    %3694 = vmatpush2.bf16.msra.mxu0 0
    %3695 = vmatprep.subr.bf16.mxu0 0
    %3696 = vmatpush2.bf16.msra.mxu0 0
    %3697 = vmatprep.subr.bf16.mxu0 0
    %3698 = vmatpush2.bf16.msra.mxu0 0
    %3699 = vmatprep.subr.bf16.mxu0 0
    %3700 = vmatpush2.bf16.msra.mxu0 0
    %3701 = vmatprep.subr.bf16.mxu0 0
    %3702 = vmatpush2.bf16.msra.mxu0 0
    %3703 = vmatprep.subr.bf16.mxu0 0
    %3704 = vmatpush2.bf16.msra.mxu0 0
    %3705 = vmatprep.mubr.bf16.mxu0 0
    %3706 = vmatmul.mubr.bf16.gmra.mxu0 %v3599
    %v3707 = vpop.f32.mrf.mxu0
    %v3708 = vadd.f32 %v3623, %v3707
    %v3709 = vpop.f32.mrf.mxu0
    %v3710 = vpop.f32.mrf.mxu0
    %v3711 = vadd.f32 %v3623, %v3710
    %v3712 = vpop.f32.mrf.mxu0
    %3713 = vdwg.mxu0
    %v3714 = vadd.f32 %v3509, %v3708
    %v3715 = vadd.f32 %v3510, %v3711
    %s3716 = scalar_lea.vmem %s20, 1
    %v3717 = vld [vmem:[%s3716] sm:$0x1]
    %s3718 = scalar_lea.vmem %s21, 1
    %v3719 = vld [vmem:[%s3718] sm:$0x1]
    %v3720 = vsel %vm175, %v3714, 0.0
    %3721 = vadd.xlane.f32.xlu0 %v3720
    %v3722 = vpop.xlane.xlu0 %3721
    %v3723 = vsel %vm175, %v3715, 0.0
    %3724 = vadd.xlane.f32.xlu0 %v3723
    %v3725 = vpop.xlane.xlu0 %3724
    %v3726 = vmul.f32 %v3722, %v182
    %v3727 = vmul.f32 %v3725, %v182
    %v3728 = vsub.f32 %v3714, %v3726
    %v3729 = vsub.f32 %v3715, %v3727
    %v3730 = vmul.f32 %v3728, %v3728
    %v3731 = vmul.f32 %v3729, %v3729
    %v3732 = vsel %vm175, %v3730, 0.0
    %3733 = vadd.xlane.f32.xlu0 %v3732
    %v3734 = vpop.xlane.xlu0 %3733
    %v3735 = vsel %vm175, %v3731, 0.0
    %3736 = vadd.xlane.f32.xlu0 %v3735
    %v3737 = vpop.xlane.xlu0 %3736
    %v3738 = vmul.f32 %v3734, %v182
    %v3739 = vmul.f32 %v3737, %v182
    %v3740 = vadd.f32 %v3738, 1e-12
    %v3741 = vadd.f32 %v3739, 1e-12
    %v3742 = vrsqrt.pop %v3740
    %v3743 = vrsqrt.pop %v3741
    %v3744 = vmul.f32 %v3728, %v3742
    %v3745 = vmul.f32 %v3729, %v3743
    %v3747 = vlaneseq
    %v3748 = vshrl.u32 %v3747, 7
    %v3749 = vsub.s32 0, %v3748
    %v3750 = vrot.slane %v3717, %v3749
    %v3752 = vmul.f32 %v3744, %v3750
    %v3753 = vmul.f32 %v3745, %v3750
    %v3755 = vlaneseq
    %v3756 = vshrl.u32 %v3755, 7
    %v3757 = vsub.s32 0, %v3756
    %v3758 = vrot.slane %v3719, %v3757
    %v3760 = vadd.f32 %v3752, %v3758
    %v3761 = vadd.f32 %v3753, %v3758
    %v3762 = vpack.c.bf16 %v3761, %v3760
    %s3763 = scalar_lea.vmem %s6, 128
    %v3764 = vld [vmem:[%s3763] sm:$0xf]
    %v3765 = vld [vmem:[%s3763 + $0x4] sm:$0xf]
    %v3766 = vld [vmem:[%s3763 + $0x8] sm:$0xf]
    %v3767 = vld [vmem:[%s3763 + $0xc] sm:$0xf]
    %s3768 = scalar_lea.vmem %s9, 8
    %v3769 = vld [vmem:[%s3768] sm:$0x1]
    %v3771 = vlaneseq
    %v3772 = vshrl.u32 %v3771, 7
    %v3773 = vsub.s32 0, %v3772
    %v3774 = vrot.slane %v3769, %v3773
    %v3780 = vunpack.c.l.b16 %v3764
    %v3781 = vunpack.c.l.b16 %v3765
    %v3782 = vunpack.c.l.b16 %v3766
    %v3783 = vunpack.c.l.b16 %v3767
    %v3784 = vpack.c.b16 %v3781, %v3780
    %v3785 = vpack.c.b16 %v3783, %v3782
    %v3789 = vsel %vm175, %v3762, 0
    %3791 = vmatprep.subr.bf16.mxu0 0
    %3792 = vmatpush1.bf16.msra.mxu0 0
    %3793 = vmatprep.subr.bf16.mxu0 0
    %3794 = vmatpush1.bf16.msra.mxu0 0
    %3795 = vmatprep.subr.bf16.mxu0 0
    %3796 = vmatpush1.bf16.msra.mxu0 0
    %3797 = vmatprep.subr.bf16.mxu0 0
    %3798 = vmatpush1.bf16.msra.mxu0 0
    %3799 = vmatprep.subr.bf16.mxu0 0
    %3800 = vmatpush1.bf16.msra.mxu0 0
    %3801 = vmatprep.subr.bf16.mxu0 0
    %3802 = vmatpush1.bf16.msra.mxu0 0
    %3803 = vmatprep.subr.bf16.mxu0 0
    %3804 = vmatpush1.bf16.msra.mxu0 %v3785
    %3805 = vmatprep.subr.bf16.mxu0 0
    %3806 = vmatpush1.bf16.msra.mxu0 %v3784
    %3807 = vmatprep.subr.bf16.mxu0 0
    %3808 = vmatpush2.bf16.msra.mxu0 0
    %3809 = vmatprep.subr.bf16.mxu0 0
    %3810 = vmatpush2.bf16.msra.mxu0 0
    %3811 = vmatprep.subr.bf16.mxu0 0
    %3812 = vmatpush2.bf16.msra.mxu0 0
    %3813 = vmatprep.subr.bf16.mxu0 0
    %3814 = vmatpush2.bf16.msra.mxu0 0
    %3815 = vmatprep.subr.bf16.mxu0 0
    %3816 = vmatpush2.bf16.msra.mxu0 0
    %3817 = vmatprep.subr.bf16.mxu0 0
    %3818 = vmatpush2.bf16.msra.mxu0 0
    %3819 = vmatprep.subr.bf16.mxu0 0
    %3820 = vmatpush2.bf16.msra.mxu0 0
    %3821 = vmatprep.subr.bf16.mxu0 0
    %3822 = vmatpush2.bf16.msra.mxu0 0
    %3823 = vmatprep.mubr.bf16.mxu0 0
    %3824 = vmatmul.mubr.bf16.gmra.mxu0 %v3789
    %v3825 = vpop.f32.mrf.mxu0
    %v3826 = vadd.f32 %v3774, %v3825
    %v3827 = vpop.f32.mrf.mxu0
    %v3828 = vpop.f32.mrf.mxu0
    %v3829 = vadd.f32 %v3774, %v3828
    %v3830 = vpop.f32.mrf.mxu0
    %3831 = vdwg.mxu0
    %s3832 = scalar_lea.vmem %s7, 128
    %v3833 = vld [vmem:[%s3832] sm:$0xf]
    %v3834 = vld [vmem:[%s3832 + $0x4] sm:$0xf]
    %v3835 = vld [vmem:[%s3832 + $0x8] sm:$0xf]
    %v3836 = vld [vmem:[%s3832 + $0xc] sm:$0xf]
    %s3837 = scalar_lea.vmem %s10, 8
    %v3838 = vld [vmem:[%s3837] sm:$0x1]
    %v3840 = vlaneseq
    %v3841 = vshrl.u32 %v3840, 7
    %v3842 = vsub.s32 0, %v3841
    %v3843 = vrot.slane %v3838, %v3842
    %v3849 = vunpack.c.l.b16 %v3833
    %v3850 = vunpack.c.l.b16 %v3834
    %v3851 = vunpack.c.l.b16 %v3835
    %v3852 = vunpack.c.l.b16 %v3836
    %v3853 = vpack.c.b16 %v3850, %v3849
    %v3854 = vpack.c.b16 %v3852, %v3851
    %3857 = vmatprep.subr.bf16.mxu0 0
    %3858 = vmatpush1.bf16.msra.mxu0 0
    %3859 = vmatprep.subr.bf16.mxu0 0
    %3860 = vmatpush1.bf16.msra.mxu0 0
    %3861 = vmatprep.subr.bf16.mxu0 0
    %3862 = vmatpush1.bf16.msra.mxu0 0
    %3863 = vmatprep.subr.bf16.mxu0 0
    %3864 = vmatpush1.bf16.msra.mxu0 0
    %3865 = vmatprep.subr.bf16.mxu0 0
    %3866 = vmatpush1.bf16.msra.mxu0 0
    %3867 = vmatprep.subr.bf16.mxu0 0
    %3868 = vmatpush1.bf16.msra.mxu0 0
    %3869 = vmatprep.subr.bf16.mxu0 0
    %3870 = vmatpush1.bf16.msra.mxu0 %v3854
    %3871 = vmatprep.subr.bf16.mxu0 0
    %3872 = vmatpush1.bf16.msra.mxu0 %v3853
    %3873 = vmatprep.subr.bf16.mxu0 0
    %3874 = vmatpush2.bf16.msra.mxu0 0
    %3875 = vmatprep.subr.bf16.mxu0 0
    %3876 = vmatpush2.bf16.msra.mxu0 0
    %3877 = vmatprep.subr.bf16.mxu0 0
    %3878 = vmatpush2.bf16.msra.mxu0 0
    %3879 = vmatprep.subr.bf16.mxu0 0
    %3880 = vmatpush2.bf16.msra.mxu0 0
    %3881 = vmatprep.subr.bf16.mxu0 0
    %3882 = vmatpush2.bf16.msra.mxu0 0
    %3883 = vmatprep.subr.bf16.mxu0 0
    %3884 = vmatpush2.bf16.msra.mxu0 0
    %3885 = vmatprep.subr.bf16.mxu0 0
    %3886 = vmatpush2.bf16.msra.mxu0 0
    %3887 = vmatprep.subr.bf16.mxu0 0
    %3888 = vmatpush2.bf16.msra.mxu0 0
    %3889 = vmatprep.mubr.bf16.mxu0 0
    %3890 = vmatmul.mubr.bf16.gmra.mxu0 %v3789
    %v3891 = vpop.f32.mrf.mxu0
    %v3892 = vadd.f32 %v3843, %v3891
    %v3893 = vpop.f32.mrf.mxu0
    %v3894 = vpop.f32.mrf.mxu0
    %v3895 = vadd.f32 %v3843, %v3894
    %v3896 = vpop.f32.mrf.mxu0
    %3897 = vdwg.mxu0
    %s3898 = scalar_lea.vmem %s8, 128
    %v3899 = vld [vmem:[%s3898] sm:$0xf]
    %v3900 = vld [vmem:[%s3898 + $0x4] sm:$0xf]
    %v3901 = vld [vmem:[%s3898 + $0x8] sm:$0xf]
    %v3902 = vld [vmem:[%s3898 + $0xc] sm:$0xf]
    %s3903 = scalar_lea.vmem %s11, 8
    %v3904 = vld [vmem:[%s3903] sm:$0x1]
    %v3906 = vlaneseq
    %v3907 = vshrl.u32 %v3906, 7
    %v3908 = vsub.s32 0, %v3907
    %v3909 = vrot.slane %v3904, %v3908
    %v3915 = vunpack.c.l.b16 %v3899
    %v3916 = vunpack.c.l.b16 %v3900
    %v3917 = vunpack.c.l.b16 %v3901
    %v3918 = vunpack.c.l.b16 %v3902
    %v3919 = vpack.c.b16 %v3916, %v3915
    %v3920 = vpack.c.b16 %v3918, %v3917
    %3923 = vmatprep.subr.bf16.mxu0 0
    %3924 = vmatpush1.bf16.msra.mxu0 0
    %3925 = vmatprep.subr.bf16.mxu0 0
    %3926 = vmatpush1.bf16.msra.mxu0 0
    %3927 = vmatprep.subr.bf16.mxu0 0
    %3928 = vmatpush1.bf16.msra.mxu0 0
    %3929 = vmatprep.subr.bf16.mxu0 0
    %3930 = vmatpush1.bf16.msra.mxu0 0
    %3931 = vmatprep.subr.bf16.mxu0 0
    %3932 = vmatpush1.bf16.msra.mxu0 0
    %3933 = vmatprep.subr.bf16.mxu0 0
    %3934 = vmatpush1.bf16.msra.mxu0 0
    %3935 = vmatprep.subr.bf16.mxu0 0
    %3936 = vmatpush1.bf16.msra.mxu0 %v3920
    %3937 = vmatprep.subr.bf16.mxu0 0
    %3938 = vmatpush1.bf16.msra.mxu0 %v3919
    %3939 = vmatprep.subr.bf16.mxu0 0
    %3940 = vmatpush2.bf16.msra.mxu0 0
    %3941 = vmatprep.subr.bf16.mxu0 0
    %3942 = vmatpush2.bf16.msra.mxu0 0
    %3943 = vmatprep.subr.bf16.mxu0 0
    %3944 = vmatpush2.bf16.msra.mxu0 0
    %3945 = vmatprep.subr.bf16.mxu0 0
    %3946 = vmatpush2.bf16.msra.mxu0 0
    %3947 = vmatprep.subr.bf16.mxu0 0
    %3948 = vmatpush2.bf16.msra.mxu0 0
    %3949 = vmatprep.subr.bf16.mxu0 0
    %3950 = vmatpush2.bf16.msra.mxu0 0
    %3951 = vmatprep.subr.bf16.mxu0 0
    %3952 = vmatpush2.bf16.msra.mxu0 0
    %3953 = vmatprep.subr.bf16.mxu0 0
    %3954 = vmatpush2.bf16.msra.mxu0 0
    %3955 = vmatprep.mubr.bf16.mxu0 0
    %3956 = vmatmul.mubr.bf16.gmra.mxu0 %v3789
    %v3957 = vpop.f32.mrf.mxu0
    %v3958 = vadd.f32 %v3909, %v3957
    %v3959 = vpop.f32.mrf.mxu0
    %v3960 = vpop.f32.mrf.mxu0
    %v3961 = vadd.f32 %v3909, %v3960
    %v3962 = vpop.f32.mrf.mxu0
    %3963 = vdwg.mxu0
    %v3964 = vpack.c.bf16 %v3829, %v3826
    %v3965 = vpack.c.bf16 %v3895, %v3892
    %v3967 = vsel %vm419, %v3964, 0
    %v3970 = vsel %vm419, %v3965, 0
    %3972 = vmatprep.subr.bf16.mxu0 0
    %3973 = vmatpush1.bf16.xpose.msra.mxu0 0
    %3974 = vmatprep.subr.bf16.mxu0 0
    %3975 = vmatpush1.bf16.xpose.msra.mxu0 0
    %3976 = vmatprep.subr.bf16.mxu0 0
    %3977 = vmatpush1.bf16.xpose.msra.mxu0 0
    %3978 = vmatprep.subr.bf16.mxu0 0
    %3979 = vmatpush1.bf16.xpose.msra.mxu0 0
    %3980 = vmatprep.subr.bf16.mxu0 0
    %3981 = vmatpush1.bf16.xpose.msra.mxu0 0
    %3982 = vmatprep.subr.bf16.mxu0 0
    %3983 = vmatpush1.bf16.xpose.msra.mxu0 0
    %3984 = vmatprep.subr.bf16.mxu0 0
    %3985 = vmatpush1.bf16.xpose.msra.mxu0 0
    %3986 = vmatprep.subr.bf16.mxu0 0
    %3987 = vmatpush1.bf16.xpose.msra.mxu0 %v3970
    %3988 = vmatprep.subr.bf16.mxu0 0
    %3989 = vmatpush2.bf16.xpose.msra.mxu0 0
    %3990 = vmatprep.subr.bf16.mxu0 0
    %3991 = vmatpush2.bf16.xpose.msra.mxu0 0
    %3992 = vmatprep.subr.bf16.mxu0 0
    %3993 = vmatpush2.bf16.xpose.msra.mxu0 0
    %3994 = vmatprep.subr.bf16.mxu0 0
    %3995 = vmatpush2.bf16.xpose.msra.mxu0 0
    %3996 = vmatprep.subr.bf16.mxu0 0
    %3997 = vmatpush2.bf16.xpose.msra.mxu0 0
    %3998 = vmatprep.subr.bf16.mxu0 0
    %3999 = vmatpush2.bf16.xpose.msra.mxu0 0
    %4000 = vmatprep.subr.bf16.mxu0 0
    %4001 = vmatpush2.bf16.xpose.msra.mxu0 0
    %4002 = vmatprep.subr.bf16.mxu0 0
    %4003 = vmatpush2.bf16.xpose.msra.mxu0 0
    %4004 = vmatprep.mubr.bf16.mxu0 0
    %4005 = vmatmul.mubr.bf16.gmra.mxu0 %v3967
    %v4006 = vpop.f32.mrf.mxu0
    %v4007 = vadd.f32 %v219, %v4006
    %v4008 = vpop.f32.mrf.mxu0
    %v4009 = vpop.f32.mrf.mxu0
    %v4010 = vadd.f32 %v220, %v4009
    %v4011 = vpop.f32.mrf.mxu0
    %4012 = vdwg.mxu0
    %v4013 = vsel %vm467, %v4007, -inf
    %4014 = vmax.xlane.f32.xlu0 %v4013
    %v4015 = vpop.xlane.xlu0 %4014
    %v4016 = vsel %vm467, %v4010, -inf
    %4017 = vmax.xlane.f32.xlu0 %v4016
    %v4018 = vpop.xlane.xlu0 %4017
    %v4019 = vsub.f32 %v4007, %v4015
    %v4020 = vsub.f32 %v4010, %v4018
    %v4021 = vmul.f32 %v4019, 1.442695
    %v4022 = vpow.pop %v4021
    %v4023 = vmul.f32 %v4020, 1.442695
    %v4024 = vpow.pop %v4023
    %v4025 = vsel %vm467, %v4022, 0.0
    %4026 = vadd.xlane.f32.xlu0 %v4025
    %v4027 = vpop.xlane.xlu0 %4026
    %v4028 = vsel %vm467, %v4024, 0.0
    %4029 = vadd.xlane.f32.xlu0 %v4028
    %v4030 = vpop.xlane.xlu0 %4029
    %v4031 = vrcp.pop %v4027
    %v4032 = vrcp.pop %v4030
    %v4033 = vmul.f32 %v4022, %v4031
    %v4034 = vmul.f32 %v4024, %v4032
    %v4035 = vpack.c.bf16 %v4034, %v4033
    %v4036 = vpack.c.bf16 %v3961, %v3958
    %v4038 = vsel %vm467, %v4035, 0
    %4040 = vmatprep.subr.bf16.mxu0 0
    %4041 = vmatpush1.bf16.msra.mxu0 0
    %4042 = vmatprep.subr.bf16.mxu0 0
    %4043 = vmatpush1.bf16.msra.mxu0 0
    %4044 = vmatprep.subr.bf16.mxu0 0
    %4045 = vmatpush1.bf16.msra.mxu0 0
    %4046 = vmatprep.subr.bf16.mxu0 0
    %4047 = vmatpush1.bf16.msra.mxu0 0
    %4048 = vmatprep.subr.bf16.mxu0 0
    %4049 = vmatpush1.bf16.msra.mxu0 0
    %4050 = vmatprep.subr.bf16.mxu0 0
    %4051 = vmatpush1.bf16.msra.mxu0 0
    %4052 = vmatprep.subr.bf16.mxu0 0
    %4053 = vmatpush1.bf16.msra.mxu0 0
    %4054 = vmatprep.subr.bf16.mxu0 0
    %4055 = vmatpush1.bf16.msra.mxu0 %v4036
    %4056 = vmatprep.subr.bf16.mxu0 0
    %4057 = vmatpush2.bf16.msra.mxu0 0
    %4058 = vmatprep.subr.bf16.mxu0 0
    %4059 = vmatpush2.bf16.msra.mxu0 0
    %4060 = vmatprep.subr.bf16.mxu0 0
    %4061 = vmatpush2.bf16.msra.mxu0 0
    %4062 = vmatprep.subr.bf16.mxu0 0
    %4063 = vmatpush2.bf16.msra.mxu0 0
    %4064 = vmatprep.subr.bf16.mxu0 0
    %4065 = vmatpush2.bf16.msra.mxu0 0
    %4066 = vmatprep.subr.bf16.mxu0 0
    %4067 = vmatpush2.bf16.msra.mxu0 0
    %4068 = vmatprep.subr.bf16.mxu0 0
    %4069 = vmatpush2.bf16.msra.mxu0 0
    %4070 = vmatprep.subr.bf16.mxu0 0
    %4071 = vmatpush2.bf16.msra.mxu0 0
    %4072 = vmatprep.mubr.bf16.mxu0 0
    %4073 = vmatmul.mubr.bf16.gmra.mxu0 %v4038
    %v4074 = vpop.f32.mrf.mxu0
    %v4075 = vadd.f32 0.0, %v4074
    %v4076 = vpop.f32.mrf.mxu0
    %v4077 = vpop.f32.mrf.mxu0
    %v4078 = vadd.f32 0.0, %v4077
    %v4079 = vpop.f32.mrf.mxu0
    %4080 = vdwg.mxu0
    %v4081 = vpack.c.bf16 %v4078, %v4075
    %s4082 = scalar_lea.vmem %s12, 32
    %v4083 = vld [vmem:[%s4082] sm:$0xf]
    %s4084 = scalar_lea.vmem %s6, 144
    %v4085 = vld [vmem:[%s4084] sm:$0xf]
    %v4086 = vld [vmem:[%s4084 + $0x4] sm:$0xf]
    %v4087 = vld [vmem:[%s4084 + $0x8] sm:$0xf]
    %v4088 = vld [vmem:[%s4084 + $0xc] sm:$0xf]
    %s4089 = scalar_lea.vmem %s9, 9
    %v4090 = vld [vmem:[%s4089] sm:$0x1]
    %v4092 = vlaneseq
    %v4093 = vshrl.u32 %v4092, 7
    %v4094 = vsub.s32 0, %v4093
    %v4095 = vrot.slane %v4090, %v4094
    %v4101 = vunpack.c.l.b16 %v4085
    %v4102 = vunpack.c.l.b16 %v4086
    %v4103 = vunpack.c.l.b16 %v4087
    %v4104 = vunpack.c.l.b16 %v4088
    %v4105 = vpack.c.b16 %v4102, %v4101
    %v4106 = vpack.c.b16 %v4104, %v4103
    %4109 = vmatprep.subr.bf16.mxu0 0
    %4110 = vmatpush1.bf16.msra.mxu0 0
    %4111 = vmatprep.subr.bf16.mxu0 0
    %4112 = vmatpush1.bf16.msra.mxu0 0
    %4113 = vmatprep.subr.bf16.mxu0 0
    %4114 = vmatpush1.bf16.msra.mxu0 0
    %4115 = vmatprep.subr.bf16.mxu0 0
    %4116 = vmatpush1.bf16.msra.mxu0 0
    %4117 = vmatprep.subr.bf16.mxu0 0
    %4118 = vmatpush1.bf16.msra.mxu0 0
    %4119 = vmatprep.subr.bf16.mxu0 0
    %4120 = vmatpush1.bf16.msra.mxu0 0
    %4121 = vmatprep.subr.bf16.mxu0 0
    %4122 = vmatpush1.bf16.msra.mxu0 %v4106
    %4123 = vmatprep.subr.bf16.mxu0 0
    %4124 = vmatpush1.bf16.msra.mxu0 %v4105
    %4125 = vmatprep.subr.bf16.mxu0 0
    %4126 = vmatpush2.bf16.msra.mxu0 0
    %4127 = vmatprep.subr.bf16.mxu0 0
    %4128 = vmatpush2.bf16.msra.mxu0 0
    %4129 = vmatprep.subr.bf16.mxu0 0
    %4130 = vmatpush2.bf16.msra.mxu0 0
    %4131 = vmatprep.subr.bf16.mxu0 0
    %4132 = vmatpush2.bf16.msra.mxu0 0
    %4133 = vmatprep.subr.bf16.mxu0 0
    %4134 = vmatpush2.bf16.msra.mxu0 0
    %4135 = vmatprep.subr.bf16.mxu0 0
    %4136 = vmatpush2.bf16.msra.mxu0 0
    %4137 = vmatprep.subr.bf16.mxu0 0
    %4138 = vmatpush2.bf16.msra.mxu0 0
    %4139 = vmatprep.subr.bf16.mxu0 0
    %4140 = vmatpush2.bf16.msra.mxu0 0
    %4141 = vmatprep.mubr.bf16.mxu0 0
    %4142 = vmatmul.mubr.bf16.gmra.mxu0 %v3789
    %v4143 = vpop.f32.mrf.mxu0
    %v4144 = vadd.f32 %v4095, %v4143
    %v4145 = vpop.f32.mrf.mxu0
    %v4146 = vpop.f32.mrf.mxu0
    %v4147 = vadd.f32 %v4095, %v4146
    %v4148 = vpop.f32.mrf.mxu0
    %4149 = vdwg.mxu0
    %s4150 = scalar_lea.vmem %s7, 144
    %v4151 = vld [vmem:[%s4150] sm:$0xf]
    %v4152 = vld [vmem:[%s4150 + $0x4] sm:$0xf]
    %v4153 = vld [vmem:[%s4150 + $0x8] sm:$0xf]
    %v4154 = vld [vmem:[%s4150 + $0xc] sm:$0xf]
    %s4155 = scalar_lea.vmem %s10, 9
    %v4156 = vld [vmem:[%s4155] sm:$0x1]
    %v4158 = vlaneseq
    %v4159 = vshrl.u32 %v4158, 7
    %v4160 = vsub.s32 0, %v4159
    %v4161 = vrot.slane %v4156, %v4160
    %v4167 = vunpack.c.l.b16 %v4151
    %v4168 = vunpack.c.l.b16 %v4152
    %v4169 = vunpack.c.l.b16 %v4153
    %v4170 = vunpack.c.l.b16 %v4154
    %v4171 = vpack.c.b16 %v4168, %v4167
    %v4172 = vpack.c.b16 %v4170, %v4169
    %4175 = vmatprep.subr.bf16.mxu0 0
    %4176 = vmatpush1.bf16.msra.mxu0 0
    %4177 = vmatprep.subr.bf16.mxu0 0
    %4178 = vmatpush1.bf16.msra.mxu0 0
    %4179 = vmatprep.subr.bf16.mxu0 0
    %4180 = vmatpush1.bf16.msra.mxu0 0
    %4181 = vmatprep.subr.bf16.mxu0 0
    %4182 = vmatpush1.bf16.msra.mxu0 0
    %4183 = vmatprep.subr.bf16.mxu0 0
    %4184 = vmatpush1.bf16.msra.mxu0 0
    %4185 = vmatprep.subr.bf16.mxu0 0
    %4186 = vmatpush1.bf16.msra.mxu0 0
    %4187 = vmatprep.subr.bf16.mxu0 0
    %4188 = vmatpush1.bf16.msra.mxu0 %v4172
    %4189 = vmatprep.subr.bf16.mxu0 0
    %4190 = vmatpush1.bf16.msra.mxu0 %v4171
    %4191 = vmatprep.subr.bf16.mxu0 0
    %4192 = vmatpush2.bf16.msra.mxu0 0
    %4193 = vmatprep.subr.bf16.mxu0 0
    %4194 = vmatpush2.bf16.msra.mxu0 0
    %4195 = vmatprep.subr.bf16.mxu0 0
    %4196 = vmatpush2.bf16.msra.mxu0 0
    %4197 = vmatprep.subr.bf16.mxu0 0
    %4198 = vmatpush2.bf16.msra.mxu0 0
    %4199 = vmatprep.subr.bf16.mxu0 0
    %4200 = vmatpush2.bf16.msra.mxu0 0
    %4201 = vmatprep.subr.bf16.mxu0 0
    %4202 = vmatpush2.bf16.msra.mxu0 0
    %4203 = vmatprep.subr.bf16.mxu0 0
    %4204 = vmatpush2.bf16.msra.mxu0 0
    %4205 = vmatprep.subr.bf16.mxu0 0
    %4206 = vmatpush2.bf16.msra.mxu0 0
    %4207 = vmatprep.mubr.bf16.mxu0 0
    %4208 = vmatmul.mubr.bf16.gmra.mxu0 %v3789
    %v4209 = vpop.f32.mrf.mxu0
    %v4210 = vadd.f32 %v4161, %v4209
    %v4211 = vpop.f32.mrf.mxu0
    %v4212 = vpop.f32.mrf.mxu0
    %v4213 = vadd.f32 %v4161, %v4212
    %v4214 = vpop.f32.mrf.mxu0
    %4215 = vdwg.mxu0
    %s4216 = scalar_lea.vmem %s8, 144
    %v4217 = vld [vmem:[%s4216] sm:$0xf]
    %v4218 = vld [vmem:[%s4216 + $0x4] sm:$0xf]
    %v4219 = vld [vmem:[%s4216 + $0x8] sm:$0xf]
    %v4220 = vld [vmem:[%s4216 + $0xc] sm:$0xf]
    %s4221 = scalar_lea.vmem %s11, 9
    %v4222 = vld [vmem:[%s4221] sm:$0x1]
    %v4224 = vlaneseq
    %v4225 = vshrl.u32 %v4224, 7
    %v4226 = vsub.s32 0, %v4225
    %v4227 = vrot.slane %v4222, %v4226
    %v4233 = vunpack.c.l.b16 %v4217
    %v4234 = vunpack.c.l.b16 %v4218
    %v4235 = vunpack.c.l.b16 %v4219
    %v4236 = vunpack.c.l.b16 %v4220
    %v4237 = vpack.c.b16 %v4234, %v4233
    %v4238 = vpack.c.b16 %v4236, %v4235
    %4241 = vmatprep.subr.bf16.mxu0 0
    %4242 = vmatpush1.bf16.msra.mxu0 0
    %4243 = vmatprep.subr.bf16.mxu0 0
    %4244 = vmatpush1.bf16.msra.mxu0 0
    %4245 = vmatprep.subr.bf16.mxu0 0
    %4246 = vmatpush1.bf16.msra.mxu0 0
    %4247 = vmatprep.subr.bf16.mxu0 0
    %4248 = vmatpush1.bf16.msra.mxu0 0
    %4249 = vmatprep.subr.bf16.mxu0 0
    %4250 = vmatpush1.bf16.msra.mxu0 0
    %4251 = vmatprep.subr.bf16.mxu0 0
    %4252 = vmatpush1.bf16.msra.mxu0 0
    %4253 = vmatprep.subr.bf16.mxu0 0
    %4254 = vmatpush1.bf16.msra.mxu0 %v4238
    %4255 = vmatprep.subr.bf16.mxu0 0
    %4256 = vmatpush1.bf16.msra.mxu0 %v4237
    %4257 = vmatprep.subr.bf16.mxu0 0
    %4258 = vmatpush2.bf16.msra.mxu0 0
    %4259 = vmatprep.subr.bf16.mxu0 0
    %4260 = vmatpush2.bf16.msra.mxu0 0
    %4261 = vmatprep.subr.bf16.mxu0 0
    %4262 = vmatpush2.bf16.msra.mxu0 0
    %4263 = vmatprep.subr.bf16.mxu0 0
    %4264 = vmatpush2.bf16.msra.mxu0 0
    %4265 = vmatprep.subr.bf16.mxu0 0
    %4266 = vmatpush2.bf16.msra.mxu0 0
    %4267 = vmatprep.subr.bf16.mxu0 0
    %4268 = vmatpush2.bf16.msra.mxu0 0
    %4269 = vmatprep.subr.bf16.mxu0 0
    %4270 = vmatpush2.bf16.msra.mxu0 0
    %4271 = vmatprep.subr.bf16.mxu0 0
    %4272 = vmatpush2.bf16.msra.mxu0 0
    %4273 = vmatprep.mubr.bf16.mxu0 0
    %4274 = vmatmul.mubr.bf16.gmra.mxu0 %v3789
    %v4275 = vpop.f32.mrf.mxu0
    %v4276 = vadd.f32 %v4227, %v4275
    %v4277 = vpop.f32.mrf.mxu0
    %v4278 = vpop.f32.mrf.mxu0
    %v4279 = vadd.f32 %v4227, %v4278
    %v4280 = vpop.f32.mrf.mxu0
    %4281 = vdwg.mxu0
    %v4282 = vpack.c.bf16 %v4147, %v4144
    %v4283 = vpack.c.bf16 %v4213, %v4210
    %v4285 = vsel %vm419, %v4282, 0
    %v4288 = vsel %vm419, %v4283, 0
    %4290 = vmatprep.subr.bf16.mxu0 0
    %4291 = vmatpush1.bf16.xpose.msra.mxu0 0
    %4292 = vmatprep.subr.bf16.mxu0 0
    %4293 = vmatpush1.bf16.xpose.msra.mxu0 0
    %4294 = vmatprep.subr.bf16.mxu0 0
    %4295 = vmatpush1.bf16.xpose.msra.mxu0 0
    %4296 = vmatprep.subr.bf16.mxu0 0
    %4297 = vmatpush1.bf16.xpose.msra.mxu0 0
    %4298 = vmatprep.subr.bf16.mxu0 0
    %4299 = vmatpush1.bf16.xpose.msra.mxu0 0
    %4300 = vmatprep.subr.bf16.mxu0 0
    %4301 = vmatpush1.bf16.xpose.msra.mxu0 0
    %4302 = vmatprep.subr.bf16.mxu0 0
    %4303 = vmatpush1.bf16.xpose.msra.mxu0 0
    %4304 = vmatprep.subr.bf16.mxu0 0
    %4305 = vmatpush1.bf16.xpose.msra.mxu0 %v4288
    %4306 = vmatprep.subr.bf16.mxu0 0
    %4307 = vmatpush2.bf16.xpose.msra.mxu0 0
    %4308 = vmatprep.subr.bf16.mxu0 0
    %4309 = vmatpush2.bf16.xpose.msra.mxu0 0
    %4310 = vmatprep.subr.bf16.mxu0 0
    %4311 = vmatpush2.bf16.xpose.msra.mxu0 0
    %4312 = vmatprep.subr.bf16.mxu0 0
    %4313 = vmatpush2.bf16.xpose.msra.mxu0 0
    %4314 = vmatprep.subr.bf16.mxu0 0
    %4315 = vmatpush2.bf16.xpose.msra.mxu0 0
    %4316 = vmatprep.subr.bf16.mxu0 0
    %4317 = vmatpush2.bf16.xpose.msra.mxu0 0
    %4318 = vmatprep.subr.bf16.mxu0 0
    %4319 = vmatpush2.bf16.xpose.msra.mxu0 0
    %4320 = vmatprep.subr.bf16.mxu0 0
    %4321 = vmatpush2.bf16.xpose.msra.mxu0 0
    %4322 = vmatprep.mubr.bf16.mxu0 0
    %4323 = vmatmul.mubr.bf16.gmra.mxu0 %v4285
    %v4324 = vpop.f32.mrf.mxu0
    %v4325 = vadd.f32 %v219, %v4324
    %v4326 = vpop.f32.mrf.mxu0
    %v4327 = vpop.f32.mrf.mxu0
    %v4328 = vadd.f32 %v220, %v4327
    %v4329 = vpop.f32.mrf.mxu0
    %4330 = vdwg.mxu0
    %v4331 = vsel %vm467, %v4325, -inf
    %4332 = vmax.xlane.f32.xlu0 %v4331
    %v4333 = vpop.xlane.xlu0 %4332
    %v4334 = vsel %vm467, %v4328, -inf
    %4335 = vmax.xlane.f32.xlu0 %v4334
    %v4336 = vpop.xlane.xlu0 %4335
    %v4337 = vsub.f32 %v4325, %v4333
    %v4338 = vsub.f32 %v4328, %v4336
    %v4339 = vmul.f32 %v4337, 1.442695
    %v4340 = vpow.pop %v4339
    %v4341 = vmul.f32 %v4338, 1.442695
    %v4342 = vpow.pop %v4341
    %v4343 = vsel %vm467, %v4340, 0.0
    %4344 = vadd.xlane.f32.xlu0 %v4343
    %v4345 = vpop.xlane.xlu0 %4344
    %v4346 = vsel %vm467, %v4342, 0.0
    %4347 = vadd.xlane.f32.xlu0 %v4346
    %v4348 = vpop.xlane.xlu0 %4347
    %v4349 = vrcp.pop %v4345
    %v4350 = vrcp.pop %v4348
    %v4351 = vmul.f32 %v4340, %v4349
    %v4352 = vmul.f32 %v4342, %v4350
    %v4353 = vpack.c.bf16 %v4352, %v4351
    %v4354 = vpack.c.bf16 %v4279, %v4276
    %v4356 = vsel %vm467, %v4353, 0
    %4358 = vmatprep.subr.bf16.mxu0 0
    %4359 = vmatpush1.bf16.msra.mxu0 0
    %4360 = vmatprep.subr.bf16.mxu0 0
    %4361 = vmatpush1.bf16.msra.mxu0 0
    %4362 = vmatprep.subr.bf16.mxu0 0
    %4363 = vmatpush1.bf16.msra.mxu0 0
    %4364 = vmatprep.subr.bf16.mxu0 0
    %4365 = vmatpush1.bf16.msra.mxu0 0
    %4366 = vmatprep.subr.bf16.mxu0 0
    %4367 = vmatpush1.bf16.msra.mxu0 0
    %4368 = vmatprep.subr.bf16.mxu0 0
    %4369 = vmatpush1.bf16.msra.mxu0 0
    %4370 = vmatprep.subr.bf16.mxu0 0
    %4371 = vmatpush1.bf16.msra.mxu0 0
    %4372 = vmatprep.subr.bf16.mxu0 0
    %4373 = vmatpush1.bf16.msra.mxu0 %v4354
    %4374 = vmatprep.subr.bf16.mxu0 0
    %4375 = vmatpush2.bf16.msra.mxu0 0
    %4376 = vmatprep.subr.bf16.mxu0 0
    %4377 = vmatpush2.bf16.msra.mxu0 0
    %4378 = vmatprep.subr.bf16.mxu0 0
    %4379 = vmatpush2.bf16.msra.mxu0 0
    %4380 = vmatprep.subr.bf16.mxu0 0
    %4381 = vmatpush2.bf16.msra.mxu0 0
    %4382 = vmatprep.subr.bf16.mxu0 0
    %4383 = vmatpush2.bf16.msra.mxu0 0
    %4384 = vmatprep.subr.bf16.mxu0 0
    %4385 = vmatpush2.bf16.msra.mxu0 0
    %4386 = vmatprep.subr.bf16.mxu0 0
    %4387 = vmatpush2.bf16.msra.mxu0 0
    %4388 = vmatprep.subr.bf16.mxu0 0
    %4389 = vmatpush2.bf16.msra.mxu0 0
    %4390 = vmatprep.mubr.bf16.mxu0 0
    %4391 = vmatmul.mubr.bf16.gmra.mxu0 %v4356
    %v4392 = vpop.f32.mrf.mxu0
    %v4393 = vadd.f32 0.0, %v4392
    %v4394 = vpop.f32.mrf.mxu0
    %v4395 = vpop.f32.mrf.mxu0
    %v4396 = vadd.f32 0.0, %v4395
    %v4397 = vpop.f32.mrf.mxu0
    %4398 = vdwg.mxu0
    %v4399 = vpack.c.bf16 %v4396, %v4393
    %s4400 = scalar_lea.vmem %s12, 36
    %v4401 = vld [vmem:[%s4400] sm:$0xf]
    %v4403 = vsel %vm419, %v4399, 0
    %v4406 = vsel %vm859, %v4401, 0
    %4408 = vmatprep.subr.bf16.mxu0 0
    %4409 = vmatpush1.bf16.msra.mxu0 0
    %4410 = vmatprep.subr.bf16.mxu0 0
    %4411 = vmatpush1.bf16.msra.mxu0 0
    %4412 = vmatprep.subr.bf16.mxu0 0
    %4413 = vmatpush1.bf16.msra.mxu0 0
    %4414 = vmatprep.subr.bf16.mxu0 0
    %4415 = vmatpush1.bf16.msra.mxu0 0
    %4416 = vmatprep.subr.bf16.mxu0 0
    %4417 = vmatpush1.bf16.msra.mxu0 0
    %4418 = vmatprep.subr.bf16.mxu0 0
    %4419 = vmatpush1.bf16.msra.mxu0 0
    %4420 = vmatprep.subr.bf16.mxu0 0
    %4421 = vmatpush1.bf16.msra.mxu0 0
    %4422 = vmatprep.subr.bf16.mxu0 0
    %4423 = vmatpush1.bf16.msra.mxu0 %v4406
    %4424 = vmatprep.subr.bf16.mxu0 0
    %4425 = vmatpush2.bf16.msra.mxu0 0
    %4426 = vmatprep.subr.bf16.mxu0 0
    %4427 = vmatpush2.bf16.msra.mxu0 0
    %4428 = vmatprep.subr.bf16.mxu0 0
    %4429 = vmatpush2.bf16.msra.mxu0 0
    %4430 = vmatprep.subr.bf16.mxu0 0
    %4431 = vmatpush2.bf16.msra.mxu0 0
    %4432 = vmatprep.subr.bf16.mxu0 0
    %4433 = vmatpush2.bf16.msra.mxu0 0
    %4434 = vmatprep.subr.bf16.mxu0 0
    %4435 = vmatpush2.bf16.msra.mxu0 0
    %4436 = vmatprep.subr.bf16.mxu0 0
    %4437 = vmatpush2.bf16.msra.mxu0 0
    %4438 = vmatprep.subr.bf16.mxu0 0
    %4439 = vmatpush2.bf16.msra.mxu0 0
    %4440 = vmatprep.mubr.bf16.mxu0 0
    %4441 = vmatmul.mubr.bf16.gmra.mxu0 %v4403
    %v4442 = vpop.f32.mrf.mxu0
    %v4443 = vadd.f32 0.0, %v4442
    %v4444 = vpop.f32.mrf.mxu0
    %v4445 = vpop.f32.mrf.mxu0
    %v4446 = vadd.f32 0.0, %v4445
    %v4447 = vpop.f32.mrf.mxu0
    %4448 = vdwg.mxu0
    %v4450 = vsel %vm419, %v4081, 0
    %v4453 = vsel %vm859, %v4083, 0
    %4455 = vmatprep.subr.bf16.mxu0 0
    %4456 = vmatpush1.bf16.msra.mxu0 0
    %4457 = vmatprep.subr.bf16.mxu0 0
    %4458 = vmatpush1.bf16.msra.mxu0 0
    %4459 = vmatprep.subr.bf16.mxu0 0
    %4460 = vmatpush1.bf16.msra.mxu0 0
    %4461 = vmatprep.subr.bf16.mxu0 0
    %4462 = vmatpush1.bf16.msra.mxu0 0
    %4463 = vmatprep.subr.bf16.mxu0 0
    %4464 = vmatpush1.bf16.msra.mxu0 0
    %4465 = vmatprep.subr.bf16.mxu0 0
    %4466 = vmatpush1.bf16.msra.mxu0 0
    %4467 = vmatprep.subr.bf16.mxu0 0
    %4468 = vmatpush1.bf16.msra.mxu0 0
    %4469 = vmatprep.subr.bf16.mxu0 0
    %4470 = vmatpush1.bf16.msra.mxu0 %v4453
    %4471 = vmatprep.subr.bf16.mxu0 0
    %4472 = vmatpush2.bf16.msra.mxu0 0
    %4473 = vmatprep.subr.bf16.mxu0 0
    %4474 = vmatpush2.bf16.msra.mxu0 0
    %4475 = vmatprep.subr.bf16.mxu0 0
    %4476 = vmatpush2.bf16.msra.mxu0 0
    %4477 = vmatprep.subr.bf16.mxu0 0
    %4478 = vmatpush2.bf16.msra.mxu0 0
    %4479 = vmatprep.subr.bf16.mxu0 0
    %4480 = vmatpush2.bf16.msra.mxu0 0
    %4481 = vmatprep.subr.bf16.mxu0 0
    %4482 = vmatpush2.bf16.msra.mxu0 0
    %4483 = vmatprep.subr.bf16.mxu0 0
    %4484 = vmatpush2.bf16.msra.mxu0 0
    %4485 = vmatprep.subr.bf16.mxu0 0
    %4486 = vmatpush2.bf16.msra.mxu0 0
    %4487 = vmatprep.mubr.bf16.mxu0 0
    %4488 = vmatmul.mubr.bf16.gmra.mxu0 %v4450
    %v4489 = vpop.f32.mrf.mxu0
    %v4490 = vadd.f32 %v4443, %v4489
    %v4491 = vpop.f32.mrf.mxu0
    %v4492 = vpop.f32.mrf.mxu0
    %v4493 = vadd.f32 %v4446, %v4492
    %v4494 = vpop.f32.mrf.mxu0
    %4495 = vdwg.mxu0
    %s4496 = scalar_lea.vmem %s6, 160
    %v4497 = vld [vmem:[%s4496] sm:$0xf]
    %v4498 = vld [vmem:[%s4496 + $0x4] sm:$0xf]
    %v4499 = vld [vmem:[%s4496 + $0x8] sm:$0xf]
    %v4500 = vld [vmem:[%s4496 + $0xc] sm:$0xf]
    %s4501 = scalar_lea.vmem %s9, 10
    %v4502 = vld [vmem:[%s4501] sm:$0x1]
    %v4504 = vlaneseq
    %v4505 = vshrl.u32 %v4504, 7
    %v4506 = vsub.s32 0, %v4505
    %v4507 = vrot.slane %v4502, %v4506
    %v4513 = vunpack.c.l.b16 %v4497
    %v4514 = vunpack.c.l.b16 %v4498
    %v4515 = vunpack.c.l.b16 %v4499
    %v4516 = vunpack.c.l.b16 %v4500
    %v4517 = vpack.c.b16 %v4514, %v4513
    %v4518 = vpack.c.b16 %v4516, %v4515
    %4521 = vmatprep.subr.bf16.mxu0 0
    %4522 = vmatpush1.bf16.msra.mxu0 0
    %4523 = vmatprep.subr.bf16.mxu0 0
    %4524 = vmatpush1.bf16.msra.mxu0 0
    %4525 = vmatprep.subr.bf16.mxu0 0
    %4526 = vmatpush1.bf16.msra.mxu0 0
    %4527 = vmatprep.subr.bf16.mxu0 0
    %4528 = vmatpush1.bf16.msra.mxu0 0
    %4529 = vmatprep.subr.bf16.mxu0 0
    %4530 = vmatpush1.bf16.msra.mxu0 0
    %4531 = vmatprep.subr.bf16.mxu0 0
    %4532 = vmatpush1.bf16.msra.mxu0 0
    %4533 = vmatprep.subr.bf16.mxu0 0
    %4534 = vmatpush1.bf16.msra.mxu0 %v4518
    %4535 = vmatprep.subr.bf16.mxu0 0
    %4536 = vmatpush1.bf16.msra.mxu0 %v4517
    %4537 = vmatprep.subr.bf16.mxu0 0
    %4538 = vmatpush2.bf16.msra.mxu0 0
    %4539 = vmatprep.subr.bf16.mxu0 0
    %4540 = vmatpush2.bf16.msra.mxu0 0
    %4541 = vmatprep.subr.bf16.mxu0 0
    %4542 = vmatpush2.bf16.msra.mxu0 0
    %4543 = vmatprep.subr.bf16.mxu0 0
    %4544 = vmatpush2.bf16.msra.mxu0 0
    %4545 = vmatprep.subr.bf16.mxu0 0
    %4546 = vmatpush2.bf16.msra.mxu0 0
    %4547 = vmatprep.subr.bf16.mxu0 0
    %4548 = vmatpush2.bf16.msra.mxu0 0
    %4549 = vmatprep.subr.bf16.mxu0 0
    %4550 = vmatpush2.bf16.msra.mxu0 0
    %4551 = vmatprep.subr.bf16.mxu0 0
    %4552 = vmatpush2.bf16.msra.mxu0 0
    %4553 = vmatprep.mubr.bf16.mxu0 0
    %4554 = vmatmul.mubr.bf16.gmra.mxu0 %v3789
    %v4555 = vpop.f32.mrf.mxu0
    %v4556 = vadd.f32 %v4507, %v4555
    %v4557 = vpop.f32.mrf.mxu0
    %v4558 = vpop.f32.mrf.mxu0
    %v4559 = vadd.f32 %v4507, %v4558
    %v4560 = vpop.f32.mrf.mxu0
    %4561 = vdwg.mxu0
    %s4562 = scalar_lea.vmem %s7, 160
    %v4563 = vld [vmem:[%s4562] sm:$0xf]
    %v4564 = vld [vmem:[%s4562 + $0x4] sm:$0xf]
    %v4565 = vld [vmem:[%s4562 + $0x8] sm:$0xf]
    %v4566 = vld [vmem:[%s4562 + $0xc] sm:$0xf]
    %s4567 = scalar_lea.vmem %s10, 10
    %v4568 = vld [vmem:[%s4567] sm:$0x1]
    %v4570 = vlaneseq
    %v4571 = vshrl.u32 %v4570, 7
    %v4572 = vsub.s32 0, %v4571
    %v4573 = vrot.slane %v4568, %v4572
    %v4579 = vunpack.c.l.b16 %v4563
    %v4580 = vunpack.c.l.b16 %v4564
    %v4581 = vunpack.c.l.b16 %v4565
    %v4582 = vunpack.c.l.b16 %v4566
    %v4583 = vpack.c.b16 %v4580, %v4579
    %v4584 = vpack.c.b16 %v4582, %v4581
    %4587 = vmatprep.subr.bf16.mxu0 0
    %4588 = vmatpush1.bf16.msra.mxu0 0
    %4589 = vmatprep.subr.bf16.mxu0 0
    %4590 = vmatpush1.bf16.msra.mxu0 0
    %4591 = vmatprep.subr.bf16.mxu0 0
    %4592 = vmatpush1.bf16.msra.mxu0 0
    %4593 = vmatprep.subr.bf16.mxu0 0
    %4594 = vmatpush1.bf16.msra.mxu0 0
    %4595 = vmatprep.subr.bf16.mxu0 0
    %4596 = vmatpush1.bf16.msra.mxu0 0
    %4597 = vmatprep.subr.bf16.mxu0 0
    %4598 = vmatpush1.bf16.msra.mxu0 0
    %4599 = vmatprep.subr.bf16.mxu0 0
    %4600 = vmatpush1.bf16.msra.mxu0 %v4584
    %4601 = vmatprep.subr.bf16.mxu0 0
    %4602 = vmatpush1.bf16.msra.mxu0 %v4583
    %4603 = vmatprep.subr.bf16.mxu0 0
    %4604 = vmatpush2.bf16.msra.mxu0 0
    %4605 = vmatprep.subr.bf16.mxu0 0
    %4606 = vmatpush2.bf16.msra.mxu0 0
    %4607 = vmatprep.subr.bf16.mxu0 0
    %4608 = vmatpush2.bf16.msra.mxu0 0
    %4609 = vmatprep.subr.bf16.mxu0 0
    %4610 = vmatpush2.bf16.msra.mxu0 0
    %4611 = vmatprep.subr.bf16.mxu0 0
    %4612 = vmatpush2.bf16.msra.mxu0 0
    %4613 = vmatprep.subr.bf16.mxu0 0
    %4614 = vmatpush2.bf16.msra.mxu0 0
    %4615 = vmatprep.subr.bf16.mxu0 0
    %4616 = vmatpush2.bf16.msra.mxu0 0
    %4617 = vmatprep.subr.bf16.mxu0 0
    %4618 = vmatpush2.bf16.msra.mxu0 0
    %4619 = vmatprep.mubr.bf16.mxu0 0
    %4620 = vmatmul.mubr.bf16.gmra.mxu0 %v3789
    %v4621 = vpop.f32.mrf.mxu0
    %v4622 = vadd.f32 %v4573, %v4621
    %v4623 = vpop.f32.mrf.mxu0
    %v4624 = vpop.f32.mrf.mxu0
    %v4625 = vadd.f32 %v4573, %v4624
    %v4626 = vpop.f32.mrf.mxu0
    %4627 = vdwg.mxu0
    %s4628 = scalar_lea.vmem %s8, 160
    %v4629 = vld [vmem:[%s4628] sm:$0xf]
    %v4630 = vld [vmem:[%s4628 + $0x4] sm:$0xf]
    %v4631 = vld [vmem:[%s4628 + $0x8] sm:$0xf]
    %v4632 = vld [vmem:[%s4628 + $0xc] sm:$0xf]
    %s4633 = scalar_lea.vmem %s11, 10
    %v4634 = vld [vmem:[%s4633] sm:$0x1]
    %v4636 = vlaneseq
    %v4637 = vshrl.u32 %v4636, 7
    %v4638 = vsub.s32 0, %v4637
    %v4639 = vrot.slane %v4634, %v4638
    %v4645 = vunpack.c.l.b16 %v4629
    %v4646 = vunpack.c.l.b16 %v4630
    %v4647 = vunpack.c.l.b16 %v4631
    %v4648 = vunpack.c.l.b16 %v4632
    %v4649 = vpack.c.b16 %v4646, %v4645
    %v4650 = vpack.c.b16 %v4648, %v4647
    %4653 = vmatprep.subr.bf16.mxu0 0
    %4654 = vmatpush1.bf16.msra.mxu0 0
    %4655 = vmatprep.subr.bf16.mxu0 0
    %4656 = vmatpush1.bf16.msra.mxu0 0
    %4657 = vmatprep.subr.bf16.mxu0 0
    %4658 = vmatpush1.bf16.msra.mxu0 0
    %4659 = vmatprep.subr.bf16.mxu0 0
    %4660 = vmatpush1.bf16.msra.mxu0 0
    %4661 = vmatprep.subr.bf16.mxu0 0
    %4662 = vmatpush1.bf16.msra.mxu0 0
    %4663 = vmatprep.subr.bf16.mxu0 0
    %4664 = vmatpush1.bf16.msra.mxu0 0
    %4665 = vmatprep.subr.bf16.mxu0 0
    %4666 = vmatpush1.bf16.msra.mxu0 %v4650
    %4667 = vmatprep.subr.bf16.mxu0 0
    %4668 = vmatpush1.bf16.msra.mxu0 %v4649
    %4669 = vmatprep.subr.bf16.mxu0 0
    %4670 = vmatpush2.bf16.msra.mxu0 0
    %4671 = vmatprep.subr.bf16.mxu0 0
    %4672 = vmatpush2.bf16.msra.mxu0 0
    %4673 = vmatprep.subr.bf16.mxu0 0
    %4674 = vmatpush2.bf16.msra.mxu0 0
    %4675 = vmatprep.subr.bf16.mxu0 0
    %4676 = vmatpush2.bf16.msra.mxu0 0
    %4677 = vmatprep.subr.bf16.mxu0 0
    %4678 = vmatpush2.bf16.msra.mxu0 0
    %4679 = vmatprep.subr.bf16.mxu0 0
    %4680 = vmatpush2.bf16.msra.mxu0 0
    %4681 = vmatprep.subr.bf16.mxu0 0
    %4682 = vmatpush2.bf16.msra.mxu0 0
    %4683 = vmatprep.subr.bf16.mxu0 0
    %4684 = vmatpush2.bf16.msra.mxu0 0
    %4685 = vmatprep.mubr.bf16.mxu0 0
    %4686 = vmatmul.mubr.bf16.gmra.mxu0 %v3789
    %v4687 = vpop.f32.mrf.mxu0
    %v4688 = vadd.f32 %v4639, %v4687
    %v4689 = vpop.f32.mrf.mxu0
    %v4690 = vpop.f32.mrf.mxu0
    %v4691 = vadd.f32 %v4639, %v4690
    %v4692 = vpop.f32.mrf.mxu0
    %4693 = vdwg.mxu0
    %v4694 = vpack.c.bf16 %v4559, %v4556
    %v4695 = vpack.c.bf16 %v4625, %v4622
    %v4697 = vsel %vm419, %v4694, 0
    %v4700 = vsel %vm419, %v4695, 0
    %4702 = vmatprep.subr.bf16.mxu0 0
    %4703 = vmatpush1.bf16.xpose.msra.mxu0 0
    %4704 = vmatprep.subr.bf16.mxu0 0
    %4705 = vmatpush1.bf16.xpose.msra.mxu0 0
    %4706 = vmatprep.subr.bf16.mxu0 0
    %4707 = vmatpush1.bf16.xpose.msra.mxu0 0
    %4708 = vmatprep.subr.bf16.mxu0 0
    %4709 = vmatpush1.bf16.xpose.msra.mxu0 0
    %4710 = vmatprep.subr.bf16.mxu0 0
    %4711 = vmatpush1.bf16.xpose.msra.mxu0 0
    %4712 = vmatprep.subr.bf16.mxu0 0
    %4713 = vmatpush1.bf16.xpose.msra.mxu0 0
    %4714 = vmatprep.subr.bf16.mxu0 0
    %4715 = vmatpush1.bf16.xpose.msra.mxu0 0
    %4716 = vmatprep.subr.bf16.mxu0 0
    %4717 = vmatpush1.bf16.xpose.msra.mxu0 %v4700
    %4718 = vmatprep.subr.bf16.mxu0 0
    %4719 = vmatpush2.bf16.xpose.msra.mxu0 0
    %4720 = vmatprep.subr.bf16.mxu0 0
    %4721 = vmatpush2.bf16.xpose.msra.mxu0 0
    %4722 = vmatprep.subr.bf16.mxu0 0
    %4723 = vmatpush2.bf16.xpose.msra.mxu0 0
    %4724 = vmatprep.subr.bf16.mxu0 0
    %4725 = vmatpush2.bf16.xpose.msra.mxu0 0
    %4726 = vmatprep.subr.bf16.mxu0 0
    %4727 = vmatpush2.bf16.xpose.msra.mxu0 0
    %4728 = vmatprep.subr.bf16.mxu0 0
    %4729 = vmatpush2.bf16.xpose.msra.mxu0 0
    %4730 = vmatprep.subr.bf16.mxu0 0
    %4731 = vmatpush2.bf16.xpose.msra.mxu0 0
    %4732 = vmatprep.subr.bf16.mxu0 0
    %4733 = vmatpush2.bf16.xpose.msra.mxu0 0
    %4734 = vmatprep.mubr.bf16.mxu0 0
    %4735 = vmatmul.mubr.bf16.gmra.mxu0 %v4697
    %v4736 = vpop.f32.mrf.mxu0
    %v4737 = vadd.f32 %v219, %v4736
    %v4738 = vpop.f32.mrf.mxu0
    %v4739 = vpop.f32.mrf.mxu0
    %v4740 = vadd.f32 %v220, %v4739
    %v4741 = vpop.f32.mrf.mxu0
    %4742 = vdwg.mxu0
    %v4743 = vsel %vm467, %v4737, -inf
    %4744 = vmax.xlane.f32.xlu0 %v4743
    %v4745 = vpop.xlane.xlu0 %4744
    %v4746 = vsel %vm467, %v4740, -inf
    %4747 = vmax.xlane.f32.xlu0 %v4746
    %v4748 = vpop.xlane.xlu0 %4747
    %v4749 = vsub.f32 %v4737, %v4745
    %v4750 = vsub.f32 %v4740, %v4748
    %v4751 = vmul.f32 %v4749, 1.442695
    %v4752 = vpow.pop %v4751
    %v4753 = vmul.f32 %v4750, 1.442695
    %v4754 = vpow.pop %v4753
    %v4755 = vsel %vm467, %v4752, 0.0
    %4756 = vadd.xlane.f32.xlu0 %v4755
    %v4757 = vpop.xlane.xlu0 %4756
    %v4758 = vsel %vm467, %v4754, 0.0
    %4759 = vadd.xlane.f32.xlu0 %v4758
    %v4760 = vpop.xlane.xlu0 %4759
    %v4761 = vrcp.pop %v4757
    %v4762 = vrcp.pop %v4760
    %v4763 = vmul.f32 %v4752, %v4761
    %v4764 = vmul.f32 %v4754, %v4762
    %v4765 = vpack.c.bf16 %v4764, %v4763
    %v4766 = vpack.c.bf16 %v4691, %v4688
    %v4768 = vsel %vm467, %v4765, 0
    %4770 = vmatprep.subr.bf16.mxu0 0
    %4771 = vmatpush1.bf16.msra.mxu0 0
    %4772 = vmatprep.subr.bf16.mxu0 0
    %4773 = vmatpush1.bf16.msra.mxu0 0
    %4774 = vmatprep.subr.bf16.mxu0 0
    %4775 = vmatpush1.bf16.msra.mxu0 0
    %4776 = vmatprep.subr.bf16.mxu0 0
    %4777 = vmatpush1.bf16.msra.mxu0 0
    %4778 = vmatprep.subr.bf16.mxu0 0
    %4779 = vmatpush1.bf16.msra.mxu0 0
    %4780 = vmatprep.subr.bf16.mxu0 0
    %4781 = vmatpush1.bf16.msra.mxu0 0
    %4782 = vmatprep.subr.bf16.mxu0 0
    %4783 = vmatpush1.bf16.msra.mxu0 0
    %4784 = vmatprep.subr.bf16.mxu0 0
    %4785 = vmatpush1.bf16.msra.mxu0 %v4766
    %4786 = vmatprep.subr.bf16.mxu0 0
    %4787 = vmatpush2.bf16.msra.mxu0 0
    %4788 = vmatprep.subr.bf16.mxu0 0
    %4789 = vmatpush2.bf16.msra.mxu0 0
    %4790 = vmatprep.subr.bf16.mxu0 0
    %4791 = vmatpush2.bf16.msra.mxu0 0
    %4792 = vmatprep.subr.bf16.mxu0 0
    %4793 = vmatpush2.bf16.msra.mxu0 0
    %4794 = vmatprep.subr.bf16.mxu0 0
    %4795 = vmatpush2.bf16.msra.mxu0 0
    %4796 = vmatprep.subr.bf16.mxu0 0
    %4797 = vmatpush2.bf16.msra.mxu0 0
    %4798 = vmatprep.subr.bf16.mxu0 0
    %4799 = vmatpush2.bf16.msra.mxu0 0
    %4800 = vmatprep.subr.bf16.mxu0 0
    %4801 = vmatpush2.bf16.msra.mxu0 0
    %4802 = vmatprep.mubr.bf16.mxu0 0
    %4803 = vmatmul.mubr.bf16.gmra.mxu0 %v4768
    %v4804 = vpop.f32.mrf.mxu0
    %v4805 = vadd.f32 0.0, %v4804
    %v4806 = vpop.f32.mrf.mxu0
    %v4807 = vpop.f32.mrf.mxu0
    %v4808 = vadd.f32 0.0, %v4807
    %v4809 = vpop.f32.mrf.mxu0
    %4810 = vdwg.mxu0
    %v4811 = vpack.c.bf16 %v4808, %v4805
    %s4812 = scalar_lea.vmem %s12, 40
    %v4813 = vld [vmem:[%s4812] sm:$0xf]
    %v4815 = vsel %vm419, %v4811, 0
    %v4818 = vsel %vm859, %v4813, 0
    %4820 = vmatprep.subr.bf16.mxu0 0
    %4821 = vmatpush1.bf16.msra.mxu0 0
    %4822 = vmatprep.subr.bf16.mxu0 0
    %4823 = vmatpush1.bf16.msra.mxu0 0
    %4824 = vmatprep.subr.bf16.mxu0 0
    %4825 = vmatpush1.bf16.msra.mxu0 0
    %4826 = vmatprep.subr.bf16.mxu0 0
    %4827 = vmatpush1.bf16.msra.mxu0 0
    %4828 = vmatprep.subr.bf16.mxu0 0
    %4829 = vmatpush1.bf16.msra.mxu0 0
    %4830 = vmatprep.subr.bf16.mxu0 0
    %4831 = vmatpush1.bf16.msra.mxu0 0
    %4832 = vmatprep.subr.bf16.mxu0 0
    %4833 = vmatpush1.bf16.msra.mxu0 0
    %4834 = vmatprep.subr.bf16.mxu0 0
    %4835 = vmatpush1.bf16.msra.mxu0 %v4818
    %4836 = vmatprep.subr.bf16.mxu0 0
    %4837 = vmatpush2.bf16.msra.mxu0 0
    %4838 = vmatprep.subr.bf16.mxu0 0
    %4839 = vmatpush2.bf16.msra.mxu0 0
    %4840 = vmatprep.subr.bf16.mxu0 0
    %4841 = vmatpush2.bf16.msra.mxu0 0
    %4842 = vmatprep.subr.bf16.mxu0 0
    %4843 = vmatpush2.bf16.msra.mxu0 0
    %4844 = vmatprep.subr.bf16.mxu0 0
    %4845 = vmatpush2.bf16.msra.mxu0 0
    %4846 = vmatprep.subr.bf16.mxu0 0
    %4847 = vmatpush2.bf16.msra.mxu0 0
    %4848 = vmatprep.subr.bf16.mxu0 0
    %4849 = vmatpush2.bf16.msra.mxu0 0
    %4850 = vmatprep.subr.bf16.mxu0 0
    %4851 = vmatpush2.bf16.msra.mxu0 0
    %4852 = vmatprep.mubr.bf16.mxu0 0
    %4853 = vmatmul.mubr.bf16.gmra.mxu0 %v4815
    %v4854 = vpop.f32.mrf.mxu0
    %v4855 = vadd.f32 0.0, %v4854
    %v4856 = vpop.f32.mrf.mxu0
    %v4857 = vpop.f32.mrf.mxu0
    %v4858 = vadd.f32 0.0, %v4857
    %v4859 = vpop.f32.mrf.mxu0
    %4860 = vdwg.mxu0
    %v4861 = vadd.f32 %v4490, %v4855
    %v4862 = vadd.f32 %v4493, %v4858
    %s4863 = scalar_lea.vmem %s6, 176
    %v4864 = vld [vmem:[%s4863] sm:$0xf]
    %v4865 = vld [vmem:[%s4863 + $0x4] sm:$0xf]
    %v4866 = vld [vmem:[%s4863 + $0x8] sm:$0xf]
    %v4867 = vld [vmem:[%s4863 + $0xc] sm:$0xf]
    %s4868 = scalar_lea.vmem %s9, 11
    %v4869 = vld [vmem:[%s4868] sm:$0x1]
    %v4871 = vlaneseq
    %v4872 = vshrl.u32 %v4871, 7
    %v4873 = vsub.s32 0, %v4872
    %v4874 = vrot.slane %v4869, %v4873
    %v4880 = vunpack.c.l.b16 %v4864
    %v4881 = vunpack.c.l.b16 %v4865
    %v4882 = vunpack.c.l.b16 %v4866
    %v4883 = vunpack.c.l.b16 %v4867
    %v4884 = vpack.c.b16 %v4881, %v4880
    %v4885 = vpack.c.b16 %v4883, %v4882
    %4888 = vmatprep.subr.bf16.mxu0 0
    %4889 = vmatpush1.bf16.msra.mxu0 0
    %4890 = vmatprep.subr.bf16.mxu0 0
    %4891 = vmatpush1.bf16.msra.mxu0 0
    %4892 = vmatprep.subr.bf16.mxu0 0
    %4893 = vmatpush1.bf16.msra.mxu0 0
    %4894 = vmatprep.subr.bf16.mxu0 0
    %4895 = vmatpush1.bf16.msra.mxu0 0
    %4896 = vmatprep.subr.bf16.mxu0 0
    %4897 = vmatpush1.bf16.msra.mxu0 0
    %4898 = vmatprep.subr.bf16.mxu0 0
    %4899 = vmatpush1.bf16.msra.mxu0 0
    %4900 = vmatprep.subr.bf16.mxu0 0
    %4901 = vmatpush1.bf16.msra.mxu0 %v4885
    %4902 = vmatprep.subr.bf16.mxu0 0
    %4903 = vmatpush1.bf16.msra.mxu0 %v4884
    %4904 = vmatprep.subr.bf16.mxu0 0
    %4905 = vmatpush2.bf16.msra.mxu0 0
    %4906 = vmatprep.subr.bf16.mxu0 0
    %4907 = vmatpush2.bf16.msra.mxu0 0
    %4908 = vmatprep.subr.bf16.mxu0 0
    %4909 = vmatpush2.bf16.msra.mxu0 0
    %4910 = vmatprep.subr.bf16.mxu0 0
    %4911 = vmatpush2.bf16.msra.mxu0 0
    %4912 = vmatprep.subr.bf16.mxu0 0
    %4913 = vmatpush2.bf16.msra.mxu0 0
    %4914 = vmatprep.subr.bf16.mxu0 0
    %4915 = vmatpush2.bf16.msra.mxu0 0
    %4916 = vmatprep.subr.bf16.mxu0 0
    %4917 = vmatpush2.bf16.msra.mxu0 0
    %4918 = vmatprep.subr.bf16.mxu0 0
    %4919 = vmatpush2.bf16.msra.mxu0 0
    %4920 = vmatprep.mubr.bf16.mxu0 0
    %4921 = vmatmul.mubr.bf16.gmra.mxu0 %v3789
    %v4922 = vpop.f32.mrf.mxu0
    %v4923 = vadd.f32 %v4874, %v4922
    %v4924 = vpop.f32.mrf.mxu0
    %v4925 = vpop.f32.mrf.mxu0
    %v4926 = vadd.f32 %v4874, %v4925
    %v4927 = vpop.f32.mrf.mxu0
    %4928 = vdwg.mxu0
    %s4929 = scalar_lea.vmem %s7, 176
    %v4930 = vld [vmem:[%s4929] sm:$0xf]
    %v4931 = vld [vmem:[%s4929 + $0x4] sm:$0xf]
    %v4932 = vld [vmem:[%s4929 + $0x8] sm:$0xf]
    %v4933 = vld [vmem:[%s4929 + $0xc] sm:$0xf]
    %s4934 = scalar_lea.vmem %s10, 11
    %v4935 = vld [vmem:[%s4934] sm:$0x1]
    %v4937 = vlaneseq
    %v4938 = vshrl.u32 %v4937, 7
    %v4939 = vsub.s32 0, %v4938
    %v4940 = vrot.slane %v4935, %v4939
    %v4946 = vunpack.c.l.b16 %v4930
    %v4947 = vunpack.c.l.b16 %v4931
    %v4948 = vunpack.c.l.b16 %v4932
    %v4949 = vunpack.c.l.b16 %v4933
    %v4950 = vpack.c.b16 %v4947, %v4946
    %v4951 = vpack.c.b16 %v4949, %v4948
    %4954 = vmatprep.subr.bf16.mxu0 0
    %4955 = vmatpush1.bf16.msra.mxu0 0
    %4956 = vmatprep.subr.bf16.mxu0 0
    %4957 = vmatpush1.bf16.msra.mxu0 0
    %4958 = vmatprep.subr.bf16.mxu0 0
    %4959 = vmatpush1.bf16.msra.mxu0 0
    %4960 = vmatprep.subr.bf16.mxu0 0
    %4961 = vmatpush1.bf16.msra.mxu0 0
    %4962 = vmatprep.subr.bf16.mxu0 0
    %4963 = vmatpush1.bf16.msra.mxu0 0
    %4964 = vmatprep.subr.bf16.mxu0 0
    %4965 = vmatpush1.bf16.msra.mxu0 0
    %4966 = vmatprep.subr.bf16.mxu0 0
    %4967 = vmatpush1.bf16.msra.mxu0 %v4951
    %4968 = vmatprep.subr.bf16.mxu0 0
    %4969 = vmatpush1.bf16.msra.mxu0 %v4950
    %4970 = vmatprep.subr.bf16.mxu0 0
    %4971 = vmatpush2.bf16.msra.mxu0 0
    %4972 = vmatprep.subr.bf16.mxu0 0
    %4973 = vmatpush2.bf16.msra.mxu0 0
    %4974 = vmatprep.subr.bf16.mxu0 0
    %4975 = vmatpush2.bf16.msra.mxu0 0
    %4976 = vmatprep.subr.bf16.mxu0 0
    %4977 = vmatpush2.bf16.msra.mxu0 0
    %4978 = vmatprep.subr.bf16.mxu0 0
    %4979 = vmatpush2.bf16.msra.mxu0 0
    %4980 = vmatprep.subr.bf16.mxu0 0
    %4981 = vmatpush2.bf16.msra.mxu0 0
    %4982 = vmatprep.subr.bf16.mxu0 0
    %4983 = vmatpush2.bf16.msra.mxu0 0
    %4984 = vmatprep.subr.bf16.mxu0 0
    %4985 = vmatpush2.bf16.msra.mxu0 0
    %4986 = vmatprep.mubr.bf16.mxu0 0
    %4987 = vmatmul.mubr.bf16.gmra.mxu0 %v3789
    %v4988 = vpop.f32.mrf.mxu0
    %v4989 = vadd.f32 %v4940, %v4988
    %v4990 = vpop.f32.mrf.mxu0
    %v4991 = vpop.f32.mrf.mxu0
    %v4992 = vadd.f32 %v4940, %v4991
    %v4993 = vpop.f32.mrf.mxu0
    %4994 = vdwg.mxu0
    %s4995 = scalar_lea.vmem %s8, 176
    %v4996 = vld [vmem:[%s4995] sm:$0xf]
    %v4997 = vld [vmem:[%s4995 + $0x4] sm:$0xf]
    %v4998 = vld [vmem:[%s4995 + $0x8] sm:$0xf]
    %v4999 = vld [vmem:[%s4995 + $0xc] sm:$0xf]
    %s5000 = scalar_lea.vmem %s11, 11
    %v5001 = vld [vmem:[%s5000] sm:$0x1]
    %v5003 = vlaneseq
    %v5004 = vshrl.u32 %v5003, 7
    %v5005 = vsub.s32 0, %v5004
    %v5006 = vrot.slane %v5001, %v5005
    %v5012 = vunpack.c.l.b16 %v4996
    %v5013 = vunpack.c.l.b16 %v4997
    %v5014 = vunpack.c.l.b16 %v4998
    %v5015 = vunpack.c.l.b16 %v4999
    %v5016 = vpack.c.b16 %v5013, %v5012
    %v5017 = vpack.c.b16 %v5015, %v5014
    %5020 = vmatprep.subr.bf16.mxu0 0
    %5021 = vmatpush1.bf16.msra.mxu0 0
    %5022 = vmatprep.subr.bf16.mxu0 0
    %5023 = vmatpush1.bf16.msra.mxu0 0
    %5024 = vmatprep.subr.bf16.mxu0 0
    %5025 = vmatpush1.bf16.msra.mxu0 0
    %5026 = vmatprep.subr.bf16.mxu0 0
    %5027 = vmatpush1.bf16.msra.mxu0 0
    %5028 = vmatprep.subr.bf16.mxu0 0
    %5029 = vmatpush1.bf16.msra.mxu0 0
    %5030 = vmatprep.subr.bf16.mxu0 0
    %5031 = vmatpush1.bf16.msra.mxu0 0
    %5032 = vmatprep.subr.bf16.mxu0 0
    %5033 = vmatpush1.bf16.msra.mxu0 %v5017
    %5034 = vmatprep.subr.bf16.mxu0 0
    %5035 = vmatpush1.bf16.msra.mxu0 %v5016
    %5036 = vmatprep.subr.bf16.mxu0 0
    %5037 = vmatpush2.bf16.msra.mxu0 0
    %5038 = vmatprep.subr.bf16.mxu0 0
    %5039 = vmatpush2.bf16.msra.mxu0 0
    %5040 = vmatprep.subr.bf16.mxu0 0
    %5041 = vmatpush2.bf16.msra.mxu0 0
    %5042 = vmatprep.subr.bf16.mxu0 0
    %5043 = vmatpush2.bf16.msra.mxu0 0
    %5044 = vmatprep.subr.bf16.mxu0 0
    %5045 = vmatpush2.bf16.msra.mxu0 0
    %5046 = vmatprep.subr.bf16.mxu0 0
    %5047 = vmatpush2.bf16.msra.mxu0 0
    %5048 = vmatprep.subr.bf16.mxu0 0
    %5049 = vmatpush2.bf16.msra.mxu0 0
    %5050 = vmatprep.subr.bf16.mxu0 0
    %5051 = vmatpush2.bf16.msra.mxu0 0
    %5052 = vmatprep.mubr.bf16.mxu0 0
    %5053 = vmatmul.mubr.bf16.gmra.mxu0 %v3789
    %v5054 = vpop.f32.mrf.mxu0
    %v5055 = vadd.f32 %v5006, %v5054
    %v5056 = vpop.f32.mrf.mxu0
    %v5057 = vpop.f32.mrf.mxu0
    %v5058 = vadd.f32 %v5006, %v5057
    %v5059 = vpop.f32.mrf.mxu0
    %5060 = vdwg.mxu0
    %v5061 = vpack.c.bf16 %v4926, %v4923
    %v5062 = vpack.c.bf16 %v4992, %v4989
    %v5064 = vsel %vm419, %v5061, 0
    %v5067 = vsel %vm419, %v5062, 0
    %5069 = vmatprep.subr.bf16.mxu0 0
    %5070 = vmatpush1.bf16.xpose.msra.mxu0 0
    %5071 = vmatprep.subr.bf16.mxu0 0
    %5072 = vmatpush1.bf16.xpose.msra.mxu0 0
    %5073 = vmatprep.subr.bf16.mxu0 0
    %5074 = vmatpush1.bf16.xpose.msra.mxu0 0
    %5075 = vmatprep.subr.bf16.mxu0 0
    %5076 = vmatpush1.bf16.xpose.msra.mxu0 0
    %5077 = vmatprep.subr.bf16.mxu0 0
    %5078 = vmatpush1.bf16.xpose.msra.mxu0 0
    %5079 = vmatprep.subr.bf16.mxu0 0
    %5080 = vmatpush1.bf16.xpose.msra.mxu0 0
    %5081 = vmatprep.subr.bf16.mxu0 0
    %5082 = vmatpush1.bf16.xpose.msra.mxu0 0
    %5083 = vmatprep.subr.bf16.mxu0 0
    %5084 = vmatpush1.bf16.xpose.msra.mxu0 %v5067
    %5085 = vmatprep.subr.bf16.mxu0 0
    %5086 = vmatpush2.bf16.xpose.msra.mxu0 0
    %5087 = vmatprep.subr.bf16.mxu0 0
    %5088 = vmatpush2.bf16.xpose.msra.mxu0 0
    %5089 = vmatprep.subr.bf16.mxu0 0
    %5090 = vmatpush2.bf16.xpose.msra.mxu0 0
    %5091 = vmatprep.subr.bf16.mxu0 0
    %5092 = vmatpush2.bf16.xpose.msra.mxu0 0
    %5093 = vmatprep.subr.bf16.mxu0 0
    %5094 = vmatpush2.bf16.xpose.msra.mxu0 0
    %5095 = vmatprep.subr.bf16.mxu0 0
    %5096 = vmatpush2.bf16.xpose.msra.mxu0 0
    %5097 = vmatprep.subr.bf16.mxu0 0
    %5098 = vmatpush2.bf16.xpose.msra.mxu0 0
    %5099 = vmatprep.subr.bf16.mxu0 0
    %5100 = vmatpush2.bf16.xpose.msra.mxu0 0
    %5101 = vmatprep.mubr.bf16.mxu0 0
    %5102 = vmatmul.mubr.bf16.gmra.mxu0 %v5064
    %v5103 = vpop.f32.mrf.mxu0
    %v5104 = vadd.f32 %v219, %v5103
    %v5105 = vpop.f32.mrf.mxu0
    %v5106 = vpop.f32.mrf.mxu0
    %v5107 = vadd.f32 %v220, %v5106
    %v5108 = vpop.f32.mrf.mxu0
    %5109 = vdwg.mxu0
    %v5110 = vsel %vm467, %v5104, -inf
    %5111 = vmax.xlane.f32.xlu0 %v5110
    %v5112 = vpop.xlane.xlu0 %5111
    %v5113 = vsel %vm467, %v5107, -inf
    %5114 = vmax.xlane.f32.xlu0 %v5113
    %v5115 = vpop.xlane.xlu0 %5114
    %v5116 = vsub.f32 %v5104, %v5112
    %v5117 = vsub.f32 %v5107, %v5115
    %v5118 = vmul.f32 %v5116, 1.442695
    %v5119 = vpow.pop %v5118
    %v5120 = vmul.f32 %v5117, 1.442695
    %v5121 = vpow.pop %v5120
    %v5122 = vsel %vm467, %v5119, 0.0
    %5123 = vadd.xlane.f32.xlu0 %v5122
    %v5124 = vpop.xlane.xlu0 %5123
    %v5125 = vsel %vm467, %v5121, 0.0
    %5126 = vadd.xlane.f32.xlu0 %v5125
    %v5127 = vpop.xlane.xlu0 %5126
    %v5128 = vrcp.pop %v5124
    %v5129 = vrcp.pop %v5127
    %v5130 = vmul.f32 %v5119, %v5128
    %v5131 = vmul.f32 %v5121, %v5129
    %v5132 = vpack.c.bf16 %v5131, %v5130
    %v5133 = vpack.c.bf16 %v5058, %v5055
    %v5135 = vsel %vm467, %v5132, 0
    %5137 = vmatprep.subr.bf16.mxu0 0
    %5138 = vmatpush1.bf16.msra.mxu0 0
    %5139 = vmatprep.subr.bf16.mxu0 0
    %5140 = vmatpush1.bf16.msra.mxu0 0
    %5141 = vmatprep.subr.bf16.mxu0 0
    %5142 = vmatpush1.bf16.msra.mxu0 0
    %5143 = vmatprep.subr.bf16.mxu0 0
    %5144 = vmatpush1.bf16.msra.mxu0 0
    %5145 = vmatprep.subr.bf16.mxu0 0
    %5146 = vmatpush1.bf16.msra.mxu0 0
    %5147 = vmatprep.subr.bf16.mxu0 0
    %5148 = vmatpush1.bf16.msra.mxu0 0
    %5149 = vmatprep.subr.bf16.mxu0 0
    %5150 = vmatpush1.bf16.msra.mxu0 0
    %5151 = vmatprep.subr.bf16.mxu0 0
    %5152 = vmatpush1.bf16.msra.mxu0 %v5133
    %5153 = vmatprep.subr.bf16.mxu0 0
    %5154 = vmatpush2.bf16.msra.mxu0 0
    %5155 = vmatprep.subr.bf16.mxu0 0
    %5156 = vmatpush2.bf16.msra.mxu0 0
    %5157 = vmatprep.subr.bf16.mxu0 0
    %5158 = vmatpush2.bf16.msra.mxu0 0
    %5159 = vmatprep.subr.bf16.mxu0 0
    %5160 = vmatpush2.bf16.msra.mxu0 0
    %5161 = vmatprep.subr.bf16.mxu0 0
    %5162 = vmatpush2.bf16.msra.mxu0 0
    %5163 = vmatprep.subr.bf16.mxu0 0
    %5164 = vmatpush2.bf16.msra.mxu0 0
    %5165 = vmatprep.subr.bf16.mxu0 0
    %5166 = vmatpush2.bf16.msra.mxu0 0
    %5167 = vmatprep.subr.bf16.mxu0 0
    %5168 = vmatpush2.bf16.msra.mxu0 0
    %5169 = vmatprep.mubr.bf16.mxu0 0
    %5170 = vmatmul.mubr.bf16.gmra.mxu0 %v5135
    %v5171 = vpop.f32.mrf.mxu0
    %v5172 = vadd.f32 0.0, %v5171
    %v5173 = vpop.f32.mrf.mxu0
    %v5174 = vpop.f32.mrf.mxu0
    %v5175 = vadd.f32 0.0, %v5174
    %v5176 = vpop.f32.mrf.mxu0
    %5177 = vdwg.mxu0
    %v5178 = vpack.c.bf16 %v5175, %v5172
    %s5179 = scalar_lea.vmem %s12, 44
    %v5180 = vld [vmem:[%s5179] sm:$0xf]
    %v5182 = vsel %vm419, %v5178, 0
    %v5185 = vsel %vm859, %v5180, 0
    %5187 = vmatprep.subr.bf16.mxu0 0
    %5188 = vmatpush1.bf16.msra.mxu0 0
    %5189 = vmatprep.subr.bf16.mxu0 0
    %5190 = vmatpush1.bf16.msra.mxu0 0
    %5191 = vmatprep.subr.bf16.mxu0 0
    %5192 = vmatpush1.bf16.msra.mxu0 0
    %5193 = vmatprep.subr.bf16.mxu0 0
    %5194 = vmatpush1.bf16.msra.mxu0 0
    %5195 = vmatprep.subr.bf16.mxu0 0
    %5196 = vmatpush1.bf16.msra.mxu0 0
    %5197 = vmatprep.subr.bf16.mxu0 0
    %5198 = vmatpush1.bf16.msra.mxu0 0
    %5199 = vmatprep.subr.bf16.mxu0 0
    %5200 = vmatpush1.bf16.msra.mxu0 0
    %5201 = vmatprep.subr.bf16.mxu0 0
    %5202 = vmatpush1.bf16.msra.mxu0 %v5185
    %5203 = vmatprep.subr.bf16.mxu0 0
    %5204 = vmatpush2.bf16.msra.mxu0 0
    %5205 = vmatprep.subr.bf16.mxu0 0
    %5206 = vmatpush2.bf16.msra.mxu0 0
    %5207 = vmatprep.subr.bf16.mxu0 0
    %5208 = vmatpush2.bf16.msra.mxu0 0
    %5209 = vmatprep.subr.bf16.mxu0 0
    %5210 = vmatpush2.bf16.msra.mxu0 0
    %5211 = vmatprep.subr.bf16.mxu0 0
    %5212 = vmatpush2.bf16.msra.mxu0 0
    %5213 = vmatprep.subr.bf16.mxu0 0
    %5214 = vmatpush2.bf16.msra.mxu0 0
    %5215 = vmatprep.subr.bf16.mxu0 0
    %5216 = vmatpush2.bf16.msra.mxu0 0
    %5217 = vmatprep.subr.bf16.mxu0 0
    %5218 = vmatpush2.bf16.msra.mxu0 0
    %5219 = vmatprep.mubr.bf16.mxu0 0
    %5220 = vmatmul.mubr.bf16.gmra.mxu0 %v5182
    %v5221 = vpop.f32.mrf.mxu0
    %v5222 = vadd.f32 0.0, %v5221
    %v5223 = vpop.f32.mrf.mxu0
    %v5224 = vpop.f32.mrf.mxu0
    %v5225 = vadd.f32 0.0, %v5224
    %v5226 = vpop.f32.mrf.mxu0
    %5227 = vdwg.mxu0
    %v5228 = vadd.f32 %v4861, %v5222
    %v5229 = vadd.f32 %v4862, %v5225
    %s5230 = scalar_lea.vmem %s13, 2
    %v5231 = vld [vmem:[%s5230] sm:$0x1]
    %v5233 = vlaneseq
    %v5234 = vshrl.u32 %v5233, 7
    %v5235 = vsub.s32 0, %v5234
    %v5236 = vrot.slane %v5231, %v5235
    %v5238 = vadd.f32 %v5228, %v5236
    %v5239 = vadd.f32 %v5229, %v5236
    %v5240 = vadd.f32 %v3760, %v5238
    %v5241 = vadd.f32 %v3761, %v5239
    %s5242 = scalar_lea.vmem %s14, 2
    %v5243 = vld [vmem:[%s5242] sm:$0x1]
    %s5244 = scalar_lea.vmem %s15, 2
    %v5245 = vld [vmem:[%s5244] sm:$0x1]
    %v5246 = vsel %vm175, %v5240, 0.0
    %5247 = vadd.xlane.f32.xlu0 %v5246
    %v5248 = vpop.xlane.xlu0 %5247
    %v5249 = vsel %vm175, %v5241, 0.0
    %5250 = vadd.xlane.f32.xlu0 %v5249
    %v5251 = vpop.xlane.xlu0 %5250
    %v5252 = vmul.f32 %v5248, %v182
    %v5253 = vmul.f32 %v5251, %v182
    %v5254 = vsub.f32 %v5240, %v5252
    %v5255 = vsub.f32 %v5241, %v5253
    %v5256 = vmul.f32 %v5254, %v5254
    %v5257 = vmul.f32 %v5255, %v5255
    %v5258 = vsel %vm175, %v5256, 0.0
    %5259 = vadd.xlane.f32.xlu0 %v5258
    %v5260 = vpop.xlane.xlu0 %5259
    %v5261 = vsel %vm175, %v5257, 0.0
    %5262 = vadd.xlane.f32.xlu0 %v5261
    %v5263 = vpop.xlane.xlu0 %5262
    %v5264 = vmul.f32 %v5260, %v182
    %v5265 = vmul.f32 %v5263, %v182
    %v5266 = vadd.f32 %v5264, 1e-05
    %v5267 = vadd.f32 %v5265, 1e-05
    %v5268 = vrsqrt.pop %v5266
    %v5269 = vrsqrt.pop %v5267
    %v5270 = vmul.f32 %v5254, %v5268
    %v5271 = vmul.f32 %v5255, %v5269
    %v5273 = vlaneseq
    %v5274 = vshrl.u32 %v5273, 7
    %v5275 = vsub.s32 0, %v5274
    %v5276 = vrot.slane %v5243, %v5275
    %v5278 = vmul.f32 %v5270, %v5276
    %v5279 = vmul.f32 %v5271, %v5276
    %v5281 = vlaneseq
    %v5282 = vshrl.u32 %v5281, 7
    %v5283 = vsub.s32 0, %v5282
    %v5284 = vrot.slane %v5245, %v5283
    %v5286 = vadd.f32 %v5278, %v5284
    %v5287 = vadd.f32 %v5279, %v5284
    %v5288 = vpack.c.bf16 %v5287, %v5286
    %s5289 = scalar_lea.vmem %s16, 32
    %v5290 = vld [vmem:[%s5289] sm:$0xf]
    %v5291 = vld [vmem:[%s5289 + $0x4] sm:$0xf]
    %v5292 = vld [vmem:[%s5289 + $0x8] sm:$0xf]
    %v5293 = vld [vmem:[%s5289 + $0xc] sm:$0xf]
    %s5294 = scalar_lea.vmem %s17, 2
    %v5295 = vld [vmem:[%s5294] sm:$0x1]
    %v5297 = vlaneseq
    %v5298 = vshrl.u32 %v5297, 7
    %v5299 = vsub.s32 0, %v5298
    %v5300 = vrot.slane %v5295, %v5299
    %v5306 = vunpack.c.l.b16 %v5290
    %v5307 = vunpack.c.l.b16 %v5291
    %v5308 = vunpack.c.l.b16 %v5292
    %v5309 = vunpack.c.l.b16 %v5293
    %v5310 = vpack.c.b16 %v5307, %v5306
    %v5311 = vpack.c.b16 %v5309, %v5308
    %v5315 = vsel %vm175, %v5288, 0
    %5317 = vmatprep.subr.bf16.mxu0 0
    %5318 = vmatpush1.bf16.msra.mxu0 0
    %5319 = vmatprep.subr.bf16.mxu0 0
    %5320 = vmatpush1.bf16.msra.mxu0 0
    %5321 = vmatprep.subr.bf16.mxu0 0
    %5322 = vmatpush1.bf16.msra.mxu0 0
    %5323 = vmatprep.subr.bf16.mxu0 0
    %5324 = vmatpush1.bf16.msra.mxu0 0
    %5325 = vmatprep.subr.bf16.mxu0 0
    %5326 = vmatpush1.bf16.msra.mxu0 0
    %5327 = vmatprep.subr.bf16.mxu0 0
    %5328 = vmatpush1.bf16.msra.mxu0 0
    %5329 = vmatprep.subr.bf16.mxu0 0
    %5330 = vmatpush1.bf16.msra.mxu0 %v5311
    %5331 = vmatprep.subr.bf16.mxu0 0
    %5332 = vmatpush1.bf16.msra.mxu0 %v5310
    %5333 = vmatprep.subr.bf16.mxu0 0
    %5334 = vmatpush2.bf16.msra.mxu0 0
    %5335 = vmatprep.subr.bf16.mxu0 0
    %5336 = vmatpush2.bf16.msra.mxu0 0
    %5337 = vmatprep.subr.bf16.mxu0 0
    %5338 = vmatpush2.bf16.msra.mxu0 0
    %5339 = vmatprep.subr.bf16.mxu0 0
    %5340 = vmatpush2.bf16.msra.mxu0 0
    %5341 = vmatprep.subr.bf16.mxu0 0
    %5342 = vmatpush2.bf16.msra.mxu0 0
    %5343 = vmatprep.subr.bf16.mxu0 0
    %5344 = vmatpush2.bf16.msra.mxu0 0
    %5345 = vmatprep.subr.bf16.mxu0 0
    %5346 = vmatpush2.bf16.msra.mxu0 0
    %5347 = vmatprep.subr.bf16.mxu0 0
    %5348 = vmatpush2.bf16.msra.mxu0 0
    %5349 = vmatprep.mubr.bf16.mxu0 0
    %5350 = vmatmul.mubr.bf16.gmra.mxu0 %v5315
    %v5351 = vpop.f32.mrf.mxu0
    %v5352 = vadd.f32 %v5300, %v5351
    %v5353 = vpop.f32.mrf.mxu0
    %v5354 = vpop.f32.mrf.mxu0
    %v5355 = vadd.f32 %v5300, %v5354
    %v5356 = vpop.f32.mrf.mxu0
    %5357 = vdwg.mxu0
    %v5358 = vmax.f32 %v5352, 0.0
    %v5359 = vmax.f32 %v5355, 0.0
    %v5360 = vpack.c.bf16 %v5359, %v5358
    %s5361 = scalar_lea.vmem %s18, 128
    %v5362 = vld [vmem:[%s5361] sm:$0xf]
    %v5363 = vld [vmem:[%s5361 + $0x4] sm:$0xf]
    %v5364 = vld [vmem:[%s5361 + $0x8] sm:$0xf]
    %v5365 = vld [vmem:[%s5361 + $0xc] sm:$0xf]
    %v5366 = vld [vmem:[%s5361 + $0x10] sm:$0xf]
    %v5367 = vld [vmem:[%s5361 + $0x14] sm:$0xf]
    %v5368 = vld [vmem:[%s5361 + $0x18] sm:$0xf]
    %v5369 = vld [vmem:[%s5361 + $0x1c] sm:$0xf]
    %v5370 = vld [vmem:[%s5361 + $0x20] sm:$0xf]
    %v5371 = vld [vmem:[%s5361 + $0x24] sm:$0xf]
    %v5372 = vld [vmem:[%s5361 + $0x28] sm:$0xf]
    %v5373 = vld [vmem:[%s5361 + $0x2c] sm:$0xf]
    %v5374 = vld [vmem:[%s5361 + $0x30] sm:$0xf]
    %v5375 = vld [vmem:[%s5361 + $0x34] sm:$0xf]
    %v5376 = vld [vmem:[%s5361 + $0x38] sm:$0xf]
    %v5377 = vld [vmem:[%s5361 + $0x3c] sm:$0xf]
    %s5378 = scalar_lea.vmem %s19, 2
    %v5379 = vld [vmem:[%s5378] sm:$0x1]
    %v5381 = vlaneseq
    %v5382 = vshrl.u32 %v5381, 7
    %v5383 = vsub.s32 0, %v5382
    %v5384 = vrot.slane %v5379, %v5383
    %v5402 = vunpack.c.l.b16 %v5362
    %v5403 = vunpack.c.l.b16 %v5363
    %v5404 = vunpack.c.l.b16 %v5364
    %v5405 = vunpack.c.l.b16 %v5365
    %v5406 = vunpack.c.l.b16 %v5366
    %v5407 = vunpack.c.l.b16 %v5367
    %v5408 = vunpack.c.l.b16 %v5368
    %v5409 = vunpack.c.l.b16 %v5369
    %v5410 = vunpack.c.l.b16 %v5370
    %v5411 = vunpack.c.l.b16 %v5371
    %v5412 = vunpack.c.l.b16 %v5372
    %v5413 = vunpack.c.l.b16 %v5373
    %v5414 = vunpack.c.l.b16 %v5374
    %v5415 = vunpack.c.l.b16 %v5375
    %v5416 = vunpack.c.l.b16 %v5376
    %v5417 = vunpack.c.l.b16 %v5377
    %v5418 = vpack.c.b16 %v5403, %v5402
    %v5419 = vpack.c.b16 %v5405, %v5404
    %v5420 = vpack.c.b16 %v5407, %v5406
    %v5421 = vpack.c.b16 %v5409, %v5408
    %v5422 = vpack.c.b16 %v5411, %v5410
    %v5423 = vpack.c.b16 %v5413, %v5412
    %v5424 = vpack.c.b16 %v5415, %v5414
    %v5425 = vpack.c.b16 %v5417, %v5416
    %5434 = vmatprep.subr.bf16.mxu0 0
    %5435 = vmatpush1.bf16.msra.mxu0 %v5425
    %5436 = vmatprep.subr.bf16.mxu0 0
    %5437 = vmatpush1.bf16.msra.mxu0 %v5424
    %5438 = vmatprep.subr.bf16.mxu0 0
    %5439 = vmatpush1.bf16.msra.mxu0 %v5423
    %5440 = vmatprep.subr.bf16.mxu0 0
    %5441 = vmatpush1.bf16.msra.mxu0 %v5422
    %5442 = vmatprep.subr.bf16.mxu0 0
    %5443 = vmatpush1.bf16.msra.mxu0 %v5421
    %5444 = vmatprep.subr.bf16.mxu0 0
    %5445 = vmatpush1.bf16.msra.mxu0 %v5420
    %5446 = vmatprep.subr.bf16.mxu0 0
    %5447 = vmatpush1.bf16.msra.mxu0 %v5419
    %5448 = vmatprep.subr.bf16.mxu0 0
    %5449 = vmatpush1.bf16.msra.mxu0 %v5418
    %5450 = vmatprep.subr.bf16.mxu0 0
    %5451 = vmatpush2.bf16.msra.mxu0 0
    %5452 = vmatprep.subr.bf16.mxu0 0
    %5453 = vmatpush2.bf16.msra.mxu0 0
    %5454 = vmatprep.subr.bf16.mxu0 0
    %5455 = vmatpush2.bf16.msra.mxu0 0
    %5456 = vmatprep.subr.bf16.mxu0 0
    %5457 = vmatpush2.bf16.msra.mxu0 0
    %5458 = vmatprep.subr.bf16.mxu0 0
    %5459 = vmatpush2.bf16.msra.mxu0 0
    %5460 = vmatprep.subr.bf16.mxu0 0
    %5461 = vmatpush2.bf16.msra.mxu0 0
    %5462 = vmatprep.subr.bf16.mxu0 0
    %5463 = vmatpush2.bf16.msra.mxu0 0
    %5464 = vmatprep.subr.bf16.mxu0 0
    %5465 = vmatpush2.bf16.msra.mxu0 0
    %5466 = vmatprep.mubr.bf16.mxu0 0
    %5467 = vmatmul.mubr.bf16.gmra.mxu0 %v5360
    %v5468 = vpop.f32.mrf.mxu0
    %v5469 = vadd.f32 %v5384, %v5468
    %v5470 = vpop.f32.mrf.mxu0
    %v5471 = vpop.f32.mrf.mxu0
    %v5472 = vadd.f32 %v5384, %v5471
    %v5473 = vpop.f32.mrf.mxu0
    %5474 = vdwg.mxu0
    %v5475 = vadd.f32 %v5286, %v5469
    %v5476 = vadd.f32 %v5287, %v5472
    %s5477 = scalar_lea.vmem %s20, 2
    %v5478 = vld [vmem:[%s5477] sm:$0x1]
    %s5479 = scalar_lea.vmem %s21, 2
    %v5480 = vld [vmem:[%s5479] sm:$0x1]
    %v5481 = vsel %vm175, %v5475, 0.0
    %5482 = vadd.xlane.f32.xlu0 %v5481
    %v5483 = vpop.xlane.xlu0 %5482
    %v5484 = vsel %vm175, %v5476, 0.0
    %5485 = vadd.xlane.f32.xlu0 %v5484
    %v5486 = vpop.xlane.xlu0 %5485
    %v5487 = vmul.f32 %v5483, %v182
    %v5488 = vmul.f32 %v5486, %v182
    %v5489 = vsub.f32 %v5475, %v5487
    %v5490 = vsub.f32 %v5476, %v5488
    %v5491 = vmul.f32 %v5489, %v5489
    %v5492 = vmul.f32 %v5490, %v5490
    %v5493 = vsel %vm175, %v5491, 0.0
    %5494 = vadd.xlane.f32.xlu0 %v5493
    %v5495 = vpop.xlane.xlu0 %5494
    %v5496 = vsel %vm175, %v5492, 0.0
    %5497 = vadd.xlane.f32.xlu0 %v5496
    %v5498 = vpop.xlane.xlu0 %5497
    %v5499 = vmul.f32 %v5495, %v182
    %v5500 = vmul.f32 %v5498, %v182
    %v5501 = vadd.f32 %v5499, 1e-05
    %v5502 = vadd.f32 %v5500, 1e-05
    %v5503 = vrsqrt.pop %v5501
    %v5504 = vrsqrt.pop %v5502
    %v5505 = vmul.f32 %v5489, %v5503
    %v5506 = vmul.f32 %v5490, %v5504
    %v5508 = vlaneseq
    %v5509 = vshrl.u32 %v5508, 7
    %v5510 = vsub.s32 0, %v5509
    %v5511 = vrot.slane %v5478, %v5510
    %v5513 = vmul.f32 %v5505, %v5511
    %v5514 = vmul.f32 %v5506, %v5511
    %v5516 = vlaneseq
    %v5517 = vshrl.u32 %v5516, 7
    %v5518 = vsub.s32 0, %v5517
    %v5519 = vrot.slane %v5480, %v5518
    %v5521 = vadd.f32 %v5513, %v5519
    %v5522 = vadd.f32 %v5514, %v5519
    %v5523 = vpack.c.bf16 %v5522, %v5521
    %s5524 = scalar_lea.vmem %s6, 192
    %v5525 = vld [vmem:[%s5524] sm:$0xf]
    %v5526 = vld [vmem:[%s5524 + $0x4] sm:$0xf]
    %v5527 = vld [vmem:[%s5524 + $0x8] sm:$0xf]
    %v5528 = vld [vmem:[%s5524 + $0xc] sm:$0xf]
    %s5529 = scalar_lea.vmem %s9, 12
    %v5530 = vld [vmem:[%s5529] sm:$0x1]
    %v5532 = vlaneseq
    %v5533 = vshrl.u32 %v5532, 7
    %v5534 = vsub.s32 0, %v5533
    %v5535 = vrot.slane %v5530, %v5534
    %v5541 = vunpack.c.l.b16 %v5525
    %v5542 = vunpack.c.l.b16 %v5526
    %v5543 = vunpack.c.l.b16 %v5527
    %v5544 = vunpack.c.l.b16 %v5528
    %v5545 = vpack.c.b16 %v5542, %v5541
    %v5546 = vpack.c.b16 %v5544, %v5543
    %v5550 = vsel %vm175, %v5523, 0
    %5552 = vmatprep.subr.bf16.mxu0 0
    %5553 = vmatpush1.bf16.msra.mxu0 0
    %5554 = vmatprep.subr.bf16.mxu0 0
    %5555 = vmatpush1.bf16.msra.mxu0 0
    %5556 = vmatprep.subr.bf16.mxu0 0
    %5557 = vmatpush1.bf16.msra.mxu0 0
    %5558 = vmatprep.subr.bf16.mxu0 0
    %5559 = vmatpush1.bf16.msra.mxu0 0
    %5560 = vmatprep.subr.bf16.mxu0 0
    %5561 = vmatpush1.bf16.msra.mxu0 0
    %5562 = vmatprep.subr.bf16.mxu0 0
    %5563 = vmatpush1.bf16.msra.mxu0 0
    %5564 = vmatprep.subr.bf16.mxu0 0
    %5565 = vmatpush1.bf16.msra.mxu0 %v5546
    %5566 = vmatprep.subr.bf16.mxu0 0
    %5567 = vmatpush1.bf16.msra.mxu0 %v5545
    %5568 = vmatprep.subr.bf16.mxu0 0
    %5569 = vmatpush2.bf16.msra.mxu0 0
    %5570 = vmatprep.subr.bf16.mxu0 0
    %5571 = vmatpush2.bf16.msra.mxu0 0
    %5572 = vmatprep.subr.bf16.mxu0 0
    %5573 = vmatpush2.bf16.msra.mxu0 0
    %5574 = vmatprep.subr.bf16.mxu0 0
    %5575 = vmatpush2.bf16.msra.mxu0 0
    %5576 = vmatprep.subr.bf16.mxu0 0
    %5577 = vmatpush2.bf16.msra.mxu0 0
    %5578 = vmatprep.subr.bf16.mxu0 0
    %5579 = vmatpush2.bf16.msra.mxu0 0
    %5580 = vmatprep.subr.bf16.mxu0 0
    %5581 = vmatpush2.bf16.msra.mxu0 0
    %5582 = vmatprep.subr.bf16.mxu0 0
    %5583 = vmatpush2.bf16.msra.mxu0 0
    %5584 = vmatprep.mubr.bf16.mxu0 0
    %5585 = vmatmul.mubr.bf16.gmra.mxu0 %v5550
    %v5586 = vpop.f32.mrf.mxu0
    %v5587 = vadd.f32 %v5535, %v5586
    %v5588 = vpop.f32.mrf.mxu0
    %v5589 = vpop.f32.mrf.mxu0
    %v5590 = vadd.f32 %v5535, %v5589
    %v5591 = vpop.f32.mrf.mxu0
    %5592 = vdwg.mxu0
    %s5593 = scalar_lea.vmem %s7, 192
    %v5594 = vld [vmem:[%s5593] sm:$0xf]
    %v5595 = vld [vmem:[%s5593 + $0x4] sm:$0xf]
    %v5596 = vld [vmem:[%s5593 + $0x8] sm:$0xf]
    %v5597 = vld [vmem:[%s5593 + $0xc] sm:$0xf]
    %s5598 = scalar_lea.vmem %s10, 12
    %v5599 = vld [vmem:[%s5598] sm:$0x1]
    %v5601 = vlaneseq
    %v5602 = vshrl.u32 %v5601, 7
    %v5603 = vsub.s32 0, %v5602
    %v5604 = vrot.slane %v5599, %v5603
    %v5610 = vunpack.c.l.b16 %v5594
    %v5611 = vunpack.c.l.b16 %v5595
    %v5612 = vunpack.c.l.b16 %v5596
    %v5613 = vunpack.c.l.b16 %v5597
    %v5614 = vpack.c.b16 %v5611, %v5610
    %v5615 = vpack.c.b16 %v5613, %v5612
    %5618 = vmatprep.subr.bf16.mxu0 0
    %5619 = vmatpush1.bf16.msra.mxu0 0
    %5620 = vmatprep.subr.bf16.mxu0 0
    %5621 = vmatpush1.bf16.msra.mxu0 0
    %5622 = vmatprep.subr.bf16.mxu0 0
    %5623 = vmatpush1.bf16.msra.mxu0 0
    %5624 = vmatprep.subr.bf16.mxu0 0
    %5625 = vmatpush1.bf16.msra.mxu0 0
    %5626 = vmatprep.subr.bf16.mxu0 0
    %5627 = vmatpush1.bf16.msra.mxu0 0
    %5628 = vmatprep.subr.bf16.mxu0 0
    %5629 = vmatpush1.bf16.msra.mxu0 0
    %5630 = vmatprep.subr.bf16.mxu0 0
    %5631 = vmatpush1.bf16.msra.mxu0 %v5615
    %5632 = vmatprep.subr.bf16.mxu0 0
    %5633 = vmatpush1.bf16.msra.mxu0 %v5614
    %5634 = vmatprep.subr.bf16.mxu0 0
    %5635 = vmatpush2.bf16.msra.mxu0 0
    %5636 = vmatprep.subr.bf16.mxu0 0
    %5637 = vmatpush2.bf16.msra.mxu0 0
    %5638 = vmatprep.subr.bf16.mxu0 0
    %5639 = vmatpush2.bf16.msra.mxu0 0
    %5640 = vmatprep.subr.bf16.mxu0 0
    %5641 = vmatpush2.bf16.msra.mxu0 0
    %5642 = vmatprep.subr.bf16.mxu0 0
    %5643 = vmatpush2.bf16.msra.mxu0 0
    %5644 = vmatprep.subr.bf16.mxu0 0
    %5645 = vmatpush2.bf16.msra.mxu0 0
    %5646 = vmatprep.subr.bf16.mxu0 0
    %5647 = vmatpush2.bf16.msra.mxu0 0
    %5648 = vmatprep.subr.bf16.mxu0 0
    %5649 = vmatpush2.bf16.msra.mxu0 0
    %5650 = vmatprep.mubr.bf16.mxu0 0
    %5651 = vmatmul.mubr.bf16.gmra.mxu0 %v5550
    %v5652 = vpop.f32.mrf.mxu0
    %v5653 = vadd.f32 %v5604, %v5652
    %v5654 = vpop.f32.mrf.mxu0
    %v5655 = vpop.f32.mrf.mxu0
    %v5656 = vadd.f32 %v5604, %v5655
    %v5657 = vpop.f32.mrf.mxu0
    %5658 = vdwg.mxu0
    %s5659 = scalar_lea.vmem %s8, 192
    %v5660 = vld [vmem:[%s5659] sm:$0xf]
    %v5661 = vld [vmem:[%s5659 + $0x4] sm:$0xf]
    %v5662 = vld [vmem:[%s5659 + $0x8] sm:$0xf]
    %v5663 = vld [vmem:[%s5659 + $0xc] sm:$0xf]
    %s5664 = scalar_lea.vmem %s11, 12
    %v5665 = vld [vmem:[%s5664] sm:$0x1]
    %v5667 = vlaneseq
    %v5668 = vshrl.u32 %v5667, 7
    %v5669 = vsub.s32 0, %v5668
    %v5670 = vrot.slane %v5665, %v5669
    %v5676 = vunpack.c.l.b16 %v5660
    %v5677 = vunpack.c.l.b16 %v5661
    %v5678 = vunpack.c.l.b16 %v5662
    %v5679 = vunpack.c.l.b16 %v5663
    %v5680 = vpack.c.b16 %v5677, %v5676
    %v5681 = vpack.c.b16 %v5679, %v5678
    %5684 = vmatprep.subr.bf16.mxu0 0
    %5685 = vmatpush1.bf16.msra.mxu0 0
    %5686 = vmatprep.subr.bf16.mxu0 0
    %5687 = vmatpush1.bf16.msra.mxu0 0
    %5688 = vmatprep.subr.bf16.mxu0 0
    %5689 = vmatpush1.bf16.msra.mxu0 0
    %5690 = vmatprep.subr.bf16.mxu0 0
    %5691 = vmatpush1.bf16.msra.mxu0 0
    %5692 = vmatprep.subr.bf16.mxu0 0
    %5693 = vmatpush1.bf16.msra.mxu0 0
    %5694 = vmatprep.subr.bf16.mxu0 0
    %5695 = vmatpush1.bf16.msra.mxu0 0
    %5696 = vmatprep.subr.bf16.mxu0 0
    %5697 = vmatpush1.bf16.msra.mxu0 %v5681
    %5698 = vmatprep.subr.bf16.mxu0 0
    %5699 = vmatpush1.bf16.msra.mxu0 %v5680
    %5700 = vmatprep.subr.bf16.mxu0 0
    %5701 = vmatpush2.bf16.msra.mxu0 0
    %5702 = vmatprep.subr.bf16.mxu0 0
    %5703 = vmatpush2.bf16.msra.mxu0 0
    %5704 = vmatprep.subr.bf16.mxu0 0
    %5705 = vmatpush2.bf16.msra.mxu0 0
    %5706 = vmatprep.subr.bf16.mxu0 0
    %5707 = vmatpush2.bf16.msra.mxu0 0
    %5708 = vmatprep.subr.bf16.mxu0 0
    %5709 = vmatpush2.bf16.msra.mxu0 0
    %5710 = vmatprep.subr.bf16.mxu0 0
    %5711 = vmatpush2.bf16.msra.mxu0 0
    %5712 = vmatprep.subr.bf16.mxu0 0
    %5713 = vmatpush2.bf16.msra.mxu0 0
    %5714 = vmatprep.subr.bf16.mxu0 0
    %5715 = vmatpush2.bf16.msra.mxu0 0
    %5716 = vmatprep.mubr.bf16.mxu0 0
    %5717 = vmatmul.mubr.bf16.gmra.mxu0 %v5550
    %v5718 = vpop.f32.mrf.mxu0
    %v5719 = vadd.f32 %v5670, %v5718
    %v5720 = vpop.f32.mrf.mxu0
    %v5721 = vpop.f32.mrf.mxu0
    %v5722 = vadd.f32 %v5670, %v5721
    %v5723 = vpop.f32.mrf.mxu0
    %5724 = vdwg.mxu0
    %v5725 = vpack.c.bf16 %v5590, %v5587
    %v5726 = vpack.c.bf16 %v5656, %v5653
    %v5728 = vsel %vm419, %v5725, 0
    %v5731 = vsel %vm419, %v5726, 0
    %5733 = vmatprep.subr.bf16.mxu0 0
    %5734 = vmatpush1.bf16.xpose.msra.mxu0 0
    %5735 = vmatprep.subr.bf16.mxu0 0
    %5736 = vmatpush1.bf16.xpose.msra.mxu0 0
    %5737 = vmatprep.subr.bf16.mxu0 0
    %5738 = vmatpush1.bf16.xpose.msra.mxu0 0
    %5739 = vmatprep.subr.bf16.mxu0 0
    %5740 = vmatpush1.bf16.xpose.msra.mxu0 0
    %5741 = vmatprep.subr.bf16.mxu0 0
    %5742 = vmatpush1.bf16.xpose.msra.mxu0 0
    %5743 = vmatprep.subr.bf16.mxu0 0
    %5744 = vmatpush1.bf16.xpose.msra.mxu0 0
    %5745 = vmatprep.subr.bf16.mxu0 0
    %5746 = vmatpush1.bf16.xpose.msra.mxu0 0
    %5747 = vmatprep.subr.bf16.mxu0 0
    %5748 = vmatpush1.bf16.xpose.msra.mxu0 %v5731
    %5749 = vmatprep.subr.bf16.mxu0 0
    %5750 = vmatpush2.bf16.xpose.msra.mxu0 0
    %5751 = vmatprep.subr.bf16.mxu0 0
    %5752 = vmatpush2.bf16.xpose.msra.mxu0 0
    %5753 = vmatprep.subr.bf16.mxu0 0
    %5754 = vmatpush2.bf16.xpose.msra.mxu0 0
    %5755 = vmatprep.subr.bf16.mxu0 0
    %5756 = vmatpush2.bf16.xpose.msra.mxu0 0
    %5757 = vmatprep.subr.bf16.mxu0 0
    %5758 = vmatpush2.bf16.xpose.msra.mxu0 0
    %5759 = vmatprep.subr.bf16.mxu0 0
    %5760 = vmatpush2.bf16.xpose.msra.mxu0 0
    %5761 = vmatprep.subr.bf16.mxu0 0
    %5762 = vmatpush2.bf16.xpose.msra.mxu0 0
    %5763 = vmatprep.subr.bf16.mxu0 0
    %5764 = vmatpush2.bf16.xpose.msra.mxu0 0
    %5765 = vmatprep.mubr.bf16.mxu0 0
    %5766 = vmatmul.mubr.bf16.gmra.mxu0 %v5728
    %v5767 = vpop.f32.mrf.mxu0
    %v5768 = vadd.f32 %v219, %v5767
    %v5769 = vpop.f32.mrf.mxu0
    %v5770 = vpop.f32.mrf.mxu0
    %v5771 = vadd.f32 %v220, %v5770
    %v5772 = vpop.f32.mrf.mxu0
    %5773 = vdwg.mxu0
    %v5774 = vsel %vm467, %v5768, -inf
    %5775 = vmax.xlane.f32.xlu0 %v5774
    %v5776 = vpop.xlane.xlu0 %5775
    %v5777 = vsel %vm467, %v5771, -inf
    %5778 = vmax.xlane.f32.xlu0 %v5777
    %v5779 = vpop.xlane.xlu0 %5778
    %v5780 = vsub.f32 %v5768, %v5776
    %v5781 = vsub.f32 %v5771, %v5779
    %v5782 = vmul.f32 %v5780, 1.442695
    %v5783 = vpow.pop %v5782
    %v5784 = vmul.f32 %v5781, 1.442695
    %v5785 = vpow.pop %v5784
    %v5786 = vsel %vm467, %v5783, 0.0
    %5787 = vadd.xlane.f32.xlu0 %v5786
    %v5788 = vpop.xlane.xlu0 %5787
    %v5789 = vsel %vm467, %v5785, 0.0
    %5790 = vadd.xlane.f32.xlu0 %v5789
    %v5791 = vpop.xlane.xlu0 %5790
    %v5792 = vrcp.pop %v5788
    %v5793 = vrcp.pop %v5791
    %v5794 = vmul.f32 %v5783, %v5792
    %v5795 = vmul.f32 %v5785, %v5793
    %v5796 = vpack.c.bf16 %v5795, %v5794
    %v5797 = vpack.c.bf16 %v5722, %v5719
    %v5799 = vsel %vm467, %v5796, 0
    %5801 = vmatprep.subr.bf16.mxu0 0
    %5802 = vmatpush1.bf16.msra.mxu0 0
    %5803 = vmatprep.subr.bf16.mxu0 0
    %5804 = vmatpush1.bf16.msra.mxu0 0
    %5805 = vmatprep.subr.bf16.mxu0 0
    %5806 = vmatpush1.bf16.msra.mxu0 0
    %5807 = vmatprep.subr.bf16.mxu0 0
    %5808 = vmatpush1.bf16.msra.mxu0 0
    %5809 = vmatprep.subr.bf16.mxu0 0
    %5810 = vmatpush1.bf16.msra.mxu0 0
    %5811 = vmatprep.subr.bf16.mxu0 0
    %5812 = vmatpush1.bf16.msra.mxu0 0
    %5813 = vmatprep.subr.bf16.mxu0 0
    %5814 = vmatpush1.bf16.msra.mxu0 0
    %5815 = vmatprep.subr.bf16.mxu0 0
    %5816 = vmatpush1.bf16.msra.mxu0 %v5797
    %5817 = vmatprep.subr.bf16.mxu0 0
    %5818 = vmatpush2.bf16.msra.mxu0 0
    %5819 = vmatprep.subr.bf16.mxu0 0
    %5820 = vmatpush2.bf16.msra.mxu0 0
    %5821 = vmatprep.subr.bf16.mxu0 0
    %5822 = vmatpush2.bf16.msra.mxu0 0
    %5823 = vmatprep.subr.bf16.mxu0 0
    %5824 = vmatpush2.bf16.msra.mxu0 0
    %5825 = vmatprep.subr.bf16.mxu0 0
    %5826 = vmatpush2.bf16.msra.mxu0 0
    %5827 = vmatprep.subr.bf16.mxu0 0
    %5828 = vmatpush2.bf16.msra.mxu0 0
    %5829 = vmatprep.subr.bf16.mxu0 0
    %5830 = vmatpush2.bf16.msra.mxu0 0
    %5831 = vmatprep.subr.bf16.mxu0 0
    %5832 = vmatpush2.bf16.msra.mxu0 0
    %5833 = vmatprep.mubr.bf16.mxu0 0
    %5834 = vmatmul.mubr.bf16.gmra.mxu0 %v5799
    %v5835 = vpop.f32.mrf.mxu0
    %v5836 = vadd.f32 0.0, %v5835
    %v5837 = vpop.f32.mrf.mxu0
    %v5838 = vpop.f32.mrf.mxu0
    %v5839 = vadd.f32 0.0, %v5838
    %v5840 = vpop.f32.mrf.mxu0
    %5841 = vdwg.mxu0
    %v5842 = vpack.c.bf16 %v5839, %v5836
    %s5843 = scalar_lea.vmem %s12, 48
    %v5844 = vld [vmem:[%s5843] sm:$0xf]
    %s5845 = scalar_lea.vmem %s6, 208
    %v5846 = vld [vmem:[%s5845] sm:$0xf]
    %v5847 = vld [vmem:[%s5845 + $0x4] sm:$0xf]
    %v5848 = vld [vmem:[%s5845 + $0x8] sm:$0xf]
    %v5849 = vld [vmem:[%s5845 + $0xc] sm:$0xf]
    %s5850 = scalar_lea.vmem %s9, 13
    %v5851 = vld [vmem:[%s5850] sm:$0x1]
    %v5853 = vlaneseq
    %v5854 = vshrl.u32 %v5853, 7
    %v5855 = vsub.s32 0, %v5854
    %v5856 = vrot.slane %v5851, %v5855
    %v5862 = vunpack.c.l.b16 %v5846
    %v5863 = vunpack.c.l.b16 %v5847
    %v5864 = vunpack.c.l.b16 %v5848
    %v5865 = vunpack.c.l.b16 %v5849
    %v5866 = vpack.c.b16 %v5863, %v5862
    %v5867 = vpack.c.b16 %v5865, %v5864
    %5870 = vmatprep.subr.bf16.mxu0 0
    %5871 = vmatpush1.bf16.msra.mxu0 0
    %5872 = vmatprep.subr.bf16.mxu0 0
    %5873 = vmatpush1.bf16.msra.mxu0 0
    %5874 = vmatprep.subr.bf16.mxu0 0
    %5875 = vmatpush1.bf16.msra.mxu0 0
    %5876 = vmatprep.subr.bf16.mxu0 0
    %5877 = vmatpush1.bf16.msra.mxu0 0
    %5878 = vmatprep.subr.bf16.mxu0 0
    %5879 = vmatpush1.bf16.msra.mxu0 0
    %5880 = vmatprep.subr.bf16.mxu0 0
    %5881 = vmatpush1.bf16.msra.mxu0 0
    %5882 = vmatprep.subr.bf16.mxu0 0
    %5883 = vmatpush1.bf16.msra.mxu0 %v5867
    %5884 = vmatprep.subr.bf16.mxu0 0
    %5885 = vmatpush1.bf16.msra.mxu0 %v5866
    %5886 = vmatprep.subr.bf16.mxu0 0
    %5887 = vmatpush2.bf16.msra.mxu0 0
    %5888 = vmatprep.subr.bf16.mxu0 0
    %5889 = vmatpush2.bf16.msra.mxu0 0
    %5890 = vmatprep.subr.bf16.mxu0 0
    %5891 = vmatpush2.bf16.msra.mxu0 0
    %5892 = vmatprep.subr.bf16.mxu0 0
    %5893 = vmatpush2.bf16.msra.mxu0 0
    %5894 = vmatprep.subr.bf16.mxu0 0
    %5895 = vmatpush2.bf16.msra.mxu0 0
    %5896 = vmatprep.subr.bf16.mxu0 0
    %5897 = vmatpush2.bf16.msra.mxu0 0
    %5898 = vmatprep.subr.bf16.mxu0 0
    %5899 = vmatpush2.bf16.msra.mxu0 0
    %5900 = vmatprep.subr.bf16.mxu0 0
    %5901 = vmatpush2.bf16.msra.mxu0 0
    %5902 = vmatprep.mubr.bf16.mxu0 0
    %5903 = vmatmul.mubr.bf16.gmra.mxu0 %v5550
    %v5904 = vpop.f32.mrf.mxu0
    %v5905 = vadd.f32 %v5856, %v5904
    %v5906 = vpop.f32.mrf.mxu0
    %v5907 = vpop.f32.mrf.mxu0
    %v5908 = vadd.f32 %v5856, %v5907
    %v5909 = vpop.f32.mrf.mxu0
    %5910 = vdwg.mxu0
    %s5911 = scalar_lea.vmem %s7, 208
    %v5912 = vld [vmem:[%s5911] sm:$0xf]
    %v5913 = vld [vmem:[%s5911 + $0x4] sm:$0xf]
    %v5914 = vld [vmem:[%s5911 + $0x8] sm:$0xf]
    %v5915 = vld [vmem:[%s5911 + $0xc] sm:$0xf]
    %s5916 = scalar_lea.vmem %s10, 13
    %v5917 = vld [vmem:[%s5916] sm:$0x1]
    %v5919 = vlaneseq
    %v5920 = vshrl.u32 %v5919, 7
    %v5921 = vsub.s32 0, %v5920
    %v5922 = vrot.slane %v5917, %v5921
    %v5928 = vunpack.c.l.b16 %v5912
    %v5929 = vunpack.c.l.b16 %v5913
    %v5930 = vunpack.c.l.b16 %v5914
    %v5931 = vunpack.c.l.b16 %v5915
    %v5932 = vpack.c.b16 %v5929, %v5928
    %v5933 = vpack.c.b16 %v5931, %v5930
    %5936 = vmatprep.subr.bf16.mxu0 0
    %5937 = vmatpush1.bf16.msra.mxu0 0
    %5938 = vmatprep.subr.bf16.mxu0 0
    %5939 = vmatpush1.bf16.msra.mxu0 0
    %5940 = vmatprep.subr.bf16.mxu0 0
    %5941 = vmatpush1.bf16.msra.mxu0 0
    %5942 = vmatprep.subr.bf16.mxu0 0
    %5943 = vmatpush1.bf16.msra.mxu0 0
    %5944 = vmatprep.subr.bf16.mxu0 0
    %5945 = vmatpush1.bf16.msra.mxu0 0
    %5946 = vmatprep.subr.bf16.mxu0 0
    %5947 = vmatpush1.bf16.msra.mxu0 0
    %5948 = vmatprep.subr.bf16.mxu0 0
    %5949 = vmatpush1.bf16.msra.mxu0 %v5933
    %5950 = vmatprep.subr.bf16.mxu0 0
    %5951 = vmatpush1.bf16.msra.mxu0 %v5932
    %5952 = vmatprep.subr.bf16.mxu0 0
    %5953 = vmatpush2.bf16.msra.mxu0 0
    %5954 = vmatprep.subr.bf16.mxu0 0
    %5955 = vmatpush2.bf16.msra.mxu0 0
    %5956 = vmatprep.subr.bf16.mxu0 0
    %5957 = vmatpush2.bf16.msra.mxu0 0
    %5958 = vmatprep.subr.bf16.mxu0 0
    %5959 = vmatpush2.bf16.msra.mxu0 0
    %5960 = vmatprep.subr.bf16.mxu0 0
    %5961 = vmatpush2.bf16.msra.mxu0 0
    %5962 = vmatprep.subr.bf16.mxu0 0
    %5963 = vmatpush2.bf16.msra.mxu0 0
    %5964 = vmatprep.subr.bf16.mxu0 0
    %5965 = vmatpush2.bf16.msra.mxu0 0
    %5966 = vmatprep.subr.bf16.mxu0 0
    %5967 = vmatpush2.bf16.msra.mxu0 0
    %5968 = vmatprep.mubr.bf16.mxu0 0
    %5969 = vmatmul.mubr.bf16.gmra.mxu0 %v5550
    %v5970 = vpop.f32.mrf.mxu0
    %v5971 = vadd.f32 %v5922, %v5970
    %v5972 = vpop.f32.mrf.mxu0
    %v5973 = vpop.f32.mrf.mxu0
    %v5974 = vadd.f32 %v5922, %v5973
    %v5975 = vpop.f32.mrf.mxu0
    %5976 = vdwg.mxu0
    %s5977 = scalar_lea.vmem %s8, 208
    %v5978 = vld [vmem:[%s5977] sm:$0xf]
    %v5979 = vld [vmem:[%s5977 + $0x4] sm:$0xf]
    %v5980 = vld [vmem:[%s5977 + $0x8] sm:$0xf]
    %v5981 = vld [vmem:[%s5977 + $0xc] sm:$0xf]
    %s5982 = scalar_lea.vmem %s11, 13
    %v5983 = vld [vmem:[%s5982] sm:$0x1]
    %v5985 = vlaneseq
    %v5986 = vshrl.u32 %v5985, 7
    %v5987 = vsub.s32 0, %v5986
    %v5988 = vrot.slane %v5983, %v5987
    %v5994 = vunpack.c.l.b16 %v5978
    %v5995 = vunpack.c.l.b16 %v5979
    %v5996 = vunpack.c.l.b16 %v5980
    %v5997 = vunpack.c.l.b16 %v5981
    %v5998 = vpack.c.b16 %v5995, %v5994
    %v5999 = vpack.c.b16 %v5997, %v5996
    %6002 = vmatprep.subr.bf16.mxu0 0
    %6003 = vmatpush1.bf16.msra.mxu0 0
    %6004 = vmatprep.subr.bf16.mxu0 0
    %6005 = vmatpush1.bf16.msra.mxu0 0
    %6006 = vmatprep.subr.bf16.mxu0 0
    %6007 = vmatpush1.bf16.msra.mxu0 0
    %6008 = vmatprep.subr.bf16.mxu0 0
    %6009 = vmatpush1.bf16.msra.mxu0 0
    %6010 = vmatprep.subr.bf16.mxu0 0
    %6011 = vmatpush1.bf16.msra.mxu0 0
    %6012 = vmatprep.subr.bf16.mxu0 0
    %6013 = vmatpush1.bf16.msra.mxu0 0
    %6014 = vmatprep.subr.bf16.mxu0 0
    %6015 = vmatpush1.bf16.msra.mxu0 %v5999
    %6016 = vmatprep.subr.bf16.mxu0 0
    %6017 = vmatpush1.bf16.msra.mxu0 %v5998
    %6018 = vmatprep.subr.bf16.mxu0 0
    %6019 = vmatpush2.bf16.msra.mxu0 0
    %6020 = vmatprep.subr.bf16.mxu0 0
    %6021 = vmatpush2.bf16.msra.mxu0 0
    %6022 = vmatprep.subr.bf16.mxu0 0
    %6023 = vmatpush2.bf16.msra.mxu0 0
    %6024 = vmatprep.subr.bf16.mxu0 0
    %6025 = vmatpush2.bf16.msra.mxu0 0
    %6026 = vmatprep.subr.bf16.mxu0 0
    %6027 = vmatpush2.bf16.msra.mxu0 0
    %6028 = vmatprep.subr.bf16.mxu0 0
    %6029 = vmatpush2.bf16.msra.mxu0 0
    %6030 = vmatprep.subr.bf16.mxu0 0
    %6031 = vmatpush2.bf16.msra.mxu0 0
    %6032 = vmatprep.subr.bf16.mxu0 0
    %6033 = vmatpush2.bf16.msra.mxu0 0
    %6034 = vmatprep.mubr.bf16.mxu0 0
    %6035 = vmatmul.mubr.bf16.gmra.mxu0 %v5550
    %v6036 = vpop.f32.mrf.mxu0
    %v6037 = vadd.f32 %v5988, %v6036
    %v6038 = vpop.f32.mrf.mxu0
    %v6039 = vpop.f32.mrf.mxu0
    %v6040 = vadd.f32 %v5988, %v6039
    %v6041 = vpop.f32.mrf.mxu0
    %6042 = vdwg.mxu0
    %v6043 = vpack.c.bf16 %v5908, %v5905
    %v6044 = vpack.c.bf16 %v5974, %v5971
    %v6046 = vsel %vm419, %v6043, 0
    %v6049 = vsel %vm419, %v6044, 0
    %6051 = vmatprep.subr.bf16.mxu0 0
    %6052 = vmatpush1.bf16.xpose.msra.mxu0 0
    %6053 = vmatprep.subr.bf16.mxu0 0
    %6054 = vmatpush1.bf16.xpose.msra.mxu0 0
    %6055 = vmatprep.subr.bf16.mxu0 0
    %6056 = vmatpush1.bf16.xpose.msra.mxu0 0
    %6057 = vmatprep.subr.bf16.mxu0 0
    %6058 = vmatpush1.bf16.xpose.msra.mxu0 0
    %6059 = vmatprep.subr.bf16.mxu0 0
    %6060 = vmatpush1.bf16.xpose.msra.mxu0 0
    %6061 = vmatprep.subr.bf16.mxu0 0
    %6062 = vmatpush1.bf16.xpose.msra.mxu0 0
    %6063 = vmatprep.subr.bf16.mxu0 0
    %6064 = vmatpush1.bf16.xpose.msra.mxu0 0
    %6065 = vmatprep.subr.bf16.mxu0 0
    %6066 = vmatpush1.bf16.xpose.msra.mxu0 %v6049
    %6067 = vmatprep.subr.bf16.mxu0 0
    %6068 = vmatpush2.bf16.xpose.msra.mxu0 0
    %6069 = vmatprep.subr.bf16.mxu0 0
    %6070 = vmatpush2.bf16.xpose.msra.mxu0 0
    %6071 = vmatprep.subr.bf16.mxu0 0
    %6072 = vmatpush2.bf16.xpose.msra.mxu0 0
    %6073 = vmatprep.subr.bf16.mxu0 0
    %6074 = vmatpush2.bf16.xpose.msra.mxu0 0
    %6075 = vmatprep.subr.bf16.mxu0 0
    %6076 = vmatpush2.bf16.xpose.msra.mxu0 0
    %6077 = vmatprep.subr.bf16.mxu0 0
    %6078 = vmatpush2.bf16.xpose.msra.mxu0 0
    %6079 = vmatprep.subr.bf16.mxu0 0
    %6080 = vmatpush2.bf16.xpose.msra.mxu0 0
    %6081 = vmatprep.subr.bf16.mxu0 0
    %6082 = vmatpush2.bf16.xpose.msra.mxu0 0
    %6083 = vmatprep.mubr.bf16.mxu0 0
    %6084 = vmatmul.mubr.bf16.gmra.mxu0 %v6046
    %v6085 = vpop.f32.mrf.mxu0
    %v6086 = vadd.f32 %v219, %v6085
    %v6087 = vpop.f32.mrf.mxu0
    %v6088 = vpop.f32.mrf.mxu0
    %v6089 = vadd.f32 %v220, %v6088
    %v6090 = vpop.f32.mrf.mxu0
    %6091 = vdwg.mxu0
    %v6092 = vsel %vm467, %v6086, -inf
    %6093 = vmax.xlane.f32.xlu0 %v6092
    %v6094 = vpop.xlane.xlu0 %6093
    %v6095 = vsel %vm467, %v6089, -inf
    %6096 = vmax.xlane.f32.xlu0 %v6095
    %v6097 = vpop.xlane.xlu0 %6096
    %v6098 = vsub.f32 %v6086, %v6094
    %v6099 = vsub.f32 %v6089, %v6097
    %v6100 = vmul.f32 %v6098, 1.442695
    %v6101 = vpow.pop %v6100
    %v6102 = vmul.f32 %v6099, 1.442695
    %v6103 = vpow.pop %v6102
    %v6104 = vsel %vm467, %v6101, 0.0
    %6105 = vadd.xlane.f32.xlu0 %v6104
    %v6106 = vpop.xlane.xlu0 %6105
    %v6107 = vsel %vm467, %v6103, 0.0
    %6108 = vadd.xlane.f32.xlu0 %v6107
    %v6109 = vpop.xlane.xlu0 %6108
    %v6110 = vrcp.pop %v6106
    %v6111 = vrcp.pop %v6109
    %v6112 = vmul.f32 %v6101, %v6110
    %v6113 = vmul.f32 %v6103, %v6111
    %v6114 = vpack.c.bf16 %v6113, %v6112
    %v6115 = vpack.c.bf16 %v6040, %v6037
    %v6117 = vsel %vm467, %v6114, 0
    %6119 = vmatprep.subr.bf16.mxu0 0
    %6120 = vmatpush1.bf16.msra.mxu0 0
    %6121 = vmatprep.subr.bf16.mxu0 0
    %6122 = vmatpush1.bf16.msra.mxu0 0
    %6123 = vmatprep.subr.bf16.mxu0 0
    %6124 = vmatpush1.bf16.msra.mxu0 0
    %6125 = vmatprep.subr.bf16.mxu0 0
    %6126 = vmatpush1.bf16.msra.mxu0 0
    %6127 = vmatprep.subr.bf16.mxu0 0
    %6128 = vmatpush1.bf16.msra.mxu0 0
    %6129 = vmatprep.subr.bf16.mxu0 0
    %6130 = vmatpush1.bf16.msra.mxu0 0
    %6131 = vmatprep.subr.bf16.mxu0 0
    %6132 = vmatpush1.bf16.msra.mxu0 0
    %6133 = vmatprep.subr.bf16.mxu0 0
    %6134 = vmatpush1.bf16.msra.mxu0 %v6115
    %6135 = vmatprep.subr.bf16.mxu0 0
    %6136 = vmatpush2.bf16.msra.mxu0 0
    %6137 = vmatprep.subr.bf16.mxu0 0
    %6138 = vmatpush2.bf16.msra.mxu0 0
    %6139 = vmatprep.subr.bf16.mxu0 0
    %6140 = vmatpush2.bf16.msra.mxu0 0
    %6141 = vmatprep.subr.bf16.mxu0 0
    %6142 = vmatpush2.bf16.msra.mxu0 0
    %6143 = vmatprep.subr.bf16.mxu0 0
    %6144 = vmatpush2.bf16.msra.mxu0 0
    %6145 = vmatprep.subr.bf16.mxu0 0
    %6146 = vmatpush2.bf16.msra.mxu0 0
    %6147 = vmatprep.subr.bf16.mxu0 0
    %6148 = vmatpush2.bf16.msra.mxu0 0
    %6149 = vmatprep.subr.bf16.mxu0 0
    %6150 = vmatpush2.bf16.msra.mxu0 0
    %6151 = vmatprep.mubr.bf16.mxu0 0
    %6152 = vmatmul.mubr.bf16.gmra.mxu0 %v6117
    %v6153 = vpop.f32.mrf.mxu0
    %v6154 = vadd.f32 0.0, %v6153
    %v6155 = vpop.f32.mrf.mxu0
    %v6156 = vpop.f32.mrf.mxu0
    %v6157 = vadd.f32 0.0, %v6156
    %v6158 = vpop.f32.mrf.mxu0
    %6159 = vdwg.mxu0
    %v6160 = vpack.c.bf16 %v6157, %v6154
    %s6161 = scalar_lea.vmem %s12, 52
    %v6162 = vld [vmem:[%s6161] sm:$0xf]
    %v6164 = vsel %vm419, %v6160, 0
    %v6167 = vsel %vm859, %v6162, 0
    %6169 = vmatprep.subr.bf16.mxu0 0
    %6170 = vmatpush1.bf16.msra.mxu0 0
    %6171 = vmatprep.subr.bf16.mxu0 0
    %6172 = vmatpush1.bf16.msra.mxu0 0
    %6173 = vmatprep.subr.bf16.mxu0 0
    %6174 = vmatpush1.bf16.msra.mxu0 0
    %6175 = vmatprep.subr.bf16.mxu0 0
    %6176 = vmatpush1.bf16.msra.mxu0 0
    %6177 = vmatprep.subr.bf16.mxu0 0
    %6178 = vmatpush1.bf16.msra.mxu0 0
    %6179 = vmatprep.subr.bf16.mxu0 0
    %6180 = vmatpush1.bf16.msra.mxu0 0
    %6181 = vmatprep.subr.bf16.mxu0 0
    %6182 = vmatpush1.bf16.msra.mxu0 0
    %6183 = vmatprep.subr.bf16.mxu0 0
    %6184 = vmatpush1.bf16.msra.mxu0 %v6167
    %6185 = vmatprep.subr.bf16.mxu0 0
    %6186 = vmatpush2.bf16.msra.mxu0 0
    %6187 = vmatprep.subr.bf16.mxu0 0
    %6188 = vmatpush2.bf16.msra.mxu0 0
    %6189 = vmatprep.subr.bf16.mxu0 0
    %6190 = vmatpush2.bf16.msra.mxu0 0
    %6191 = vmatprep.subr.bf16.mxu0 0
    %6192 = vmatpush2.bf16.msra.mxu0 0
    %6193 = vmatprep.subr.bf16.mxu0 0
    %6194 = vmatpush2.bf16.msra.mxu0 0
    %6195 = vmatprep.subr.bf16.mxu0 0
    %6196 = vmatpush2.bf16.msra.mxu0 0
    %6197 = vmatprep.subr.bf16.mxu0 0
    %6198 = vmatpush2.bf16.msra.mxu0 0
    %6199 = vmatprep.subr.bf16.mxu0 0
    %6200 = vmatpush2.bf16.msra.mxu0 0
    %6201 = vmatprep.mubr.bf16.mxu0 0
    %6202 = vmatmul.mubr.bf16.gmra.mxu0 %v6164
    %v6203 = vpop.f32.mrf.mxu0
    %v6204 = vadd.f32 0.0, %v6203
    %v6205 = vpop.f32.mrf.mxu0
    %v6206 = vpop.f32.mrf.mxu0
    %v6207 = vadd.f32 0.0, %v6206
    %v6208 = vpop.f32.mrf.mxu0
    %6209 = vdwg.mxu0
    %v6211 = vsel %vm419, %v5842, 0
    %v6214 = vsel %vm859, %v5844, 0
    %6216 = vmatprep.subr.bf16.mxu0 0
    %6217 = vmatpush1.bf16.msra.mxu0 0
    %6218 = vmatprep.subr.bf16.mxu0 0
    %6219 = vmatpush1.bf16.msra.mxu0 0
    %6220 = vmatprep.subr.bf16.mxu0 0
    %6221 = vmatpush1.bf16.msra.mxu0 0
    %6222 = vmatprep.subr.bf16.mxu0 0
    %6223 = vmatpush1.bf16.msra.mxu0 0
    %6224 = vmatprep.subr.bf16.mxu0 0
    %6225 = vmatpush1.bf16.msra.mxu0 0
    %6226 = vmatprep.subr.bf16.mxu0 0
    %6227 = vmatpush1.bf16.msra.mxu0 0
    %6228 = vmatprep.subr.bf16.mxu0 0
    %6229 = vmatpush1.bf16.msra.mxu0 0
    %6230 = vmatprep.subr.bf16.mxu0 0
    %6231 = vmatpush1.bf16.msra.mxu0 %v6214
    %6232 = vmatprep.subr.bf16.mxu0 0
    %6233 = vmatpush2.bf16.msra.mxu0 0
    %6234 = vmatprep.subr.bf16.mxu0 0
    %6235 = vmatpush2.bf16.msra.mxu0 0
    %6236 = vmatprep.subr.bf16.mxu0 0
    %6237 = vmatpush2.bf16.msra.mxu0 0
    %6238 = vmatprep.subr.bf16.mxu0 0
    %6239 = vmatpush2.bf16.msra.mxu0 0
    %6240 = vmatprep.subr.bf16.mxu0 0
    %6241 = vmatpush2.bf16.msra.mxu0 0
    %6242 = vmatprep.subr.bf16.mxu0 0
    %6243 = vmatpush2.bf16.msra.mxu0 0
    %6244 = vmatprep.subr.bf16.mxu0 0
    %6245 = vmatpush2.bf16.msra.mxu0 0
    %6246 = vmatprep.subr.bf16.mxu0 0
    %6247 = vmatpush2.bf16.msra.mxu0 0
    %6248 = vmatprep.mubr.bf16.mxu0 0
    %6249 = vmatmul.mubr.bf16.gmra.mxu0 %v6211
    %v6250 = vpop.f32.mrf.mxu0
    %v6251 = vadd.f32 %v6204, %v6250
    %v6252 = vpop.f32.mrf.mxu0
    %v6253 = vpop.f32.mrf.mxu0
    %v6254 = vadd.f32 %v6207, %v6253
    %v6255 = vpop.f32.mrf.mxu0
    %6256 = vdwg.mxu0
    %s6257 = scalar_lea.vmem %s6, 224
    %v6258 = vld [vmem:[%s6257] sm:$0xf]
    %v6259 = vld [vmem:[%s6257 + $0x4] sm:$0xf]
    %v6260 = vld [vmem:[%s6257 + $0x8] sm:$0xf]
    %v6261 = vld [vmem:[%s6257 + $0xc] sm:$0xf]
    %s6262 = scalar_lea.vmem %s9, 14
    %v6263 = vld [vmem:[%s6262] sm:$0x1]
    %v6265 = vlaneseq
    %v6266 = vshrl.u32 %v6265, 7
    %v6267 = vsub.s32 0, %v6266
    %v6268 = vrot.slane %v6263, %v6267
    %v6274 = vunpack.c.l.b16 %v6258
    %v6275 = vunpack.c.l.b16 %v6259
    %v6276 = vunpack.c.l.b16 %v6260
    %v6277 = vunpack.c.l.b16 %v6261
    %v6278 = vpack.c.b16 %v6275, %v6274
    %v6279 = vpack.c.b16 %v6277, %v6276
    %6282 = vmatprep.subr.bf16.mxu0 0
    %6283 = vmatpush1.bf16.msra.mxu0 0
    %6284 = vmatprep.subr.bf16.mxu0 0
    %6285 = vmatpush1.bf16.msra.mxu0 0
    %6286 = vmatprep.subr.bf16.mxu0 0
    %6287 = vmatpush1.bf16.msra.mxu0 0
    %6288 = vmatprep.subr.bf16.mxu0 0
    %6289 = vmatpush1.bf16.msra.mxu0 0
    %6290 = vmatprep.subr.bf16.mxu0 0
    %6291 = vmatpush1.bf16.msra.mxu0 0
    %6292 = vmatprep.subr.bf16.mxu0 0
    %6293 = vmatpush1.bf16.msra.mxu0 0
    %6294 = vmatprep.subr.bf16.mxu0 0
    %6295 = vmatpush1.bf16.msra.mxu0 %v6279
    %6296 = vmatprep.subr.bf16.mxu0 0
    %6297 = vmatpush1.bf16.msra.mxu0 %v6278
    %6298 = vmatprep.subr.bf16.mxu0 0
    %6299 = vmatpush2.bf16.msra.mxu0 0
    %6300 = vmatprep.subr.bf16.mxu0 0
    %6301 = vmatpush2.bf16.msra.mxu0 0
    %6302 = vmatprep.subr.bf16.mxu0 0
    %6303 = vmatpush2.bf16.msra.mxu0 0
    %6304 = vmatprep.subr.bf16.mxu0 0
    %6305 = vmatpush2.bf16.msra.mxu0 0
    %6306 = vmatprep.subr.bf16.mxu0 0
    %6307 = vmatpush2.bf16.msra.mxu0 0
    %6308 = vmatprep.subr.bf16.mxu0 0
    %6309 = vmatpush2.bf16.msra.mxu0 0
    %6310 = vmatprep.subr.bf16.mxu0 0
    %6311 = vmatpush2.bf16.msra.mxu0 0
    %6312 = vmatprep.subr.bf16.mxu0 0
    %6313 = vmatpush2.bf16.msra.mxu0 0
    %6314 = vmatprep.mubr.bf16.mxu0 0
    %6315 = vmatmul.mubr.bf16.gmra.mxu0 %v5550
    %v6316 = vpop.f32.mrf.mxu0
    %v6317 = vadd.f32 %v6268, %v6316
    %v6318 = vpop.f32.mrf.mxu0
    %v6319 = vpop.f32.mrf.mxu0
    %v6320 = vadd.f32 %v6268, %v6319
    %v6321 = vpop.f32.mrf.mxu0
    %6322 = vdwg.mxu0
    %s6323 = scalar_lea.vmem %s7, 224
    %v6324 = vld [vmem:[%s6323] sm:$0xf]
    %v6325 = vld [vmem:[%s6323 + $0x4] sm:$0xf]
    %v6326 = vld [vmem:[%s6323 + $0x8] sm:$0xf]
    %v6327 = vld [vmem:[%s6323 + $0xc] sm:$0xf]
    %s6328 = scalar_lea.vmem %s10, 14
    %v6329 = vld [vmem:[%s6328] sm:$0x1]
    %v6331 = vlaneseq
    %v6332 = vshrl.u32 %v6331, 7
    %v6333 = vsub.s32 0, %v6332
    %v6334 = vrot.slane %v6329, %v6333
    %v6340 = vunpack.c.l.b16 %v6324
    %v6341 = vunpack.c.l.b16 %v6325
    %v6342 = vunpack.c.l.b16 %v6326
    %v6343 = vunpack.c.l.b16 %v6327
    %v6344 = vpack.c.b16 %v6341, %v6340
    %v6345 = vpack.c.b16 %v6343, %v6342
    %6348 = vmatprep.subr.bf16.mxu0 0
    %6349 = vmatpush1.bf16.msra.mxu0 0
    %6350 = vmatprep.subr.bf16.mxu0 0
    %6351 = vmatpush1.bf16.msra.mxu0 0
    %6352 = vmatprep.subr.bf16.mxu0 0
    %6353 = vmatpush1.bf16.msra.mxu0 0
    %6354 = vmatprep.subr.bf16.mxu0 0
    %6355 = vmatpush1.bf16.msra.mxu0 0
    %6356 = vmatprep.subr.bf16.mxu0 0
    %6357 = vmatpush1.bf16.msra.mxu0 0
    %6358 = vmatprep.subr.bf16.mxu0 0
    %6359 = vmatpush1.bf16.msra.mxu0 0
    %6360 = vmatprep.subr.bf16.mxu0 0
    %6361 = vmatpush1.bf16.msra.mxu0 %v6345
    %6362 = vmatprep.subr.bf16.mxu0 0
    %6363 = vmatpush1.bf16.msra.mxu0 %v6344
    %6364 = vmatprep.subr.bf16.mxu0 0
    %6365 = vmatpush2.bf16.msra.mxu0 0
    %6366 = vmatprep.subr.bf16.mxu0 0
    %6367 = vmatpush2.bf16.msra.mxu0 0
    %6368 = vmatprep.subr.bf16.mxu0 0
    %6369 = vmatpush2.bf16.msra.mxu0 0
    %6370 = vmatprep.subr.bf16.mxu0 0
    %6371 = vmatpush2.bf16.msra.mxu0 0
    %6372 = vmatprep.subr.bf16.mxu0 0
    %6373 = vmatpush2.bf16.msra.mxu0 0
    %6374 = vmatprep.subr.bf16.mxu0 0
    %6375 = vmatpush2.bf16.msra.mxu0 0
    %6376 = vmatprep.subr.bf16.mxu0 0
    %6377 = vmatpush2.bf16.msra.mxu0 0
    %6378 = vmatprep.subr.bf16.mxu0 0
    %6379 = vmatpush2.bf16.msra.mxu0 0
    %6380 = vmatprep.mubr.bf16.mxu0 0
    %6381 = vmatmul.mubr.bf16.gmra.mxu0 %v5550
    %v6382 = vpop.f32.mrf.mxu0
    %v6383 = vadd.f32 %v6334, %v6382
    %v6384 = vpop.f32.mrf.mxu0
    %v6385 = vpop.f32.mrf.mxu0
    %v6386 = vadd.f32 %v6334, %v6385
    %v6387 = vpop.f32.mrf.mxu0
    %6388 = vdwg.mxu0
    %s6389 = scalar_lea.vmem %s8, 224
    %v6390 = vld [vmem:[%s6389] sm:$0xf]
    %v6391 = vld [vmem:[%s6389 + $0x4] sm:$0xf]
    %v6392 = vld [vmem:[%s6389 + $0x8] sm:$0xf]
    %v6393 = vld [vmem:[%s6389 + $0xc] sm:$0xf]
    %s6394 = scalar_lea.vmem %s11, 14
    %v6395 = vld [vmem:[%s6394] sm:$0x1]
    %v6397 = vlaneseq
    %v6398 = vshrl.u32 %v6397, 7
    %v6399 = vsub.s32 0, %v6398
    %v6400 = vrot.slane %v6395, %v6399
    %v6406 = vunpack.c.l.b16 %v6390
    %v6407 = vunpack.c.l.b16 %v6391
    %v6408 = vunpack.c.l.b16 %v6392
    %v6409 = vunpack.c.l.b16 %v6393
    %v6410 = vpack.c.b16 %v6407, %v6406
    %v6411 = vpack.c.b16 %v6409, %v6408
    %6414 = vmatprep.subr.bf16.mxu0 0
    %6415 = vmatpush1.bf16.msra.mxu0 0
    %6416 = vmatprep.subr.bf16.mxu0 0
    %6417 = vmatpush1.bf16.msra.mxu0 0
    %6418 = vmatprep.subr.bf16.mxu0 0
    %6419 = vmatpush1.bf16.msra.mxu0 0
    %6420 = vmatprep.subr.bf16.mxu0 0
    %6421 = vmatpush1.bf16.msra.mxu0 0
    %6422 = vmatprep.subr.bf16.mxu0 0
    %6423 = vmatpush1.bf16.msra.mxu0 0
    %6424 = vmatprep.subr.bf16.mxu0 0
    %6425 = vmatpush1.bf16.msra.mxu0 0
    %6426 = vmatprep.subr.bf16.mxu0 0
    %6427 = vmatpush1.bf16.msra.mxu0 %v6411
    %6428 = vmatprep.subr.bf16.mxu0 0
    %6429 = vmatpush1.bf16.msra.mxu0 %v6410
    %6430 = vmatprep.subr.bf16.mxu0 0
    %6431 = vmatpush2.bf16.msra.mxu0 0
    %6432 = vmatprep.subr.bf16.mxu0 0
    %6433 = vmatpush2.bf16.msra.mxu0 0
    %6434 = vmatprep.subr.bf16.mxu0 0
    %6435 = vmatpush2.bf16.msra.mxu0 0
    %6436 = vmatprep.subr.bf16.mxu0 0
    %6437 = vmatpush2.bf16.msra.mxu0 0
    %6438 = vmatprep.subr.bf16.mxu0 0
    %6439 = vmatpush2.bf16.msra.mxu0 0
    %6440 = vmatprep.subr.bf16.mxu0 0
    %6441 = vmatpush2.bf16.msra.mxu0 0
    %6442 = vmatprep.subr.bf16.mxu0 0
    %6443 = vmatpush2.bf16.msra.mxu0 0
    %6444 = vmatprep.subr.bf16.mxu0 0
    %6445 = vmatpush2.bf16.msra.mxu0 0
    %6446 = vmatprep.mubr.bf16.mxu0 0
    %6447 = vmatmul.mubr.bf16.gmra.mxu0 %v5550
    %v6448 = vpop.f32.mrf.mxu0
    %v6449 = vadd.f32 %v6400, %v6448
    %v6450 = vpop.f32.mrf.mxu0
    %v6451 = vpop.f32.mrf.mxu0
    %v6452 = vadd.f32 %v6400, %v6451
    %v6453 = vpop.f32.mrf.mxu0
    %6454 = vdwg.mxu0
    %v6455 = vpack.c.bf16 %v6320, %v6317
    %v6456 = vpack.c.bf16 %v6386, %v6383
    %v6458 = vsel %vm419, %v6455, 0
    %v6461 = vsel %vm419, %v6456, 0
    %6463 = vmatprep.subr.bf16.mxu0 0
    %6464 = vmatpush1.bf16.xpose.msra.mxu0 0
    %6465 = vmatprep.subr.bf16.mxu0 0
    %6466 = vmatpush1.bf16.xpose.msra.mxu0 0
    %6467 = vmatprep.subr.bf16.mxu0 0
    %6468 = vmatpush1.bf16.xpose.msra.mxu0 0
    %6469 = vmatprep.subr.bf16.mxu0 0
    %6470 = vmatpush1.bf16.xpose.msra.mxu0 0
    %6471 = vmatprep.subr.bf16.mxu0 0
    %6472 = vmatpush1.bf16.xpose.msra.mxu0 0
    %6473 = vmatprep.subr.bf16.mxu0 0
    %6474 = vmatpush1.bf16.xpose.msra.mxu0 0
    %6475 = vmatprep.subr.bf16.mxu0 0
    %6476 = vmatpush1.bf16.xpose.msra.mxu0 0
    %6477 = vmatprep.subr.bf16.mxu0 0
    %6478 = vmatpush1.bf16.xpose.msra.mxu0 %v6461
    %6479 = vmatprep.subr.bf16.mxu0 0
    %6480 = vmatpush2.bf16.xpose.msra.mxu0 0
    %6481 = vmatprep.subr.bf16.mxu0 0
    %6482 = vmatpush2.bf16.xpose.msra.mxu0 0
    %6483 = vmatprep.subr.bf16.mxu0 0
    %6484 = vmatpush2.bf16.xpose.msra.mxu0 0
    %6485 = vmatprep.subr.bf16.mxu0 0
    %6486 = vmatpush2.bf16.xpose.msra.mxu0 0
    %6487 = vmatprep.subr.bf16.mxu0 0
    %6488 = vmatpush2.bf16.xpose.msra.mxu0 0
    %6489 = vmatprep.subr.bf16.mxu0 0
    %6490 = vmatpush2.bf16.xpose.msra.mxu0 0
    %6491 = vmatprep.subr.bf16.mxu0 0
    %6492 = vmatpush2.bf16.xpose.msra.mxu0 0
    %6493 = vmatprep.subr.bf16.mxu0 0
    %6494 = vmatpush2.bf16.xpose.msra.mxu0 0
    %6495 = vmatprep.mubr.bf16.mxu0 0
    %6496 = vmatmul.mubr.bf16.gmra.mxu0 %v6458
    %v6497 = vpop.f32.mrf.mxu0
    %v6498 = vadd.f32 %v219, %v6497
    %v6499 = vpop.f32.mrf.mxu0
    %v6500 = vpop.f32.mrf.mxu0
    %v6501 = vadd.f32 %v220, %v6500
    %v6502 = vpop.f32.mrf.mxu0
    %6503 = vdwg.mxu0
    %v6504 = vsel %vm467, %v6498, -inf
    %6505 = vmax.xlane.f32.xlu0 %v6504
    %v6506 = vpop.xlane.xlu0 %6505
    %v6507 = vsel %vm467, %v6501, -inf
    %6508 = vmax.xlane.f32.xlu0 %v6507
    %v6509 = vpop.xlane.xlu0 %6508
    %v6510 = vsub.f32 %v6498, %v6506
    %v6511 = vsub.f32 %v6501, %v6509
    %v6512 = vmul.f32 %v6510, 1.442695
    %v6513 = vpow.pop %v6512
    %v6514 = vmul.f32 %v6511, 1.442695
    %v6515 = vpow.pop %v6514
    %v6516 = vsel %vm467, %v6513, 0.0
    %6517 = vadd.xlane.f32.xlu0 %v6516
    %v6518 = vpop.xlane.xlu0 %6517
    %v6519 = vsel %vm467, %v6515, 0.0
    %6520 = vadd.xlane.f32.xlu0 %v6519
    %v6521 = vpop.xlane.xlu0 %6520
    %v6522 = vrcp.pop %v6518
    %v6523 = vrcp.pop %v6521
    %v6524 = vmul.f32 %v6513, %v6522
    %v6525 = vmul.f32 %v6515, %v6523
    %v6526 = vpack.c.bf16 %v6525, %v6524
    %v6527 = vpack.c.bf16 %v6452, %v6449
    %v6529 = vsel %vm467, %v6526, 0
    %6531 = vmatprep.subr.bf16.mxu0 0
    %6532 = vmatpush1.bf16.msra.mxu0 0
    %6533 = vmatprep.subr.bf16.mxu0 0
    %6534 = vmatpush1.bf16.msra.mxu0 0
    %6535 = vmatprep.subr.bf16.mxu0 0
    %6536 = vmatpush1.bf16.msra.mxu0 0
    %6537 = vmatprep.subr.bf16.mxu0 0
    %6538 = vmatpush1.bf16.msra.mxu0 0
    %6539 = vmatprep.subr.bf16.mxu0 0
    %6540 = vmatpush1.bf16.msra.mxu0 0
    %6541 = vmatprep.subr.bf16.mxu0 0
    %6542 = vmatpush1.bf16.msra.mxu0 0
    %6543 = vmatprep.subr.bf16.mxu0 0
    %6544 = vmatpush1.bf16.msra.mxu0 0
    %6545 = vmatprep.subr.bf16.mxu0 0
    %6546 = vmatpush1.bf16.msra.mxu0 %v6527
    %6547 = vmatprep.subr.bf16.mxu0 0
    %6548 = vmatpush2.bf16.msra.mxu0 0
    %6549 = vmatprep.subr.bf16.mxu0 0
    %6550 = vmatpush2.bf16.msra.mxu0 0
    %6551 = vmatprep.subr.bf16.mxu0 0
    %6552 = vmatpush2.bf16.msra.mxu0 0
    %6553 = vmatprep.subr.bf16.mxu0 0
    %6554 = vmatpush2.bf16.msra.mxu0 0
    %6555 = vmatprep.subr.bf16.mxu0 0
    %6556 = vmatpush2.bf16.msra.mxu0 0
    %6557 = vmatprep.subr.bf16.mxu0 0
    %6558 = vmatpush2.bf16.msra.mxu0 0
    %6559 = vmatprep.subr.bf16.mxu0 0
    %6560 = vmatpush2.bf16.msra.mxu0 0
    %6561 = vmatprep.subr.bf16.mxu0 0
    %6562 = vmatpush2.bf16.msra.mxu0 0
    %6563 = vmatprep.mubr.bf16.mxu0 0
    %6564 = vmatmul.mubr.bf16.gmra.mxu0 %v6529
    %v6565 = vpop.f32.mrf.mxu0
    %v6566 = vadd.f32 0.0, %v6565
    %v6567 = vpop.f32.mrf.mxu0
    %v6568 = vpop.f32.mrf.mxu0
    %v6569 = vadd.f32 0.0, %v6568
    %v6570 = vpop.f32.mrf.mxu0
    %6571 = vdwg.mxu0
    %v6572 = vpack.c.bf16 %v6569, %v6566
    %s6573 = scalar_lea.vmem %s12, 56
    %v6574 = vld [vmem:[%s6573] sm:$0xf]
    %v6576 = vsel %vm419, %v6572, 0
    %v6579 = vsel %vm859, %v6574, 0
    %6581 = vmatprep.subr.bf16.mxu0 0
    %6582 = vmatpush1.bf16.msra.mxu0 0
    %6583 = vmatprep.subr.bf16.mxu0 0
    %6584 = vmatpush1.bf16.msra.mxu0 0
    %6585 = vmatprep.subr.bf16.mxu0 0
    %6586 = vmatpush1.bf16.msra.mxu0 0
    %6587 = vmatprep.subr.bf16.mxu0 0
    %6588 = vmatpush1.bf16.msra.mxu0 0
    %6589 = vmatprep.subr.bf16.mxu0 0
    %6590 = vmatpush1.bf16.msra.mxu0 0
    %6591 = vmatprep.subr.bf16.mxu0 0
    %6592 = vmatpush1.bf16.msra.mxu0 0
    %6593 = vmatprep.subr.bf16.mxu0 0
    %6594 = vmatpush1.bf16.msra.mxu0 0
    %6595 = vmatprep.subr.bf16.mxu0 0
    %6596 = vmatpush1.bf16.msra.mxu0 %v6579
    %6597 = vmatprep.subr.bf16.mxu0 0
    %6598 = vmatpush2.bf16.msra.mxu0 0
    %6599 = vmatprep.subr.bf16.mxu0 0
    %6600 = vmatpush2.bf16.msra.mxu0 0
    %6601 = vmatprep.subr.bf16.mxu0 0
    %6602 = vmatpush2.bf16.msra.mxu0 0
    %6603 = vmatprep.subr.bf16.mxu0 0
    %6604 = vmatpush2.bf16.msra.mxu0 0
    %6605 = vmatprep.subr.bf16.mxu0 0
    %6606 = vmatpush2.bf16.msra.mxu0 0
    %6607 = vmatprep.subr.bf16.mxu0 0
    %6608 = vmatpush2.bf16.msra.mxu0 0
    %6609 = vmatprep.subr.bf16.mxu0 0
    %6610 = vmatpush2.bf16.msra.mxu0 0
    %6611 = vmatprep.subr.bf16.mxu0 0
    %6612 = vmatpush2.bf16.msra.mxu0 0
    %6613 = vmatprep.mubr.bf16.mxu0 0
    %6614 = vmatmul.mubr.bf16.gmra.mxu0 %v6576
    %v6615 = vpop.f32.mrf.mxu0
    %v6616 = vadd.f32 0.0, %v6615
    %v6617 = vpop.f32.mrf.mxu0
    %v6618 = vpop.f32.mrf.mxu0
    %v6619 = vadd.f32 0.0, %v6618
    %v6620 = vpop.f32.mrf.mxu0
    %6621 = vdwg.mxu0
    %v6622 = vadd.f32 %v6251, %v6616
    %v6623 = vadd.f32 %v6254, %v6619
    %s6624 = scalar_lea.vmem %s6, 240
    %v6625 = vld [vmem:[%s6624] sm:$0xf]
    %v6626 = vld [vmem:[%s6624 + $0x4] sm:$0xf]
    %v6627 = vld [vmem:[%s6624 + $0x8] sm:$0xf]
    %v6628 = vld [vmem:[%s6624 + $0xc] sm:$0xf]
    %s6629 = scalar_lea.vmem %s9, 15
    %v6630 = vld [vmem:[%s6629] sm:$0x1]
    %v6632 = vlaneseq
    %v6633 = vshrl.u32 %v6632, 7
    %v6634 = vsub.s32 0, %v6633
    %v6635 = vrot.slane %v6630, %v6634
    %v6641 = vunpack.c.l.b16 %v6625
    %v6642 = vunpack.c.l.b16 %v6626
    %v6643 = vunpack.c.l.b16 %v6627
    %v6644 = vunpack.c.l.b16 %v6628
    %v6645 = vpack.c.b16 %v6642, %v6641
    %v6646 = vpack.c.b16 %v6644, %v6643
    %6649 = vmatprep.subr.bf16.mxu0 0
    %6650 = vmatpush1.bf16.msra.mxu0 0
    %6651 = vmatprep.subr.bf16.mxu0 0
    %6652 = vmatpush1.bf16.msra.mxu0 0
    %6653 = vmatprep.subr.bf16.mxu0 0
    %6654 = vmatpush1.bf16.msra.mxu0 0
    %6655 = vmatprep.subr.bf16.mxu0 0
    %6656 = vmatpush1.bf16.msra.mxu0 0
    %6657 = vmatprep.subr.bf16.mxu0 0
    %6658 = vmatpush1.bf16.msra.mxu0 0
    %6659 = vmatprep.subr.bf16.mxu0 0
    %6660 = vmatpush1.bf16.msra.mxu0 0
    %6661 = vmatprep.subr.bf16.mxu0 0
    %6662 = vmatpush1.bf16.msra.mxu0 %v6646
    %6663 = vmatprep.subr.bf16.mxu0 0
    %6664 = vmatpush1.bf16.msra.mxu0 %v6645
    %6665 = vmatprep.subr.bf16.mxu0 0
    %6666 = vmatpush2.bf16.msra.mxu0 0
    %6667 = vmatprep.subr.bf16.mxu0 0
    %6668 = vmatpush2.bf16.msra.mxu0 0
    %6669 = vmatprep.subr.bf16.mxu0 0
    %6670 = vmatpush2.bf16.msra.mxu0 0
    %6671 = vmatprep.subr.bf16.mxu0 0
    %6672 = vmatpush2.bf16.msra.mxu0 0
    %6673 = vmatprep.subr.bf16.mxu0 0
    %6674 = vmatpush2.bf16.msra.mxu0 0
    %6675 = vmatprep.subr.bf16.mxu0 0
    %6676 = vmatpush2.bf16.msra.mxu0 0
    %6677 = vmatprep.subr.bf16.mxu0 0
    %6678 = vmatpush2.bf16.msra.mxu0 0
    %6679 = vmatprep.subr.bf16.mxu0 0
    %6680 = vmatpush2.bf16.msra.mxu0 0
    %6681 = vmatprep.mubr.bf16.mxu0 0
    %6682 = vmatmul.mubr.bf16.gmra.mxu0 %v5550
    %v6683 = vpop.f32.mrf.mxu0
    %v6684 = vadd.f32 %v6635, %v6683
    %v6685 = vpop.f32.mrf.mxu0
    %v6686 = vpop.f32.mrf.mxu0
    %v6687 = vadd.f32 %v6635, %v6686
    %v6688 = vpop.f32.mrf.mxu0
    %6689 = vdwg.mxu0
    %s6690 = scalar_lea.vmem %s7, 240
    %v6691 = vld [vmem:[%s6690] sm:$0xf]
    %v6692 = vld [vmem:[%s6690 + $0x4] sm:$0xf]
    %v6693 = vld [vmem:[%s6690 + $0x8] sm:$0xf]
    %v6694 = vld [vmem:[%s6690 + $0xc] sm:$0xf]
    %s6695 = scalar_lea.vmem %s10, 15
    %v6696 = vld [vmem:[%s6695] sm:$0x1]
    %v6698 = vlaneseq
    %v6699 = vshrl.u32 %v6698, 7
    %v6700 = vsub.s32 0, %v6699
    %v6701 = vrot.slane %v6696, %v6700
    %v6707 = vunpack.c.l.b16 %v6691
    %v6708 = vunpack.c.l.b16 %v6692
    %v6709 = vunpack.c.l.b16 %v6693
    %v6710 = vunpack.c.l.b16 %v6694
    %v6711 = vpack.c.b16 %v6708, %v6707
    %v6712 = vpack.c.b16 %v6710, %v6709
    %6715 = vmatprep.subr.bf16.mxu0 0
    %6716 = vmatpush1.bf16.msra.mxu0 0
    %6717 = vmatprep.subr.bf16.mxu0 0
    %6718 = vmatpush1.bf16.msra.mxu0 0
    %6719 = vmatprep.subr.bf16.mxu0 0
    %6720 = vmatpush1.bf16.msra.mxu0 0
    %6721 = vmatprep.subr.bf16.mxu0 0
    %6722 = vmatpush1.bf16.msra.mxu0 0
    %6723 = vmatprep.subr.bf16.mxu0 0
    %6724 = vmatpush1.bf16.msra.mxu0 0
    %6725 = vmatprep.subr.bf16.mxu0 0
    %6726 = vmatpush1.bf16.msra.mxu0 0
    %6727 = vmatprep.subr.bf16.mxu0 0
    %6728 = vmatpush1.bf16.msra.mxu0 %v6712
    %6729 = vmatprep.subr.bf16.mxu0 0
    %6730 = vmatpush1.bf16.msra.mxu0 %v6711
    %6731 = vmatprep.subr.bf16.mxu0 0
    %6732 = vmatpush2.bf16.msra.mxu0 0
    %6733 = vmatprep.subr.bf16.mxu0 0
    %6734 = vmatpush2.bf16.msra.mxu0 0
    %6735 = vmatprep.subr.bf16.mxu0 0
    %6736 = vmatpush2.bf16.msra.mxu0 0
    %6737 = vmatprep.subr.bf16.mxu0 0
    %6738 = vmatpush2.bf16.msra.mxu0 0
    %6739 = vmatprep.subr.bf16.mxu0 0
    %6740 = vmatpush2.bf16.msra.mxu0 0
    %6741 = vmatprep.subr.bf16.mxu0 0
    %6742 = vmatpush2.bf16.msra.mxu0 0
    %6743 = vmatprep.subr.bf16.mxu0 0
    %6744 = vmatpush2.bf16.msra.mxu0 0
    %6745 = vmatprep.subr.bf16.mxu0 0
    %6746 = vmatpush2.bf16.msra.mxu0 0
    %6747 = vmatprep.mubr.bf16.mxu0 0
    %6748 = vmatmul.mubr.bf16.gmra.mxu0 %v5550
    %v6749 = vpop.f32.mrf.mxu0
    %v6750 = vadd.f32 %v6701, %v6749
    %v6751 = vpop.f32.mrf.mxu0
    %v6752 = vpop.f32.mrf.mxu0
    %v6753 = vadd.f32 %v6701, %v6752
    %v6754 = vpop.f32.mrf.mxu0
    %6755 = vdwg.mxu0
    %s6756 = scalar_lea.vmem %s8, 240
    %v6757 = vld [vmem:[%s6756] sm:$0xf]
    %v6758 = vld [vmem:[%s6756 + $0x4] sm:$0xf]
    %v6759 = vld [vmem:[%s6756 + $0x8] sm:$0xf]
    %v6760 = vld [vmem:[%s6756 + $0xc] sm:$0xf]
    %s6761 = scalar_lea.vmem %s11, 15
    %v6762 = vld [vmem:[%s6761] sm:$0x1]
    %v6764 = vlaneseq
    %v6765 = vshrl.u32 %v6764, 7
    %v6766 = vsub.s32 0, %v6765
    %v6767 = vrot.slane %v6762, %v6766
    %v6773 = vunpack.c.l.b16 %v6757
    %v6774 = vunpack.c.l.b16 %v6758
    %v6775 = vunpack.c.l.b16 %v6759
    %v6776 = vunpack.c.l.b16 %v6760
    %v6777 = vpack.c.b16 %v6774, %v6773
    %v6778 = vpack.c.b16 %v6776, %v6775
    %6781 = vmatprep.subr.bf16.mxu0 0
    %6782 = vmatpush1.bf16.msra.mxu0 0
    %6783 = vmatprep.subr.bf16.mxu0 0
    %6784 = vmatpush1.bf16.msra.mxu0 0
    %6785 = vmatprep.subr.bf16.mxu0 0
    %6786 = vmatpush1.bf16.msra.mxu0 0
    %6787 = vmatprep.subr.bf16.mxu0 0
    %6788 = vmatpush1.bf16.msra.mxu0 0
    %6789 = vmatprep.subr.bf16.mxu0 0
    %6790 = vmatpush1.bf16.msra.mxu0 0
    %6791 = vmatprep.subr.bf16.mxu0 0
    %6792 = vmatpush1.bf16.msra.mxu0 0
    %6793 = vmatprep.subr.bf16.mxu0 0
    %6794 = vmatpush1.bf16.msra.mxu0 %v6778
    %6795 = vmatprep.subr.bf16.mxu0 0
    %6796 = vmatpush1.bf16.msra.mxu0 %v6777
    %6797 = vmatprep.subr.bf16.mxu0 0
    %6798 = vmatpush2.bf16.msra.mxu0 0
    %6799 = vmatprep.subr.bf16.mxu0 0
    %6800 = vmatpush2.bf16.msra.mxu0 0
    %6801 = vmatprep.subr.bf16.mxu0 0
    %6802 = vmatpush2.bf16.msra.mxu0 0
    %6803 = vmatprep.subr.bf16.mxu0 0
    %6804 = vmatpush2.bf16.msra.mxu0 0
    %6805 = vmatprep.subr.bf16.mxu0 0
    %6806 = vmatpush2.bf16.msra.mxu0 0
    %6807 = vmatprep.subr.bf16.mxu0 0
    %6808 = vmatpush2.bf16.msra.mxu0 0
    %6809 = vmatprep.subr.bf16.mxu0 0
    %6810 = vmatpush2.bf16.msra.mxu0 0
    %6811 = vmatprep.subr.bf16.mxu0 0
    %6812 = vmatpush2.bf16.msra.mxu0 0
    %6813 = vmatprep.mubr.bf16.mxu0 0
    %6814 = vmatmul.mubr.bf16.gmra.mxu0 %v5550
    %v6815 = vpop.f32.mrf.mxu0
    %v6816 = vadd.f32 %v6767, %v6815
    %v6817 = vpop.f32.mrf.mxu0
    %v6818 = vpop.f32.mrf.mxu0
    %v6819 = vadd.f32 %v6767, %v6818
    %v6820 = vpop.f32.mrf.mxu0
    %6821 = vdwg.mxu0
    %v6822 = vpack.c.bf16 %v6687, %v6684
    %v6823 = vpack.c.bf16 %v6753, %v6750
    %v6825 = vsel %vm419, %v6822, 0
    %v6828 = vsel %vm419, %v6823, 0
    %6830 = vmatprep.subr.bf16.mxu0 0
    %6831 = vmatpush1.bf16.xpose.msra.mxu0 0
    %6832 = vmatprep.subr.bf16.mxu0 0
    %6833 = vmatpush1.bf16.xpose.msra.mxu0 0
    %6834 = vmatprep.subr.bf16.mxu0 0
    %6835 = vmatpush1.bf16.xpose.msra.mxu0 0
    %6836 = vmatprep.subr.bf16.mxu0 0
    %6837 = vmatpush1.bf16.xpose.msra.mxu0 0
    %6838 = vmatprep.subr.bf16.mxu0 0
    %6839 = vmatpush1.bf16.xpose.msra.mxu0 0
    %6840 = vmatprep.subr.bf16.mxu0 0
    %6841 = vmatpush1.bf16.xpose.msra.mxu0 0
    %6842 = vmatprep.subr.bf16.mxu0 0
    %6843 = vmatpush1.bf16.xpose.msra.mxu0 0
    %6844 = vmatprep.subr.bf16.mxu0 0
    %6845 = vmatpush1.bf16.xpose.msra.mxu0 %v6828
    %6846 = vmatprep.subr.bf16.mxu0 0
    %6847 = vmatpush2.bf16.xpose.msra.mxu0 0
    %6848 = vmatprep.subr.bf16.mxu0 0
    %6849 = vmatpush2.bf16.xpose.msra.mxu0 0
    %6850 = vmatprep.subr.bf16.mxu0 0
    %6851 = vmatpush2.bf16.xpose.msra.mxu0 0
    %6852 = vmatprep.subr.bf16.mxu0 0
    %6853 = vmatpush2.bf16.xpose.msra.mxu0 0
    %6854 = vmatprep.subr.bf16.mxu0 0
    %6855 = vmatpush2.bf16.xpose.msra.mxu0 0
    %6856 = vmatprep.subr.bf16.mxu0 0
    %6857 = vmatpush2.bf16.xpose.msra.mxu0 0
    %6858 = vmatprep.subr.bf16.mxu0 0
    %6859 = vmatpush2.bf16.xpose.msra.mxu0 0
    %6860 = vmatprep.subr.bf16.mxu0 0
    %6861 = vmatpush2.bf16.xpose.msra.mxu0 0
    %6862 = vmatprep.mubr.bf16.mxu0 0
    %6863 = vmatmul.mubr.bf16.gmra.mxu0 %v6825
    %v6864 = vpop.f32.mrf.mxu0
    %v6865 = vadd.f32 %v219, %v6864
    %v6866 = vpop.f32.mrf.mxu0
    %v6867 = vpop.f32.mrf.mxu0
    %v6868 = vadd.f32 %v220, %v6867
    %v6869 = vpop.f32.mrf.mxu0
    %6870 = vdwg.mxu0
    %v6871 = vsel %vm467, %v6865, -inf
    %6872 = vmax.xlane.f32.xlu0 %v6871
    %v6873 = vpop.xlane.xlu0 %6872
    %v6874 = vsel %vm467, %v6868, -inf
    %6875 = vmax.xlane.f32.xlu0 %v6874
    %v6876 = vpop.xlane.xlu0 %6875
    %v6877 = vsub.f32 %v6865, %v6873
    %v6878 = vsub.f32 %v6868, %v6876
    %v6879 = vmul.f32 %v6877, 1.442695
    %v6880 = vpow.pop %v6879
    %v6881 = vmul.f32 %v6878, 1.442695
    %v6882 = vpow.pop %v6881
    %v6883 = vsel %vm467, %v6880, 0.0
    %6884 = vadd.xlane.f32.xlu0 %v6883
    %v6885 = vpop.xlane.xlu0 %6884
    %v6886 = vsel %vm467, %v6882, 0.0
    %6887 = vadd.xlane.f32.xlu0 %v6886
    %v6888 = vpop.xlane.xlu0 %6887
    %v6889 = vrcp.pop %v6885
    %v6890 = vrcp.pop %v6888
    %v6891 = vmul.f32 %v6880, %v6889
    %v6892 = vmul.f32 %v6882, %v6890
    %v6893 = vpack.c.bf16 %v6892, %v6891
    %v6894 = vpack.c.bf16 %v6819, %v6816
    %v6896 = vsel %vm467, %v6893, 0
    %6898 = vmatprep.subr.bf16.mxu0 0
    %6899 = vmatpush1.bf16.msra.mxu0 0
    %6900 = vmatprep.subr.bf16.mxu0 0
    %6901 = vmatpush1.bf16.msra.mxu0 0
    %6902 = vmatprep.subr.bf16.mxu0 0
    %6903 = vmatpush1.bf16.msra.mxu0 0
    %6904 = vmatprep.subr.bf16.mxu0 0
    %6905 = vmatpush1.bf16.msra.mxu0 0
    %6906 = vmatprep.subr.bf16.mxu0 0
    %6907 = vmatpush1.bf16.msra.mxu0 0
    %6908 = vmatprep.subr.bf16.mxu0 0
    %6909 = vmatpush1.bf16.msra.mxu0 0
    %6910 = vmatprep.subr.bf16.mxu0 0
    %6911 = vmatpush1.bf16.msra.mxu0 0
    %6912 = vmatprep.subr.bf16.mxu0 0
    %6913 = vmatpush1.bf16.msra.mxu0 %v6894
    %6914 = vmatprep.subr.bf16.mxu0 0
    %6915 = vmatpush2.bf16.msra.mxu0 0
    %6916 = vmatprep.subr.bf16.mxu0 0
    %6917 = vmatpush2.bf16.msra.mxu0 0
    %6918 = vmatprep.subr.bf16.mxu0 0
    %6919 = vmatpush2.bf16.msra.mxu0 0
    %6920 = vmatprep.subr.bf16.mxu0 0
    %6921 = vmatpush2.bf16.msra.mxu0 0
    %6922 = vmatprep.subr.bf16.mxu0 0
    %6923 = vmatpush2.bf16.msra.mxu0 0
    %6924 = vmatprep.subr.bf16.mxu0 0
    %6925 = vmatpush2.bf16.msra.mxu0 0
    %6926 = vmatprep.subr.bf16.mxu0 0
    %6927 = vmatpush2.bf16.msra.mxu0 0
    %6928 = vmatprep.subr.bf16.mxu0 0
    %6929 = vmatpush2.bf16.msra.mxu0 0
    %6930 = vmatprep.mubr.bf16.mxu0 0
    %6931 = vmatmul.mubr.bf16.gmra.mxu0 %v6896
    %v6932 = vpop.f32.mrf.mxu0
    %v6933 = vadd.f32 0.0, %v6932
    %v6934 = vpop.f32.mrf.mxu0
    %v6935 = vpop.f32.mrf.mxu0
    %v6936 = vadd.f32 0.0, %v6935
    %v6937 = vpop.f32.mrf.mxu0
    %6938 = vdwg.mxu0
    %v6939 = vpack.c.bf16 %v6936, %v6933
    %s6940 = scalar_lea.vmem %s12, 60
    %v6941 = vld [vmem:[%s6940] sm:$0xf]
    %v6943 = vsel %vm419, %v6939, 0
    %v6946 = vsel %vm859, %v6941, 0
    %6948 = vmatprep.subr.bf16.mxu0 0
    %6949 = vmatpush1.bf16.msra.mxu0 0
    %6950 = vmatprep.subr.bf16.mxu0 0
    %6951 = vmatpush1.bf16.msra.mxu0 0
    %6952 = vmatprep.subr.bf16.mxu0 0
    %6953 = vmatpush1.bf16.msra.mxu0 0
    %6954 = vmatprep.subr.bf16.mxu0 0
    %6955 = vmatpush1.bf16.msra.mxu0 0
    %6956 = vmatprep.subr.bf16.mxu0 0
    %6957 = vmatpush1.bf16.msra.mxu0 0
    %6958 = vmatprep.subr.bf16.mxu0 0
    %6959 = vmatpush1.bf16.msra.mxu0 0
    %6960 = vmatprep.subr.bf16.mxu0 0
    %6961 = vmatpush1.bf16.msra.mxu0 0
    %6962 = vmatprep.subr.bf16.mxu0 0
    %6963 = vmatpush1.bf16.msra.mxu0 %v6946
    %6964 = vmatprep.subr.bf16.mxu0 0
    %6965 = vmatpush2.bf16.msra.mxu0 0
    %6966 = vmatprep.subr.bf16.mxu0 0
    %6967 = vmatpush2.bf16.msra.mxu0 0
    %6968 = vmatprep.subr.bf16.mxu0 0
    %6969 = vmatpush2.bf16.msra.mxu0 0
    %6970 = vmatprep.subr.bf16.mxu0 0
    %6971 = vmatpush2.bf16.msra.mxu0 0
    %6972 = vmatprep.subr.bf16.mxu0 0
    %6973 = vmatpush2.bf16.msra.mxu0 0
    %6974 = vmatprep.subr.bf16.mxu0 0
    %6975 = vmatpush2.bf16.msra.mxu0 0
    %6976 = vmatprep.subr.bf16.mxu0 0
    %6977 = vmatpush2.bf16.msra.mxu0 0
    %6978 = vmatprep.subr.bf16.mxu0 0
    %6979 = vmatpush2.bf16.msra.mxu0 0
    %6980 = vmatprep.mubr.bf16.mxu0 0
    %6981 = vmatmul.mubr.bf16.gmra.mxu0 %v6943
    %v6982 = vpop.f32.mrf.mxu0
    %v6983 = vadd.f32 0.0, %v6982
    %v6984 = vpop.f32.mrf.mxu0
    %v6985 = vpop.f32.mrf.mxu0
    %v6986 = vadd.f32 0.0, %v6985
    %v6987 = vpop.f32.mrf.mxu0
    %6988 = vdwg.mxu0
    %v6989 = vadd.f32 %v6622, %v6983
    %v6990 = vadd.f32 %v6623, %v6986
    %s6991 = scalar_lea.vmem %s13, 3
    %v6992 = vld [vmem:[%s6991] sm:$0x1]
    %v6994 = vlaneseq
    %v6995 = vshrl.u32 %v6994, 7
    %v6996 = vsub.s32 0, %v6995
    %v6997 = vrot.slane %v6992, %v6996
    %v6999 = vadd.f32 %v6989, %v6997
    %v7000 = vadd.f32 %v6990, %v6997
    %v7001 = vadd.f32 %v5521, %v6999
    %v7002 = vadd.f32 %v5522, %v7000
    %s7003 = scalar_lea.vmem %s14, 3
    %v7004 = vld [vmem:[%s7003] sm:$0x1]
    %s7005 = scalar_lea.vmem %s15, 3
    %v7006 = vld [vmem:[%s7005] sm:$0x1]
    %v7007 = vsel %vm175, %v7001, 0.0
    %7008 = vadd.xlane.f32.xlu0 %v7007
    %v7009 = vpop.xlane.xlu0 %7008
    %v7010 = vsel %vm175, %v7002, 0.0
    %7011 = vadd.xlane.f32.xlu0 %v7010
    %v7012 = vpop.xlane.xlu0 %7011
    %v7013 = vmul.f32 %v7009, %v182
    %v7014 = vmul.f32 %v7012, %v182
    %v7015 = vsub.f32 %v7001, %v7013
    %v7016 = vsub.f32 %v7002, %v7014
    %v7017 = vmul.f32 %v7015, %v7015
    %v7018 = vmul.f32 %v7016, %v7016
    %v7019 = vsel %vm175, %v7017, 0.0
    %7020 = vadd.xlane.f32.xlu0 %v7019
    %v7021 = vpop.xlane.xlu0 %7020
    %v7022 = vsel %vm175, %v7018, 0.0
    %7023 = vadd.xlane.f32.xlu0 %v7022
    %v7024 = vpop.xlane.xlu0 %7023
    %v7025 = vmul.f32 %v7021, %v182
    %v7026 = vmul.f32 %v7024, %v182
    %v7027 = vadd.f32 %v7025, 1e-05
    %v7028 = vadd.f32 %v7026, 1e-05
    %v7029 = vrsqrt.pop %v7027
    %v7030 = vrsqrt.pop %v7028
    %v7031 = vmul.f32 %v7015, %v7029
    %v7032 = vmul.f32 %v7016, %v7030
    %v7034 = vlaneseq
    %v7035 = vshrl.u32 %v7034, 7
    %v7036 = vsub.s32 0, %v7035
    %v7037 = vrot.slane %v7004, %v7036
    %v7039 = vmul.f32 %v7031, %v7037
    %v7040 = vmul.f32 %v7032, %v7037
    %v7042 = vlaneseq
    %v7043 = vshrl.u32 %v7042, 7
    %v7044 = vsub.s32 0, %v7043
    %v7045 = vrot.slane %v7006, %v7044
    %v7047 = vadd.f32 %v7039, %v7045
    %v7048 = vadd.f32 %v7040, %v7045
    %v7049 = vpack.c.bf16 %v7048, %v7047
    %s7050 = scalar_lea.vmem %s16, 48
    %v7051 = vld [vmem:[%s7050] sm:$0xf]
    %v7052 = vld [vmem:[%s7050 + $0x4] sm:$0xf]
    %v7053 = vld [vmem:[%s7050 + $0x8] sm:$0xf]
    %v7054 = vld [vmem:[%s7050 + $0xc] sm:$0xf]
    %s7055 = scalar_lea.vmem %s17, 3
    %v7056 = vld [vmem:[%s7055] sm:$0x1]
    %v7058 = vlaneseq
    %v7059 = vshrl.u32 %v7058, 7
    %v7060 = vsub.s32 0, %v7059
    %v7061 = vrot.slane %v7056, %v7060
    %v7067 = vunpack.c.l.b16 %v7051
    %v7068 = vunpack.c.l.b16 %v7052
    %v7069 = vunpack.c.l.b16 %v7053
    %v7070 = vunpack.c.l.b16 %v7054
    %v7071 = vpack.c.b16 %v7068, %v7067
    %v7072 = vpack.c.b16 %v7070, %v7069
    %v7076 = vsel %vm175, %v7049, 0
    %7078 = vmatprep.subr.bf16.mxu0 0
    %7079 = vmatpush1.bf16.msra.mxu0 0
    %7080 = vmatprep.subr.bf16.mxu0 0
    %7081 = vmatpush1.bf16.msra.mxu0 0
    %7082 = vmatprep.subr.bf16.mxu0 0
    %7083 = vmatpush1.bf16.msra.mxu0 0
    %7084 = vmatprep.subr.bf16.mxu0 0
    %7085 = vmatpush1.bf16.msra.mxu0 0
    %7086 = vmatprep.subr.bf16.mxu0 0
    %7087 = vmatpush1.bf16.msra.mxu0 0
    %7088 = vmatprep.subr.bf16.mxu0 0
    %7089 = vmatpush1.bf16.msra.mxu0 0
    %7090 = vmatprep.subr.bf16.mxu0 0
    %7091 = vmatpush1.bf16.msra.mxu0 %v7072
    %7092 = vmatprep.subr.bf16.mxu0 0
    %7093 = vmatpush1.bf16.msra.mxu0 %v7071
    %7094 = vmatprep.subr.bf16.mxu0 0
    %7095 = vmatpush2.bf16.msra.mxu0 0
    %7096 = vmatprep.subr.bf16.mxu0 0
    %7097 = vmatpush2.bf16.msra.mxu0 0
    %7098 = vmatprep.subr.bf16.mxu0 0
    %7099 = vmatpush2.bf16.msra.mxu0 0
    %7100 = vmatprep.subr.bf16.mxu0 0
    %7101 = vmatpush2.bf16.msra.mxu0 0
    %7102 = vmatprep.subr.bf16.mxu0 0
    %7103 = vmatpush2.bf16.msra.mxu0 0
    %7104 = vmatprep.subr.bf16.mxu0 0
    %7105 = vmatpush2.bf16.msra.mxu0 0
    %7106 = vmatprep.subr.bf16.mxu0 0
    %7107 = vmatpush2.bf16.msra.mxu0 0
    %7108 = vmatprep.subr.bf16.mxu0 0
    %7109 = vmatpush2.bf16.msra.mxu0 0
    %7110 = vmatprep.mubr.bf16.mxu0 0
    %7111 = vmatmul.mubr.bf16.gmra.mxu0 %v7076
    %v7112 = vpop.f32.mrf.mxu0
    %v7113 = vadd.f32 %v7061, %v7112
    %v7114 = vpop.f32.mrf.mxu0
    %v7115 = vpop.f32.mrf.mxu0
    %v7116 = vadd.f32 %v7061, %v7115
    %v7117 = vpop.f32.mrf.mxu0
    %7118 = vdwg.mxu0
    %v7119 = vmax.f32 %v7113, 0.0
    %v7120 = vmax.f32 %v7116, 0.0
    %v7121 = vpack.c.bf16 %v7120, %v7119
    %s7122 = scalar_lea.vmem %s18, 192
    %v7123 = vld [vmem:[%s7122] sm:$0xf]
    %v7124 = vld [vmem:[%s7122 + $0x4] sm:$0xf]
    %v7125 = vld [vmem:[%s7122 + $0x8] sm:$0xf]
    %v7126 = vld [vmem:[%s7122 + $0xc] sm:$0xf]
    %v7127 = vld [vmem:[%s7122 + $0x10] sm:$0xf]
    %v7128 = vld [vmem:[%s7122 + $0x14] sm:$0xf]
    %v7129 = vld [vmem:[%s7122 + $0x18] sm:$0xf]
    %v7130 = vld [vmem:[%s7122 + $0x1c] sm:$0xf]
    %v7131 = vld [vmem:[%s7122 + $0x20] sm:$0xf]
    %v7132 = vld [vmem:[%s7122 + $0x24] sm:$0xf]
    %v7133 = vld [vmem:[%s7122 + $0x28] sm:$0xf]
    %v7134 = vld [vmem:[%s7122 + $0x2c] sm:$0xf]
    %v7135 = vld [vmem:[%s7122 + $0x30] sm:$0xf]
    %v7136 = vld [vmem:[%s7122 + $0x34] sm:$0xf]
    %v7137 = vld [vmem:[%s7122 + $0x38] sm:$0xf]
    %v7138 = vld [vmem:[%s7122 + $0x3c] sm:$0xf]
    %s7139 = scalar_lea.vmem %s19, 3
    %v7140 = vld [vmem:[%s7139] sm:$0x1]
    %v7142 = vlaneseq
    %v7143 = vshrl.u32 %v7142, 7
    %v7144 = vsub.s32 0, %v7143
    %v7145 = vrot.slane %v7140, %v7144
    %v7163 = vunpack.c.l.b16 %v7123
    %v7164 = vunpack.c.l.b16 %v7124
    %v7165 = vunpack.c.l.b16 %v7125
    %v7166 = vunpack.c.l.b16 %v7126
    %v7167 = vunpack.c.l.b16 %v7127
    %v7168 = vunpack.c.l.b16 %v7128
    %v7169 = vunpack.c.l.b16 %v7129
    %v7170 = vunpack.c.l.b16 %v7130
    %v7171 = vunpack.c.l.b16 %v7131
    %v7172 = vunpack.c.l.b16 %v7132
    %v7173 = vunpack.c.l.b16 %v7133
    %v7174 = vunpack.c.l.b16 %v7134
    %v7175 = vunpack.c.l.b16 %v7135
    %v7176 = vunpack.c.l.b16 %v7136
    %v7177 = vunpack.c.l.b16 %v7137
    %v7178 = vunpack.c.l.b16 %v7138
    %v7179 = vpack.c.b16 %v7164, %v7163
    %v7180 = vpack.c.b16 %v7166, %v7165
    %v7181 = vpack.c.b16 %v7168, %v7167
    %v7182 = vpack.c.b16 %v7170, %v7169
    %v7183 = vpack.c.b16 %v7172, %v7171
    %v7184 = vpack.c.b16 %v7174, %v7173
    %v7185 = vpack.c.b16 %v7176, %v7175
    %v7186 = vpack.c.b16 %v7178, %v7177
    %7195 = vmatprep.subr.bf16.mxu0 0
    %7196 = vmatpush1.bf16.msra.mxu0 %v7186
    %7197 = vmatprep.subr.bf16.mxu0 0
    %7198 = vmatpush1.bf16.msra.mxu0 %v7185
    %7199 = vmatprep.subr.bf16.mxu0 0
    %7200 = vmatpush1.bf16.msra.mxu0 %v7184
    %7201 = vmatprep.subr.bf16.mxu0 0
    %7202 = vmatpush1.bf16.msra.mxu0 %v7183
    %7203 = vmatprep.subr.bf16.mxu0 0
    %7204 = vmatpush1.bf16.msra.mxu0 %v7182
    %7205 = vmatprep.subr.bf16.mxu0 0
    %7206 = vmatpush1.bf16.msra.mxu0 %v7181
    %7207 = vmatprep.subr.bf16.mxu0 0
    %7208 = vmatpush1.bf16.msra.mxu0 %v7180
    %7209 = vmatprep.subr.bf16.mxu0 0
    %7210 = vmatpush1.bf16.msra.mxu0 %v7179
    %7211 = vmatprep.subr.bf16.mxu0 0
    %7212 = vmatpush2.bf16.msra.mxu0 0
    %7213 = vmatprep.subr.bf16.mxu0 0
    %7214 = vmatpush2.bf16.msra.mxu0 0
    %7215 = vmatprep.subr.bf16.mxu0 0
    %7216 = vmatpush2.bf16.msra.mxu0 0
    %7217 = vmatprep.subr.bf16.mxu0 0
    %7218 = vmatpush2.bf16.msra.mxu0 0
    %7219 = vmatprep.subr.bf16.mxu0 0
    %7220 = vmatpush2.bf16.msra.mxu0 0
    %7221 = vmatprep.subr.bf16.mxu0 0
    %7222 = vmatpush2.bf16.msra.mxu0 0
    %7223 = vmatprep.subr.bf16.mxu0 0
    %7224 = vmatpush2.bf16.msra.mxu0 0
    %7225 = vmatprep.subr.bf16.mxu0 0
    %7226 = vmatpush2.bf16.msra.mxu0 0
    %7227 = vmatprep.mubr.bf16.mxu0 0
    %7228 = vmatmul.mubr.bf16.gmra.mxu0 %v7121
    %v7229 = vpop.f32.mrf.mxu0
    %v7230 = vadd.f32 %v7145, %v7229
    %v7231 = vpop.f32.mrf.mxu0
    %v7232 = vpop.f32.mrf.mxu0
    %v7233 = vadd.f32 %v7145, %v7232
    %v7234 = vpop.f32.mrf.mxu0
    %7235 = vdwg.mxu0
    %v7236 = vadd.f32 %v7047, %v7230
    %v7237 = vadd.f32 %v7048, %v7233
    %s7238 = scalar_lea.vmem %s20, 3
    %v7239 = vld [vmem:[%s7238] sm:$0x1]
    %s7240 = scalar_lea.vmem %s21, 3
    %v7241 = vld [vmem:[%s7240] sm:$0x1]
    %v7242 = vsel %vm175, %v7236, 0.0
    %7243 = vadd.xlane.f32.xlu0 %v7242
    %v7244 = vpop.xlane.xlu0 %7243
    %v7245 = vsel %vm175, %v7237, 0.0
    %7246 = vadd.xlane.f32.xlu0 %v7245
    %v7247 = vpop.xlane.xlu0 %7246
    %v7248 = vmul.f32 %v7244, %v182
    %v7249 = vmul.f32 %v7247, %v182
    %v7250 = vsub.f32 %v7236, %v7248
    %v7251 = vsub.f32 %v7237, %v7249
    %v7252 = vmul.f32 %v7250, %v7250
    %v7253 = vmul.f32 %v7251, %v7251
    %v7254 = vsel %vm175, %v7252, 0.0
    %7255 = vadd.xlane.f32.xlu0 %v7254
    %v7256 = vpop.xlane.xlu0 %7255
    %v7257 = vsel %vm175, %v7253, 0.0
    %7258 = vadd.xlane.f32.xlu0 %v7257
    %v7259 = vpop.xlane.xlu0 %7258
    %v7260 = vmul.f32 %v7256, %v182
    %v7261 = vmul.f32 %v7259, %v182
    %v7262 = vadd.f32 %v7260, 1e-05
    %v7263 = vadd.f32 %v7261, 1e-05
    %v7264 = vrsqrt.pop %v7262
    %v7265 = vrsqrt.pop %v7263
    %v7266 = vmul.f32 %v7250, %v7264
    %v7267 = vmul.f32 %v7251, %v7265
    %v7269 = vlaneseq
    %v7270 = vshrl.u32 %v7269, 7
    %v7271 = vsub.s32 0, %v7270
    %v7272 = vrot.slane %v7239, %v7271
    %v7274 = vmul.f32 %v7266, %v7272
    %v7275 = vmul.f32 %v7267, %v7272
    %v7277 = vlaneseq
    %v7278 = vshrl.u32 %v7277, 7
    %v7279 = vsub.s32 0, %v7278
    %v7280 = vrot.slane %v7241, %v7279
    %v7282 = vadd.f32 %v7274, %v7280
    %v7283 = vadd.f32 %v7275, %v7280
    %v7284 = vpack.c.bf16 %v7283, %v7282
    %v7285 = vld [vmem:[%s22] sm:$0xf]
    %v7286 = vld [vmem:[%s22 + $0x4] sm:$0xf]
    %v7287 = vld [vmem:[%s22 + $0x8] sm:$0xf]
    %v7288 = vld [vmem:[%s22 + $0xc] sm:$0xf]
    %v7289 = vld [vmem:[%s23] sm:$0x1]
    %v7291 = vlaneseq
    %v7292 = vshrl.u32 %v7291, 7
    %v7293 = vsub.s32 0, %v7292
    %v7294 = vrot.slane %v7289, %v7293
    %v7300 = vunpack.c.l.b16 %v7285
    %v7301 = vunpack.c.l.b16 %v7286
    %v7302 = vunpack.c.l.b16 %v7287
    %v7303 = vunpack.c.l.b16 %v7288
    %v7304 = vpack.c.b16 %v7301, %v7300
    %v7305 = vpack.c.b16 %v7303, %v7302
    %v7309 = vsel %vm175, %v7284, 0
    %7311 = vmatprep.subr.bf16.mxu0 0
    %7312 = vmatpush1.bf16.msra.mxu0 0
    %7313 = vmatprep.subr.bf16.mxu0 0
    %7314 = vmatpush1.bf16.msra.mxu0 0
    %7315 = vmatprep.subr.bf16.mxu0 0
    %7316 = vmatpush1.bf16.msra.mxu0 0
    %7317 = vmatprep.subr.bf16.mxu0 0
    %7318 = vmatpush1.bf16.msra.mxu0 0
    %7319 = vmatprep.subr.bf16.mxu0 0
    %7320 = vmatpush1.bf16.msra.mxu0 0
    %7321 = vmatprep.subr.bf16.mxu0 0
    %7322 = vmatpush1.bf16.msra.mxu0 0
    %7323 = vmatprep.subr.bf16.mxu0 0
    %7324 = vmatpush1.bf16.msra.mxu0 %v7305
    %7325 = vmatprep.subr.bf16.mxu0 0
    %7326 = vmatpush1.bf16.msra.mxu0 %v7304
    %7327 = vmatprep.subr.bf16.mxu0 0
    %7328 = vmatpush2.bf16.msra.mxu0 0
    %7329 = vmatprep.subr.bf16.mxu0 0
    %7330 = vmatpush2.bf16.msra.mxu0 0
    %7331 = vmatprep.subr.bf16.mxu0 0
    %7332 = vmatpush2.bf16.msra.mxu0 0
    %7333 = vmatprep.subr.bf16.mxu0 0
    %7334 = vmatpush2.bf16.msra.mxu0 0
    %7335 = vmatprep.subr.bf16.mxu0 0
    %7336 = vmatpush2.bf16.msra.mxu0 0
    %7337 = vmatprep.subr.bf16.mxu0 0
    %7338 = vmatpush2.bf16.msra.mxu0 0
    %7339 = vmatprep.subr.bf16.mxu0 0
    %7340 = vmatpush2.bf16.msra.mxu0 0
    %7341 = vmatprep.subr.bf16.mxu0 0
    %7342 = vmatpush2.bf16.msra.mxu0 0
    %7343 = vmatprep.mubr.bf16.mxu0 0
    %7344 = vmatmul.mubr.bf16.gmra.mxu0 %v7309
    %v7345 = vpop.f32.mrf.mxu0
    %v7346 = vadd.f32 %v7294, %v7345
    %v7347 = vpop.f32.mrf.mxu0
    %v7348 = vpop.f32.mrf.mxu0
    %v7349 = vadd.f32 %v7294, %v7348
    %v7350 = vpop.f32.mrf.mxu0
    %7351 = vdwg.mxu0
    %7352 = vst.msk [vmem:[#allocation2] sm:$0xff] %vm175, %v7346
    %7353 = vst.msk [vmem:[#allocation2 + $0x8] sm:$0xff] %vm175, %v7349
    // Predicated region
    $region98: #{tpu_custom_call.1} parent=1 // pred_check
      _
    $region99: #{tpu_custom_call.1} parent=1 // pred_check_branch
      %7355 = sbr.rel (0) target = $region101
    $region100: #{tpu_custom_call.1} parent=1 // pred_region
      %s7357 = ssub.s32 256, 256
      %7358 = vsyncadd [#allocation3], %s7357
      %s7359 = sshll.u32 [#allocation2], 4
      %s7360 = int_to_ptr.vmem [resolvable:$true] %s7359
      %7365 = dma.vmem_to_hbm [thread:$0]  %s7360, 256, %s24, [#allocation3], 128, 128, 8
    $region101: #{tpu_custom_call.1} parent=1 // pred_fallthru
      _
    // Predicated region
    $region102: #{tpu_custom_call.1} parent=1 // pred_check
      _
    $region103: #{tpu_custom_call.1} parent=1 // pred_check_branch
      %7367 = sbr.rel (0) target = $region105
    $region104: #{tpu_custom_call.1} parent=1 // pred_region
      %7368 = dma.done [#allocation3], 256
    $region105: #{tpu_custom_call.1} parent=1 // pred_fallthru
      _
    %7369 = vsyncpa [#allocation3], 1

</llo_original>
